<compile_context>
chip_gen: v7x
topology: tpu7x:2x2x1
jax: 0.10.0
libtpu: 0.0.40
codegen_flags: <defaults>
</compile_context>

<pallas_src>
import math

import jax
import jax.numpy as jnp
from jax.experimental import pallas as pl
from jax.experimental.pallas import tpu as pltpu

_VMEM = pl.BlockSpec(memory_space=pltpu.MemorySpace.VMEM)


# ----------------------------------------------------------------------------
# Single fused kernel: 2x (2-layer BiGRU) + masked time-sum + 3-layer MLP head.
# Weight packing (done at init time):
#   w_ih : (Din, 6*Hd)   columns = [fwd: r|z|n , bwd: r|z|n]   (pre-transposed)
#   w_hh : (2*Hd, 6*Hd)  block-diagonal: rows[0:Hd]->cols[0:3Hd] (fwd),
#                        rows[Hd:2Hd]->cols[3Hd:6Hd] (bwd)
#   b_x  : (1, 6*Hd)     folded b_ih + b_hh for r,z; b_ih only for n
#   b_hn : (1, 2*Hd)     [b_hn_fwd | b_hn_bwd]
# ----------------------------------------------------------------------------
def _make_fused_kernel(T_t, T_w, B, Hd):
    G = 3 * Hd          # gate block per direction
    H = 2 * Hd          # BiGRU output width

    def gru_cell(xg, gh, b_hn, h_prev):
        # xg, gh: (B, 3*Hd) with lane layout [r | z | n]; h_prev: (B, Hd)
        r = jax.nn.sigmoid(xg[:, :Hd] + gh[:, :Hd])
        z = jax.nn.sigmoid(xg[:, Hd:2 * Hd] + gh[:, Hd:2 * Hd])
        n = jnp.tanh(xg[:, 2 * Hd:] + r * (gh[:, 2 * Hd:] + b_hn))
        return (1.0 - z) * n + z * h_prev

    def bigru_layer(x_flat, T, w_ih, w_hh, b_x, b_hn):
        # x_flat: (T*B, Din) -> returns (T*B, 2*Hd), row index = t*B + b.
        # Hoisted input projection for both directions / all gates at once.
        xp = jnp.dot(x_flat, w_ih, preferred_element_type=jnp.float32) + b_x  # (T*B, 6Hd)

        h = jnp.zeros((B, H), jnp.float32)            # [h_fwd | h_bwd]
        outs_f = [None] * T
        outs_b = [None] * T
        for t in range(T):                            # static full unroll
            tb = T - 1 - t
            xg_f = xp[t * B:(t + 1) * B, :G]          # fwd consumes x[t]
            xg_b = xp[tb * B:(tb + 1) * B, G:]        # bwd consumes x[T-1-t]
            # single block-diagonal recurrent matmul for both directions
            gh = jnp.dot(h, w_hh, preferred_element_type=jnp.float32)  # (B, 6Hd)
            h_f = gru_cell(xg_f, gh[:, :G], b_hn[:, :Hd], h[:, :Hd])
            h_b = gru_cell(xg_b, gh[:, G:], b_hn[:, Hd:], h[:, Hd:])
            h = jnp.concatenate([h_f, h_b], axis=-1)
            outs_f[t] = h_f
            outs_b[tb] = h_b                          # bwd output at original time tb
        return jnp.concatenate(
            [jnp.concatenate([outs_f[t], outs_b[t]], axis=-1) for t in range(T)],
            axis=0)                                   # (T*B, 2*Hd)

    def kernel(temb_ref, mask_ref, wemb_ref,
               t1_wih, t1_whh, t1_bx, t1_bhn,
               t2_wih, t2_whh, t2_bx, t2_bhn,
               v1_wih, v1_whh, v1_bx, v1_bhn,
               v2_wih, v2_whh, v2_bx, v2_bhn,
               hw1t, hw1w, hb1, hw2, hb2, hw3, hb3,
               out_ref):
        # --- target-sequence 2-layer BiGRU ---------------------------------
        t_h = bigru_layer(temb_ref[...], T_t, t1_wih[...], t1_whh[...],
                          t1_bx[...], t1_bhn[...])
        t_h = bigru_layer(t_h, T_t, t2_wih[...], t2_whh[...],
                          t2_bx[...], t2_bhn[...])
        # --- window-sequence 2-layer BiGRU ---------------------------------
        w_h = bigru_layer(wemb_ref[...], T_w, v1_wih[...], v1_whh[...],
                          v1_bx[...], v1_bhn[...])
        w_h = bigru_layer(w_h, T_w, v2_wih[...], v2_whh[...],
                          v2_bx[...], v2_bhn[...])
        # --- masked time-sum of the target sequence ------------------------
        masked = t_h * mask_ref[...]                  # (T_t*B, H)
        t_vect = masked[:B]
        for t in range(1, T_t):
            t_vect = t_vect + masked[t * B:(t + 1) * B]   # (B, H)
        # --- head MLP, vectorized over all T_w*B rows ----------------------
        # concat([t_vect, w_t]) @ W1 == t_vect @ W1[:H] + w_t @ W1[H:]
        g_t = jnp.dot(t_vect, hw1t[...], preferred_element_type=jnp.float32)  # (B, 200)
        g_t = jnp.concatenate([g_t] * T_w, axis=0)                            # (T_w*B, 200)
        h1 = jax.nn.sigmoid(
            jnp.dot(w_h, hw1w[...], preferred_element_type=jnp.float32) + g_t + hb1[...])
        h2 = jax.nn.sigmoid(
            jnp.dot(h1, hw2[...], preferred_element_type=jnp.float32) + hb2[...])
        h3 = jax.nn.sigmoid(
            jnp.dot(h2, hw3[...], preferred_element_type=jnp.float32) + hb3[...])
        out_ref[...] = h3                                                     # (T_w*B, 1)

    return kernel


# ----------------------------------------------------------------------------
# Deterministic parameter init (shapes follow the PyTorch module __init__),
# packed into the fused-kernel layout described above.
# ----------------------------------------------------------------------------
def init_params(key, max_features, embedding_dim, hidden_size):
    E, H = embedding_dim, hidden_size
    Hd = hidden_size // 2
    keys = iter(jax.random.split(key, 128))

    def u(shape, scale):
        return jax.random.uniform(next(keys), shape, jnp.float32, -scale, scale)

    emb = jax.random.normal(next(keys), (max_features, E), jnp.float32)

    k_rnn = 1.0 / math.sqrt(Hd)

    def gru_dir(in_dim):
        # per-gate (r, z, n), pre-transposed to (in, out) as in PyTorch GRU
        return dict(w_ih=u((3, in_dim, Hd), k_rnn),
                    w_hh=u((3, Hd, Hd), k_rnn),
                    b_ih=u((3, Hd), k_rnn),
                    b_hh=u((3, Hd), k_rnn))

    def pack_bigru_layer(in_dim):
        f, b = gru_dir(in_dim), gru_dir(in_dim)
        # fused input-projection weights: (Din, 6*Hd), [fwd r|z|n , bwd r|z|n]
        w_ih = jnp.concatenate(
            [f["w_ih"][0], f["w_ih"][1], f["w_ih"][2],
             b["w_ih"][0], b["w_ih"][1], b["w_ih"][2]], axis=1)
        # block-diagonal recurrent weights: (2*Hd, 6*Hd)
        whh_f = jnp.concatenate([f["w_hh"][0], f["w_hh"][1], f["w_hh"][2]], axis=1)
        whh_b = jnp.concatenate([b["w_hh"][0], b["w_hh"][1], b["w_hh"][2]], axis=1)
        zeros = jnp.zeros((Hd, 3 * Hd), jnp.float32)
        w_hh = jnp.concatenate(
            [jnp.concatenate([whh_f, zeros], axis=1),
             jnp.concatenate([zeros, whh_b], axis=1)], axis=0)
        # folded biases: r,z get b_ih + b_hh; n keeps only b_ih (b_hn stays apart)
        def bx(d):
            return jnp.concatenate([d["b_ih"][0] + d["b_hh"][0],
                                    d["b_ih"][1] + d["b_hh"][1],
                                    d["b_ih"][2]], axis=0)
        b_x = jnp.concatenate([bx(f), bx(b)], axis=0)[None, :]                  # (1, 6Hd)
        b_hn = jnp.concatenate([f["b_hh"][2], b["b_hh"][2]], axis=0)[None, :]   # (1, 2Hd)
        return (w_ih, w_hh, b_x, b_hn)

    gru_t = [pack_bigru_layer(E), pack_bigru_layer(H)]   # layer-1 in=E, layer-2 in=H
    gru_w = [pack_bigru_layer(E), pack_bigru_layer(H)]

    k1 = 1.0 / math.sqrt(2 * H)
    w1 = u((2 * H, 200), k1)
    b1 = u((1, 200), k1)
    k2 = 1.0 / math.sqrt(200)
    w2 = u((200, 200), k2)
    b2 = u((1, 200), k2)
    w3 = u((200, 1), k2)
    b3 = u((1, 1), k2)

    return dict(emb=emb, gru_t=gru_t, gru_w=gru_w,
                w1t=w1[:H], w1w=w1[H:], b1=b1, w2=w2, b2=b2, w3=w3, b3=b3)


# ----------------------------------------------------------------------------
# Full forward pass (mirrors Recurrent.forward) — a single pallas_call.
# ----------------------------------------------------------------------------
def recurrent_forward(params, predarg, target_seq, mask, window):
    del predarg  # unused in the PyTorch forward as well
    T_t, B = target_seq.shape
    T_w, _ = window.shape
    E = params["emb"].shape[1]
    H = params["w1t"].shape[0]
    Hd = H // 2

    # Embedding lookups: data-dependent gather, kept as plain-JAX glue feeding
    # straight into the single fused kernel (no intermediate pallas boundaries).
    t_emb = params["emb"][target_seq].reshape(T_t * B, E)
    w_emb = params["emb"][window].reshape(T_w * B, E)
    mask_flat = mask.reshape(T_t * B, 1).astype(jnp.float32)

    args = [t_emb, mask_flat, w_emb]
    for layer in params["gru_t"] + params["gru_w"]:
        args.extend(layer)
    args.extend([params["w1t"], params["w1w"], params["b1"],
                 params["w2"], params["b2"], params["w3"], params["b3"]])

    kernel = _make_fused_kernel(T_t, T_w, B, Hd)
    out = pl.pallas_call(
        kernel,
        out_shape=jax.ShapeDtypeStruct((T_w * B, 1), jnp.float32),
        in_specs=[_VMEM] * len(args),
        out_specs=_VMEM,
    )(*args)
    return out  # (T_w*B, 1), time-major-then-batch row order (matches wt.view)


if __name__ == "__main__":
    max_features, embedding_dim, hidden_size = 50, 32, 32
    T_t, T_w, B = 6, 8, 2

    root = jax.random.PRNGKey(0)
    k_params, k_t, k_w, k_m = jax.random.split(root, 4)

    params = init_params(k_params, max_features, embedding_dim, hidden_size)

    target_seq = jax.random.randint(k_t, (T_t, B), 0, max_features, jnp.int32)
    window = jax.random.randint(k_w, (T_w, B), 0, max_features, jnp.int32)
    predarg = jnp.zeros((T_t, B), jnp.int32)  # present in the signature, unused
    mask = (jax.random.uniform(k_m, (T_t, B, 1)) > 0.3).astype(jnp.float32)

    fwd = jax.jit(recurrent_forward)
    out = fwd(params, predarg, target_seq, mask, window)
    out = jax.block_until_ready(out)

    assert out.shape == (T_w * B, 1), out.shape
    assert out.dtype == jnp.float32
    assert bool(jnp.all(jnp.isfinite(out)))
    assert bool(jnp.all((out >= 0.0) & (out <= 1.0)))  # sigmoid output range
    print("KERNEL_OK")
</pallas_src>

<mosaic_0001>
module attributes {stable_mosaic.version = 11 : i64} {
  func.func @kernel(%arg0: memref<12x32xf32, #tpu.memory_space<vmem>>, %arg1: memref<12x1xf32, #tpu.memory_space<vmem>>, %arg2: memref<16x32xf32, #tpu.memory_space<vmem>>, %arg3: memref<32x96xf32, #tpu.memory_space<vmem>>, %arg4: memref<32x96xf32, #tpu.memory_space<vmem>>, %arg5: memref<1x96xf32, #tpu.memory_space<vmem>>, %arg6: memref<1x32xf32, #tpu.memory_space<vmem>>, %arg7: memref<32x96xf32, #tpu.memory_space<vmem>>, %arg8: memref<32x96xf32, #tpu.memory_space<vmem>>, %arg9: memref<1x96xf32, #tpu.memory_space<vmem>>, %arg10: memref<1x32xf32, #tpu.memory_space<vmem>>, %arg11: memref<32x96xf32, #tpu.memory_space<vmem>>, %arg12: memref<32x96xf32, #tpu.memory_space<vmem>>, %arg13: memref<1x96xf32, #tpu.memory_space<vmem>>, %arg14: memref<1x32xf32, #tpu.memory_space<vmem>>, %arg15: memref<32x96xf32, #tpu.memory_space<vmem>>, %arg16: memref<32x96xf32, #tpu.memory_space<vmem>>, %arg17: memref<1x96xf32, #tpu.memory_space<vmem>>, %arg18: memref<1x32xf32, #tpu.memory_space<vmem>>, %arg19: memref<32x200xf32, #tpu.memory_space<vmem>>, %arg20: memref<32x200xf32, #tpu.memory_space<vmem>>, %arg21: memref<1x200xf32, #tpu.memory_space<vmem>>, %arg22: memref<200x200xf32, #tpu.memory_space<vmem>>, %arg23: memref<1x200xf32, #tpu.memory_space<vmem>>, %arg24: memref<200x1xf32, #tpu.memory_space<vmem>>, %arg25: memref<1x1xf32, #tpu.memory_space<vmem>>, %arg26: memref<16x1xf32, #tpu.memory_space<vmem>>) attributes {dimension_semantics = [], scalar_prefetch = 0 : i64, scratch_operands = 0 : i64, tpu.core_type = #tpu.core_type<tc>} {
    %c0 = arith.constant 0 : index
    %c0_0 = arith.constant 0 : index
    %0 = vector.load %arg0[%c0, %c0_0] : memref<12x32xf32, #tpu.memory_space<vmem>>, vector<12x32xf32>
    %c0_1 = arith.constant 0 : index
    %c0_2 = arith.constant 0 : index
    %1 = vector.load %arg3[%c0_1, %c0_2] : memref<32x96xf32, #tpu.memory_space<vmem>>, vector<32x96xf32>
    %c0_3 = arith.constant 0 : index
    %c0_4 = arith.constant 0 : index
    %2 = vector.load %arg4[%c0_3, %c0_4] : memref<32x96xf32, #tpu.memory_space<vmem>>, vector<32x96xf32>
    %c0_5 = arith.constant 0 : index
    %c0_6 = arith.constant 0 : index
    %3 = vector.load %arg5[%c0_5, %c0_6] : memref<1x96xf32, #tpu.memory_space<vmem>>, vector<1x96xf32>
    %c0_7 = arith.constant 0 : index
    %c0_8 = arith.constant 0 : index
    %4 = vector.load %arg6[%c0_7, %c0_8] : memref<1x32xf32, #tpu.memory_space<vmem>>, vector<1x32xf32>
    %cst = arith.constant dense<0.000000e+00> : vector<12x96xf32>
    %5 = tpu.matmul %0, %1, %cst {dimension_numbers = #tpu.dot_dimension_numbers<[1], [0], [0], [1], [0, 0, 1, 1], [], []>} : vector<12x32xf32>, vector<32x96xf32>, vector<12x96xf32> -> vector<12x96xf32>
    %6 = vector.broadcast %3 : vector<1x96xf32> to vector<12x96xf32>
    %7 = arith.addf %5, %6 : vector<12x96xf32>
    %cst_9 = arith.constant 0.000000e+00 : f32
    %8 = vector.broadcast %cst_9 : f32 to vector<2x32xf32>
    %9 = vector.extract_strided_slice %7 {offsets = [0, 0], sizes = [2, 48], strides = [1, 1]} : vector<12x96xf32> to vector<2x48xf32>
    %10 = vector.extract_strided_slice %7 {offsets = [10, 48], sizes = [2, 48], strides = [1, 1]} : vector<12x96xf32> to vector<2x48xf32>
    %cst_10 = arith.constant dense<0.000000e+00> : vector<2x96xf32>
    %11 = tpu.matmul %8, %2, %cst_10 {dimension_numbers = #tpu.dot_dimension_numbers<[1], [0], [0], [1], [0, 0, 1, 1], [], []>} : vector<2x32xf32>, vector<32x96xf32>, vector<2x96xf32> -> vector<2x96xf32>
    %12 = vector.extract_strided_slice %11 {offsets = [0, 0], sizes = [2, 48], strides = [1, 1]} : vector<2x96xf32> to vector<2x48xf32>
    %13 = vector.extract_strided_slice %4 {offsets = [0, 0], sizes = [1, 16], strides = [1, 1]} : vector<1x32xf32> to vector<1x16xf32>
    %14 = vector.extract_strided_slice %8 {offsets = [0, 0], sizes = [2, 16], strides = [1, 1]} : vector<2x32xf32> to vector<2x16xf32>
    %15 = vector.extract_strided_slice %9 {offsets = [0, 0], sizes = [2, 16], strides = [1, 1]} : vector<2x48xf32> to vector<2x16xf32>
    %16 = vector.extract_strided_slice %12 {offsets = [0, 0], sizes = [2, 16], strides = [1, 1]} : vector<2x48xf32> to vector<2x16xf32>
    %17 = arith.addf %15, %16 : vector<2x16xf32>
    %18 = arith.negf %17 : vector<2x16xf32>
    %19 = math.exp %18 : vector<2x16xf32>
    %cst_11 = arith.constant 1.000000e+00 : f32
    %20 = vector.broadcast %cst_11 : f32 to vector<2x16xf32>
    %21 = arith.addf %20, %19 : vector<2x16xf32>
    %22 = arith.divf %20, %21 : vector<2x16xf32>
    %23 = vector.extract_strided_slice %9 {offsets = [0, 16], sizes = [2, 16], strides = [1, 1]} : vector<2x48xf32> to vector<2x16xf32>
    %24 = vector.extract_strided_slice %12 {offsets = [0, 16], sizes = [2, 16], strides = [1, 1]} : vector<2x48xf32> to vector<2x16xf32>
    %25 = arith.addf %23, %24 : vector<2x16xf32>
    %26 = arith.negf %25 : vector<2x16xf32>
    %27 = math.exp %26 : vector<2x16xf32>
    %cst_12 = arith.constant 1.000000e+00 : f32
    %28 = vector.broadcast %cst_12 : f32 to vector<2x16xf32>
    %29 = arith.addf %28, %27 : vector<2x16xf32>
    %30 = arith.divf %28, %29 : vector<2x16xf32>
    %31 = vector.extract_strided_slice %9 {offsets = [0, 32], sizes = [2, 16], strides = [1, 1]} : vector<2x48xf32> to vector<2x16xf32>
    %32 = vector.extract_strided_slice %12 {offsets = [0, 32], sizes = [2, 16], strides = [1, 1]} : vector<2x48xf32> to vector<2x16xf32>
    %33 = vector.broadcast %13 : vector<1x16xf32> to vector<2x16xf32>
    %34 = arith.addf %32, %33 : vector<2x16xf32>
    %35 = arith.mulf %22, %34 : vector<2x16xf32>
    %36 = arith.addf %31, %35 : vector<2x16xf32>
    %37 = math.tanh %36 : vector<2x16xf32>
    %cst_13 = arith.constant 1.000000e+00 : f32
    %38 = vector.broadcast %cst_13 : f32 to vector<2x16xf32>
    %39 = arith.subf %38, %30 : vector<2x16xf32>
    %40 = arith.mulf %39, %37 : vector<2x16xf32>
    %41 = arith.mulf %30, %14 : vector<2x16xf32>
    %42 = arith.addf %40, %41 : vector<2x16xf32>
    %43 = vector.extract_strided_slice %11 {offsets = [0, 48], sizes = [2, 48], strides = [1, 1]} : vector<2x96xf32> to vector<2x48xf32>
    %44 = vector.extract_strided_slice %4 {offsets = [0, 16], sizes = [1, 16], strides = [1, 1]} : vector<1x32xf32> to vector<1x16xf32>
    %45 = vector.extract_strided_slice %8 {offsets = [0, 16], sizes = [2, 16], strides = [1, 1]} : vector<2x32xf32> to vector<2x16xf32>
    %46 = vector.extract_strided_slice %10 {offsets = [0, 0], sizes = [2, 16], strides = [1, 1]} : vector<2x48xf32> to vector<2x16xf32>
    %47 = vector.extract_strided_slice %43 {offsets = [0, 0], sizes = [2, 16], strides = [1, 1]} : vector<2x48xf32> to vector<2x16xf32>
    %48 = arith.addf %46, %47 : vector<2x16xf32>
    %49 = arith.negf %48 : vector<2x16xf32>
    %50 = math.exp %49 : vector<2x16xf32>
    %cst_14 = arith.constant 1.000000e+00 : f32
    %51 = vector.broadcast %cst_14 : f32 to vector<2x16xf32>
    %52 = arith.addf %51, %50 : vector<2x16xf32>
    %53 = arith.divf %51, %52 : vector<2x16xf32>
    %54 = vector.extract_strided_slice %10 {offsets = [0, 16], sizes = [2, 16], strides = [1, 1]} : vector<2x48xf32> to vector<2x16xf32>
    %55 = vector.extract_strided_slice %43 {offsets = [0, 16], sizes = [2, 16], strides = [1, 1]} : vector<2x48xf32> to vector<2x16xf32>
    %56 = arith.addf %54, %55 : vector<2x16xf32>
    %57 = arith.negf %56 : vector<2x16xf32>
    %58 = math.exp %57 : vector<2x16xf32>
    %cst_15 = arith.constant 1.000000e+00 : f32
    %59 = vector.broadcast %cst_15 : f32 to vector<2x16xf32>
    %60 = arith.addf %59, %58 : vector<2x16xf32>
    %61 = arith.divf %59, %60 : vector<2x16xf32>
    %62 = vector.extract_strided_slice %10 {offsets = [0, 32], sizes = [2, 16], strides = [1, 1]} : vector<2x48xf32> to vector<2x16xf32>
    %63 = vector.extract_strided_slice %43 {offsets = [0, 32], sizes = [2, 16], strides = [1, 1]} : vector<2x48xf32> to vector<2x16xf32>
    %64 = vector.broadcast %44 : vector<1x16xf32> to vector<2x16xf32>
    %65 = arith.addf %63, %64 : vector<2x16xf32>
    %66 = arith.mulf %53, %65 : vector<2x16xf32>
    %67 = arith.addf %62, %66 : vector<2x16xf32>
    %68 = math.tanh %67 : vector<2x16xf32>
    %cst_16 = arith.constant 1.000000e+00 : f32
    %69 = vector.broadcast %cst_16 : f32 to vector<2x16xf32>
    %70 = arith.subf %69, %61 : vector<2x16xf32>
    %71 = arith.mulf %70, %68 : vector<2x16xf32>
    %72 = arith.mulf %61, %45 : vector<2x16xf32>
    %73 = arith.addf %71, %72 : vector<2x16xf32>
    %74 = tpu.concatenate %42, %73 in 1 : vector<2x16xf32>, vector<2x16xf32> -> vector<2x32xf32>
    %75 = vector.extract_strided_slice %7 {offsets = [2, 0], sizes = [2, 48], strides = [1, 1]} : vector<12x96xf32> to vector<2x48xf32>
    %76 = vector.extract_strided_slice %7 {offsets = [8, 48], sizes = [2, 48], strides = [1, 1]} : vector<12x96xf32> to vector<2x48xf32>
    %cst_17 = arith.constant dense<0.000000e+00> : vector<2x96xf32>
    %77 = tpu.matmul %74, %2, %cst_17 {dimension_numbers = #tpu.dot_dimension_numbers<[1], [0], [0], [1], [0, 0, 1, 1], [], []>} : vector<2x32xf32>, vector<32x96xf32>, vector<2x96xf32> -> vector<2x96xf32>
    %78 = vector.extract_strided_slice %77 {offsets = [0, 0], sizes = [2, 48], strides = [1, 1]} : vector<2x96xf32> to vector<2x48xf32>
    %79 = vector.extract_strided_slice %4 {offsets = [0, 0], sizes = [1, 16], strides = [1, 1]} : vector<1x32xf32> to vector<1x16xf32>
    %80 = vector.extract_strided_slice %74 {offsets = [0, 0], sizes = [2, 16], strides = [1, 1]} : vector<2x32xf32> to vector<2x16xf32>
    %81 = vector.extract_strided_slice %75 {offsets = [0, 0], sizes = [2, 16], strides = [1, 1]} : vector<2x48xf32> to vector<2x16xf32>
    %82 = vector.extract_strided_slice %78 {offsets = [0, 0], sizes = [2, 16], strides = [1, 1]} : vector<2x48xf32> to vector<2x16xf32>
    %83 = arith.addf %81, %82 : vector<2x16xf32>
    %84 = arith.negf %83 : vector<2x16xf32>
    %85 = math.exp %84 : vector<2x16xf32>
    %cst_18 = arith.constant 1.000000e+00 : f32
    %86 = vector.broadcast %cst_18 : f32 to vector<2x16xf32>
    %87 = arith.addf %86, %85 : vector<2x16xf32>
    %88 = arith.divf %86, %87 : vector<2x16xf32>
    %89 = vector.extract_strided_slice %75 {offsets = [0, 16], sizes = [2, 16], strides = [1, 1]} : vector<2x48xf32> to vector<2x16xf32>
    %90 = vector.extract_strided_slice %78 {offsets = [0, 16], sizes = [2, 16], strides = [1, 1]} : vector<2x48xf32> to vector<2x16xf32>
    %91 = arith.addf %89, %90 : vector<2x16xf32>
    %92 = arith.negf %91 : vector<2x16xf32>
    %93 = math.exp %92 : vector<2x16xf32>
    %cst_19 = arith.constant 1.000000e+00 : f32
    %94 = vector.broadcast %cst_19 : f32 to vector<2x16xf32>
    %95 = arith.addf %94, %93 : vector<2x16xf32>
    %96 = arith.divf %94, %95 : vector<2x16xf32>
    %97 = vector.extract_strided_slice %75 {offsets = [0, 32], sizes = [2, 16], strides = [1, 1]} : vector<2x48xf32> to vector<2x16xf32>
    %98 = vector.extract_strided_slice %78 {offsets = [0, 32], sizes = [2, 16], strides = [1, 1]} : vector<2x48xf32> to vector<2x16xf32>
    %99 = vector.broadcast %79 : vector<1x16xf32> to vector<2x16xf32>
    %100 = arith.addf %98, %99 : vector<2x16xf32>
    %101 = arith.mulf %88, %100 : vector<2x16xf32>
    %102 = arith.addf %97, %101 : vector<2x16xf32>
    %103 = math.tanh %102 : vector<2x16xf32>
    %cst_20 = arith.constant 1.000000e+00 : f32
    %104 = vector.broadcast %cst_20 : f32 to vector<2x16xf32>
    %105 = arith.subf %104, %96 : vector<2x16xf32>
    %106 = arith.mulf %105, %103 : vector<2x16xf32>
    %107 = arith.mulf %96, %80 : vector<2x16xf32>
    %108 = arith.addf %106, %107 : vector<2x16xf32>
    %109 = vector.extract_strided_slice %77 {offsets = [0, 48], sizes = [2, 48], strides = [1, 1]} : vector<2x96xf32> to vector<2x48xf32>
    %110 = vector.extract_strided_slice %4 {offsets = [0, 16], sizes = [1, 16], strides = [1, 1]} : vector<1x32xf32> to vector<1x16xf32>
    %111 = vector.extract_strided_slice %74 {offsets = [0, 16], sizes = [2, 16], strides = [1, 1]} : vector<2x32xf32> to vector<2x16xf32>
    %112 = vector.extract_strided_slice %76 {offsets = [0, 0], sizes = [2, 16], strides = [1, 1]} : vector<2x48xf32> to vector<2x16xf32>
    %113 = vector.extract_strided_slice %109 {offsets = [0, 0], sizes = [2, 16], strides = [1, 1]} : vector<2x48xf32> to vector<2x16xf32>
    %114 = arith.addf %112, %113 : vector<2x16xf32>
    %115 = arith.negf %114 : vector<2x16xf32>
    %116 = math.exp %115 : vector<2x16xf32>
    %cst_21 = arith.constant 1.000000e+00 : f32
    %117 = vector.broadcast %cst_21 : f32 to vector<2x16xf32>
    %118 = arith.addf %117, %116 : vector<2x16xf32>
    %119 = arith.divf %117, %118 : vector<2x16xf32>
    %120 = vector.extract_strided_slice %76 {offsets = [0, 16], sizes = [2, 16], strides = [1, 1]} : vector<2x48xf32> to vector<2x16xf32>
    %121 = vector.extract_strided_slice %109 {offsets = [0, 16], sizes = [2, 16], strides = [1, 1]} : vector<2x48xf32> to vector<2x16xf32>
    %122 = arith.addf %120, %121 : vector<2x16xf32>
    %123 = arith.negf %122 : vector<2x16xf32>
    %124 = math.exp %123 : vector<2x16xf32>
    %cst_22 = arith.constant 1.000000e+00 : f32
    %125 = vector.broadcast %cst_22 : f32 to vector<2x16xf32>
    %126 = arith.addf %125, %124 : vector<2x16xf32>
    %127 = arith.divf %125, %126 : vector<2x16xf32>
    %128 = vector.extract_strided_slice %76 {offsets = [0, 32], sizes = [2, 16], strides = [1, 1]} : vector<2x48xf32> to vector<2x16xf32>
    %129 = vector.extract_strided_slice %109 {offsets = [0, 32], sizes = [2, 16], strides = [1, 1]} : vector<2x48xf32> to vector<2x16xf32>
    %130 = vector.broadcast %110 : vector<1x16xf32> to vector<2x16xf32>
    %131 = arith.addf %129, %130 : vector<2x16xf32>
    %132 = arith.mulf %119, %131 : vector<2x16xf32>
    %133 = arith.addf %128, %132 : vector<2x16xf32>
    %134 = math.tanh %133 : vector<2x16xf32>
    %cst_23 = arith.constant 1.000000e+00 : f32
    %135 = vector.broadcast %cst_23 : f32 to vector<2x16xf32>
    %136 = arith.subf %135, %127 : vector<2x16xf32>
    %137 = arith.mulf %136, %134 : vector<2x16xf32>
    %138 = arith.mulf %127, %111 : vector<2x16xf32>
    %139 = arith.addf %137, %138 : vector<2x16xf32>
    %140 = tpu.concatenate %108, %139 in 1 : vector<2x16xf32>, vector<2x16xf32> -> vector<2x32xf32>
    %141 = vector.extract_strided_slice %7 {offsets = [4, 0], sizes = [2, 48], strides = [1, 1]} : vector<12x96xf32> to vector<2x48xf32>
    %142 = vector.extract_strided_slice %7 {offsets = [6, 48], sizes = [2, 48], strides = [1, 1]} : vector<12x96xf32> to vector<2x48xf32>
    %cst_24 = arith.constant dense<0.000000e+00> : vector<2x96xf32>
    %143 = tpu.matmul %140, %2, %cst_24 {dimension_numbers = #tpu.dot_dimension_numbers<[1], [0], [0], [1], [0, 0, 1, 1], [], []>} : vector<2x32xf32>, vector<32x96xf32>, vector<2x96xf32> -> vector<2x96xf32>
    %144 = vector.extract_strided_slice %143 {offsets = [0, 0], sizes = [2, 48], strides = [1, 1]} : vector<2x96xf32> to vector<2x48xf32>
    %145 = vector.extract_strided_slice %4 {offsets = [0, 0], sizes = [1, 16], strides = [1, 1]} : vector<1x32xf32> to vector<1x16xf32>
    %146 = vector.extract_strided_slice %140 {offsets = [0, 0], sizes = [2, 16], strides = [1, 1]} : vector<2x32xf32> to vector<2x16xf32>
    %147 = vector.extract_strided_slice %141 {offsets = [0, 0], sizes = [2, 16], strides = [1, 1]} : vector<2x48xf32> to vector<2x16xf32>
    %148 = vector.extract_strided_slice %144 {offsets = [0, 0], sizes = [2, 16], strides = [1, 1]} : vector<2x48xf32> to vector<2x16xf32>
    %149 = arith.addf %147, %148 : vector<2x16xf32>
    %150 = arith.negf %149 : vector<2x16xf32>
    %151 = math.exp %150 : vector<2x16xf32>
    %cst_25 = arith.constant 1.000000e+00 : f32
    %152 = vector.broadcast %cst_25 : f32 to vector<2x16xf32>
    %153 = arith.addf %152, %151 : vector<2x16xf32>
    %154 = arith.divf %152, %153 : vector<2x16xf32>
    %155 = vector.extract_strided_slice %141 {offsets = [0, 16], sizes = [2, 16], strides = [1, 1]} : vector<2x48xf32> to vector<2x16xf32>
    %156 = vector.extract_strided_slice %144 {offsets = [0, 16], sizes = [2, 16], strides = [1, 1]} : vector<2x48xf32> to vector<2x16xf32>
    %157 = arith.addf %155, %156 : vector<2x16xf32>
    %158 = arith.negf %157 : vector<2x16xf32>
    %159 = math.exp %158 : vector<2x16xf32>
    %cst_26 = arith.constant 1.000000e+00 : f32
    %160 = vector.broadcast %cst_26 : f32 to vector<2x16xf32>
    %161 = arith.addf %160, %159 : vector<2x16xf32>
    %162 = arith.divf %160, %161 : vector<2x16xf32>
    %163 = vector.extract_strided_slice %141 {offsets = [0, 32], sizes = [2, 16], strides = [1, 1]} : vector<2x48xf32> to vector<2x16xf32>
    %164 = vector.extract_strided_slice %144 {offsets = [0, 32], sizes = [2, 16], strides = [1, 1]} : vector<2x48xf32> to vector<2x16xf32>
    %165 = vector.broadcast %145 : vector<1x16xf32> to vector<2x16xf32>
    %166 = arith.addf %164, %165 : vector<2x16xf32>
    %167 = arith.mulf %154, %166 : vector<2x16xf32>
    %168 = arith.addf %163, %167 : vector<2x16xf32>
    %169 = math.tanh %168 : vector<2x16xf32>
    %cst_27 = arith.constant 1.000000e+00 : f32
    %170 = vector.broadcast %cst_27 : f32 to vector<2x16xf32>
    %171 = arith.subf %170, %162 : vector<2x16xf32>
    %172 = arith.mulf %171, %169 : vector<2x16xf32>
    %173 = arith.mulf %162, %146 : vector<2x16xf32>
    %174 = arith.addf %172, %173 : vector<2x16xf32>
    %175 = vector.extract_strided_slice %143 {offsets = [0, 48], sizes = [2, 48], strides = [1, 1]} : vector<2x96xf32> to vector<2x48xf32>
    %176 = vector.extract_strided_slice %4 {offsets = [0, 16], sizes = [1, 16], strides = [1, 1]} : vector<1x32xf32> to vector<1x16xf32>
    %177 = vector.extract_strided_slice %140 {offsets = [0, 16], sizes = [2, 16], strides = [1, 1]} : vector<2x32xf32> to vector<2x16xf32>
    %178 = vector.extract_strided_slice %142 {offsets = [0, 0], sizes = [2, 16], strides = [1, 1]} : vector<2x48xf32> to vector<2x16xf32>
    %179 = vector.extract_strided_slice %175 {offsets = [0, 0], sizes = [2, 16], strides = [1, 1]} : vector<2x48xf32> to vector<2x16xf32>
    %180 = arith.addf %178, %179 : vector<2x16xf32>
    %181 = arith.negf %180 : vector<2x16xf32>
    %182 = math.exp %181 : vector<2x16xf32>
    %cst_28 = arith.constant 1.000000e+00 : f32
    %183 = vector.broadcast %cst_28 : f32 to vector<2x16xf32>
    %184 = arith.addf %183, %182 : vector<2x16xf32>
    %185 = arith.divf %183, %184 : vector<2x16xf32>
    %186 = vector.extract_strided_slice %142 {offsets = [0, 16], sizes = [2, 16], strides = [1, 1]} : vector<2x48xf32> to vector<2x16xf32>
    %187 = vector.extract_strided_slice %175 {offsets = [0, 16], sizes = [2, 16], strides = [1, 1]} : vector<2x48xf32> to vector<2x16xf32>
    %188 = arith.addf %186, %187 : vector<2x16xf32>
    %189 = arith.negf %188 : vector<2x16xf32>
    %190 = math.exp %189 : vector<2x16xf32>
    %cst_29 = arith.constant 1.000000e+00 : f32
    %191 = vector.broadcast %cst_29 : f32 to vector<2x16xf32>
    %192 = arith.addf %191, %190 : vector<2x16xf32>
    %193 = arith.divf %191, %192 : vector<2x16xf32>
    %194 = vector.extract_strided_slice %142 {offsets = [0, 32], sizes = [2, 16], strides = [1, 1]} : vector<2x48xf32> to vector<2x16xf32>
    %195 = vector.extract_strided_slice %175 {offsets = [0, 32], sizes = [2, 16], strides = [1, 1]} : vector<2x48xf32> to vector<2x16xf32>
    %196 = vector.broadcast %176 : vector<1x16xf32> to vector<2x16xf32>
    %197 = arith.addf %195, %196 : vector<2x16xf32>
    %198 = arith.mulf %185, %197 : vector<2x16xf32>
    %199 = arith.addf %194, %198 : vector<2x16xf32>
    %200 = math.tanh %199 : vector<2x16xf32>
    %cst_30 = arith.constant 1.000000e+00 : f32
    %201 = vector.broadcast %cst_30 : f32 to vector<2x16xf32>
    %202 = arith.subf %201, %193 : vector<2x16xf32>
    %203 = arith.mulf %202, %200 : vector<2x16xf32>
    %204 = arith.mulf %193, %177 : vector<2x16xf32>
    %205 = arith.addf %203, %204 : vector<2x16xf32>
    %206 = tpu.concatenate %174, %205 in 1 : vector<2x16xf32>, vector<2x16xf32> -> vector<2x32xf32>
    %207 = vector.extract_strided_slice %7 {offsets = [6, 0], sizes = [2, 48], strides = [1, 1]} : vector<12x96xf32> to vector<2x48xf32>
    %208 = vector.extract_strided_slice %7 {offsets = [4, 48], sizes = [2, 48], strides = [1, 1]} : vector<12x96xf32> to vector<2x48xf32>
    %cst_31 = arith.constant dense<0.000000e+00> : vector<2x96xf32>
    %209 = tpu.matmul %206, %2, %cst_31 {dimension_numbers = #tpu.dot_dimension_numbers<[1], [0], [0], [1], [0, 0, 1, 1], [], []>} : vector<2x32xf32>, vector<32x96xf32>, vector<2x96xf32> -> vector<2x96xf32>
    %210 = vector.extract_strided_slice %209 {offsets = [0, 0], sizes = [2, 48], strides = [1, 1]} : vector<2x96xf32> to vector<2x48xf32>
    %211 = vector.extract_strided_slice %4 {offsets = [0, 0], sizes = [1, 16], strides = [1, 1]} : vector<1x32xf32> to vector<1x16xf32>
    %212 = vector.extract_strided_slice %206 {offsets = [0, 0], sizes = [2, 16], strides = [1, 1]} : vector<2x32xf32> to vector<2x16xf32>
    %213 = vector.extract_strided_slice %207 {offsets = [0, 0], sizes = [2, 16], strides = [1, 1]} : vector<2x48xf32> to vector<2x16xf32>
    %214 = vector.extract_strided_slice %210 {offsets = [0, 0], sizes = [2, 16], strides = [1, 1]} : vector<2x48xf32> to vector<2x16xf32>
    %215 = arith.addf %213, %214 : vector<2x16xf32>
    %216 = arith.negf %215 : vector<2x16xf32>
    %217 = math.exp %216 : vector<2x16xf32>
    %cst_32 = arith.constant 1.000000e+00 : f32
    %218 = vector.broadcast %cst_32 : f32 to vector<2x16xf32>
    %219 = arith.addf %218, %217 : vector<2x16xf32>
    %220 = arith.divf %218, %219 : vector<2x16xf32>
    %221 = vector.extract_strided_slice %207 {offsets = [0, 16], sizes = [2, 16], strides = [1, 1]} : vector<2x48xf32> to vector<2x16xf32>
    %222 = vector.extract_strided_slice %210 {offsets = [0, 16], sizes = [2, 16], strides = [1, 1]} : vector<2x48xf32> to vector<2x16xf32>
    %223 = arith.addf %221, %222 : vector<2x16xf32>
    %224 = arith.negf %223 : vector<2x16xf32>
    %225 = math.exp %224 : vector<2x16xf32>
    %cst_33 = arith.constant 1.000000e+00 : f32
    %226 = vector.broadcast %cst_33 : f32 to vector<2x16xf32>
    %227 = arith.addf %226, %225 : vector<2x16xf32>
    %228 = arith.divf %226, %227 : vector<2x16xf32>
    %229 = vector.extract_strided_slice %207 {offsets = [0, 32], sizes = [2, 16], strides = [1, 1]} : vector<2x48xf32> to vector<2x16xf32>
    %230 = vector.extract_strided_slice %210 {offsets = [0, 32], sizes = [2, 16], strides = [1, 1]} : vector<2x48xf32> to vector<2x16xf32>
    %231 = vector.broadcast %211 : vector<1x16xf32> to vector<2x16xf32>
    %232 = arith.addf %230, %231 : vector<2x16xf32>
    %233 = arith.mulf %220, %232 : vector<2x16xf32>
    %234 = arith.addf %229, %233 : vector<2x16xf32>
    %235 = math.tanh %234 : vector<2x16xf32>
    %cst_34 = arith.constant 1.000000e+00 : f32
    %236 = vector.broadcast %cst_34 : f32 to vector<2x16xf32>
    %237 = arith.subf %236, %228 : vector<2x16xf32>
    %238 = arith.mulf %237, %235 : vector<2x16xf32>
    %239 = arith.mulf %228, %212 : vector<2x16xf32>
    %240 = arith.addf %238, %239 : vector<2x16xf32>
    %241 = vector.extract_strided_slice %209 {offsets = [0, 48], sizes = [2, 48], strides = [1, 1]} : vector<2x96xf32> to vector<2x48xf32>
    %242 = vector.extract_strided_slice %4 {offsets = [0, 16], sizes = [1, 16], strides = [1, 1]} : vector<1x32xf32> to vector<1x16xf32>
    %243 = vector.extract_strided_slice %206 {offsets = [0, 16], sizes = [2, 16], strides = [1, 1]} : vector<2x32xf32> to vector<2x16xf32>
    %244 = vector.extract_strided_slice %208 {offsets = [0, 0], sizes = [2, 16], strides = [1, 1]} : vector<2x48xf32> to vector<2x16xf32>
    %245 = vector.extract_strided_slice %241 {offsets = [0, 0], sizes = [2, 16], strides = [1, 1]} : vector<2x48xf32> to vector<2x16xf32>
    %246 = arith.addf %244, %245 : vector<2x16xf32>
    %247 = arith.negf %246 : vector<2x16xf32>
    %248 = math.exp %247 : vector<2x16xf32>
    %cst_35 = arith.constant 1.000000e+00 : f32
    %249 = vector.broadcast %cst_35 : f32 to vector<2x16xf32>
    %250 = arith.addf %249, %248 : vector<2x16xf32>
    %251 = arith.divf %249, %250 : vector<2x16xf32>
    %252 = vector.extract_strided_slice %208 {offsets = [0, 16], sizes = [2, 16], strides = [1, 1]} : vector<2x48xf32> to vector<2x16xf32>
    %253 = vector.extract_strided_slice %241 {offsets = [0, 16], sizes = [2, 16], strides = [1, 1]} : vector<2x48xf32> to vector<2x16xf32>
    %254 = arith.addf %252, %253 : vector<2x16xf32>
    %255 = arith.negf %254 : vector<2x16xf32>
    %256 = math.exp %255 : vector<2x16xf32>
    %cst_36 = arith.constant 1.000000e+00 : f32
    %257 = vector.broadcast %cst_36 : f32 to vector<2x16xf32>
    %258 = arith.addf %257, %256 : vector<2x16xf32>
    %259 = arith.divf %257, %258 : vector<2x16xf32>
    %260 = vector.extract_strided_slice %208 {offsets = [0, 32], sizes = [2, 16], strides = [1, 1]} : vector<2x48xf32> to vector<2x16xf32>
    %261 = vector.extract_strided_slice %241 {offsets = [0, 32], sizes = [2, 16], strides = [1, 1]} : vector<2x48xf32> to vector<2x16xf32>
    %262 = vector.broadcast %242 : vector<1x16xf32> to vector<2x16xf32>
    %263 = arith.addf %261, %262 : vector<2x16xf32>
    %264 = arith.mulf %251, %263 : vector<2x16xf32>
    %265 = arith.addf %260, %264 : vector<2x16xf32>
    %266 = math.tanh %265 : vector<2x16xf32>
    %cst_37 = arith.constant 1.000000e+00 : f32
    %267 = vector.broadcast %cst_37 : f32 to vector<2x16xf32>
    %268 = arith.subf %267, %259 : vector<2x16xf32>
    %269 = arith.mulf %268, %266 : vector<2x16xf32>
    %270 = arith.mulf %259, %243 : vector<2x16xf32>
    %271 = arith.addf %269, %270 : vector<2x16xf32>
    %272 = tpu.concatenate %240, %271 in 1 : vector<2x16xf32>, vector<2x16xf32> -> vector<2x32xf32>
    %273 = vector.extract_strided_slice %7 {offsets = [8, 0], sizes = [2, 48], strides = [1, 1]} : vector<12x96xf32> to vector<2x48xf32>
    %274 = vector.extract_strided_slice %7 {offsets = [2, 48], sizes = [2, 48], strides = [1, 1]} : vector<12x96xf32> to vector<2x48xf32>
    %cst_38 = arith.constant dense<0.000000e+00> : vector<2x96xf32>
    %275 = tpu.matmul %272, %2, %cst_38 {dimension_numbers = #tpu.dot_dimension_numbers<[1], [0], [0], [1], [0, 0, 1, 1], [], []>} : vector<2x32xf32>, vector<32x96xf32>, vector<2x96xf32> -> vector<2x96xf32>
    %276 = vector.extract_strided_slice %275 {offsets = [0, 0], sizes = [2, 48], strides = [1, 1]} : vector<2x96xf32> to vector<2x48xf32>
    %277 = vector.extract_strided_slice %4 {offsets = [0, 0], sizes = [1, 16], strides = [1, 1]} : vector<1x32xf32> to vector<1x16xf32>
    %278 = vector.extract_strided_slice %272 {offsets = [0, 0], sizes = [2, 16], strides = [1, 1]} : vector<2x32xf32> to vector<2x16xf32>
    %279 = vector.extract_strided_slice %273 {offsets = [0, 0], sizes = [2, 16], strides = [1, 1]} : vector<2x48xf32> to vector<2x16xf32>
    %280 = vector.extract_strided_slice %276 {offsets = [0, 0], sizes = [2, 16], strides = [1, 1]} : vector<2x48xf32> to vector<2x16xf32>
    %281 = arith.addf %279, %280 : vector<2x16xf32>
    %282 = arith.negf %281 : vector<2x16xf32>
    %283 = math.exp %282 : vector<2x16xf32>
    %cst_39 = arith.constant 1.000000e+00 : f32
    %284 = vector.broadcast %cst_39 : f32 to vector<2x16xf32>
    %285 = arith.addf %284, %283 : vector<2x16xf32>
    %286 = arith.divf %284, %285 : vector<2x16xf32>
    %287 = vector.extract_strided_slice %273 {offsets = [0, 16], sizes = [2, 16], strides = [1, 1]} : vector<2x48xf32> to vector<2x16xf32>
    %288 = vector.extract_strided_slice %276 {offsets = [0, 16], sizes = [2, 16], strides = [1, 1]} : vector<2x48xf32> to vector<2x16xf32>
    %289 = arith.addf %287, %288 : vector<2x16xf32>
    %290 = arith.negf %289 : vector<2x16xf32>
    %291 = math.exp %290 : vector<2x16xf32>
    %cst_40 = arith.constant 1.000000e+00 : f32
    %292 = vector.broadcast %cst_40 : f32 to vector<2x16xf32>
    %293 = arith.addf %292, %291 : vector<2x16xf32>
    %294 = arith.divf %292, %293 : vector<2x16xf32>
    %295 = vector.extract_strided_slice %273 {offsets = [0, 32], sizes = [2, 16], strides = [1, 1]} : vector<2x48xf32> to vector<2x16xf32>
    %296 = vector.extract_strided_slice %276 {offsets = [0, 32], sizes = [2, 16], strides = [1, 1]} : vector<2x48xf32> to vector<2x16xf32>
    %297 = vector.broadcast %277 : vector<1x16xf32> to vector<2x16xf32>
    %298 = arith.addf %296, %297 : vector<2x16xf32>
    %299 = arith.mulf %286, %298 : vector<2x16xf32>
    %300 = arith.addf %295, %299 : vector<2x16xf32>
    %301 = math.tanh %300 : vector<2x16xf32>
    %cst_41 = arith.constant 1.000000e+00 : f32
    %302 = vector.broadcast %cst_41 : f32 to vector<2x16xf32>
    %303 = arith.subf %302, %294 : vector<2x16xf32>
    %304 = arith.mulf %303, %301 : vector<2x16xf32>
    %305 = arith.mulf %294, %278 : vector<2x16xf32>
    %306 = arith.addf %304, %305 : vector<2x16xf32>
    %307 = vector.extract_strided_slice %275 {offsets = [0, 48], sizes = [2, 48], strides = [1, 1]} : vector<2x96xf32> to vector<2x48xf32>
    %308 = vector.extract_strided_slice %4 {offsets = [0, 16], sizes = [1, 16], strides = [1, 1]} : vector<1x32xf32> to vector<1x16xf32>
    %309 = vector.extract_strided_slice %272 {offsets = [0, 16], sizes = [2, 16], strides = [1, 1]} : vector<2x32xf32> to vector<2x16xf32>
    %310 = vector.extract_strided_slice %274 {offsets = [0, 0], sizes = [2, 16], strides = [1, 1]} : vector<2x48xf32> to vector<2x16xf32>
    %311 = vector.extract_strided_slice %307 {offsets = [0, 0], sizes = [2, 16], strides = [1, 1]} : vector<2x48xf32> to vector<2x16xf32>
    %312 = arith.addf %310, %311 : vector<2x16xf32>
    %313 = arith.negf %312 : vector<2x16xf32>
    %314 = math.exp %313 : vector<2x16xf32>
    %cst_42 = arith.constant 1.000000e+00 : f32
    %315 = vector.broadcast %cst_42 : f32 to vector<2x16xf32>
    %316 = arith.addf %315, %314 : vector<2x16xf32>
    %317 = arith.divf %315, %316 : vector<2x16xf32>
    %318 = vector.extract_strided_slice %274 {offsets = [0, 16], sizes = [2, 16], strides = [1, 1]} : vector<2x48xf32> to vector<2x16xf32>
    %319 = vector.extract_strided_slice %307 {offsets = [0, 16], sizes = [2, 16], strides = [1, 1]} : vector<2x48xf32> to vector<2x16xf32>
    %320 = arith.addf %318, %319 : vector<2x16xf32>
    %321 = arith.negf %320 : vector<2x16xf32>
    %322 = math.exp %321 : vector<2x16xf32>
    %cst_43 = arith.constant 1.000000e+00 : f32
    %323 = vector.broadcast %cst_43 : f32 to vector<2x16xf32>
    %324 = arith.addf %323, %322 : vector<2x16xf32>
    %325 = arith.divf %323, %324 : vector<2x16xf32>
    %326 = vector.extract_strided_slice %274 {offsets = [0, 32], sizes = [2, 16], strides = [1, 1]} : vector<2x48xf32> to vector<2x16xf32>
    %327 = vector.extract_strided_slice %307 {offsets = [0, 32], sizes = [2, 16], strides = [1, 1]} : vector<2x48xf32> to vector<2x16xf32>
    %328 = vector.broadcast %308 : vector<1x16xf32> to vector<2x16xf32>
    %329 = arith.addf %327, %328 : vector<2x16xf32>
    %330 = arith.mulf %317, %329 : vector<2x16xf32>
    %331 = arith.addf %326, %330 : vector<2x16xf32>
    %332 = math.tanh %331 : vector<2x16xf32>
    %cst_44 = arith.constant 1.000000e+00 : f32
    %333 = vector.broadcast %cst_44 : f32 to vector<2x16xf32>
    %334 = arith.subf %333, %325 : vector<2x16xf32>
    %335 = arith.mulf %334, %332 : vector<2x16xf32>
    %336 = arith.mulf %325, %309 : vector<2x16xf32>
    %337 = arith.addf %335, %336 : vector<2x16xf32>
    %338 = tpu.concatenate %306, %337 in 1 : vector<2x16xf32>, vector<2x16xf32> -> vector<2x32xf32>
    %339 = vector.extract_strided_slice %7 {offsets = [10, 0], sizes = [2, 48], strides = [1, 1]} : vector<12x96xf32> to vector<2x48xf32>
    %340 = vector.extract_strided_slice %7 {offsets = [0, 48], sizes = [2, 48], strides = [1, 1]} : vector<12x96xf32> to vector<2x48xf32>
    %cst_45 = arith.constant dense<0.000000e+00> : vector<2x96xf32>
    %341 = tpu.matmul %338, %2, %cst_45 {dimension_numbers = #tpu.dot_dimension_numbers<[1], [0], [0], [1], [0, 0, 1, 1], [], []>} : vector<2x32xf32>, vector<32x96xf32>, vector<2x96xf32> -> vector<2x96xf32>
    %342 = vector.extract_strided_slice %341 {offsets = [0, 0], sizes = [2, 48], strides = [1, 1]} : vector<2x96xf32> to vector<2x48xf32>
    %343 = vector.extract_strided_slice %4 {offsets = [0, 0], sizes = [1, 16], strides = [1, 1]} : vector<1x32xf32> to vector<1x16xf32>
    %344 = vector.extract_strided_slice %338 {offsets = [0, 0], sizes = [2, 16], strides = [1, 1]} : vector<2x32xf32> to vector<2x16xf32>
    %345 = vector.extract_strided_slice %339 {offsets = [0, 0], sizes = [2, 16], strides = [1, 1]} : vector<2x48xf32> to vector<2x16xf32>
    %346 = vector.extract_strided_slice %342 {offsets = [0, 0], sizes = [2, 16], strides = [1, 1]} : vector<2x48xf32> to vector<2x16xf32>
    %347 = arith.addf %345, %346 : vector<2x16xf32>
    %348 = arith.negf %347 : vector<2x16xf32>
    %349 = math.exp %348 : vector<2x16xf32>
    %cst_46 = arith.constant 1.000000e+00 : f32
    %350 = vector.broadcast %cst_46 : f32 to vector<2x16xf32>
    %351 = arith.addf %350, %349 : vector<2x16xf32>
    %352 = arith.divf %350, %351 : vector<2x16xf32>
    %353 = vector.extract_strided_slice %339 {offsets = [0, 16], sizes = [2, 16], strides = [1, 1]} : vector<2x48xf32> to vector<2x16xf32>
    %354 = vector.extract_strided_slice %342 {offsets = [0, 16], sizes = [2, 16], strides = [1, 1]} : vector<2x48xf32> to vector<2x16xf32>
    %355 = arith.addf %353, %354 : vector<2x16xf32>
    %356 = arith.negf %355 : vector<2x16xf32>
    %357 = math.exp %356 : vector<2x16xf32>
    %cst_47 = arith.constant 1.000000e+00 : f32
    %358 = vector.broadcast %cst_47 : f32 to vector<2x16xf32>
    %359 = arith.addf %358, %357 : vector<2x16xf32>
    %360 = arith.divf %358, %359 : vector<2x16xf32>
    %361 = vector.extract_strided_slice %339 {offsets = [0, 32], sizes = [2, 16], strides = [1, 1]} : vector<2x48xf32> to vector<2x16xf32>
    %362 = vector.extract_strided_slice %342 {offsets = [0, 32], sizes = [2, 16], strides = [1, 1]} : vector<2x48xf32> to vector<2x16xf32>
    %363 = vector.broadcast %343 : vector<1x16xf32> to vector<2x16xf32>
    %364 = arith.addf %362, %363 : vector<2x16xf32>
    %365 = arith.mulf %352, %364 : vector<2x16xf32>
    %366 = arith.addf %361, %365 : vector<2x16xf32>
    %367 = math.tanh %366 : vector<2x16xf32>
    %cst_48 = arith.constant 1.000000e+00 : f32
    %368 = vector.broadcast %cst_48 : f32 to vector<2x16xf32>
    %369 = arith.subf %368, %360 : vector<2x16xf32>
    %370 = arith.mulf %369, %367 : vector<2x16xf32>
    %371 = arith.mulf %360, %344 : vector<2x16xf32>
    %372 = arith.addf %370, %371 : vector<2x16xf32>
    %373 = vector.extract_strided_slice %341 {offsets = [0, 48], sizes = [2, 48], strides = [1, 1]} : vector<2x96xf32> to vector<2x48xf32>
    %374 = vector.extract_strided_slice %4 {offsets = [0, 16], sizes = [1, 16], strides = [1, 1]} : vector<1x32xf32> to vector<1x16xf32>
    %375 = vector.extract_strided_slice %338 {offsets = [0, 16], sizes = [2, 16], strides = [1, 1]} : vector<2x32xf32> to vector<2x16xf32>
    %376 = vector.extract_strided_slice %340 {offsets = [0, 0], sizes = [2, 16], strides = [1, 1]} : vector<2x48xf32> to vector<2x16xf32>
    %377 = vector.extract_strided_slice %373 {offsets = [0, 0], sizes = [2, 16], strides = [1, 1]} : vector<2x48xf32> to vector<2x16xf32>
    %378 = arith.addf %376, %377 : vector<2x16xf32>
    %379 = arith.negf %378 : vector<2x16xf32>
    %380 = math.exp %379 : vector<2x16xf32>
    %cst_49 = arith.constant 1.000000e+00 : f32
    %381 = vector.broadcast %cst_49 : f32 to vector<2x16xf32>
    %382 = arith.addf %381, %380 : vector<2x16xf32>
    %383 = arith.divf %381, %382 : vector<2x16xf32>
    %384 = vector.extract_strided_slice %340 {offsets = [0, 16], sizes = [2, 16], strides = [1, 1]} : vector<2x48xf32> to vector<2x16xf32>
    %385 = vector.extract_strided_slice %373 {offsets = [0, 16], sizes = [2, 16], strides = [1, 1]} : vector<2x48xf32> to vector<2x16xf32>
    %386 = arith.addf %384, %385 : vector<2x16xf32>
    %387 = arith.negf %386 : vector<2x16xf32>
    %388 = math.exp %387 : vector<2x16xf32>
    %cst_50 = arith.constant 1.000000e+00 : f32
    %389 = vector.broadcast %cst_50 : f32 to vector<2x16xf32>
    %390 = arith.addf %389, %388 : vector<2x16xf32>
    %391 = arith.divf %389, %390 : vector<2x16xf32>
    %392 = vector.extract_strided_slice %340 {offsets = [0, 32], sizes = [2, 16], strides = [1, 1]} : vector<2x48xf32> to vector<2x16xf32>
    %393 = vector.extract_strided_slice %373 {offsets = [0, 32], sizes = [2, 16], strides = [1, 1]} : vector<2x48xf32> to vector<2x16xf32>
    %394 = vector.broadcast %374 : vector<1x16xf32> to vector<2x16xf32>
    %395 = arith.addf %393, %394 : vector<2x16xf32>
    %396 = arith.mulf %383, %395 : vector<2x16xf32>
    %397 = arith.addf %392, %396 : vector<2x16xf32>
    %398 = math.tanh %397 : vector<2x16xf32>
    %cst_51 = arith.constant 1.000000e+00 : f32
    %399 = vector.broadcast %cst_51 : f32 to vector<2x16xf32>
    %400 = arith.subf %399, %391 : vector<2x16xf32>
    %401 = arith.mulf %400, %398 : vector<2x16xf32>
    %402 = arith.mulf %391, %375 : vector<2x16xf32>
    %403 = arith.addf %401, %402 : vector<2x16xf32>
    %404 = tpu.concatenate %42, %403 in 1 : vector<2x16xf32>, vector<2x16xf32> -> vector<2x32xf32>
    %405 = tpu.concatenate %108, %337 in 1 : vector<2x16xf32>, vector<2x16xf32> -> vector<2x32xf32>
    %406 = tpu.concatenate %174, %271 in 1 : vector<2x16xf32>, vector<2x16xf32> -> vector<2x32xf32>
    %407 = tpu.concatenate %240, %205 in 1 : vector<2x16xf32>, vector<2x16xf32> -> vector<2x32xf32>
    %408 = tpu.concatenate %306, %139 in 1 : vector<2x16xf32>, vector<2x16xf32> -> vector<2x32xf32>
    %409 = tpu.concatenate %372, %73 in 1 : vector<2x16xf32>, vector<2x16xf32> -> vector<2x32xf32>
    %410 = tpu.concatenate %404, %405, %406, %407, %408, %409 in 0 : vector<2x32xf32>, vector<2x32xf32>, vector<2x32xf32>, vector<2x32xf32>, vector<2x32xf32>, vector<2x32xf32> -> vector<12x32xf32>
    %c0_52 = arith.constant 0 : index
    %c0_53 = arith.constant 0 : index
    %411 = vector.load %arg7[%c0_52, %c0_53] : memref<32x96xf32, #tpu.memory_space<vmem>>, vector<32x96xf32>
    %c0_54 = arith.constant 0 : index
    %c0_55 = arith.constant 0 : index
    %412 = vector.load %arg8[%c0_54, %c0_55] : memref<32x96xf32, #tpu.memory_space<vmem>>, vector<32x96xf32>
    %c0_56 = arith.constant 0 : index
    %c0_57 = arith.constant 0 : index
    %413 = vector.load %arg9[%c0_56, %c0_57] : memref<1x96xf32, #tpu.memory_space<vmem>>, vector<1x96xf32>
    %c0_58 = arith.constant 0 : index
    %c0_59 = arith.constant 0 : index
    %414 = vector.load %arg10[%c0_58, %c0_59] : memref<1x32xf32, #tpu.memory_space<vmem>>, vector<1x32xf32>
    %cst_60 = arith.constant dense<0.000000e+00> : vector<12x96xf32>
    %415 = tpu.matmul %410, %411, %cst_60 {dimension_numbers = #tpu.dot_dimension_numbers<[1], [0], [0], [1], [0, 0, 1, 1], [], []>} : vector<12x32xf32>, vector<32x96xf32>, vector<12x96xf32> -> vector<12x96xf32>
    %416 = vector.broadcast %413 : vector<1x96xf32> to vector<12x96xf32>
    %417 = arith.addf %415, %416 : vector<12x96xf32>
    %cst_61 = arith.constant 0.000000e+00 : f32
    %418 = vector.broadcast %cst_61 : f32 to vector<2x32xf32>
    %419 = vector.extract_strided_slice %417 {offsets = [0, 0], sizes = [2, 48], strides = [1, 1]} : vector<12x96xf32> to vector<2x48xf32>
    %420 = vector.extract_strided_slice %417 {offsets = [10, 48], sizes = [2, 48], strides = [1, 1]} : vector<12x96xf32> to vector<2x48xf32>
    %cst_62 = arith.constant dense<0.000000e+00> : vector<2x96xf32>
    %421 = tpu.matmul %418, %412, %cst_62 {dimension_numbers = #tpu.dot_dimension_numbers<[1], [0], [0], [1], [0, 0, 1, 1], [], []>} : vector<2x32xf32>, vector<32x96xf32>, vector<2x96xf32> -> vector<2x96xf32>
    %422 = vector.extract_strided_slice %421 {offsets = [0, 0], sizes = [2, 48], strides = [1, 1]} : vector<2x96xf32> to vector<2x48xf32>
    %423 = vector.extract_strided_slice %414 {offsets = [0, 0], sizes = [1, 16], strides = [1, 1]} : vector<1x32xf32> to vector<1x16xf32>
    %424 = vector.extract_strided_slice %418 {offsets = [0, 0], sizes = [2, 16], strides = [1, 1]} : vector<2x32xf32> to vector<2x16xf32>
    %425 = vector.extract_strided_slice %419 {offsets = [0, 0], sizes = [2, 16], strides = [1, 1]} : vector<2x48xf32> to vector<2x16xf32>
    %426 = vector.extract_strided_slice %422 {offsets = [0, 0], sizes = [2, 16], strides = [1, 1]} : vector<2x48xf32> to vector<2x16xf32>
    %427 = arith.addf %425, %426 : vector<2x16xf32>
    %428 = arith.negf %427 : vector<2x16xf32>
    %429 = math.exp %428 : vector<2x16xf32>
    %cst_63 = arith.constant 1.000000e+00 : f32
    %430 = vector.broadcast %cst_63 : f32 to vector<2x16xf32>
    %431 = arith.addf %430, %429 : vector<2x16xf32>
    %432 = arith.divf %430, %431 : vector<2x16xf32>
    %433 = vector.extract_strided_slice %419 {offsets = [0, 16], sizes = [2, 16], strides = [1, 1]} : vector<2x48xf32> to vector<2x16xf32>
    %434 = vector.extract_strided_slice %422 {offsets = [0, 16], sizes = [2, 16], strides = [1, 1]} : vector<2x48xf32> to vector<2x16xf32>
    %435 = arith.addf %433, %434 : vector<2x16xf32>
    %436 = arith.negf %435 : vector<2x16xf32>
    %437 = math.exp %436 : vector<2x16xf32>
    %cst_64 = arith.constant 1.000000e+00 : f32
    %438 = vector.broadcast %cst_64 : f32 to vector<2x16xf32>
    %439 = arith.addf %438, %437 : vector<2x16xf32>
    %440 = arith.divf %438, %439 : vector<2x16xf32>
    %441 = vector.extract_strided_slice %419 {offsets = [0, 32], sizes = [2, 16], strides = [1, 1]} : vector<2x48xf32> to vector<2x16xf32>
    %442 = vector.extract_strided_slice %422 {offsets = [0, 32], sizes = [2, 16], strides = [1, 1]} : vector<2x48xf32> to vector<2x16xf32>
    %443 = vector.broadcast %423 : vector<1x16xf32> to vector<2x16xf32>
    %444 = arith.addf %442, %443 : vector<2x16xf32>
    %445 = arith.mulf %432, %444 : vector<2x16xf32>
    %446 = arith.addf %441, %445 : vector<2x16xf32>
    %447 = math.tanh %446 : vector<2x16xf32>
    %cst_65 = arith.constant 1.000000e+00 : f32
    %448 = vector.broadcast %cst_65 : f32 to vector<2x16xf32>
    %449 = arith.subf %448, %440 : vector<2x16xf32>
    %450 = arith.mulf %449, %447 : vector<2x16xf32>
    %451 = arith.mulf %440, %424 : vector<2x16xf32>
    %452 = arith.addf %450, %451 : vector<2x16xf32>
    %453 = vector.extract_strided_slice %421 {offsets = [0, 48], sizes = [2, 48], strides = [1, 1]} : vector<2x96xf32> to vector<2x48xf32>
    %454 = vector.extract_strided_slice %414 {offsets = [0, 16], sizes = [1, 16], strides = [1, 1]} : vector<1x32xf32> to vector<1x16xf32>
    %455 = vector.extract_strided_slice %418 {offsets = [0, 16], sizes = [2, 16], strides = [1, 1]} : vector<2x32xf32> to vector<2x16xf32>
    %456 = vector.extract_strided_slice %420 {offsets = [0, 0], sizes = [2, 16], strides = [1, 1]} : vector<2x48xf32> to vector<2x16xf32>
    %457 = vector.extract_strided_slice %453 {offsets = [0, 0], sizes = [2, 16], strides = [1, 1]} : vector<2x48xf32> to vector<2x16xf32>
    %458 = arith.addf %456, %457 : vector<2x16xf32>
    %459 = arith.negf %458 : vector<2x16xf32>
    %460 = math.exp %459 : vector<2x16xf32>
    %cst_66 = arith.constant 1.000000e+00 : f32
    %461 = vector.broadcast %cst_66 : f32 to vector<2x16xf32>
    %462 = arith.addf %461, %460 : vector<2x16xf32>
    %463 = arith.divf %461, %462 : vector<2x16xf32>
    %464 = vector.extract_strided_slice %420 {offsets = [0, 16], sizes = [2, 16], strides = [1, 1]} : vector<2x48xf32> to vector<2x16xf32>
    %465 = vector.extract_strided_slice %453 {offsets = [0, 16], sizes = [2, 16], strides = [1, 1]} : vector<2x48xf32> to vector<2x16xf32>
    %466 = arith.addf %464, %465 : vector<2x16xf32>
    %467 = arith.negf %466 : vector<2x16xf32>
    %468 = math.exp %467 : vector<2x16xf32>
    %cst_67 = arith.constant 1.000000e+00 : f32
    %469 = vector.broadcast %cst_67 : f32 to vector<2x16xf32>
    %470 = arith.addf %469, %468 : vector<2x16xf32>
    %471 = arith.divf %469, %470 : vector<2x16xf32>
    %472 = vector.extract_strided_slice %420 {offsets = [0, 32], sizes = [2, 16], strides = [1, 1]} : vector<2x48xf32> to vector<2x16xf32>
    %473 = vector.extract_strided_slice %453 {offsets = [0, 32], sizes = [2, 16], strides = [1, 1]} : vector<2x48xf32> to vector<2x16xf32>
    %474 = vector.broadcast %454 : vector<1x16xf32> to vector<2x16xf32>
    %475 = arith.addf %473, %474 : vector<2x16xf32>
    %476 = arith.mulf %463, %475 : vector<2x16xf32>
    %477 = arith.addf %472, %476 : vector<2x16xf32>
    %478 = math.tanh %477 : vector<2x16xf32>
    %cst_68 = arith.constant 1.000000e+00 : f32
    %479 = vector.broadcast %cst_68 : f32 to vector<2x16xf32>
    %480 = arith.subf %479, %471 : vector<2x16xf32>
    %481 = arith.mulf %480, %478 : vector<2x16xf32>
    %482 = arith.mulf %471, %455 : vector<2x16xf32>
    %483 = arith.addf %481, %482 : vector<2x16xf32>
    %484 = tpu.concatenate %452, %483 in 1 : vector<2x16xf32>, vector<2x16xf32> -> vector<2x32xf32>
    %485 = vector.extract_strided_slice %417 {offsets = [2, 0], sizes = [2, 48], strides = [1, 1]} : vector<12x96xf32> to vector<2x48xf32>
    %486 = vector.extract_strided_slice %417 {offsets = [8, 48], sizes = [2, 48], strides = [1, 1]} : vector<12x96xf32> to vector<2x48xf32>
    %cst_69 = arith.constant dense<0.000000e+00> : vector<2x96xf32>
    %487 = tpu.matmul %484, %412, %cst_69 {dimension_numbers = #tpu.dot_dimension_numbers<[1], [0], [0], [1], [0, 0, 1, 1], [], []>} : vector<2x32xf32>, vector<32x96xf32>, vector<2x96xf32> -> vector<2x96xf32>
    %488 = vector.extract_strided_slice %487 {offsets = [0, 0], sizes = [2, 48], strides = [1, 1]} : vector<2x96xf32> to vector<2x48xf32>
    %489 = vector.extract_strided_slice %414 {offsets = [0, 0], sizes = [1, 16], strides = [1, 1]} : vector<1x32xf32> to vector<1x16xf32>
    %490 = vector.extract_strided_slice %484 {offsets = [0, 0], sizes = [2, 16], strides = [1, 1]} : vector<2x32xf32> to vector<2x16xf32>
    %491 = vector.extract_strided_slice %485 {offsets = [0, 0], sizes = [2, 16], strides = [1, 1]} : vector<2x48xf32> to vector<2x16xf32>
    %492 = vector.extract_strided_slice %488 {offsets = [0, 0], sizes = [2, 16], strides = [1, 1]} : vector<2x48xf32> to vector<2x16xf32>
    %493 = arith.addf %491, %492 : vector<2x16xf32>
    %494 = arith.negf %493 : vector<2x16xf32>
    %495 = math.exp %494 : vector<2x16xf32>
    %cst_70 = arith.constant 1.000000e+00 : f32
    %496 = vector.broadcast %cst_70 : f32 to vector<2x16xf32>
    %497 = arith.addf %496, %495 : vector<2x16xf32>
    %498 = arith.divf %496, %497 : vector<2x16xf32>
    %499 = vector.extract_strided_slice %485 {offsets = [0, 16], sizes = [2, 16], strides = [1, 1]} : vector<2x48xf32> to vector<2x16xf32>
    %500 = vector.extract_strided_slice %488 {offsets = [0, 16], sizes = [2, 16], strides = [1, 1]} : vector<2x48xf32> to vector<2x16xf32>
    %501 = arith.addf %499, %500 : vector<2x16xf32>
    %502 = arith.negf %501 : vector<2x16xf32>
    %503 = math.exp %502 : vector<2x16xf32>
    %cst_71 = arith.constant 1.000000e+00 : f32
    %504 = vector.broadcast %cst_71 : f32 to vector<2x16xf32>
    %505 = arith.addf %504, %503 : vector<2x16xf32>
    %506 = arith.divf %504, %505 : vector<2x16xf32>
    %507 = vector.extract_strided_slice %485 {offsets = [0, 32], sizes = [2, 16], strides = [1, 1]} : vector<2x48xf32> to vector<2x16xf32>
    %508 = vector.extract_strided_slice %488 {offsets = [0, 32], sizes = [2, 16], strides = [1, 1]} : vector<2x48xf32> to vector<2x16xf32>
    %509 = vector.broadcast %489 : vector<1x16xf32> to vector<2x16xf32>
    %510 = arith.addf %508, %509 : vector<2x16xf32>
    %511 = arith.mulf %498, %510 : vector<2x16xf32>
    %512 = arith.addf %507, %511 : vector<2x16xf32>
    %513 = math.tanh %512 : vector<2x16xf32>
    %cst_72 = arith.constant 1.000000e+00 : f32
    %514 = vector.broadcast %cst_72 : f32 to vector<2x16xf32>
    %515 = arith.subf %514, %506 : vector<2x16xf32>
    %516 = arith.mulf %515, %513 : vector<2x16xf32>
    %517 = arith.mulf %506, %490 : vector<2x16xf32>
    %518 = arith.addf %516, %517 : vector<2x16xf32>
    %519 = vector.extract_strided_slice %487 {offsets = [0, 48], sizes = [2, 48], strides = [1, 1]} : vector<2x96xf32> to vector<2x48xf32>
    %520 = vector.extract_strided_slice %414 {offsets = [0, 16], sizes = [1, 16], strides = [1, 1]} : vector<1x32xf32> to vector<1x16xf32>
    %521 = vector.extract_strided_slice %484 {offsets = [0, 16], sizes = [2, 16], strides = [1, 1]} : vector<2x32xf32> to vector<2x16xf32>
    %522 = vector.extract_strided_slice %486 {offsets = [0, 0], sizes = [2, 16], strides = [1, 1]} : vector<2x48xf32> to vector<2x16xf32>
    %523 = vector.extract_strided_slice %519 {offsets = [0, 0], sizes = [2, 16], strides = [1, 1]} : vector<2x48xf32> to vector<2x16xf32>
    %524 = arith.addf %522, %523 : vector<2x16xf32>
    %525 = arith.negf %524 : vector<2x16xf32>
    %526 = math.exp %525 : vector<2x16xf32>
    %cst_73 = arith.constant 1.000000e+00 : f32
    %527 = vector.broadcast %cst_73 : f32 to vector<2x16xf32>
    %528 = arith.addf %527, %526 : vector<2x16xf32>
    %529 = arith.divf %527, %528 : vector<2x16xf32>
    %530 = vector.extract_strided_slice %486 {offsets = [0, 16], sizes = [2, 16], strides = [1, 1]} : vector<2x48xf32> to vector<2x16xf32>
    %531 = vector.extract_strided_slice %519 {offsets = [0, 16], sizes = [2, 16], strides = [1, 1]} : vector<2x48xf32> to vector<2x16xf32>
    %532 = arith.addf %530, %531 : vector<2x16xf32>
    %533 = arith.negf %532 : vector<2x16xf32>
    %534 = math.exp %533 : vector<2x16xf32>
    %cst_74 = arith.constant 1.000000e+00 : f32
    %535 = vector.broadcast %cst_74 : f32 to vector<2x16xf32>
    %536 = arith.addf %535, %534 : vector<2x16xf32>
    %537 = arith.divf %535, %536 : vector<2x16xf32>
    %538 = vector.extract_strided_slice %486 {offsets = [0, 32], sizes = [2, 16], strides = [1, 1]} : vector<2x48xf32> to vector<2x16xf32>
    %539 = vector.extract_strided_slice %519 {offsets = [0, 32], sizes = [2, 16], strides = [1, 1]} : vector<2x48xf32> to vector<2x16xf32>
    %540 = vector.broadcast %520 : vector<1x16xf32> to vector<2x16xf32>
    %541 = arith.addf %539, %540 : vector<2x16xf32>
    %542 = arith.mulf %529, %541 : vector<2x16xf32>
    %543 = arith.addf %538, %542 : vector<2x16xf32>
    %544 = math.tanh %543 : vector<2x16xf32>
    %cst_75 = arith.constant 1.000000e+00 : f32
    %545 = vector.broadcast %cst_75 : f32 to vector<2x16xf32>
    %546 = arith.subf %545, %537 : vector<2x16xf32>
    %547 = arith.mulf %546, %544 : vector<2x16xf32>
    %548 = arith.mulf %537, %521 : vector<2x16xf32>
    %549 = arith.addf %547, %548 : vector<2x16xf32>
    %550 = tpu.concatenate %518, %549 in 1 : vector<2x16xf32>, vector<2x16xf32> -> vector<2x32xf32>
    %551 = vector.extract_strided_slice %417 {offsets = [4, 0], sizes = [2, 48], strides = [1, 1]} : vector<12x96xf32> to vector<2x48xf32>
    %552 = vector.extract_strided_slice %417 {offsets = [6, 48], sizes = [2, 48], strides = [1, 1]} : vector<12x96xf32> to vector<2x48xf32>
    %cst_76 = arith.constant dense<0.000000e+00> : vector<2x96xf32>
    %553 = tpu.matmul %550, %412, %cst_76 {dimension_numbers = #tpu.dot_dimension_numbers<[1], [0], [0], [1], [0, 0, 1, 1], [], []>} : vector<2x32xf32>, vector<32x96xf32>, vector<2x96xf32> -> vector<2x96xf32>
    %554 = vector.extract_strided_slice %553 {offsets = [0, 0], sizes = [2, 48], strides = [1, 1]} : vector<2x96xf32> to vector<2x48xf32>
    %555 = vector.extract_strided_slice %414 {offsets = [0, 0], sizes = [1, 16], strides = [1, 1]} : vector<1x32xf32> to vector<1x16xf32>
    %556 = vector.extract_strided_slice %550 {offsets = [0, 0], sizes = [2, 16], strides = [1, 1]} : vector<2x32xf32> to vector<2x16xf32>
    %557 = vector.extract_strided_slice %551 {offsets = [0, 0], sizes = [2, 16], strides = [1, 1]} : vector<2x48xf32> to vector<2x16xf32>
    %558 = vector.extract_strided_slice %554 {offsets = [0, 0], sizes = [2, 16], strides = [1, 1]} : vector<2x48xf32> to vector<2x16xf32>
    %559 = arith.addf %557, %558 : vector<2x16xf32>
    %560 = arith.negf %559 : vector<2x16xf32>
    %561 = math.exp %560 : vector<2x16xf32>
    %cst_77 = arith.constant 1.000000e+00 : f32
    %562 = vector.broadcast %cst_77 : f32 to vector<2x16xf32>
    %563 = arith.addf %562, %561 : vector<2x16xf32>
    %564 = arith.divf %562, %563 : vector<2x16xf32>
    %565 = vector.extract_strided_slice %551 {offsets = [0, 16], sizes = [2, 16], strides = [1, 1]} : vector<2x48xf32> to vector<2x16xf32>
    %566 = vector.extract_strided_slice %554 {offsets = [0, 16], sizes = [2, 16], strides = [1, 1]} : vector<2x48xf32> to vector<2x16xf32>
    %567 = arith.addf %565, %566 : vector<2x16xf32>
    %568 = arith.negf %567 : vector<2x16xf32>
    %569 = math.exp %568 : vector<2x16xf32>
    %cst_78 = arith.constant 1.000000e+00 : f32
    %570 = vector.broadcast %cst_78 : f32 to vector<2x16xf32>
    %571 = arith.addf %570, %569 : vector<2x16xf32>
    %572 = arith.divf %570, %571 : vector<2x16xf32>
    %573 = vector.extract_strided_slice %551 {offsets = [0, 32], sizes = [2, 16], strides = [1, 1]} : vector<2x48xf32> to vector<2x16xf32>
    %574 = vector.extract_strided_slice %554 {offsets = [0, 32], sizes = [2, 16], strides = [1, 1]} : vector<2x48xf32> to vector<2x16xf32>
    %575 = vector.broadcast %555 : vector<1x16xf32> to vector<2x16xf32>
    %576 = arith.addf %574, %575 : vector<2x16xf32>
    %577 = arith.mulf %564, %576 : vector<2x16xf32>
    %578 = arith.addf %573, %577 : vector<2x16xf32>
    %579 = math.tanh %578 : vector<2x16xf32>
    %cst_79 = arith.constant 1.000000e+00 : f32
    %580 = vector.broadcast %cst_79 : f32 to vector<2x16xf32>
    %581 = arith.subf %580, %572 : vector<2x16xf32>
    %582 = arith.mulf %581, %579 : vector<2x16xf32>
    %583 = arith.mulf %572, %556 : vector<2x16xf32>
    %584 = arith.addf %582, %583 : vector<2x16xf32>
    %585 = vector.extract_strided_slice %553 {offsets = [0, 48], sizes = [2, 48], strides = [1, 1]} : vector<2x96xf32> to vector<2x48xf32>
    %586 = vector.extract_strided_slice %414 {offsets = [0, 16], sizes = [1, 16], strides = [1, 1]} : vector<1x32xf32> to vector<1x16xf32>
    %587 = vector.extract_strided_slice %550 {offsets = [0, 16], sizes = [2, 16], strides = [1, 1]} : vector<2x32xf32> to vector<2x16xf32>
    %588 = vector.extract_strided_slice %552 {offsets = [0, 0], sizes = [2, 16], strides = [1, 1]} : vector<2x48xf32> to vector<2x16xf32>
    %589 = vector.extract_strided_slice %585 {offsets = [0, 0], sizes = [2, 16], strides = [1, 1]} : vector<2x48xf32> to vector<2x16xf32>
    %590 = arith.addf %588, %589 : vector<2x16xf32>
    %591 = arith.negf %590 : vector<2x16xf32>
    %592 = math.exp %591 : vector<2x16xf32>
    %cst_80 = arith.constant 1.000000e+00 : f32
    %593 = vector.broadcast %cst_80 : f32 to vector<2x16xf32>
    %594 = arith.addf %593, %592 : vector<2x16xf32>
    %595 = arith.divf %593, %594 : vector<2x16xf32>
    %596 = vector.extract_strided_slice %552 {offsets = [0, 16], sizes = [2, 16], strides = [1, 1]} : vector<2x48xf32> to vector<2x16xf32>
    %597 = vector.extract_strided_slice %585 {offsets = [0, 16], sizes = [2, 16], strides = [1, 1]} : vector<2x48xf32> to vector<2x16xf32>
    %598 = arith.addf %596, %597 : vector<2x16xf32>
    %599 = arith.negf %598 : vector<2x16xf32>
    %600 = math.exp %599 : vector<2x16xf32>
    %cst_81 = arith.constant 1.000000e+00 : f32
    %601 = vector.broadcast %cst_81 : f32 to vector<2x16xf32>
    %602 = arith.addf %601, %600 : vector<2x16xf32>
    %603 = arith.divf %601, %602 : vector<2x16xf32>
    %604 = vector.extract_strided_slice %552 {offsets = [0, 32], sizes = [2, 16], strides = [1, 1]} : vector<2x48xf32> to vector<2x16xf32>
    %605 = vector.extract_strided_slice %585 {offsets = [0, 32], sizes = [2, 16], strides = [1, 1]} : vector<2x48xf32> to vector<2x16xf32>
    %606 = vector.broadcast %586 : vector<1x16xf32> to vector<2x16xf32>
    %607 = arith.addf %605, %606 : vector<2x16xf32>
    %608 = arith.mulf %595, %607 : vector<2x16xf32>
    %609 = arith.addf %604, %608 : vector<2x16xf32>
    %610 = math.tanh %609 : vector<2x16xf32>
    %cst_82 = arith.constant 1.000000e+00 : f32
    %611 = vector.broadcast %cst_82 : f32 to vector<2x16xf32>
    %612 = arith.subf %611, %603 : vector<2x16xf32>
    %613 = arith.mulf %612, %610 : vector<2x16xf32>
    %614 = arith.mulf %603, %587 : vector<2x16xf32>
    %615 = arith.addf %613, %614 : vector<2x16xf32>
    %616 = tpu.concatenate %584, %615 in 1 : vector<2x16xf32>, vector<2x16xf32> -> vector<2x32xf32>
    %617 = vector.extract_strided_slice %417 {offsets = [6, 0], sizes = [2, 48], strides = [1, 1]} : vector<12x96xf32> to vector<2x48xf32>
    %618 = vector.extract_strided_slice %417 {offsets = [4, 48], sizes = [2, 48], strides = [1, 1]} : vector<12x96xf32> to vector<2x48xf32>
    %cst_83 = arith.constant dense<0.000000e+00> : vector<2x96xf32>
    %619 = tpu.matmul %616, %412, %cst_83 {dimension_numbers = #tpu.dot_dimension_numbers<[1], [0], [0], [1], [0, 0, 1, 1], [], []>} : vector<2x32xf32>, vector<32x96xf32>, vector<2x96xf32> -> vector<2x96xf32>
    %620 = vector.extract_strided_slice %619 {offsets = [0, 0], sizes = [2, 48], strides = [1, 1]} : vector<2x96xf32> to vector<2x48xf32>
    %621 = vector.extract_strided_slice %414 {offsets = [0, 0], sizes = [1, 16], strides = [1, 1]} : vector<1x32xf32> to vector<1x16xf32>
    %622 = vector.extract_strided_slice %616 {offsets = [0, 0], sizes = [2, 16], strides = [1, 1]} : vector<2x32xf32> to vector<2x16xf32>
    %623 = vector.extract_strided_slice %617 {offsets = [0, 0], sizes = [2, 16], strides = [1, 1]} : vector<2x48xf32> to vector<2x16xf32>
    %624 = vector.extract_strided_slice %620 {offsets = [0, 0], sizes = [2, 16], strides = [1, 1]} : vector<2x48xf32> to vector<2x16xf32>
    %625 = arith.addf %623, %624 : vector<2x16xf32>
    %626 = arith.negf %625 : vector<2x16xf32>
    %627 = math.exp %626 : vector<2x16xf32>
    %cst_84 = arith.constant 1.000000e+00 : f32
    %628 = vector.broadcast %cst_84 : f32 to vector<2x16xf32>
    %629 = arith.addf %628, %627 : vector<2x16xf32>
    %630 = arith.divf %628, %629 : vector<2x16xf32>
    %631 = vector.extract_strided_slice %617 {offsets = [0, 16], sizes = [2, 16], strides = [1, 1]} : vector<2x48xf32> to vector<2x16xf32>
    %632 = vector.extract_strided_slice %620 {offsets = [0, 16], sizes = [2, 16], strides = [1, 1]} : vector<2x48xf32> to vector<2x16xf32>
    %633 = arith.addf %631, %632 : vector<2x16xf32>
    %634 = arith.negf %633 : vector<2x16xf32>
    %635 = math.exp %634 : vector<2x16xf32>
    %cst_85 = arith.constant 1.000000e+00 : f32
    %636 = vector.broadcast %cst_85 : f32 to vector<2x16xf32>
    %637 = arith.addf %636, %635 : vector<2x16xf32>
    %638 = arith.divf %636, %637 : vector<2x16xf32>
    %639 = vector.extract_strided_slice %617 {offsets = [0, 32], sizes = [2, 16], strides = [1, 1]} : vector<2x48xf32> to vector<2x16xf32>
    %640 = vector.extract_strided_slice %620 {offsets = [0, 32], sizes = [2, 16], strides = [1, 1]} : vector<2x48xf32> to vector<2x16xf32>
    %641 = vector.broadcast %621 : vector<1x16xf32> to vector<2x16xf32>
    %642 = arith.addf %640, %641 : vector<2x16xf32>
    %643 = arith.mulf %630, %642 : vector<2x16xf32>
    %644 = arith.addf %639, %643 : vector<2x16xf32>
    %645 = math.tanh %644 : vector<2x16xf32>
    %cst_86 = arith.constant 1.000000e+00 : f32
    %646 = vector.broadcast %cst_86 : f32 to vector<2x16xf32>
    %647 = arith.subf %646, %638 : vector<2x16xf32>
    %648 = arith.mulf %647, %645 : vector<2x16xf32>
    %649 = arith.mulf %638, %622 : vector<2x16xf32>
    %650 = arith.addf %648, %649 : vector<2x16xf32>
    %651 = vector.extract_strided_slice %619 {offsets = [0, 48], sizes = [2, 48], strides = [1, 1]} : vector<2x96xf32> to vector<2x48xf32>
    %652 = vector.extract_strided_slice %414 {offsets = [0, 16], sizes = [1, 16], strides = [1, 1]} : vector<1x32xf32> to vector<1x16xf32>
    %653 = vector.extract_strided_slice %616 {offsets = [0, 16], sizes = [2, 16], strides = [1, 1]} : vector<2x32xf32> to vector<2x16xf32>
    %654 = vector.extract_strided_slice %618 {offsets = [0, 0], sizes = [2, 16], strides = [1, 1]} : vector<2x48xf32> to vector<2x16xf32>
    %655 = vector.extract_strided_slice %651 {offsets = [0, 0], sizes = [2, 16], strides = [1, 1]} : vector<2x48xf32> to vector<2x16xf32>
    %656 = arith.addf %654, %655 : vector<2x16xf32>
    %657 = arith.negf %656 : vector<2x16xf32>
    %658 = math.exp %657 : vector<2x16xf32>
    %cst_87 = arith.constant 1.000000e+00 : f32
    %659 = vector.broadcast %cst_87 : f32 to vector<2x16xf32>
    %660 = arith.addf %659, %658 : vector<2x16xf32>
    %661 = arith.divf %659, %660 : vector<2x16xf32>
    %662 = vector.extract_strided_slice %618 {offsets = [0, 16], sizes = [2, 16], strides = [1, 1]} : vector<2x48xf32> to vector<2x16xf32>
    %663 = vector.extract_strided_slice %651 {offsets = [0, 16], sizes = [2, 16], strides = [1, 1]} : vector<2x48xf32> to vector<2x16xf32>
    %664 = arith.addf %662, %663 : vector<2x16xf32>
    %665 = arith.negf %664 : vector<2x16xf32>
    %666 = math.exp %665 : vector<2x16xf32>
    %cst_88 = arith.constant 1.000000e+00 : f32
    %667 = vector.broadcast %cst_88 : f32 to vector<2x16xf32>
    %668 = arith.addf %667, %666 : vector<2x16xf32>
    %669 = arith.divf %667, %668 : vector<2x16xf32>
    %670 = vector.extract_strided_slice %618 {offsets = [0, 32], sizes = [2, 16], strides = [1, 1]} : vector<2x48xf32> to vector<2x16xf32>
    %671 = vector.extract_strided_slice %651 {offsets = [0, 32], sizes = [2, 16], strides = [1, 1]} : vector<2x48xf32> to vector<2x16xf32>
    %672 = vector.broadcast %652 : vector<1x16xf32> to vector<2x16xf32>
    %673 = arith.addf %671, %672 : vector<2x16xf32>
    %674 = arith.mulf %661, %673 : vector<2x16xf32>
    %675 = arith.addf %670, %674 : vector<2x16xf32>
    %676 = math.tanh %675 : vector<2x16xf32>
    %cst_89 = arith.constant 1.000000e+00 : f32
    %677 = vector.broadcast %cst_89 : f32 to vector<2x16xf32>
    %678 = arith.subf %677, %669 : vector<2x16xf32>
    %679 = arith.mulf %678, %676 : vector<2x16xf32>
    %680 = arith.mulf %669, %653 : vector<2x16xf32>
    %681 = arith.addf %679, %680 : vector<2x16xf32>
    %682 = tpu.concatenate %650, %681 in 1 : vector<2x16xf32>, vector<2x16xf32> -> vector<2x32xf32>
    %683 = vector.extract_strided_slice %417 {offsets = [8, 0], sizes = [2, 48], strides = [1, 1]} : vector<12x96xf32> to vector<2x48xf32>
    %684 = vector.extract_strided_slice %417 {offsets = [2, 48], sizes = [2, 48], strides = [1, 1]} : vector<12x96xf32> to vector<2x48xf32>
    %cst_90 = arith.constant dense<0.000000e+00> : vector<2x96xf32>
    %685 = tpu.matmul %682, %412, %cst_90 {dimension_numbers = #tpu.dot_dimension_numbers<[1], [0], [0], [1], [0, 0, 1, 1], [], []>} : vector<2x32xf32>, vector<32x96xf32>, vector<2x96xf32> -> vector<2x96xf32>
    %686 = vector.extract_strided_slice %685 {offsets = [0, 0], sizes = [2, 48], strides = [1, 1]} : vector<2x96xf32> to vector<2x48xf32>
    %687 = vector.extract_strided_slice %414 {offsets = [0, 0], sizes = [1, 16], strides = [1, 1]} : vector<1x32xf32> to vector<1x16xf32>
    %688 = vector.extract_strided_slice %682 {offsets = [0, 0], sizes = [2, 16], strides = [1, 1]} : vector<2x32xf32> to vector<2x16xf32>
    %689 = vector.extract_strided_slice %683 {offsets = [0, 0], sizes = [2, 16], strides = [1, 1]} : vector<2x48xf32> to vector<2x16xf32>
    %690 = vector.extract_strided_slice %686 {offsets = [0, 0], sizes = [2, 16], strides = [1, 1]} : vector<2x48xf32> to vector<2x16xf32>
    %691 = arith.addf %689, %690 : vector<2x16xf32>
    %692 = arith.negf %691 : vector<2x16xf32>
    %693 = math.exp %692 : vector<2x16xf32>
    %cst_91 = arith.constant 1.000000e+00 : f32
    %694 = vector.broadcast %cst_91 : f32 to vector<2x16xf32>
    %695 = arith.addf %694, %693 : vector<2x16xf32>
    %696 = arith.divf %694, %695 : vector<2x16xf32>
    %697 = vector.extract_strided_slice %683 {offsets = [0, 16], sizes = [2, 16], strides = [1, 1]} : vector<2x48xf32> to vector<2x16xf32>
    %698 = vector.extract_strided_slice %686 {offsets = [0, 16], sizes = [2, 16], strides = [1, 1]} : vector<2x48xf32> to vector<2x16xf32>
    %699 = arith.addf %697, %698 : vector<2x16xf32>
    %700 = arith.negf %699 : vector<2x16xf32>
    %701 = math.exp %700 : vector<2x16xf32>
    %cst_92 = arith.constant 1.000000e+00 : f32
    %702 = vector.broadcast %cst_92 : f32 to vector<2x16xf32>
    %703 = arith.addf %702, %701 : vector<2x16xf32>
    %704 = arith.divf %702, %703 : vector<2x16xf32>
    %705 = vector.extract_strided_slice %683 {offsets = [0, 32], sizes = [2, 16], strides = [1, 1]} : vector<2x48xf32> to vector<2x16xf32>
    %706 = vector.extract_strided_slice %686 {offsets = [0, 32], sizes = [2, 16], strides = [1, 1]} : vector<2x48xf32> to vector<2x16xf32>
    %707 = vector.broadcast %687 : vector<1x16xf32> to vector<2x16xf32>
    %708 = arith.addf %706, %707 : vector<2x16xf32>
    %709 = arith.mulf %696, %708 : vector<2x16xf32>
    %710 = arith.addf %705, %709 : vector<2x16xf32>
    %711 = math.tanh %710 : vector<2x16xf32>
    %cst_93 = arith.constant 1.000000e+00 : f32
    %712 = vector.broadcast %cst_93 : f32 to vector<2x16xf32>
    %713 = arith.subf %712, %704 : vector<2x16xf32>
    %714 = arith.mulf %713, %711 : vector<2x16xf32>
    %715 = arith.mulf %704, %688 : vector<2x16xf32>
    %716 = arith.addf %714, %715 : vector<2x16xf32>
    %717 = vector.extract_strided_slice %685 {offsets = [0, 48], sizes = [2, 48], strides = [1, 1]} : vector<2x96xf32> to vector<2x48xf32>
    %718 = vector.extract_strided_slice %414 {offsets = [0, 16], sizes = [1, 16], strides = [1, 1]} : vector<1x32xf32> to vector<1x16xf32>
    %719 = vector.extract_strided_slice %682 {offsets = [0, 16], sizes = [2, 16], strides = [1, 1]} : vector<2x32xf32> to vector<2x16xf32>
    %720 = vector.extract_strided_slice %684 {offsets = [0, 0], sizes = [2, 16], strides = [1, 1]} : vector<2x48xf32> to vector<2x16xf32>
    %721 = vector.extract_strided_slice %717 {offsets = [0, 0], sizes = [2, 16], strides = [1, 1]} : vector<2x48xf32> to vector<2x16xf32>
    %722 = arith.addf %720, %721 : vector<2x16xf32>
    %723 = arith.negf %722 : vector<2x16xf32>
    %724 = math.exp %723 : vector<2x16xf32>
    %cst_94 = arith.constant 1.000000e+00 : f32
    %725 = vector.broadcast %cst_94 : f32 to vector<2x16xf32>
    %726 = arith.addf %725, %724 : vector<2x16xf32>
    %727 = arith.divf %725, %726 : vector<2x16xf32>
    %728 = vector.extract_strided_slice %684 {offsets = [0, 16], sizes = [2, 16], strides = [1, 1]} : vector<2x48xf32> to vector<2x16xf32>
    %729 = vector.extract_strided_slice %717 {offsets = [0, 16], sizes = [2, 16], strides = [1, 1]} : vector<2x48xf32> to vector<2x16xf32>
    %730 = arith.addf %728, %729 : vector<2x16xf32>
    %731 = arith.negf %730 : vector<2x16xf32>
    %732 = math.exp %731 : vector<2x16xf32>
    %cst_95 = arith.constant 1.000000e+00 : f32
    %733 = vector.broadcast %cst_95 : f32 to vector<2x16xf32>
    %734 = arith.addf %733, %732 : vector<2x16xf32>
    %735 = arith.divf %733, %734 : vector<2x16xf32>
    %736 = vector.extract_strided_slice %684 {offsets = [0, 32], sizes = [2, 16], strides = [1, 1]} : vector<2x48xf32> to vector<2x16xf32>
    %737 = vector.extract_strided_slice %717 {offsets = [0, 32], sizes = [2, 16], strides = [1, 1]} : vector<2x48xf32> to vector<2x16xf32>
    %738 = vector.broadcast %718 : vector<1x16xf32> to vector<2x16xf32>
    %739 = arith.addf %737, %738 : vector<2x16xf32>
    %740 = arith.mulf %727, %739 : vector<2x16xf32>
    %741 = arith.addf %736, %740 : vector<2x16xf32>
    %742 = math.tanh %741 : vector<2x16xf32>
    %cst_96 = arith.constant 1.000000e+00 : f32
    %743 = vector.broadcast %cst_96 : f32 to vector<2x16xf32>
    %744 = arith.subf %743, %735 : vector<2x16xf32>
    %745 = arith.mulf %744, %742 : vector<2x16xf32>
    %746 = arith.mulf %735, %719 : vector<2x16xf32>
    %747 = arith.addf %745, %746 : vector<2x16xf32>
    %748 = tpu.concatenate %716, %747 in 1 : vector<2x16xf32>, vector<2x16xf32> -> vector<2x32xf32>
    %749 = vector.extract_strided_slice %417 {offsets = [10, 0], sizes = [2, 48], strides = [1, 1]} : vector<12x96xf32> to vector<2x48xf32>
    %750 = vector.extract_strided_slice %417 {offsets = [0, 48], sizes = [2, 48], strides = [1, 1]} : vector<12x96xf32> to vector<2x48xf32>
    %cst_97 = arith.constant dense<0.000000e+00> : vector<2x96xf32>
    %751 = tpu.matmul %748, %412, %cst_97 {dimension_numbers = #tpu.dot_dimension_numbers<[1], [0], [0], [1], [0, 0, 1, 1], [], []>} : vector<2x32xf32>, vector<32x96xf32>, vector<2x96xf32> -> vector<2x96xf32>
    %752 = vector.extract_strided_slice %751 {offsets = [0, 0], sizes = [2, 48], strides = [1, 1]} : vector<2x96xf32> to vector<2x48xf32>
    %753 = vector.extract_strided_slice %414 {offsets = [0, 0], sizes = [1, 16], strides = [1, 1]} : vector<1x32xf32> to vector<1x16xf32>
    %754 = vector.extract_strided_slice %748 {offsets = [0, 0], sizes = [2, 16], strides = [1, 1]} : vector<2x32xf32> to vector<2x16xf32>
    %755 = vector.extract_strided_slice %749 {offsets = [0, 0], sizes = [2, 16], strides = [1, 1]} : vector<2x48xf32> to vector<2x16xf32>
    %756 = vector.extract_strided_slice %752 {offsets = [0, 0], sizes = [2, 16], strides = [1, 1]} : vector<2x48xf32> to vector<2x16xf32>
    %757 = arith.addf %755, %756 : vector<2x16xf32>
    %758 = arith.negf %757 : vector<2x16xf32>
    %759 = math.exp %758 : vector<2x16xf32>
    %cst_98 = arith.constant 1.000000e+00 : f32
    %760 = vector.broadcast %cst_98 : f32 to vector<2x16xf32>
    %761 = arith.addf %760, %759 : vector<2x16xf32>
    %762 = arith.divf %760, %761 : vector<2x16xf32>
    %763 = vector.extract_strided_slice %749 {offsets = [0, 16], sizes = [2, 16], strides = [1, 1]} : vector<2x48xf32> to vector<2x16xf32>
    %764 = vector.extract_strided_slice %752 {offsets = [0, 16], sizes = [2, 16], strides = [1, 1]} : vector<2x48xf32> to vector<2x16xf32>
    %765 = arith.addf %763, %764 : vector<2x16xf32>
    %766 = arith.negf %765 : vector<2x16xf32>
    %767 = math.exp %766 : vector<2x16xf32>
    %cst_99 = arith.constant 1.000000e+00 : f32
    %768 = vector.broadcast %cst_99 : f32 to vector<2x16xf32>
    %769 = arith.addf %768, %767 : vector<2x16xf32>
    %770 = arith.divf %768, %769 : vector<2x16xf32>
    %771 = vector.extract_strided_slice %749 {offsets = [0, 32], sizes = [2, 16], strides = [1, 1]} : vector<2x48xf32> to vector<2x16xf32>
    %772 = vector.extract_strided_slice %752 {offsets = [0, 32], sizes = [2, 16], strides = [1, 1]} : vector<2x48xf32> to vector<2x16xf32>
    %773 = vector.broadcast %753 : vector<1x16xf32> to vector<2x16xf32>
    %774 = arith.addf %772, %773 : vector<2x16xf32>
    %775 = arith.mulf %762, %774 : vector<2x16xf32>
    %776 = arith.addf %771, %775 : vector<2x16xf32>
    %777 = math.tanh %776 : vector<2x16xf32>
    %cst_100 = arith.constant 1.000000e+00 : f32
    %778 = vector.broadcast %cst_100 : f32 to vector<2x16xf32>
    %779 = arith.subf %778, %770 : vector<2x16xf32>
    %780 = arith.mulf %779, %777 : vector<2x16xf32>
    %781 = arith.mulf %770, %754 : vector<2x16xf32>
    %782 = arith.addf %780, %781 : vector<2x16xf32>
    %783 = vector.extract_strided_slice %751 {offsets = [0, 48], sizes = [2, 48], strides = [1, 1]} : vector<2x96xf32> to vector<2x48xf32>
    %784 = vector.extract_strided_slice %414 {offsets = [0, 16], sizes = [1, 16], strides = [1, 1]} : vector<1x32xf32> to vector<1x16xf32>
    %785 = vector.extract_strided_slice %748 {offsets = [0, 16], sizes = [2, 16], strides = [1, 1]} : vector<2x32xf32> to vector<2x16xf32>
    %786 = vector.extract_strided_slice %750 {offsets = [0, 0], sizes = [2, 16], strides = [1, 1]} : vector<2x48xf32> to vector<2x16xf32>
    %787 = vector.extract_strided_slice %783 {offsets = [0, 0], sizes = [2, 16], strides = [1, 1]} : vector<2x48xf32> to vector<2x16xf32>
    %788 = arith.addf %786, %787 : vector<2x16xf32>
    %789 = arith.negf %788 : vector<2x16xf32>
    %790 = math.exp %789 : vector<2x16xf32>
    %cst_101 = arith.constant 1.000000e+00 : f32
    %791 = vector.broadcast %cst_101 : f32 to vector<2x16xf32>
    %792 = arith.addf %791, %790 : vector<2x16xf32>
    %793 = arith.divf %791, %792 : vector<2x16xf32>
    %794 = vector.extract_strided_slice %750 {offsets = [0, 16], sizes = [2, 16], strides = [1, 1]} : vector<2x48xf32> to vector<2x16xf32>
    %795 = vector.extract_strided_slice %783 {offsets = [0, 16], sizes = [2, 16], strides = [1, 1]} : vector<2x48xf32> to vector<2x16xf32>
    %796 = arith.addf %794, %795 : vector<2x16xf32>
    %797 = arith.negf %796 : vector<2x16xf32>
    %798 = math.exp %797 : vector<2x16xf32>
    %cst_102 = arith.constant 1.000000e+00 : f32
    %799 = vector.broadcast %cst_102 : f32 to vector<2x16xf32>
    %800 = arith.addf %799, %798 : vector<2x16xf32>
    %801 = arith.divf %799, %800 : vector<2x16xf32>
    %802 = vector.extract_strided_slice %750 {offsets = [0, 32], sizes = [2, 16], strides = [1, 1]} : vector<2x48xf32> to vector<2x16xf32>
    %803 = vector.extract_strided_slice %783 {offsets = [0, 32], sizes = [2, 16], strides = [1, 1]} : vector<2x48xf32> to vector<2x16xf32>
    %804 = vector.broadcast %784 : vector<1x16xf32> to vector<2x16xf32>
    %805 = arith.addf %803, %804 : vector<2x16xf32>
    %806 = arith.mulf %793, %805 : vector<2x16xf32>
    %807 = arith.addf %802, %806 : vector<2x16xf32>
    %808 = math.tanh %807 : vector<2x16xf32>
    %cst_103 = arith.constant 1.000000e+00 : f32
    %809 = vector.broadcast %cst_103 : f32 to vector<2x16xf32>
    %810 = arith.subf %809, %801 : vector<2x16xf32>
    %811 = arith.mulf %810, %808 : vector<2x16xf32>
    %812 = arith.mulf %801, %785 : vector<2x16xf32>
    %813 = arith.addf %811, %812 : vector<2x16xf32>
    %814 = tpu.concatenate %452, %813 in 1 : vector<2x16xf32>, vector<2x16xf32> -> vector<2x32xf32>
    %815 = tpu.concatenate %518, %747 in 1 : vector<2x16xf32>, vector<2x16xf32> -> vector<2x32xf32>
    %816 = tpu.concatenate %584, %681 in 1 : vector<2x16xf32>, vector<2x16xf32> -> vector<2x32xf32>
    %817 = tpu.concatenate %650, %615 in 1 : vector<2x16xf32>, vector<2x16xf32> -> vector<2x32xf32>
    %818 = tpu.concatenate %716, %549 in 1 : vector<2x16xf32>, vector<2x16xf32> -> vector<2x32xf32>
    %819 = tpu.concatenate %782, %483 in 1 : vector<2x16xf32>, vector<2x16xf32> -> vector<2x32xf32>
    %820 = tpu.concatenate %814, %815, %816, %817, %818, %819 in 0 : vector<2x32xf32>, vector<2x32xf32>, vector<2x32xf32>, vector<2x32xf32>, vector<2x32xf32>, vector<2x32xf32> -> vector<12x32xf32>
    %c0_104 = arith.constant 0 : index
    %c0_105 = arith.constant 0 : index
    %821 = vector.load %arg2[%c0_104, %c0_105] : memref<16x32xf32, #tpu.memory_space<vmem>>, vector<16x32xf32>
    %c0_106 = arith.constant 0 : index
    %c0_107 = arith.constant 0 : index
    %822 = vector.load %arg11[%c0_106, %c0_107] : memref<32x96xf32, #tpu.memory_space<vmem>>, vector<32x96xf32>
    %c0_108 = arith.constant 0 : index
    %c0_109 = arith.constant 0 : index
    %823 = vector.load %arg12[%c0_108, %c0_109] : memref<32x96xf32, #tpu.memory_space<vmem>>, vector<32x96xf32>
    %c0_110 = arith.constant 0 : index
    %c0_111 = arith.constant 0 : index
    %824 = vector.load %arg13[%c0_110, %c0_111] : memref<1x96xf32, #tpu.memory_space<vmem>>, vector<1x96xf32>
    %c0_112 = arith.constant 0 : index
    %c0_113 = arith.constant 0 : index
    %825 = vector.load %arg14[%c0_112, %c0_113] : memref<1x32xf32, #tpu.memory_space<vmem>>, vector<1x32xf32>
    %cst_114 = arith.constant dense<0.000000e+00> : vector<16x96xf32>
    %826 = tpu.matmul %821, %822, %cst_114 {dimension_numbers = #tpu.dot_dimension_numbers<[1], [0], [0], [1], [0, 0, 1, 1], [], []>} : vector<16x32xf32>, vector<32x96xf32>, vector<16x96xf32> -> vector<16x96xf32>
    %827 = vector.broadcast %824 : vector<1x96xf32> to vector<16x96xf32>
    %828 = arith.addf %826, %827 : vector<16x96xf32>
    %cst_115 = arith.constant 0.000000e+00 : f32
    %829 = vector.broadcast %cst_115 : f32 to vector<2x32xf32>
    %830 = vector.extract_strided_slice %828 {offsets = [0, 0], sizes = [2, 48], strides = [1, 1]} : vector<16x96xf32> to vector<2x48xf32>
    %831 = vector.extract_strided_slice %828 {offsets = [14, 48], sizes = [2, 48], strides = [1, 1]} : vector<16x96xf32> to vector<2x48xf32>
    %cst_116 = arith.constant dense<0.000000e+00> : vector<2x96xf32>
    %832 = tpu.matmul %829, %823, %cst_116 {dimension_numbers = #tpu.dot_dimension_numbers<[1], [0], [0], [1], [0, 0, 1, 1], [], []>} : vector<2x32xf32>, vector<32x96xf32>, vector<2x96xf32> -> vector<2x96xf32>
    %833 = vector.extract_strided_slice %832 {offsets = [0, 0], sizes = [2, 48], strides = [1, 1]} : vector<2x96xf32> to vector<2x48xf32>
    %834 = vector.extract_strided_slice %825 {offsets = [0, 0], sizes = [1, 16], strides = [1, 1]} : vector<1x32xf32> to vector<1x16xf32>
    %835 = vector.extract_strided_slice %829 {offsets = [0, 0], sizes = [2, 16], strides = [1, 1]} : vector<2x32xf32> to vector<2x16xf32>
    %836 = vector.extract_strided_slice %830 {offsets = [0, 0], sizes = [2, 16], strides = [1, 1]} : vector<2x48xf32> to vector<2x16xf32>
    %837 = vector.extract_strided_slice %833 {offsets = [0, 0], sizes = [2, 16], strides = [1, 1]} : vector<2x48xf32> to vector<2x16xf32>
    %838 = arith.addf %836, %837 : vector<2x16xf32>
    %839 = arith.negf %838 : vector<2x16xf32>
    %840 = math.exp %839 : vector<2x16xf32>
    %cst_117 = arith.constant 1.000000e+00 : f32
    %841 = vector.broadcast %cst_117 : f32 to vector<2x16xf32>
    %842 = arith.addf %841, %840 : vector<2x16xf32>
    %843 = arith.divf %841, %842 : vector<2x16xf32>
    %844 = vector.extract_strided_slice %830 {offsets = [0, 16], sizes = [2, 16], strides = [1, 1]} : vector<2x48xf32> to vector<2x16xf32>
    %845 = vector.extract_strided_slice %833 {offsets = [0, 16], sizes = [2, 16], strides = [1, 1]} : vector<2x48xf32> to vector<2x16xf32>
    %846 = arith.addf %844, %845 : vector<2x16xf32>
    %847 = arith.negf %846 : vector<2x16xf32>
    %848 = math.exp %847 : vector<2x16xf32>
    %cst_118 = arith.constant 1.000000e+00 : f32
    %849 = vector.broadcast %cst_118 : f32 to vector<2x16xf32>
    %850 = arith.addf %849, %848 : vector<2x16xf32>
    %851 = arith.divf %849, %850 : vector<2x16xf32>
    %852 = vector.extract_strided_slice %830 {offsets = [0, 32], sizes = [2, 16], strides = [1, 1]} : vector<2x48xf32> to vector<2x16xf32>
    %853 = vector.extract_strided_slice %833 {offsets = [0, 32], sizes = [2, 16], strides = [1, 1]} : vector<2x48xf32> to vector<2x16xf32>
    %854 = vector.broadcast %834 : vector<1x16xf32> to vector<2x16xf32>
    %855 = arith.addf %853, %854 : vector<2x16xf32>
    %856 = arith.mulf %843, %855 : vector<2x16xf32>
    %857 = arith.addf %852, %856 : vector<2x16xf32>
    %858 = math.tanh %857 : vector<2x16xf32>
    %cst_119 = arith.constant 1.000000e+00 : f32
    %859 = vector.broadcast %cst_119 : f32 to vector<2x16xf32>
    %860 = arith.subf %859, %851 : vector<2x16xf32>
    %861 = arith.mulf %860, %858 : vector<2x16xf32>
    %862 = arith.mulf %851, %835 : vector<2x16xf32>
    %863 = arith.addf %861, %862 : vector<2x16xf32>
    %864 = vector.extract_strided_slice %832 {offsets = [0, 48], sizes = [2, 48], strides = [1, 1]} : vector<2x96xf32> to vector<2x48xf32>
    %865 = vector.extract_strided_slice %825 {offsets = [0, 16], sizes = [1, 16], strides = [1, 1]} : vector<1x32xf32> to vector<1x16xf32>
    %866 = vector.extract_strided_slice %829 {offsets = [0, 16], sizes = [2, 16], strides = [1, 1]} : vector<2x32xf32> to vector<2x16xf32>
    %867 = vector.extract_strided_slice %831 {offsets = [0, 0], sizes = [2, 16], strides = [1, 1]} : vector<2x48xf32> to vector<2x16xf32>
    %868 = vector.extract_strided_slice %864 {offsets = [0, 0], sizes = [2, 16], strides = [1, 1]} : vector<2x48xf32> to vector<2x16xf32>
    %869 = arith.addf %867, %868 : vector<2x16xf32>
    %870 = arith.negf %869 : vector<2x16xf32>
    %871 = math.exp %870 : vector<2x16xf32>
    %cst_120 = arith.constant 1.000000e+00 : f32
    %872 = vector.broadcast %cst_120 : f32 to vector<2x16xf32>
    %873 = arith.addf %872, %871 : vector<2x16xf32>
    %874 = arith.divf %872, %873 : vector<2x16xf32>
    %875 = vector.extract_strided_slice %831 {offsets = [0, 16], sizes = [2, 16], strides = [1, 1]} : vector<2x48xf32> to vector<2x16xf32>
    %876 = vector.extract_strided_slice %864 {offsets = [0, 16], sizes = [2, 16], strides = [1, 1]} : vector<2x48xf32> to vector<2x16xf32>
    %877 = arith.addf %875, %876 : vector<2x16xf32>
    %878 = arith.negf %877 : vector<2x16xf32>
    %879 = math.exp %878 : vector<2x16xf32>
    %cst_121 = arith.constant 1.000000e+00 : f32
    %880 = vector.broadcast %cst_121 : f32 to vector<2x16xf32>
    %881 = arith.addf %880, %879 : vector<2x16xf32>
    %882 = arith.divf %880, %881 : vector<2x16xf32>
    %883 = vector.extract_strided_slice %831 {offsets = [0, 32], sizes = [2, 16], strides = [1, 1]} : vector<2x48xf32> to vector<2x16xf32>
    %884 = vector.extract_strided_slice %864 {offsets = [0, 32], sizes = [2, 16], strides = [1, 1]} : vector<2x48xf32> to vector<2x16xf32>
    %885 = vector.broadcast %865 : vector<1x16xf32> to vector<2x16xf32>
    %886 = arith.addf %884, %885 : vector<2x16xf32>
    %887 = arith.mulf %874, %886 : vector<2x16xf32>
    %888 = arith.addf %883, %887 : vector<2x16xf32>
    %889 = math.tanh %888 : vector<2x16xf32>
    %cst_122 = arith.constant 1.000000e+00 : f32
    %890 = vector.broadcast %cst_122 : f32 to vector<2x16xf32>
    %891 = arith.subf %890, %882 : vector<2x16xf32>
    %892 = arith.mulf %891, %889 : vector<2x16xf32>
    %893 = arith.mulf %882, %866 : vector<2x16xf32>
    %894 = arith.addf %892, %893 : vector<2x16xf32>
    %895 = tpu.concatenate %863, %894 in 1 : vector<2x16xf32>, vector<2x16xf32> -> vector<2x32xf32>
    %896 = vector.extract_strided_slice %828 {offsets = [2, 0], sizes = [2, 48], strides = [1, 1]} : vector<16x96xf32> to vector<2x48xf32>
    %897 = vector.extract_strided_slice %828 {offsets = [12, 48], sizes = [2, 48], strides = [1, 1]} : vector<16x96xf32> to vector<2x48xf32>
    %cst_123 = arith.constant dense<0.000000e+00> : vector<2x96xf32>
    %898 = tpu.matmul %895, %823, %cst_123 {dimension_numbers = #tpu.dot_dimension_numbers<[1], [0], [0], [1], [0, 0, 1, 1], [], []>} : vector<2x32xf32>, vector<32x96xf32>, vector<2x96xf32> -> vector<2x96xf32>
    %899 = vector.extract_strided_slice %898 {offsets = [0, 0], sizes = [2, 48], strides = [1, 1]} : vector<2x96xf32> to vector<2x48xf32>
    %900 = vector.extract_strided_slice %825 {offsets = [0, 0], sizes = [1, 16], strides = [1, 1]} : vector<1x32xf32> to vector<1x16xf32>
    %901 = vector.extract_strided_slice %895 {offsets = [0, 0], sizes = [2, 16], strides = [1, 1]} : vector<2x32xf32> to vector<2x16xf32>
    %902 = vector.extract_strided_slice %896 {offsets = [0, 0], sizes = [2, 16], strides = [1, 1]} : vector<2x48xf32> to vector<2x16xf32>
    %903 = vector.extract_strided_slice %899 {offsets = [0, 0], sizes = [2, 16], strides = [1, 1]} : vector<2x48xf32> to vector<2x16xf32>
    %904 = arith.addf %902, %903 : vector<2x16xf32>
    %905 = arith.negf %904 : vector<2x16xf32>
    %906 = math.exp %905 : vector<2x16xf32>
    %cst_124 = arith.constant 1.000000e+00 : f32
    %907 = vector.broadcast %cst_124 : f32 to vector<2x16xf32>
    %908 = arith.addf %907, %906 : vector<2x16xf32>
    %909 = arith.divf %907, %908 : vector<2x16xf32>
    %910 = vector.extract_strided_slice %896 {offsets = [0, 16], sizes = [2, 16], strides = [1, 1]} : vector<2x48xf32> to vector<2x16xf32>
    %911 = vector.extract_strided_slice %899 {offsets = [0, 16], sizes = [2, 16], strides = [1, 1]} : vector<2x48xf32> to vector<2x16xf32>
    %912 = arith.addf %910, %911 : vector<2x16xf32>
    %913 = arith.negf %912 : vector<2x16xf32>
    %914 = math.exp %913 : vector<2x16xf32>
    %cst_125 = arith.constant 1.000000e+00 : f32
    %915 = vector.broadcast %cst_125 : f32 to vector<2x16xf32>
    %916 = arith.addf %915, %914 : vector<2x16xf32>
    %917 = arith.divf %915, %916 : vector<2x16xf32>
    %918 = vector.extract_strided_slice %896 {offsets = [0, 32], sizes = [2, 16], strides = [1, 1]} : vector<2x48xf32> to vector<2x16xf32>
    %919 = vector.extract_strided_slice %899 {offsets = [0, 32], sizes = [2, 16], strides = [1, 1]} : vector<2x48xf32> to vector<2x16xf32>
    %920 = vector.broadcast %900 : vector<1x16xf32> to vector<2x16xf32>
    %921 = arith.addf %919, %920 : vector<2x16xf32>
    %922 = arith.mulf %909, %921 : vector<2x16xf32>
    %923 = arith.addf %918, %922 : vector<2x16xf32>
    %924 = math.tanh %923 : vector<2x16xf32>
    %cst_126 = arith.constant 1.000000e+00 : f32
    %925 = vector.broadcast %cst_126 : f32 to vector<2x16xf32>
    %926 = arith.subf %925, %917 : vector<2x16xf32>
    %927 = arith.mulf %926, %924 : vector<2x16xf32>
    %928 = arith.mulf %917, %901 : vector<2x16xf32>
    %929 = arith.addf %927, %928 : vector<2x16xf32>
    %930 = vector.extract_strided_slice %898 {offsets = [0, 48], sizes = [2, 48], strides = [1, 1]} : vector<2x96xf32> to vector<2x48xf32>
    %931 = vector.extract_strided_slice %825 {offsets = [0, 16], sizes = [1, 16], strides = [1, 1]} : vector<1x32xf32> to vector<1x16xf32>
    %932 = vector.extract_strided_slice %895 {offsets = [0, 16], sizes = [2, 16], strides = [1, 1]} : vector<2x32xf32> to vector<2x16xf32>
    %933 = vector.extract_strided_slice %897 {offsets = [0, 0], sizes = [2, 16], strides = [1, 1]} : vector<2x48xf32> to vector<2x16xf32>
    %934 = vector.extract_strided_slice %930 {offsets = [0, 0], sizes = [2, 16], strides = [1, 1]} : vector<2x48xf32> to vector<2x16xf32>
    %935 = arith.addf %933, %934 : vector<2x16xf32>
    %936 = arith.negf %935 : vector<2x16xf32>
    %937 = math.exp %936 : vector<2x16xf32>
    %cst_127 = arith.constant 1.000000e+00 : f32
    %938 = vector.broadcast %cst_127 : f32 to vector<2x16xf32>
    %939 = arith.addf %938, %937 : vector<2x16xf32>
    %940 = arith.divf %938, %939 : vector<2x16xf32>
    %941 = vector.extract_strided_slice %897 {offsets = [0, 16], sizes = [2, 16], strides = [1, 1]} : vector<2x48xf32> to vector<2x16xf32>
    %942 = vector.extract_strided_slice %930 {offsets = [0, 16], sizes = [2, 16], strides = [1, 1]} : vector<2x48xf32> to vector<2x16xf32>
    %943 = arith.addf %941, %942 : vector<2x16xf32>
    %944 = arith.negf %943 : vector<2x16xf32>
    %945 = math.exp %944 : vector<2x16xf32>
    %cst_128 = arith.constant 1.000000e+00 : f32
    %946 = vector.broadcast %cst_128 : f32 to vector<2x16xf32>
    %947 = arith.addf %946, %945 : vector<2x16xf32>
    %948 = arith.divf %946, %947 : vector<2x16xf32>
    %949 = vector.extract_strided_slice %897 {offsets = [0, 32], sizes = [2, 16], strides = [1, 1]} : vector<2x48xf32> to vector<2x16xf32>
    %950 = vector.extract_strided_slice %930 {offsets = [0, 32], sizes = [2, 16], strides = [1, 1]} : vector<2x48xf32> to vector<2x16xf32>
    %951 = vector.broadcast %931 : vector<1x16xf32> to vector<2x16xf32>
    %952 = arith.addf %950, %951 : vector<2x16xf32>
    %953 = arith.mulf %940, %952 : vector<2x16xf32>
    %954 = arith.addf %949, %953 : vector<2x16xf32>
    %955 = math.tanh %954 : vector<2x16xf32>
    %cst_129 = arith.constant 1.000000e+00 : f32
    %956 = vector.broadcast %cst_129 : f32 to vector<2x16xf32>
    %957 = arith.subf %956, %948 : vector<2x16xf32>
    %958 = arith.mulf %957, %955 : vector<2x16xf32>
    %959 = arith.mulf %948, %932 : vector<2x16xf32>
    %960 = arith.addf %958, %959 : vector<2x16xf32>
    %961 = tpu.concatenate %929, %960 in 1 : vector<2x16xf32>, vector<2x16xf32> -> vector<2x32xf32>
    %962 = vector.extract_strided_slice %828 {offsets = [4, 0], sizes = [2, 48], strides = [1, 1]} : vector<16x96xf32> to vector<2x48xf32>
    %963 = vector.extract_strided_slice %828 {offsets = [10, 48], sizes = [2, 48], strides = [1, 1]} : vector<16x96xf32> to vector<2x48xf32>
    %cst_130 = arith.constant dense<0.000000e+00> : vector<2x96xf32>
    %964 = tpu.matmul %961, %823, %cst_130 {dimension_numbers = #tpu.dot_dimension_numbers<[1], [0], [0], [1], [0, 0, 1, 1], [], []>} : vector<2x32xf32>, vector<32x96xf32>, vector<2x96xf32> -> vector<2x96xf32>
    %965 = vector.extract_strided_slice %964 {offsets = [0, 0], sizes = [2, 48], strides = [1, 1]} : vector<2x96xf32> to vector<2x48xf32>
    %966 = vector.extract_strided_slice %825 {offsets = [0, 0], sizes = [1, 16], strides = [1, 1]} : vector<1x32xf32> to vector<1x16xf32>
    %967 = vector.extract_strided_slice %961 {offsets = [0, 0], sizes = [2, 16], strides = [1, 1]} : vector<2x32xf32> to vector<2x16xf32>
    %968 = vector.extract_strided_slice %962 {offsets = [0, 0], sizes = [2, 16], strides = [1, 1]} : vector<2x48xf32> to vector<2x16xf32>
    %969 = vector.extract_strided_slice %965 {offsets = [0, 0], sizes = [2, 16], strides = [1, 1]} : vector<2x48xf32> to vector<2x16xf32>
    %970 = arith.addf %968, %969 : vector<2x16xf32>
    %971 = arith.negf %970 : vector<2x16xf32>
    %972 = math.exp %971 : vector<2x16xf32>
    %cst_131 = arith.constant 1.000000e+00 : f32
    %973 = vector.broadcast %cst_131 : f32 to vector<2x16xf32>
    %974 = arith.addf %973, %972 : vector<2x16xf32>
    %975 = arith.divf %973, %974 : vector<2x16xf32>
    %976 = vector.extract_strided_slice %962 {offsets = [0, 16], sizes = [2, 16], strides = [1, 1]} : vector<2x48xf32> to vector<2x16xf32>
    %977 = vector.extract_strided_slice %965 {offsets = [0, 16], sizes = [2, 16], strides = [1, 1]} : vector<2x48xf32> to vector<2x16xf32>
    %978 = arith.addf %976, %977 : vector<2x16xf32>
    %979 = arith.negf %978 : vector<2x16xf32>
    %980 = math.exp %979 : vector<2x16xf32>
    %cst_132 = arith.constant 1.000000e+00 : f32
    %981 = vector.broadcast %cst_132 : f32 to vector<2x16xf32>
    %982 = arith.addf %981, %980 : vector<2x16xf32>
    %983 = arith.divf %981, %982 : vector<2x16xf32>
    %984 = vector.extract_strided_slice %962 {offsets = [0, 32], sizes = [2, 16], strides = [1, 1]} : vector<2x48xf32> to vector<2x16xf32>
    %985 = vector.extract_strided_slice %965 {offsets = [0, 32], sizes = [2, 16], strides = [1, 1]} : vector<2x48xf32> to vector<2x16xf32>
    %986 = vector.broadcast %966 : vector<1x16xf32> to vector<2x16xf32>
    %987 = arith.addf %985, %986 : vector<2x16xf32>
    %988 = arith.mulf %975, %987 : vector<2x16xf32>
    %989 = arith.addf %984, %988 : vector<2x16xf32>
    %990 = math.tanh %989 : vector<2x16xf32>
    %cst_133 = arith.constant 1.000000e+00 : f32
    %991 = vector.broadcast %cst_133 : f32 to vector<2x16xf32>
    %992 = arith.subf %991, %983 : vector<2x16xf32>
    %993 = arith.mulf %992, %990 : vector<2x16xf32>
    %994 = arith.mulf %983, %967 : vector<2x16xf32>
    %995 = arith.addf %993, %994 : vector<2x16xf32>
    %996 = vector.extract_strided_slice %964 {offsets = [0, 48], sizes = [2, 48], strides = [1, 1]} : vector<2x96xf32> to vector<2x48xf32>
    %997 = vector.extract_strided_slice %825 {offsets = [0, 16], sizes = [1, 16], strides = [1, 1]} : vector<1x32xf32> to vector<1x16xf32>
    %998 = vector.extract_strided_slice %961 {offsets = [0, 16], sizes = [2, 16], strides = [1, 1]} : vector<2x32xf32> to vector<2x16xf32>
    %999 = vector.extract_strided_slice %963 {offsets = [0, 0], sizes = [2, 16], strides = [1, 1]} : vector<2x48xf32> to vector<2x16xf32>
    %1000 = vector.extract_strided_slice %996 {offsets = [0, 0], sizes = [2, 16], strides = [1, 1]} : vector<2x48xf32> to vector<2x16xf32>
    %1001 = arith.addf %999, %1000 : vector<2x16xf32>
    %1002 = arith.negf %1001 : vector<2x16xf32>
    %1003 = math.exp %1002 : vector<2x16xf32>
    %cst_134 = arith.constant 1.000000e+00 : f32
    %1004 = vector.broadcast %cst_134 : f32 to vector<2x16xf32>
    %1005 = arith.addf %1004, %1003 : vector<2x16xf32>
    %1006 = arith.divf %1004, %1005 : vector<2x16xf32>
    %1007 = vector.extract_strided_slice %963 {offsets = [0, 16], sizes = [2, 16], strides = [1, 1]} : vector<2x48xf32> to vector<2x16xf32>
    %1008 = vector.extract_strided_slice %996 {offsets = [0, 16], sizes = [2, 16], strides = [1, 1]} : vector<2x48xf32> to vector<2x16xf32>
    %1009 = arith.addf %1007, %1008 : vector<2x16xf32>
    %1010 = arith.negf %1009 : vector<2x16xf32>
    %1011 = math.exp %1010 : vector<2x16xf32>
    %cst_135 = arith.constant 1.000000e+00 : f32
    %1012 = vector.broadcast %cst_135 : f32 to vector<2x16xf32>
    %1013 = arith.addf %1012, %1011 : vector<2x16xf32>
    %1014 = arith.divf %1012, %1013 : vector<2x16xf32>
    %1015 = vector.extract_strided_slice %963 {offsets = [0, 32], sizes = [2, 16], strides = [1, 1]} : vector<2x48xf32> to vector<2x16xf32>
    %1016 = vector.extract_strided_slice %996 {offsets = [0, 32], sizes = [2, 16], strides = [1, 1]} : vector<2x48xf32> to vector<2x16xf32>
    %1017 = vector.broadcast %997 : vector<1x16xf32> to vector<2x16xf32>
    %1018 = arith.addf %1016, %1017 : vector<2x16xf32>
    %1019 = arith.mulf %1006, %1018 : vector<2x16xf32>
    %1020 = arith.addf %1015, %1019 : vector<2x16xf32>
    %1021 = math.tanh %1020 : vector<2x16xf32>
    %cst_136 = arith.constant 1.000000e+00 : f32
    %1022 = vector.broadcast %cst_136 : f32 to vector<2x16xf32>
    %1023 = arith.subf %1022, %1014 : vector<2x16xf32>
    %1024 = arith.mulf %1023, %1021 : vector<2x16xf32>
    %1025 = arith.mulf %1014, %998 : vector<2x16xf32>
    %1026 = arith.addf %1024, %1025 : vector<2x16xf32>
    %1027 = tpu.concatenate %995, %1026 in 1 : vector<2x16xf32>, vector<2x16xf32> -> vector<2x32xf32>
    %1028 = vector.extract_strided_slice %828 {offsets = [6, 0], sizes = [2, 48], strides = [1, 1]} : vector<16x96xf32> to vector<2x48xf32>
    %1029 = vector.extract_strided_slice %828 {offsets = [8, 48], sizes = [2, 48], strides = [1, 1]} : vector<16x96xf32> to vector<2x48xf32>
    %cst_137 = arith.constant dense<0.000000e+00> : vector<2x96xf32>
    %1030 = tpu.matmul %1027, %823, %cst_137 {dimension_numbers = #tpu.dot_dimension_numbers<[1], [0], [0], [1], [0, 0, 1, 1], [], []>} : vector<2x32xf32>, vector<32x96xf32>, vector<2x96xf32> -> vector<2x96xf32>
    %1031 = vector.extract_strided_slice %1030 {offsets = [0, 0], sizes = [2, 48], strides = [1, 1]} : vector<2x96xf32> to vector<2x48xf32>
    %1032 = vector.extract_strided_slice %825 {offsets = [0, 0], sizes = [1, 16], strides = [1, 1]} : vector<1x32xf32> to vector<1x16xf32>
    %1033 = vector.extract_strided_slice %1027 {offsets = [0, 0], sizes = [2, 16], strides = [1, 1]} : vector<2x32xf32> to vector<2x16xf32>
    %1034 = vector.extract_strided_slice %1028 {offsets = [0, 0], sizes = [2, 16], strides = [1, 1]} : vector<2x48xf32> to vector<2x16xf32>
    %1035 = vector.extract_strided_slice %1031 {offsets = [0, 0], sizes = [2, 16], strides = [1, 1]} : vector<2x48xf32> to vector<2x16xf32>
    %1036 = arith.addf %1034, %1035 : vector<2x16xf32>
    %1037 = arith.negf %1036 : vector<2x16xf32>
    %1038 = math.exp %1037 : vector<2x16xf32>
    %cst_138 = arith.constant 1.000000e+00 : f32
    %1039 = vector.broadcast %cst_138 : f32 to vector<2x16xf32>
    %1040 = arith.addf %1039, %1038 : vector<2x16xf32>
    %1041 = arith.divf %1039, %1040 : vector<2x16xf32>
    %1042 = vector.extract_strided_slice %1028 {offsets = [0, 16], sizes = [2, 16], strides = [1, 1]} : vector<2x48xf32> to vector<2x16xf32>
    %1043 = vector.extract_strided_slice %1031 {offsets = [0, 16], sizes = [2, 16], strides = [1, 1]} : vector<2x48xf32> to vector<2x16xf32>
    %1044 = arith.addf %1042, %1043 : vector<2x16xf32>
    %1045 = arith.negf %1044 : vector<2x16xf32>
    %1046 = math.exp %1045 : vector<2x16xf32>
    %cst_139 = arith.constant 1.000000e+00 : f32
    %1047 = vector.broadcast %cst_139 : f32 to vector<2x16xf32>
    %1048 = arith.addf %1047, %1046 : vector<2x16xf32>
    %1049 = arith.divf %1047, %1048 : vector<2x16xf32>
    %1050 = vector.extract_strided_slice %1028 {offsets = [0, 32], sizes = [2, 16], strides = [1, 1]} : vector<2x48xf32> to vector<2x16xf32>
    %1051 = vector.extract_strided_slice %1031 {offsets = [0, 32], sizes = [2, 16], strides = [1, 1]} : vector<2x48xf32> to vector<2x16xf32>
    %1052 = vector.broadcast %1032 : vector<1x16xf32> to vector<2x16xf32>
    %1053 = arith.addf %1051, %1052 : vector<2x16xf32>
    %1054 = arith.mulf %1041, %1053 : vector<2x16xf32>
    %1055 = arith.addf %1050, %1054 : vector<2x16xf32>
    %1056 = math.tanh %1055 : vector<2x16xf32>
    %cst_140 = arith.constant 1.000000e+00 : f32
    %1057 = vector.broadcast %cst_140 : f32 to vector<2x16xf32>
    %1058 = arith.subf %1057, %1049 : vector<2x16xf32>
    %1059 = arith.mulf %1058, %1056 : vector<2x16xf32>
    %1060 = arith.mulf %1049, %1033 : vector<2x16xf32>
    %1061 = arith.addf %1059, %1060 : vector<2x16xf32>
    %1062 = vector.extract_strided_slice %1030 {offsets = [0, 48], sizes = [2, 48], strides = [1, 1]} : vector<2x96xf32> to vector<2x48xf32>
    %1063 = vector.extract_strided_slice %825 {offsets = [0, 16], sizes = [1, 16], strides = [1, 1]} : vector<1x32xf32> to vector<1x16xf32>
    %1064 = vector.extract_strided_slice %1027 {offsets = [0, 16], sizes = [2, 16], strides = [1, 1]} : vector<2x32xf32> to vector<2x16xf32>
    %1065 = vector.extract_strided_slice %1029 {offsets = [0, 0], sizes = [2, 16], strides = [1, 1]} : vector<2x48xf32> to vector<2x16xf32>
    %1066 = vector.extract_strided_slice %1062 {offsets = [0, 0], sizes = [2, 16], strides = [1, 1]} : vector<2x48xf32> to vector<2x16xf32>
    %1067 = arith.addf %1065, %1066 : vector<2x16xf32>
    %1068 = arith.negf %1067 : vector<2x16xf32>
    %1069 = math.exp %1068 : vector<2x16xf32>
    %cst_141 = arith.constant 1.000000e+00 : f32
    %1070 = vector.broadcast %cst_141 : f32 to vector<2x16xf32>
    %1071 = arith.addf %1070, %1069 : vector<2x16xf32>
    %1072 = arith.divf %1070, %1071 : vector<2x16xf32>
    %1073 = vector.extract_strided_slice %1029 {offsets = [0, 16], sizes = [2, 16], strides = [1, 1]} : vector<2x48xf32> to vector<2x16xf32>
    %1074 = vector.extract_strided_slice %1062 {offsets = [0, 16], sizes = [2, 16], strides = [1, 1]} : vector<2x48xf32> to vector<2x16xf32>
    %1075 = arith.addf %1073, %1074 : vector<2x16xf32>
    %1076 = arith.negf %1075 : vector<2x16xf32>
    %1077 = math.exp %1076 : vector<2x16xf32>
    %cst_142 = arith.constant 1.000000e+00 : f32
    %1078 = vector.broadcast %cst_142 : f32 to vector<2x16xf32>
    %1079 = arith.addf %1078, %1077 : vector<2x16xf32>
    %1080 = arith.divf %1078, %1079 : vector<2x16xf32>
    %1081 = vector.extract_strided_slice %1029 {offsets = [0, 32], sizes = [2, 16], strides = [1, 1]} : vector<2x48xf32> to vector<2x16xf32>
    %1082 = vector.extract_strided_slice %1062 {offsets = [0, 32], sizes = [2, 16], strides = [1, 1]} : vector<2x48xf32> to vector<2x16xf32>
    %1083 = vector.broadcast %1063 : vector<1x16xf32> to vector<2x16xf32>
    %1084 = arith.addf %1082, %1083 : vector<2x16xf32>
    %1085 = arith.mulf %1072, %1084 : vector<2x16xf32>
    %1086 = arith.addf %1081, %1085 : vector<2x16xf32>
    %1087 = math.tanh %1086 : vector<2x16xf32>
    %cst_143 = arith.constant 1.000000e+00 : f32
    %1088 = vector.broadcast %cst_143 : f32 to vector<2x16xf32>
    %1089 = arith.subf %1088, %1080 : vector<2x16xf32>
    %1090 = arith.mulf %1089, %1087 : vector<2x16xf32>
    %1091 = arith.mulf %1080, %1064 : vector<2x16xf32>
    %1092 = arith.addf %1090, %1091 : vector<2x16xf32>
    %1093 = tpu.concatenate %1061, %1092 in 1 : vector<2x16xf32>, vector<2x16xf32> -> vector<2x32xf32>
    %1094 = vector.extract_strided_slice %828 {offsets = [8, 0], sizes = [2, 48], strides = [1, 1]} : vector<16x96xf32> to vector<2x48xf32>
    %1095 = vector.extract_strided_slice %828 {offsets = [6, 48], sizes = [2, 48], strides = [1, 1]} : vector<16x96xf32> to vector<2x48xf32>
    %cst_144 = arith.constant dense<0.000000e+00> : vector<2x96xf32>
    %1096 = tpu.matmul %1093, %823, %cst_144 {dimension_numbers = #tpu.dot_dimension_numbers<[1], [0], [0], [1], [0, 0, 1, 1], [], []>} : vector<2x32xf32>, vector<32x96xf32>, vector<2x96xf32> -> vector<2x96xf32>
    %1097 = vector.extract_strided_slice %1096 {offsets = [0, 0], sizes = [2, 48], strides = [1, 1]} : vector<2x96xf32> to vector<2x48xf32>
    %1098 = vector.extract_strided_slice %825 {offsets = [0, 0], sizes = [1, 16], strides = [1, 1]} : vector<1x32xf32> to vector<1x16xf32>
    %1099 = vector.extract_strided_slice %1093 {offsets = [0, 0], sizes = [2, 16], strides = [1, 1]} : vector<2x32xf32> to vector<2x16xf32>
    %1100 = vector.extract_strided_slice %1094 {offsets = [0, 0], sizes = [2, 16], strides = [1, 1]} : vector<2x48xf32> to vector<2x16xf32>
    %1101 = vector.extract_strided_slice %1097 {offsets = [0, 0], sizes = [2, 16], strides = [1, 1]} : vector<2x48xf32> to vector<2x16xf32>
    %1102 = arith.addf %1100, %1101 : vector<2x16xf32>
    %1103 = arith.negf %1102 : vector<2x16xf32>
    %1104 = math.exp %1103 : vector<2x16xf32>
    %cst_145 = arith.constant 1.000000e+00 : f32
    %1105 = vector.broadcast %cst_145 : f32 to vector<2x16xf32>
    %1106 = arith.addf %1105, %1104 : vector<2x16xf32>
    %1107 = arith.divf %1105, %1106 : vector<2x16xf32>
    %1108 = vector.extract_strided_slice %1094 {offsets = [0, 16], sizes = [2, 16], strides = [1, 1]} : vector<2x48xf32> to vector<2x16xf32>
    %1109 = vector.extract_strided_slice %1097 {offsets = [0, 16], sizes = [2, 16], strides = [1, 1]} : vector<2x48xf32> to vector<2x16xf32>
    %1110 = arith.addf %1108, %1109 : vector<2x16xf32>
    %1111 = arith.negf %1110 : vector<2x16xf32>
    %1112 = math.exp %1111 : vector<2x16xf32>
    %cst_146 = arith.constant 1.000000e+00 : f32
    %1113 = vector.broadcast %cst_146 : f32 to vector<2x16xf32>
    %1114 = arith.addf %1113, %1112 : vector<2x16xf32>
    %1115 = arith.divf %1113, %1114 : vector<2x16xf32>
    %1116 = vector.extract_strided_slice %1094 {offsets = [0, 32], sizes = [2, 16], strides = [1, 1]} : vector<2x48xf32> to vector<2x16xf32>
    %1117 = vector.extract_strided_slice %1097 {offsets = [0, 32], sizes = [2, 16], strides = [1, 1]} : vector<2x48xf32> to vector<2x16xf32>
    %1118 = vector.broadcast %1098 : vector<1x16xf32> to vector<2x16xf32>
    %1119 = arith.addf %1117, %1118 : vector<2x16xf32>
    %1120 = arith.mulf %1107, %1119 : vector<2x16xf32>
    %1121 = arith.addf %1116, %1120 : vector<2x16xf32>
    %1122 = math.tanh %1121 : vector<2x16xf32>
    %cst_147 = arith.constant 1.000000e+00 : f32
    %1123 = vector.broadcast %cst_147 : f32 to vector<2x16xf32>
    %1124 = arith.subf %1123, %1115 : vector<2x16xf32>
    %1125 = arith.mulf %1124, %1122 : vector<2x16xf32>
    %1126 = arith.mulf %1115, %1099 : vector<2x16xf32>
    %1127 = arith.addf %1125, %1126 : vector<2x16xf32>
    %1128 = vector.extract_strided_slice %1096 {offsets = [0, 48], sizes = [2, 48], strides = [1, 1]} : vector<2x96xf32> to vector<2x48xf32>
    %1129 = vector.extract_strided_slice %825 {offsets = [0, 16], sizes = [1, 16], strides = [1, 1]} : vector<1x32xf32> to vector<1x16xf32>
    %1130 = vector.extract_strided_slice %1093 {offsets = [0, 16], sizes = [2, 16], strides = [1, 1]} : vector<2x32xf32> to vector<2x16xf32>
    %1131 = vector.extract_strided_slice %1095 {offsets = [0, 0], sizes = [2, 16], strides = [1, 1]} : vector<2x48xf32> to vector<2x16xf32>
    %1132 = vector.extract_strided_slice %1128 {offsets = [0, 0], sizes = [2, 16], strides = [1, 1]} : vector<2x48xf32> to vector<2x16xf32>
    %1133 = arith.addf %1131, %1132 : vector<2x16xf32>
    %1134 = arith.negf %1133 : vector<2x16xf32>
    %1135 = math.exp %1134 : vector<2x16xf32>
    %cst_148 = arith.constant 1.000000e+00 : f32
    %1136 = vector.broadcast %cst_148 : f32 to vector<2x16xf32>
    %1137 = arith.addf %1136, %1135 : vector<2x16xf32>
    %1138 = arith.divf %1136, %1137 : vector<2x16xf32>
    %1139 = vector.extract_strided_slice %1095 {offsets = [0, 16], sizes = [2, 16], strides = [1, 1]} : vector<2x48xf32> to vector<2x16xf32>
    %1140 = vector.extract_strided_slice %1128 {offsets = [0, 16], sizes = [2, 16], strides = [1, 1]} : vector<2x48xf32> to vector<2x16xf32>
    %1141 = arith.addf %1139, %1140 : vector<2x16xf32>
    %1142 = arith.negf %1141 : vector<2x16xf32>
    %1143 = math.exp %1142 : vector<2x16xf32>
    %cst_149 = arith.constant 1.000000e+00 : f32
    %1144 = vector.broadcast %cst_149 : f32 to vector<2x16xf32>
    %1145 = arith.addf %1144, %1143 : vector<2x16xf32>
    %1146 = arith.divf %1144, %1145 : vector<2x16xf32>
    %1147 = vector.extract_strided_slice %1095 {offsets = [0, 32], sizes = [2, 16], strides = [1, 1]} : vector<2x48xf32> to vector<2x16xf32>
    %1148 = vector.extract_strided_slice %1128 {offsets = [0, 32], sizes = [2, 16], strides = [1, 1]} : vector<2x48xf32> to vector<2x16xf32>
    %1149 = vector.broadcast %1129 : vector<1x16xf32> to vector<2x16xf32>
    %1150 = arith.addf %1148, %1149 : vector<2x16xf32>
    %1151 = arith.mulf %1138, %1150 : vector<2x16xf32>
    %1152 = arith.addf %1147, %1151 : vector<2x16xf32>
    %1153 = math.tanh %1152 : vector<2x16xf32>
    %cst_150 = arith.constant 1.000000e+00 : f32
    %1154 = vector.broadcast %cst_150 : f32 to vector<2x16xf32>
    %1155 = arith.subf %1154, %1146 : vector<2x16xf32>
    %1156 = arith.mulf %1155, %1153 : vector<2x16xf32>
    %1157 = arith.mulf %1146, %1130 : vector<2x16xf32>
    %1158 = arith.addf %1156, %1157 : vector<2x16xf32>
    %1159 = tpu.concatenate %1127, %1158 in 1 : vector<2x16xf32>, vector<2x16xf32> -> vector<2x32xf32>
    %1160 = vector.extract_strided_slice %828 {offsets = [10, 0], sizes = [2, 48], strides = [1, 1]} : vector<16x96xf32> to vector<2x48xf32>
    %1161 = vector.extract_strided_slice %828 {offsets = [4, 48], sizes = [2, 48], strides = [1, 1]} : vector<16x96xf32> to vector<2x48xf32>
    %cst_151 = arith.constant dense<0.000000e+00> : vector<2x96xf32>
    %1162 = tpu.matmul %1159, %823, %cst_151 {dimension_numbers = #tpu.dot_dimension_numbers<[1], [0], [0], [1], [0, 0, 1, 1], [], []>} : vector<2x32xf32>, vector<32x96xf32>, vector<2x96xf32> -> vector<2x96xf32>
    %1163 = vector.extract_strided_slice %1162 {offsets = [0, 0], sizes = [2, 48], strides = [1, 1]} : vector<2x96xf32> to vector<2x48xf32>
    %1164 = vector.extract_strided_slice %825 {offsets = [0, 0], sizes = [1, 16], strides = [1, 1]} : vector<1x32xf32> to vector<1x16xf32>
    %1165 = vector.extract_strided_slice %1159 {offsets = [0, 0], sizes = [2, 16], strides = [1, 1]} : vector<2x32xf32> to vector<2x16xf32>
    %1166 = vector.extract_strided_slice %1160 {offsets = [0, 0], sizes = [2, 16], strides = [1, 1]} : vector<2x48xf32> to vector<2x16xf32>
    %1167 = vector.extract_strided_slice %1163 {offsets = [0, 0], sizes = [2, 16], strides = [1, 1]} : vector<2x48xf32> to vector<2x16xf32>
    %1168 = arith.addf %1166, %1167 : vector<2x16xf32>
    %1169 = arith.negf %1168 : vector<2x16xf32>
    %1170 = math.exp %1169 : vector<2x16xf32>
    %cst_152 = arith.constant 1.000000e+00 : f32
    %1171 = vector.broadcast %cst_152 : f32 to vector<2x16xf32>
    %1172 = arith.addf %1171, %1170 : vector<2x16xf32>
    %1173 = arith.divf %1171, %1172 : vector<2x16xf32>
    %1174 = vector.extract_strided_slice %1160 {offsets = [0, 16], sizes = [2, 16], strides = [1, 1]} : vector<2x48xf32> to vector<2x16xf32>
    %1175 = vector.extract_strided_slice %1163 {offsets = [0, 16], sizes = [2, 16], strides = [1, 1]} : vector<2x48xf32> to vector<2x16xf32>
    %1176 = arith.addf %1174, %1175 : vector<2x16xf32>
    %1177 = arith.negf %1176 : vector<2x16xf32>
    %1178 = math.exp %1177 : vector<2x16xf32>
    %cst_153 = arith.constant 1.000000e+00 : f32
    %1179 = vector.broadcast %cst_153 : f32 to vector<2x16xf32>
    %1180 = arith.addf %1179, %1178 : vector<2x16xf32>
    %1181 = arith.divf %1179, %1180 : vector<2x16xf32>
    %1182 = vector.extract_strided_slice %1160 {offsets = [0, 32], sizes = [2, 16], strides = [1, 1]} : vector<2x48xf32> to vector<2x16xf32>
    %1183 = vector.extract_strided_slice %1163 {offsets = [0, 32], sizes = [2, 16], strides = [1, 1]} : vector<2x48xf32> to vector<2x16xf32>
    %1184 = vector.broadcast %1164 : vector<1x16xf32> to vector<2x16xf32>
    %1185 = arith.addf %1183, %1184 : vector<2x16xf32>
    %1186 = arith.mulf %1173, %1185 : vector<2x16xf32>
    %1187 = arith.addf %1182, %1186 : vector<2x16xf32>
    %1188 = math.tanh %1187 : vector<2x16xf32>
    %cst_154 = arith.constant 1.000000e+00 : f32
    %1189 = vector.broadcast %cst_154 : f32 to vector<2x16xf32>
    %1190 = arith.subf %1189, %1181 : vector<2x16xf32>
    %1191 = arith.mulf %1190, %1188 : vector<2x16xf32>
    %1192 = arith.mulf %1181, %1165 : vector<2x16xf32>
    %1193 = arith.addf %1191, %1192 : vector<2x16xf32>
    %1194 = vector.extract_strided_slice %1162 {offsets = [0, 48], sizes = [2, 48], strides = [1, 1]} : vector<2x96xf32> to vector<2x48xf32>
    %1195 = vector.extract_strided_slice %825 {offsets = [0, 16], sizes = [1, 16], strides = [1, 1]} : vector<1x32xf32> to vector<1x16xf32>
    %1196 = vector.extract_strided_slice %1159 {offsets = [0, 16], sizes = [2, 16], strides = [1, 1]} : vector<2x32xf32> to vector<2x16xf32>
    %1197 = vector.extract_strided_slice %1161 {offsets = [0, 0], sizes = [2, 16], strides = [1, 1]} : vector<2x48xf32> to vector<2x16xf32>
    %1198 = vector.extract_strided_slice %1194 {offsets = [0, 0], sizes = [2, 16], strides = [1, 1]} : vector<2x48xf32> to vector<2x16xf32>
    %1199 = arith.addf %1197, %1198 : vector<2x16xf32>
    %1200 = arith.negf %1199 : vector<2x16xf32>
    %1201 = math.exp %1200 : vector<2x16xf32>
    %cst_155 = arith.constant 1.000000e+00 : f32
    %1202 = vector.broadcast %cst_155 : f32 to vector<2x16xf32>
    %1203 = arith.addf %1202, %1201 : vector<2x16xf32>
    %1204 = arith.divf %1202, %1203 : vector<2x16xf32>
    %1205 = vector.extract_strided_slice %1161 {offsets = [0, 16], sizes = [2, 16], strides = [1, 1]} : vector<2x48xf32> to vector<2x16xf32>
    %1206 = vector.extract_strided_slice %1194 {offsets = [0, 16], sizes = [2, 16], strides = [1, 1]} : vector<2x48xf32> to vector<2x16xf32>
    %1207 = arith.addf %1205, %1206 : vector<2x16xf32>
    %1208 = arith.negf %1207 : vector<2x16xf32>
    %1209 = math.exp %1208 : vector<2x16xf32>
    %cst_156 = arith.constant 1.000000e+00 : f32
    %1210 = vector.broadcast %cst_156 : f32 to vector<2x16xf32>
    %1211 = arith.addf %1210, %1209 : vector<2x16xf32>
    %1212 = arith.divf %1210, %1211 : vector<2x16xf32>
    %1213 = vector.extract_strided_slice %1161 {offsets = [0, 32], sizes = [2, 16], strides = [1, 1]} : vector<2x48xf32> to vector<2x16xf32>
    %1214 = vector.extract_strided_slice %1194 {offsets = [0, 32], sizes = [2, 16], strides = [1, 1]} : vector<2x48xf32> to vector<2x16xf32>
    %1215 = vector.broadcast %1195 : vector<1x16xf32> to vector<2x16xf32>
    %1216 = arith.addf %1214, %1215 : vector<2x16xf32>
    %1217 = arith.mulf %1204, %1216 : vector<2x16xf32>
    %1218 = arith.addf %1213, %1217 : vector<2x16xf32>
    %1219 = math.tanh %1218 : vector<2x16xf32>
    %cst_157 = arith.constant 1.000000e+00 : f32
    %1220 = vector.broadcast %cst_157 : f32 to vector<2x16xf32>
    %1221 = arith.subf %1220, %1212 : vector<2x16xf32>
    %1222 = arith.mulf %1221, %1219 : vector<2x16xf32>
    %1223 = arith.mulf %1212, %1196 : vector<2x16xf32>
    %1224 = arith.addf %1222, %1223 : vector<2x16xf32>
    %1225 = tpu.concatenate %1193, %1224 in 1 : vector<2x16xf32>, vector<2x16xf32> -> vector<2x32xf32>
    %1226 = vector.extract_strided_slice %828 {offsets = [12, 0], sizes = [2, 48], strides = [1, 1]} : vector<16x96xf32> to vector<2x48xf32>
    %1227 = vector.extract_strided_slice %828 {offsets = [2, 48], sizes = [2, 48], strides = [1, 1]} : vector<16x96xf32> to vector<2x48xf32>
    %cst_158 = arith.constant dense<0.000000e+00> : vector<2x96xf32>
    %1228 = tpu.matmul %1225, %823, %cst_158 {dimension_numbers = #tpu.dot_dimension_numbers<[1], [0], [0], [1], [0, 0, 1, 1], [], []>} : vector<2x32xf32>, vector<32x96xf32>, vector<2x96xf32> -> vector<2x96xf32>
    %1229 = vector.extract_strided_slice %1228 {offsets = [0, 0], sizes = [2, 48], strides = [1, 1]} : vector<2x96xf32> to vector<2x48xf32>
    %1230 = vector.extract_strided_slice %825 {offsets = [0, 0], sizes = [1, 16], strides = [1, 1]} : vector<1x32xf32> to vector<1x16xf32>
    %1231 = vector.extract_strided_slice %1225 {offsets = [0, 0], sizes = [2, 16], strides = [1, 1]} : vector<2x32xf32> to vector<2x16xf32>
    %1232 = vector.extract_strided_slice %1226 {offsets = [0, 0], sizes = [2, 16], strides = [1, 1]} : vector<2x48xf32> to vector<2x16xf32>
    %1233 = vector.extract_strided_slice %1229 {offsets = [0, 0], sizes = [2, 16], strides = [1, 1]} : vector<2x48xf32> to vector<2x16xf32>
    %1234 = arith.addf %1232, %1233 : vector<2x16xf32>
    %1235 = arith.negf %1234 : vector<2x16xf32>
    %1236 = math.exp %1235 : vector<2x16xf32>
    %cst_159 = arith.constant 1.000000e+00 : f32
    %1237 = vector.broadcast %cst_159 : f32 to vector<2x16xf32>
    %1238 = arith.addf %1237, %1236 : vector<2x16xf32>
    %1239 = arith.divf %1237, %1238 : vector<2x16xf32>
    %1240 = vector.extract_strided_slice %1226 {offsets = [0, 16], sizes = [2, 16], strides = [1, 1]} : vector<2x48xf32> to vector<2x16xf32>
    %1241 = vector.extract_strided_slice %1229 {offsets = [0, 16], sizes = [2, 16], strides = [1, 1]} : vector<2x48xf32> to vector<2x16xf32>
    %1242 = arith.addf %1240, %1241 : vector<2x16xf32>
    %1243 = arith.negf %1242 : vector<2x16xf32>
    %1244 = math.exp %1243 : vector<2x16xf32>
    %cst_160 = arith.constant 1.000000e+00 : f32
    %1245 = vector.broadcast %cst_160 : f32 to vector<2x16xf32>
    %1246 = arith.addf %1245, %1244 : vector<2x16xf32>
    %1247 = arith.divf %1245, %1246 : vector<2x16xf32>
    %1248 = vector.extract_strided_slice %1226 {offsets = [0, 32], sizes = [2, 16], strides = [1, 1]} : vector<2x48xf32> to vector<2x16xf32>
    %1249 = vector.extract_strided_slice %1229 {offsets = [0, 32], sizes = [2, 16], strides = [1, 1]} : vector<2x48xf32> to vector<2x16xf32>
    %1250 = vector.broadcast %1230 : vector<1x16xf32> to vector<2x16xf32>
    %1251 = arith.addf %1249, %1250 : vector<2x16xf32>
    %1252 = arith.mulf %1239, %1251 : vector<2x16xf32>
    %1253 = arith.addf %1248, %1252 : vector<2x16xf32>
    %1254 = math.tanh %1253 : vector<2x16xf32>
    %cst_161 = arith.constant 1.000000e+00 : f32
    %1255 = vector.broadcast %cst_161 : f32 to vector<2x16xf32>
    %1256 = arith.subf %1255, %1247 : vector<2x16xf32>
    %1257 = arith.mulf %1256, %1254 : vector<2x16xf32>
    %1258 = arith.mulf %1247, %1231 : vector<2x16xf32>
    %1259 = arith.addf %1257, %1258 : vector<2x16xf32>
    %1260 = vector.extract_strided_slice %1228 {offsets = [0, 48], sizes = [2, 48], strides = [1, 1]} : vector<2x96xf32> to vector<2x48xf32>
    %1261 = vector.extract_strided_slice %825 {offsets = [0, 16], sizes = [1, 16], strides = [1, 1]} : vector<1x32xf32> to vector<1x16xf32>
    %1262 = vector.extract_strided_slice %1225 {offsets = [0, 16], sizes = [2, 16], strides = [1, 1]} : vector<2x32xf32> to vector<2x16xf32>
    %1263 = vector.extract_strided_slice %1227 {offsets = [0, 0], sizes = [2, 16], strides = [1, 1]} : vector<2x48xf32> to vector<2x16xf32>
    %1264 = vector.extract_strided_slice %1260 {offsets = [0, 0], sizes = [2, 16], strides = [1, 1]} : vector<2x48xf32> to vector<2x16xf32>
    %1265 = arith.addf %1263, %1264 : vector<2x16xf32>
    %1266 = arith.negf %1265 : vector<2x16xf32>
    %1267 = math.exp %1266 : vector<2x16xf32>
    %cst_162 = arith.constant 1.000000e+00 : f32
    %1268 = vector.broadcast %cst_162 : f32 to vector<2x16xf32>
    %1269 = arith.addf %1268, %1267 : vector<2x16xf32>
    %1270 = arith.divf %1268, %1269 : vector<2x16xf32>
    %1271 = vector.extract_strided_slice %1227 {offsets = [0, 16], sizes = [2, 16], strides = [1, 1]} : vector<2x48xf32> to vector<2x16xf32>
    %1272 = vector.extract_strided_slice %1260 {offsets = [0, 16], sizes = [2, 16], strides = [1, 1]} : vector<2x48xf32> to vector<2x16xf32>
    %1273 = arith.addf %1271, %1272 : vector<2x16xf32>
    %1274 = arith.negf %1273 : vector<2x16xf32>
    %1275 = math.exp %1274 : vector<2x16xf32>
    %cst_163 = arith.constant 1.000000e+00 : f32
    %1276 = vector.broadcast %cst_163 : f32 to vector<2x16xf32>
    %1277 = arith.addf %1276, %1275 : vector<2x16xf32>
    %1278 = arith.divf %1276, %1277 : vector<2x16xf32>
    %1279 = vector.extract_strided_slice %1227 {offsets = [0, 32], sizes = [2, 16], strides = [1, 1]} : vector<2x48xf32> to vector<2x16xf32>
    %1280 = vector.extract_strided_slice %1260 {offsets = [0, 32], sizes = [2, 16], strides = [1, 1]} : vector<2x48xf32> to vector<2x16xf32>
    %1281 = vector.broadcast %1261 : vector<1x16xf32> to vector<2x16xf32>
    %1282 = arith.addf %1280, %1281 : vector<2x16xf32>
    %1283 = arith.mulf %1270, %1282 : vector<2x16xf32>
    %1284 = arith.addf %1279, %1283 : vector<2x16xf32>
    %1285 = math.tanh %1284 : vector<2x16xf32>
    %cst_164 = arith.constant 1.000000e+00 : f32
    %1286 = vector.broadcast %cst_164 : f32 to vector<2x16xf32>
    %1287 = arith.subf %1286, %1278 : vector<2x16xf32>
    %1288 = arith.mulf %1287, %1285 : vector<2x16xf32>
    %1289 = arith.mulf %1278, %1262 : vector<2x16xf32>
    %1290 = arith.addf %1288, %1289 : vector<2x16xf32>
    %1291 = tpu.concatenate %1259, %1290 in 1 : vector<2x16xf32>, vector<2x16xf32> -> vector<2x32xf32>
    %1292 = vector.extract_strided_slice %828 {offsets = [14, 0], sizes = [2, 48], strides = [1, 1]} : vector<16x96xf32> to vector<2x48xf32>
    %1293 = vector.extract_strided_slice %828 {offsets = [0, 48], sizes = [2, 48], strides = [1, 1]} : vector<16x96xf32> to vector<2x48xf32>
    %cst_165 = arith.constant dense<0.000000e+00> : vector<2x96xf32>
    %1294 = tpu.matmul %1291, %823, %cst_165 {dimension_numbers = #tpu.dot_dimension_numbers<[1], [0], [0], [1], [0, 0, 1, 1], [], []>} : vector<2x32xf32>, vector<32x96xf32>, vector<2x96xf32> -> vector<2x96xf32>
    %1295 = vector.extract_strided_slice %1294 {offsets = [0, 0], sizes = [2, 48], strides = [1, 1]} : vector<2x96xf32> to vector<2x48xf32>
    %1296 = vector.extract_strided_slice %825 {offsets = [0, 0], sizes = [1, 16], strides = [1, 1]} : vector<1x32xf32> to vector<1x16xf32>
    %1297 = vector.extract_strided_slice %1291 {offsets = [0, 0], sizes = [2, 16], strides = [1, 1]} : vector<2x32xf32> to vector<2x16xf32>
    %1298 = vector.extract_strided_slice %1292 {offsets = [0, 0], sizes = [2, 16], strides = [1, 1]} : vector<2x48xf32> to vector<2x16xf32>
    %1299 = vector.extract_strided_slice %1295 {offsets = [0, 0], sizes = [2, 16], strides = [1, 1]} : vector<2x48xf32> to vector<2x16xf32>
    %1300 = arith.addf %1298, %1299 : vector<2x16xf32>
    %1301 = arith.negf %1300 : vector<2x16xf32>
    %1302 = math.exp %1301 : vector<2x16xf32>
    %cst_166 = arith.constant 1.000000e+00 : f32
    %1303 = vector.broadcast %cst_166 : f32 to vector<2x16xf32>
    %1304 = arith.addf %1303, %1302 : vector<2x16xf32>
    %1305 = arith.divf %1303, %1304 : vector<2x16xf32>
    %1306 = vector.extract_strided_slice %1292 {offsets = [0, 16], sizes = [2, 16], strides = [1, 1]} : vector<2x48xf32> to vector<2x16xf32>
    %1307 = vector.extract_strided_slice %1295 {offsets = [0, 16], sizes = [2, 16], strides = [1, 1]} : vector<2x48xf32> to vector<2x16xf32>
    %1308 = arith.addf %1306, %1307 : vector<2x16xf32>
    %1309 = arith.negf %1308 : vector<2x16xf32>
    %1310 = math.exp %1309 : vector<2x16xf32>
    %cst_167 = arith.constant 1.000000e+00 : f32
    %1311 = vector.broadcast %cst_167 : f32 to vector<2x16xf32>
    %1312 = arith.addf %1311, %1310 : vector<2x16xf32>
    %1313 = arith.divf %1311, %1312 : vector<2x16xf32>
    %1314 = vector.extract_strided_slice %1292 {offsets = [0, 32], sizes = [2, 16], strides = [1, 1]} : vector<2x48xf32> to vector<2x16xf32>
    %1315 = vector.extract_strided_slice %1295 {offsets = [0, 32], sizes = [2, 16], strides = [1, 1]} : vector<2x48xf32> to vector<2x16xf32>
    %1316 = vector.broadcast %1296 : vector<1x16xf32> to vector<2x16xf32>
    %1317 = arith.addf %1315, %1316 : vector<2x16xf32>
    %1318 = arith.mulf %1305, %1317 : vector<2x16xf32>
    %1319 = arith.addf %1314, %1318 : vector<2x16xf32>
    %1320 = math.tanh %1319 : vector<2x16xf32>
    %cst_168 = arith.constant 1.000000e+00 : f32
    %1321 = vector.broadcast %cst_168 : f32 to vector<2x16xf32>
    %1322 = arith.subf %1321, %1313 : vector<2x16xf32>
    %1323 = arith.mulf %1322, %1320 : vector<2x16xf32>
    %1324 = arith.mulf %1313, %1297 : vector<2x16xf32>
    %1325 = arith.addf %1323, %1324 : vector<2x16xf32>
    %1326 = vector.extract_strided_slice %1294 {offsets = [0, 48], sizes = [2, 48], strides = [1, 1]} : vector<2x96xf32> to vector<2x48xf32>
    %1327 = vector.extract_strided_slice %825 {offsets = [0, 16], sizes = [1, 16], strides = [1, 1]} : vector<1x32xf32> to vector<1x16xf32>
    %1328 = vector.extract_strided_slice %1291 {offsets = [0, 16], sizes = [2, 16], strides = [1, 1]} : vector<2x32xf32> to vector<2x16xf32>
    %1329 = vector.extract_strided_slice %1293 {offsets = [0, 0], sizes = [2, 16], strides = [1, 1]} : vector<2x48xf32> to vector<2x16xf32>
    %1330 = vector.extract_strided_slice %1326 {offsets = [0, 0], sizes = [2, 16], strides = [1, 1]} : vector<2x48xf32> to vector<2x16xf32>
    %1331 = arith.addf %1329, %1330 : vector<2x16xf32>
    %1332 = arith.negf %1331 : vector<2x16xf32>
    %1333 = math.exp %1332 : vector<2x16xf32>
    %cst_169 = arith.constant 1.000000e+00 : f32
    %1334 = vector.broadcast %cst_169 : f32 to vector<2x16xf32>
    %1335 = arith.addf %1334, %1333 : vector<2x16xf32>
    %1336 = arith.divf %1334, %1335 : vector<2x16xf32>
    %1337 = vector.extract_strided_slice %1293 {offsets = [0, 16], sizes = [2, 16], strides = [1, 1]} : vector<2x48xf32> to vector<2x16xf32>
    %1338 = vector.extract_strided_slice %1326 {offsets = [0, 16], sizes = [2, 16], strides = [1, 1]} : vector<2x48xf32> to vector<2x16xf32>
    %1339 = arith.addf %1337, %1338 : vector<2x16xf32>
    %1340 = arith.negf %1339 : vector<2x16xf32>
    %1341 = math.exp %1340 : vector<2x16xf32>
    %cst_170 = arith.constant 1.000000e+00 : f32
    %1342 = vector.broadcast %cst_170 : f32 to vector<2x16xf32>
    %1343 = arith.addf %1342, %1341 : vector<2x16xf32>
    %1344 = arith.divf %1342, %1343 : vector<2x16xf32>
    %1345 = vector.extract_strided_slice %1293 {offsets = [0, 32], sizes = [2, 16], strides = [1, 1]} : vector<2x48xf32> to vector<2x16xf32>
    %1346 = vector.extract_strided_slice %1326 {offsets = [0, 32], sizes = [2, 16], strides = [1, 1]} : vector<2x48xf32> to vector<2x16xf32>
    %1347 = vector.broadcast %1327 : vector<1x16xf32> to vector<2x16xf32>
    %1348 = arith.addf %1346, %1347 : vector<2x16xf32>
    %1349 = arith.mulf %1336, %1348 : vector<2x16xf32>
    %1350 = arith.addf %1345, %1349 : vector<2x16xf32>
    %1351 = math.tanh %1350 : vector<2x16xf32>
    %cst_171 = arith.constant 1.000000e+00 : f32
    %1352 = vector.broadcast %cst_171 : f32 to vector<2x16xf32>
    %1353 = arith.subf %1352, %1344 : vector<2x16xf32>
    %1354 = arith.mulf %1353, %1351 : vector<2x16xf32>
    %1355 = arith.mulf %1344, %1328 : vector<2x16xf32>
    %1356 = arith.addf %1354, %1355 : vector<2x16xf32>
    %1357 = tpu.concatenate %863, %1356 in 1 : vector<2x16xf32>, vector<2x16xf32> -> vector<2x32xf32>
    %1358 = tpu.concatenate %929, %1290 in 1 : vector<2x16xf32>, vector<2x16xf32> -> vector<2x32xf32>
    %1359 = tpu.concatenate %995, %1224 in 1 : vector<2x16xf32>, vector<2x16xf32> -> vector<2x32xf32>
    %1360 = tpu.concatenate %1061, %1158 in 1 : vector<2x16xf32>, vector<2x16xf32> -> vector<2x32xf32>
    %1361 = tpu.concatenate %1127, %1092 in 1 : vector<2x16xf32>, vector<2x16xf32> -> vector<2x32xf32>
    %1362 = tpu.concatenate %1193, %1026 in 1 : vector<2x16xf32>, vector<2x16xf32> -> vector<2x32xf32>
    %1363 = tpu.concatenate %1259, %960 in 1 : vector<2x16xf32>, vector<2x16xf32> -> vector<2x32xf32>
    %1364 = tpu.concatenate %1325, %894 in 1 : vector<2x16xf32>, vector<2x16xf32> -> vector<2x32xf32>
    %1365 = tpu.concatenate %1357, %1358, %1359, %1360, %1361, %1362, %1363, %1364 in 0 : vector<2x32xf32>, vector<2x32xf32>, vector<2x32xf32>, vector<2x32xf32>, vector<2x32xf32>, vector<2x32xf32>, vector<2x32xf32>, vector<2x32xf32> -> vector<16x32xf32>
    %c0_172 = arith.constant 0 : index
    %c0_173 = arith.constant 0 : index
    %1366 = vector.load %arg15[%c0_172, %c0_173] : memref<32x96xf32, #tpu.memory_space<vmem>>, vector<32x96xf32>
    %c0_174 = arith.constant 0 : index
    %c0_175 = arith.constant 0 : index
    %1367 = vector.load %arg16[%c0_174, %c0_175] : memref<32x96xf32, #tpu.memory_space<vmem>>, vector<32x96xf32>
    %c0_176 = arith.constant 0 : index
    %c0_177 = arith.constant 0 : index
    %1368 = vector.load %arg17[%c0_176, %c0_177] : memref<1x96xf32, #tpu.memory_space<vmem>>, vector<1x96xf32>
    %c0_178 = arith.constant 0 : index
    %c0_179 = arith.constant 0 : index
    %1369 = vector.load %arg18[%c0_178, %c0_179] : memref<1x32xf32, #tpu.memory_space<vmem>>, vector<1x32xf32>
    %cst_180 = arith.constant dense<0.000000e+00> : vector<16x96xf32>
    %1370 = tpu.matmul %1365, %1366, %cst_180 {dimension_numbers = #tpu.dot_dimension_numbers<[1], [0], [0], [1], [0, 0, 1, 1], [], []>} : vector<16x32xf32>, vector<32x96xf32>, vector<16x96xf32> -> vector<16x96xf32>
    %1371 = vector.broadcast %1368 : vector<1x96xf32> to vector<16x96xf32>
    %1372 = arith.addf %1370, %1371 : vector<16x96xf32>
    %cst_181 = arith.constant 0.000000e+00 : f32
    %1373 = vector.broadcast %cst_181 : f32 to vector<2x32xf32>
    %1374 = vector.extract_strided_slice %1372 {offsets = [0, 0], sizes = [2, 48], strides = [1, 1]} : vector<16x96xf32> to vector<2x48xf32>
    %1375 = vector.extract_strided_slice %1372 {offsets = [14, 48], sizes = [2, 48], strides = [1, 1]} : vector<16x96xf32> to vector<2x48xf32>
    %cst_182 = arith.constant dense<0.000000e+00> : vector<2x96xf32>
    %1376 = tpu.matmul %1373, %1367, %cst_182 {dimension_numbers = #tpu.dot_dimension_numbers<[1], [0], [0], [1], [0, 0, 1, 1], [], []>} : vector<2x32xf32>, vector<32x96xf32>, vector<2x96xf32> -> vector<2x96xf32>
    %1377 = vector.extract_strided_slice %1376 {offsets = [0, 0], sizes = [2, 48], strides = [1, 1]} : vector<2x96xf32> to vector<2x48xf32>
    %1378 = vector.extract_strided_slice %1369 {offsets = [0, 0], sizes = [1, 16], strides = [1, 1]} : vector<1x32xf32> to vector<1x16xf32>
    %1379 = vector.extract_strided_slice %1373 {offsets = [0, 0], sizes = [2, 16], strides = [1, 1]} : vector<2x32xf32> to vector<2x16xf32>
    %1380 = vector.extract_strided_slice %1374 {offsets = [0, 0], sizes = [2, 16], strides = [1, 1]} : vector<2x48xf32> to vector<2x16xf32>
    %1381 = vector.extract_strided_slice %1377 {offsets = [0, 0], sizes = [2, 16], strides = [1, 1]} : vector<2x48xf32> to vector<2x16xf32>
    %1382 = arith.addf %1380, %1381 : vector<2x16xf32>
    %1383 = arith.negf %1382 : vector<2x16xf32>
    %1384 = math.exp %1383 : vector<2x16xf32>
    %cst_183 = arith.constant 1.000000e+00 : f32
    %1385 = vector.broadcast %cst_183 : f32 to vector<2x16xf32>
    %1386 = arith.addf %1385, %1384 : vector<2x16xf32>
    %1387 = arith.divf %1385, %1386 : vector<2x16xf32>
    %1388 = vector.extract_strided_slice %1374 {offsets = [0, 16], sizes = [2, 16], strides = [1, 1]} : vector<2x48xf32> to vector<2x16xf32>
    %1389 = vector.extract_strided_slice %1377 {offsets = [0, 16], sizes = [2, 16], strides = [1, 1]} : vector<2x48xf32> to vector<2x16xf32>
    %1390 = arith.addf %1388, %1389 : vector<2x16xf32>
    %1391 = arith.negf %1390 : vector<2x16xf32>
    %1392 = math.exp %1391 : vector<2x16xf32>
    %cst_184 = arith.constant 1.000000e+00 : f32
    %1393 = vector.broadcast %cst_184 : f32 to vector<2x16xf32>
    %1394 = arith.addf %1393, %1392 : vector<2x16xf32>
    %1395 = arith.divf %1393, %1394 : vector<2x16xf32>
    %1396 = vector.extract_strided_slice %1374 {offsets = [0, 32], sizes = [2, 16], strides = [1, 1]} : vector<2x48xf32> to vector<2x16xf32>
    %1397 = vector.extract_strided_slice %1377 {offsets = [0, 32], sizes = [2, 16], strides = [1, 1]} : vector<2x48xf32> to vector<2x16xf32>
    %1398 = vector.broadcast %1378 : vector<1x16xf32> to vector<2x16xf32>
    %1399 = arith.addf %1397, %1398 : vector<2x16xf32>
    %1400 = arith.mulf %1387, %1399 : vector<2x16xf32>
    %1401 = arith.addf %1396, %1400 : vector<2x16xf32>
    %1402 = math.tanh %1401 : vector<2x16xf32>
    %cst_185 = arith.constant 1.000000e+00 : f32
    %1403 = vector.broadcast %cst_185 : f32 to vector<2x16xf32>
    %1404 = arith.subf %1403, %1395 : vector<2x16xf32>
    %1405 = arith.mulf %1404, %1402 : vector<2x16xf32>
    %1406 = arith.mulf %1395, %1379 : vector<2x16xf32>
    %1407 = arith.addf %1405, %1406 : vector<2x16xf32>
    %1408 = vector.extract_strided_slice %1376 {offsets = [0, 48], sizes = [2, 48], strides = [1, 1]} : vector<2x96xf32> to vector<2x48xf32>
    %1409 = vector.extract_strided_slice %1369 {offsets = [0, 16], sizes = [1, 16], strides = [1, 1]} : vector<1x32xf32> to vector<1x16xf32>
    %1410 = vector.extract_strided_slice %1373 {offsets = [0, 16], sizes = [2, 16], strides = [1, 1]} : vector<2x32xf32> to vector<2x16xf32>
    %1411 = vector.extract_strided_slice %1375 {offsets = [0, 0], sizes = [2, 16], strides = [1, 1]} : vector<2x48xf32> to vector<2x16xf32>
    %1412 = vector.extract_strided_slice %1408 {offsets = [0, 0], sizes = [2, 16], strides = [1, 1]} : vector<2x48xf32> to vector<2x16xf32>
    %1413 = arith.addf %1411, %1412 : vector<2x16xf32>
    %1414 = arith.negf %1413 : vector<2x16xf32>
    %1415 = math.exp %1414 : vector<2x16xf32>
    %cst_186 = arith.constant 1.000000e+00 : f32
    %1416 = vector.broadcast %cst_186 : f32 to vector<2x16xf32>
    %1417 = arith.addf %1416, %1415 : vector<2x16xf32>
    %1418 = arith.divf %1416, %1417 : vector<2x16xf32>
    %1419 = vector.extract_strided_slice %1375 {offsets = [0, 16], sizes = [2, 16], strides = [1, 1]} : vector<2x48xf32> to vector<2x16xf32>
    %1420 = vector.extract_strided_slice %1408 {offsets = [0, 16], sizes = [2, 16], strides = [1, 1]} : vector<2x48xf32> to vector<2x16xf32>
    %1421 = arith.addf %1419, %1420 : vector<2x16xf32>
    %1422 = arith.negf %1421 : vector<2x16xf32>
    %1423 = math.exp %1422 : vector<2x16xf32>
    %cst_187 = arith.constant 1.000000e+00 : f32
    %1424 = vector.broadcast %cst_187 : f32 to vector<2x16xf32>
    %1425 = arith.addf %1424, %1423 : vector<2x16xf32>
    %1426 = arith.divf %1424, %1425 : vector<2x16xf32>
    %1427 = vector.extract_strided_slice %1375 {offsets = [0, 32], sizes = [2, 16], strides = [1, 1]} : vector<2x48xf32> to vector<2x16xf32>
    %1428 = vector.extract_strided_slice %1408 {offsets = [0, 32], sizes = [2, 16], strides = [1, 1]} : vector<2x48xf32> to vector<2x16xf32>
    %1429 = vector.broadcast %1409 : vector<1x16xf32> to vector<2x16xf32>
    %1430 = arith.addf %1428, %1429 : vector<2x16xf32>
    %1431 = arith.mulf %1418, %1430 : vector<2x16xf32>
    %1432 = arith.addf %1427, %1431 : vector<2x16xf32>
    %1433 = math.tanh %1432 : vector<2x16xf32>
    %cst_188 = arith.constant 1.000000e+00 : f32
    %1434 = vector.broadcast %cst_188 : f32 to vector<2x16xf32>
    %1435 = arith.subf %1434, %1426 : vector<2x16xf32>
    %1436 = arith.mulf %1435, %1433 : vector<2x16xf32>
    %1437 = arith.mulf %1426, %1410 : vector<2x16xf32>
    %1438 = arith.addf %1436, %1437 : vector<2x16xf32>
    %1439 = tpu.concatenate %1407, %1438 in 1 : vector<2x16xf32>, vector<2x16xf32> -> vector<2x32xf32>
    %1440 = vector.extract_strided_slice %1372 {offsets = [2, 0], sizes = [2, 48], strides = [1, 1]} : vector<16x96xf32> to vector<2x48xf32>
    %1441 = vector.extract_strided_slice %1372 {offsets = [12, 48], sizes = [2, 48], strides = [1, 1]} : vector<16x96xf32> to vector<2x48xf32>
    %cst_189 = arith.constant dense<0.000000e+00> : vector<2x96xf32>
    %1442 = tpu.matmul %1439, %1367, %cst_189 {dimension_numbers = #tpu.dot_dimension_numbers<[1], [0], [0], [1], [0, 0, 1, 1], [], []>} : vector<2x32xf32>, vector<32x96xf32>, vector<2x96xf32> -> vector<2x96xf32>
    %1443 = vector.extract_strided_slice %1442 {offsets = [0, 0], sizes = [2, 48], strides = [1, 1]} : vector<2x96xf32> to vector<2x48xf32>
    %1444 = vector.extract_strided_slice %1369 {offsets = [0, 0], sizes = [1, 16], strides = [1, 1]} : vector<1x32xf32> to vector<1x16xf32>
    %1445 = vector.extract_strided_slice %1439 {offsets = [0, 0], sizes = [2, 16], strides = [1, 1]} : vector<2x32xf32> to vector<2x16xf32>
    %1446 = vector.extract_strided_slice %1440 {offsets = [0, 0], sizes = [2, 16], strides = [1, 1]} : vector<2x48xf32> to vector<2x16xf32>
    %1447 = vector.extract_strided_slice %1443 {offsets = [0, 0], sizes = [2, 16], strides = [1, 1]} : vector<2x48xf32> to vector<2x16xf32>
    %1448 = arith.addf %1446, %1447 : vector<2x16xf32>
    %1449 = arith.negf %1448 : vector<2x16xf32>
    %1450 = math.exp %1449 : vector<2x16xf32>
    %cst_190 = arith.constant 1.000000e+00 : f32
    %1451 = vector.broadcast %cst_190 : f32 to vector<2x16xf32>
    %1452 = arith.addf %1451, %1450 : vector<2x16xf32>
    %1453 = arith.divf %1451, %1452 : vector<2x16xf32>
    %1454 = vector.extract_strided_slice %1440 {offsets = [0, 16], sizes = [2, 16], strides = [1, 1]} : vector<2x48xf32> to vector<2x16xf32>
    %1455 = vector.extract_strided_slice %1443 {offsets = [0, 16], sizes = [2, 16], strides = [1, 1]} : vector<2x48xf32> to vector<2x16xf32>
    %1456 = arith.addf %1454, %1455 : vector<2x16xf32>
    %1457 = arith.negf %1456 : vector<2x16xf32>
    %1458 = math.exp %1457 : vector<2x16xf32>
    %cst_191 = arith.constant 1.000000e+00 : f32
    %1459 = vector.broadcast %cst_191 : f32 to vector<2x16xf32>
    %1460 = arith.addf %1459, %1458 : vector<2x16xf32>
    %1461 = arith.divf %1459, %1460 : vector<2x16xf32>
    %1462 = vector.extract_strided_slice %1440 {offsets = [0, 32], sizes = [2, 16], strides = [1, 1]} : vector<2x48xf32> to vector<2x16xf32>
    %1463 = vector.extract_strided_slice %1443 {offsets = [0, 32], sizes = [2, 16], strides = [1, 1]} : vector<2x48xf32> to vector<2x16xf32>
    %1464 = vector.broadcast %1444 : vector<1x16xf32> to vector<2x16xf32>
    %1465 = arith.addf %1463, %1464 : vector<2x16xf32>
    %1466 = arith.mulf %1453, %1465 : vector<2x16xf32>
    %1467 = arith.addf %1462, %1466 : vector<2x16xf32>
    %1468 = math.tanh %1467 : vector<2x16xf32>
    %cst_192 = arith.constant 1.000000e+00 : f32
    %1469 = vector.broadcast %cst_192 : f32 to vector<2x16xf32>
    %1470 = arith.subf %1469, %1461 : vector<2x16xf32>
    %1471 = arith.mulf %1470, %1468 : vector<2x16xf32>
    %1472 = arith.mulf %1461, %1445 : vector<2x16xf32>
    %1473 = arith.addf %1471, %1472 : vector<2x16xf32>
    %1474 = vector.extract_strided_slice %1442 {offsets = [0, 48], sizes = [2, 48], strides = [1, 1]} : vector<2x96xf32> to vector<2x48xf32>
    %1475 = vector.extract_strided_slice %1369 {offsets = [0, 16], sizes = [1, 16], strides = [1, 1]} : vector<1x32xf32> to vector<1x16xf32>
    %1476 = vector.extract_strided_slice %1439 {offsets = [0, 16], sizes = [2, 16], strides = [1, 1]} : vector<2x32xf32> to vector<2x16xf32>
    %1477 = vector.extract_strided_slice %1441 {offsets = [0, 0], sizes = [2, 16], strides = [1, 1]} : vector<2x48xf32> to vector<2x16xf32>
    %1478 = vector.extract_strided_slice %1474 {offsets = [0, 0], sizes = [2, 16], strides = [1, 1]} : vector<2x48xf32> to vector<2x16xf32>
    %1479 = arith.addf %1477, %1478 : vector<2x16xf32>
    %1480 = arith.negf %1479 : vector<2x16xf32>
    %1481 = math.exp %1480 : vector<2x16xf32>
    %cst_193 = arith.constant 1.000000e+00 : f32
    %1482 = vector.broadcast %cst_193 : f32 to vector<2x16xf32>
    %1483 = arith.addf %1482, %1481 : vector<2x16xf32>
    %1484 = arith.divf %1482, %1483 : vector<2x16xf32>
    %1485 = vector.extract_strided_slice %1441 {offsets = [0, 16], sizes = [2, 16], strides = [1, 1]} : vector<2x48xf32> to vector<2x16xf32>
    %1486 = vector.extract_strided_slice %1474 {offsets = [0, 16], sizes = [2, 16], strides = [1, 1]} : vector<2x48xf32> to vector<2x16xf32>
    %1487 = arith.addf %1485, %1486 : vector<2x16xf32>
    %1488 = arith.negf %1487 : vector<2x16xf32>
    %1489 = math.exp %1488 : vector<2x16xf32>
    %cst_194 = arith.constant 1.000000e+00 : f32
    %1490 = vector.broadcast %cst_194 : f32 to vector<2x16xf32>
    %1491 = arith.addf %1490, %1489 : vector<2x16xf32>
    %1492 = arith.divf %1490, %1491 : vector<2x16xf32>
    %1493 = vector.extract_strided_slice %1441 {offsets = [0, 32], sizes = [2, 16], strides = [1, 1]} : vector<2x48xf32> to vector<2x16xf32>
    %1494 = vector.extract_strided_slice %1474 {offsets = [0, 32], sizes = [2, 16], strides = [1, 1]} : vector<2x48xf32> to vector<2x16xf32>
    %1495 = vector.broadcast %1475 : vector<1x16xf32> to vector<2x16xf32>
    %1496 = arith.addf %1494, %1495 : vector<2x16xf32>
    %1497 = arith.mulf %1484, %1496 : vector<2x16xf32>
    %1498 = arith.addf %1493, %1497 : vector<2x16xf32>
    %1499 = math.tanh %1498 : vector<2x16xf32>
    %cst_195 = arith.constant 1.000000e+00 : f32
    %1500 = vector.broadcast %cst_195 : f32 to vector<2x16xf32>
    %1501 = arith.subf %1500, %1492 : vector<2x16xf32>
    %1502 = arith.mulf %1501, %1499 : vector<2x16xf32>
    %1503 = arith.mulf %1492, %1476 : vector<2x16xf32>
    %1504 = arith.addf %1502, %1503 : vector<2x16xf32>
    %1505 = tpu.concatenate %1473, %1504 in 1 : vector<2x16xf32>, vector<2x16xf32> -> vector<2x32xf32>
    %1506 = vector.extract_strided_slice %1372 {offsets = [4, 0], sizes = [2, 48], strides = [1, 1]} : vector<16x96xf32> to vector<2x48xf32>
    %1507 = vector.extract_strided_slice %1372 {offsets = [10, 48], sizes = [2, 48], strides = [1, 1]} : vector<16x96xf32> to vector<2x48xf32>
    %cst_196 = arith.constant dense<0.000000e+00> : vector<2x96xf32>
    %1508 = tpu.matmul %1505, %1367, %cst_196 {dimension_numbers = #tpu.dot_dimension_numbers<[1], [0], [0], [1], [0, 0, 1, 1], [], []>} : vector<2x32xf32>, vector<32x96xf32>, vector<2x96xf32> -> vector<2x96xf32>
    %1509 = vector.extract_strided_slice %1508 {offsets = [0, 0], sizes = [2, 48], strides = [1, 1]} : vector<2x96xf32> to vector<2x48xf32>
    %1510 = vector.extract_strided_slice %1369 {offsets = [0, 0], sizes = [1, 16], strides = [1, 1]} : vector<1x32xf32> to vector<1x16xf32>
    %1511 = vector.extract_strided_slice %1505 {offsets = [0, 0], sizes = [2, 16], strides = [1, 1]} : vector<2x32xf32> to vector<2x16xf32>
    %1512 = vector.extract_strided_slice %1506 {offsets = [0, 0], sizes = [2, 16], strides = [1, 1]} : vector<2x48xf32> to vector<2x16xf32>
    %1513 = vector.extract_strided_slice %1509 {offsets = [0, 0], sizes = [2, 16], strides = [1, 1]} : vector<2x48xf32> to vector<2x16xf32>
    %1514 = arith.addf %1512, %1513 : vector<2x16xf32>
    %1515 = arith.negf %1514 : vector<2x16xf32>
    %1516 = math.exp %1515 : vector<2x16xf32>
    %cst_197 = arith.constant 1.000000e+00 : f32
    %1517 = vector.broadcast %cst_197 : f32 to vector<2x16xf32>
    %1518 = arith.addf %1517, %1516 : vector<2x16xf32>
    %1519 = arith.divf %1517, %1518 : vector<2x16xf32>
    %1520 = vector.extract_strided_slice %1506 {offsets = [0, 16], sizes = [2, 16], strides = [1, 1]} : vector<2x48xf32> to vector<2x16xf32>
    %1521 = vector.extract_strided_slice %1509 {offsets = [0, 16], sizes = [2, 16], strides = [1, 1]} : vector<2x48xf32> to vector<2x16xf32>
    %1522 = arith.addf %1520, %1521 : vector<2x16xf32>
    %1523 = arith.negf %1522 : vector<2x16xf32>
    %1524 = math.exp %1523 : vector<2x16xf32>
    %cst_198 = arith.constant 1.000000e+00 : f32
    %1525 = vector.broadcast %cst_198 : f32 to vector<2x16xf32>
    %1526 = arith.addf %1525, %1524 : vector<2x16xf32>
    %1527 = arith.divf %1525, %1526 : vector<2x16xf32>
    %1528 = vector.extract_strided_slice %1506 {offsets = [0, 32], sizes = [2, 16], strides = [1, 1]} : vector<2x48xf32> to vector<2x16xf32>
    %1529 = vector.extract_strided_slice %1509 {offsets = [0, 32], sizes = [2, 16], strides = [1, 1]} : vector<2x48xf32> to vector<2x16xf32>
    %1530 = vector.broadcast %1510 : vector<1x16xf32> to vector<2x16xf32>
    %1531 = arith.addf %1529, %1530 : vector<2x16xf32>
    %1532 = arith.mulf %1519, %1531 : vector<2x16xf32>
    %1533 = arith.addf %1528, %1532 : vector<2x16xf32>
    %1534 = math.tanh %1533 : vector<2x16xf32>
    %cst_199 = arith.constant 1.000000e+00 : f32
    %1535 = vector.broadcast %cst_199 : f32 to vector<2x16xf32>
    %1536 = arith.subf %1535, %1527 : vector<2x16xf32>
    %1537 = arith.mulf %1536, %1534 : vector<2x16xf32>
    %1538 = arith.mulf %1527, %1511 : vector<2x16xf32>
    %1539 = arith.addf %1537, %1538 : vector<2x16xf32>
    %1540 = vector.extract_strided_slice %1508 {offsets = [0, 48], sizes = [2, 48], strides = [1, 1]} : vector<2x96xf32> to vector<2x48xf32>
    %1541 = vector.extract_strided_slice %1369 {offsets = [0, 16], sizes = [1, 16], strides = [1, 1]} : vector<1x32xf32> to vector<1x16xf32>
    %1542 = vector.extract_strided_slice %1505 {offsets = [0, 16], sizes = [2, 16], strides = [1, 1]} : vector<2x32xf32> to vector<2x16xf32>
    %1543 = vector.extract_strided_slice %1507 {offsets = [0, 0], sizes = [2, 16], strides = [1, 1]} : vector<2x48xf32> to vector<2x16xf32>
    %1544 = vector.extract_strided_slice %1540 {offsets = [0, 0], sizes = [2, 16], strides = [1, 1]} : vector<2x48xf32> to vector<2x16xf32>
    %1545 = arith.addf %1543, %1544 : vector<2x16xf32>
    %1546 = arith.negf %1545 : vector<2x16xf32>
    %1547 = math.exp %1546 : vector<2x16xf32>
    %cst_200 = arith.constant 1.000000e+00 : f32
    %1548 = vector.broadcast %cst_200 : f32 to vector<2x16xf32>
    %1549 = arith.addf %1548, %1547 : vector<2x16xf32>
    %1550 = arith.divf %1548, %1549 : vector<2x16xf32>
    %1551 = vector.extract_strided_slice %1507 {offsets = [0, 16], sizes = [2, 16], strides = [1, 1]} : vector<2x48xf32> to vector<2x16xf32>
    %1552 = vector.extract_strided_slice %1540 {offsets = [0, 16], sizes = [2, 16], strides = [1, 1]} : vector<2x48xf32> to vector<2x16xf32>
    %1553 = arith.addf %1551, %1552 : vector<2x16xf32>
    %1554 = arith.negf %1553 : vector<2x16xf32>
    %1555 = math.exp %1554 : vector<2x16xf32>
    %cst_201 = arith.constant 1.000000e+00 : f32
    %1556 = vector.broadcast %cst_201 : f32 to vector<2x16xf32>
    %1557 = arith.addf %1556, %1555 : vector<2x16xf32>
    %1558 = arith.divf %1556, %1557 : vector<2x16xf32>
    %1559 = vector.extract_strided_slice %1507 {offsets = [0, 32], sizes = [2, 16], strides = [1, 1]} : vector<2x48xf32> to vector<2x16xf32>
    %1560 = vector.extract_strided_slice %1540 {offsets = [0, 32], sizes = [2, 16], strides = [1, 1]} : vector<2x48xf32> to vector<2x16xf32>
    %1561 = vector.broadcast %1541 : vector<1x16xf32> to vector<2x16xf32>
    %1562 = arith.addf %1560, %1561 : vector<2x16xf32>
    %1563 = arith.mulf %1550, %1562 : vector<2x16xf32>
    %1564 = arith.addf %1559, %1563 : vector<2x16xf32>
    %1565 = math.tanh %1564 : vector<2x16xf32>
    %cst_202 = arith.constant 1.000000e+00 : f32
    %1566 = vector.broadcast %cst_202 : f32 to vector<2x16xf32>
    %1567 = arith.subf %1566, %1558 : vector<2x16xf32>
    %1568 = arith.mulf %1567, %1565 : vector<2x16xf32>
    %1569 = arith.mulf %1558, %1542 : vector<2x16xf32>
    %1570 = arith.addf %1568, %1569 : vector<2x16xf32>
    %1571 = tpu.concatenate %1539, %1570 in 1 : vector<2x16xf32>, vector<2x16xf32> -> vector<2x32xf32>
    %1572 = vector.extract_strided_slice %1372 {offsets = [6, 0], sizes = [2, 48], strides = [1, 1]} : vector<16x96xf32> to vector<2x48xf32>
    %1573 = vector.extract_strided_slice %1372 {offsets = [8, 48], sizes = [2, 48], strides = [1, 1]} : vector<16x96xf32> to vector<2x48xf32>
    %cst_203 = arith.constant dense<0.000000e+00> : vector<2x96xf32>
    %1574 = tpu.matmul %1571, %1367, %cst_203 {dimension_numbers = #tpu.dot_dimension_numbers<[1], [0], [0], [1], [0, 0, 1, 1], [], []>} : vector<2x32xf32>, vector<32x96xf32>, vector<2x96xf32> -> vector<2x96xf32>
    %1575 = vector.extract_strided_slice %1574 {offsets = [0, 0], sizes = [2, 48], strides = [1, 1]} : vector<2x96xf32> to vector<2x48xf32>
    %1576 = vector.extract_strided_slice %1369 {offsets = [0, 0], sizes = [1, 16], strides = [1, 1]} : vector<1x32xf32> to vector<1x16xf32>
    %1577 = vector.extract_strided_slice %1571 {offsets = [0, 0], sizes = [2, 16], strides = [1, 1]} : vector<2x32xf32> to vector<2x16xf32>
    %1578 = vector.extract_strided_slice %1572 {offsets = [0, 0], sizes = [2, 16], strides = [1, 1]} : vector<2x48xf32> to vector<2x16xf32>
    %1579 = vector.extract_strided_slice %1575 {offsets = [0, 0], sizes = [2, 16], strides = [1, 1]} : vector<2x48xf32> to vector<2x16xf32>
    %1580 = arith.addf %1578, %1579 : vector<2x16xf32>
    %1581 = arith.negf %1580 : vector<2x16xf32>
    %1582 = math.exp %1581 : vector<2x16xf32>
    %cst_204 = arith.constant 1.000000e+00 : f32
    %1583 = vector.broadcast %cst_204 : f32 to vector<2x16xf32>
    %1584 = arith.addf %1583, %1582 : vector<2x16xf32>
    %1585 = arith.divf %1583, %1584 : vector<2x16xf32>
    %1586 = vector.extract_strided_slice %1572 {offsets = [0, 16], sizes = [2, 16], strides = [1, 1]} : vector<2x48xf32> to vector<2x16xf32>
    %1587 = vector.extract_strided_slice %1575 {offsets = [0, 16], sizes = [2, 16], strides = [1, 1]} : vector<2x48xf32> to vector<2x16xf32>
    %1588 = arith.addf %1586, %1587 : vector<2x16xf32>
    %1589 = arith.negf %1588 : vector<2x16xf32>
    %1590 = math.exp %1589 : vector<2x16xf32>
    %cst_205 = arith.constant 1.000000e+00 : f32
    %1591 = vector.broadcast %cst_205 : f32 to vector<2x16xf32>
    %1592 = arith.addf %1591, %1590 : vector<2x16xf32>
    %1593 = arith.divf %1591, %1592 : vector<2x16xf32>
    %1594 = vector.extract_strided_slice %1572 {offsets = [0, 32], sizes = [2, 16], strides = [1, 1]} : vector<2x48xf32> to vector<2x16xf32>
    %1595 = vector.extract_strided_slice %1575 {offsets = [0, 32], sizes = [2, 16], strides = [1, 1]} : vector<2x48xf32> to vector<2x16xf32>
    %1596 = vector.broadcast %1576 : vector<1x16xf32> to vector<2x16xf32>
    %1597 = arith.addf %1595, %1596 : vector<2x16xf32>
    %1598 = arith.mulf %1585, %1597 : vector<2x16xf32>
    %1599 = arith.addf %1594, %1598 : vector<2x16xf32>
    %1600 = math.tanh %1599 : vector<2x16xf32>
    %cst_206 = arith.constant 1.000000e+00 : f32
    %1601 = vector.broadcast %cst_206 : f32 to vector<2x16xf32>
    %1602 = arith.subf %1601, %1593 : vector<2x16xf32>
    %1603 = arith.mulf %1602, %1600 : vector<2x16xf32>
    %1604 = arith.mulf %1593, %1577 : vector<2x16xf32>
    %1605 = arith.addf %1603, %1604 : vector<2x16xf32>
    %1606 = vector.extract_strided_slice %1574 {offsets = [0, 48], sizes = [2, 48], strides = [1, 1]} : vector<2x96xf32> to vector<2x48xf32>
    %1607 = vector.extract_strided_slice %1369 {offsets = [0, 16], sizes = [1, 16], strides = [1, 1]} : vector<1x32xf32> to vector<1x16xf32>
    %1608 = vector.extract_strided_slice %1571 {offsets = [0, 16], sizes = [2, 16], strides = [1, 1]} : vector<2x32xf32> to vector<2x16xf32>
    %1609 = vector.extract_strided_slice %1573 {offsets = [0, 0], sizes = [2, 16], strides = [1, 1]} : vector<2x48xf32> to vector<2x16xf32>
    %1610 = vector.extract_strided_slice %1606 {offsets = [0, 0], sizes = [2, 16], strides = [1, 1]} : vector<2x48xf32> to vector<2x16xf32>
    %1611 = arith.addf %1609, %1610 : vector<2x16xf32>
    %1612 = arith.negf %1611 : vector<2x16xf32>
    %1613 = math.exp %1612 : vector<2x16xf32>
    %cst_207 = arith.constant 1.000000e+00 : f32
    %1614 = vector.broadcast %cst_207 : f32 to vector<2x16xf32>
    %1615 = arith.addf %1614, %1613 : vector<2x16xf32>
    %1616 = arith.divf %1614, %1615 : vector<2x16xf32>
    %1617 = vector.extract_strided_slice %1573 {offsets = [0, 16], sizes = [2, 16], strides = [1, 1]} : vector<2x48xf32> to vector<2x16xf32>
    %1618 = vector.extract_strided_slice %1606 {offsets = [0, 16], sizes = [2, 16], strides = [1, 1]} : vector<2x48xf32> to vector<2x16xf32>
    %1619 = arith.addf %1617, %1618 : vector<2x16xf32>
    %1620 = arith.negf %1619 : vector<2x16xf32>
    %1621 = math.exp %1620 : vector<2x16xf32>
    %cst_208 = arith.constant 1.000000e+00 : f32
    %1622 = vector.broadcast %cst_208 : f32 to vector<2x16xf32>
    %1623 = arith.addf %1622, %1621 : vector<2x16xf32>
    %1624 = arith.divf %1622, %1623 : vector<2x16xf32>
    %1625 = vector.extract_strided_slice %1573 {offsets = [0, 32], sizes = [2, 16], strides = [1, 1]} : vector<2x48xf32> to vector<2x16xf32>
    %1626 = vector.extract_strided_slice %1606 {offsets = [0, 32], sizes = [2, 16], strides = [1, 1]} : vector<2x48xf32> to vector<2x16xf32>
    %1627 = vector.broadcast %1607 : vector<1x16xf32> to vector<2x16xf32>
    %1628 = arith.addf %1626, %1627 : vector<2x16xf32>
    %1629 = arith.mulf %1616, %1628 : vector<2x16xf32>
    %1630 = arith.addf %1625, %1629 : vector<2x16xf32>
    %1631 = math.tanh %1630 : vector<2x16xf32>
    %cst_209 = arith.constant 1.000000e+00 : f32
    %1632 = vector.broadcast %cst_209 : f32 to vector<2x16xf32>
    %1633 = arith.subf %1632, %1624 : vector<2x16xf32>
    %1634 = arith.mulf %1633, %1631 : vector<2x16xf32>
    %1635 = arith.mulf %1624, %1608 : vector<2x16xf32>
    %1636 = arith.addf %1634, %1635 : vector<2x16xf32>
    %1637 = tpu.concatenate %1605, %1636 in 1 : vector<2x16xf32>, vector<2x16xf32> -> vector<2x32xf32>
    %1638 = vector.extract_strided_slice %1372 {offsets = [8, 0], sizes = [2, 48], strides = [1, 1]} : vector<16x96xf32> to vector<2x48xf32>
    %1639 = vector.extract_strided_slice %1372 {offsets = [6, 48], sizes = [2, 48], strides = [1, 1]} : vector<16x96xf32> to vector<2x48xf32>
    %cst_210 = arith.constant dense<0.000000e+00> : vector<2x96xf32>
    %1640 = tpu.matmul %1637, %1367, %cst_210 {dimension_numbers = #tpu.dot_dimension_numbers<[1], [0], [0], [1], [0, 0, 1, 1], [], []>} : vector<2x32xf32>, vector<32x96xf32>, vector<2x96xf32> -> vector<2x96xf32>
    %1641 = vector.extract_strided_slice %1640 {offsets = [0, 0], sizes = [2, 48], strides = [1, 1]} : vector<2x96xf32> to vector<2x48xf32>
    %1642 = vector.extract_strided_slice %1369 {offsets = [0, 0], sizes = [1, 16], strides = [1, 1]} : vector<1x32xf32> to vector<1x16xf32>
    %1643 = vector.extract_strided_slice %1637 {offsets = [0, 0], sizes = [2, 16], strides = [1, 1]} : vector<2x32xf32> to vector<2x16xf32>
    %1644 = vector.extract_strided_slice %1638 {offsets = [0, 0], sizes = [2, 16], strides = [1, 1]} : vector<2x48xf32> to vector<2x16xf32>
    %1645 = vector.extract_strided_slice %1641 {offsets = [0, 0], sizes = [2, 16], strides = [1, 1]} : vector<2x48xf32> to vector<2x16xf32>
    %1646 = arith.addf %1644, %1645 : vector<2x16xf32>
    %1647 = arith.negf %1646 : vector<2x16xf32>
    %1648 = math.exp %1647 : vector<2x16xf32>
    %cst_211 = arith.constant 1.000000e+00 : f32
    %1649 = vector.broadcast %cst_211 : f32 to vector<2x16xf32>
    %1650 = arith.addf %1649, %1648 : vector<2x16xf32>
    %1651 = arith.divf %1649, %1650 : vector<2x16xf32>
    %1652 = vector.extract_strided_slice %1638 {offsets = [0, 16], sizes = [2, 16], strides = [1, 1]} : vector<2x48xf32> to vector<2x16xf32>
    %1653 = vector.extract_strided_slice %1641 {offsets = [0, 16], sizes = [2, 16], strides = [1, 1]} : vector<2x48xf32> to vector<2x16xf32>
    %1654 = arith.addf %1652, %1653 : vector<2x16xf32>
    %1655 = arith.negf %1654 : vector<2x16xf32>
    %1656 = math.exp %1655 : vector<2x16xf32>
    %cst_212 = arith.constant 1.000000e+00 : f32
    %1657 = vector.broadcast %cst_212 : f32 to vector<2x16xf32>
    %1658 = arith.addf %1657, %1656 : vector<2x16xf32>
    %1659 = arith.divf %1657, %1658 : vector<2x16xf32>
    %1660 = vector.extract_strided_slice %1638 {offsets = [0, 32], sizes = [2, 16], strides = [1, 1]} : vector<2x48xf32> to vector<2x16xf32>
    %1661 = vector.extract_strided_slice %1641 {offsets = [0, 32], sizes = [2, 16], strides = [1, 1]} : vector<2x48xf32> to vector<2x16xf32>
    %1662 = vector.broadcast %1642 : vector<1x16xf32> to vector<2x16xf32>
    %1663 = arith.addf %1661, %1662 : vector<2x16xf32>
    %1664 = arith.mulf %1651, %1663 : vector<2x16xf32>
    %1665 = arith.addf %1660, %1664 : vector<2x16xf32>
    %1666 = math.tanh %1665 : vector<2x16xf32>
    %cst_213 = arith.constant 1.000000e+00 : f32
    %1667 = vector.broadcast %cst_213 : f32 to vector<2x16xf32>
    %1668 = arith.subf %1667, %1659 : vector<2x16xf32>
    %1669 = arith.mulf %1668, %1666 : vector<2x16xf32>
    %1670 = arith.mulf %1659, %1643 : vector<2x16xf32>
    %1671 = arith.addf %1669, %1670 : vector<2x16xf32>
    %1672 = vector.extract_strided_slice %1640 {offsets = [0, 48], sizes = [2, 48], strides = [1, 1]} : vector<2x96xf32> to vector<2x48xf32>
    %1673 = vector.extract_strided_slice %1369 {offsets = [0, 16], sizes = [1, 16], strides = [1, 1]} : vector<1x32xf32> to vector<1x16xf32>
    %1674 = vector.extract_strided_slice %1637 {offsets = [0, 16], sizes = [2, 16], strides = [1, 1]} : vector<2x32xf32> to vector<2x16xf32>
    %1675 = vector.extract_strided_slice %1639 {offsets = [0, 0], sizes = [2, 16], strides = [1, 1]} : vector<2x48xf32> to vector<2x16xf32>
    %1676 = vector.extract_strided_slice %1672 {offsets = [0, 0], sizes = [2, 16], strides = [1, 1]} : vector<2x48xf32> to vector<2x16xf32>
    %1677 = arith.addf %1675, %1676 : vector<2x16xf32>
    %1678 = arith.negf %1677 : vector<2x16xf32>
    %1679 = math.exp %1678 : vector<2x16xf32>
    %cst_214 = arith.constant 1.000000e+00 : f32
    %1680 = vector.broadcast %cst_214 : f32 to vector<2x16xf32>
    %1681 = arith.addf %1680, %1679 : vector<2x16xf32>
    %1682 = arith.divf %1680, %1681 : vector<2x16xf32>
    %1683 = vector.extract_strided_slice %1639 {offsets = [0, 16], sizes = [2, 16], strides = [1, 1]} : vector<2x48xf32> to vector<2x16xf32>
    %1684 = vector.extract_strided_slice %1672 {offsets = [0, 16], sizes = [2, 16], strides = [1, 1]} : vector<2x48xf32> to vector<2x16xf32>
    %1685 = arith.addf %1683, %1684 : vector<2x16xf32>
    %1686 = arith.negf %1685 : vector<2x16xf32>
    %1687 = math.exp %1686 : vector<2x16xf32>
    %cst_215 = arith.constant 1.000000e+00 : f32
    %1688 = vector.broadcast %cst_215 : f32 to vector<2x16xf32>
    %1689 = arith.addf %1688, %1687 : vector<2x16xf32>
    %1690 = arith.divf %1688, %1689 : vector<2x16xf32>
    %1691 = vector.extract_strided_slice %1639 {offsets = [0, 32], sizes = [2, 16], strides = [1, 1]} : vector<2x48xf32> to vector<2x16xf32>
    %1692 = vector.extract_strided_slice %1672 {offsets = [0, 32], sizes = [2, 16], strides = [1, 1]} : vector<2x48xf32> to vector<2x16xf32>
    %1693 = vector.broadcast %1673 : vector<1x16xf32> to vector<2x16xf32>
    %1694 = arith.addf %1692, %1693 : vector<2x16xf32>
    %1695 = arith.mulf %1682, %1694 : vector<2x16xf32>
    %1696 = arith.addf %1691, %1695 : vector<2x16xf32>
    %1697 = math.tanh %1696 : vector<2x16xf32>
    %cst_216 = arith.constant 1.000000e+00 : f32
    %1698 = vector.broadcast %cst_216 : f32 to vector<2x16xf32>
    %1699 = arith.subf %1698, %1690 : vector<2x16xf32>
    %1700 = arith.mulf %1699, %1697 : vector<2x16xf32>
    %1701 = arith.mulf %1690, %1674 : vector<2x16xf32>
    %1702 = arith.addf %1700, %1701 : vector<2x16xf32>
    %1703 = tpu.concatenate %1671, %1702 in 1 : vector<2x16xf32>, vector<2x16xf32> -> vector<2x32xf32>
    %1704 = vector.extract_strided_slice %1372 {offsets = [10, 0], sizes = [2, 48], strides = [1, 1]} : vector<16x96xf32> to vector<2x48xf32>
    %1705 = vector.extract_strided_slice %1372 {offsets = [4, 48], sizes = [2, 48], strides = [1, 1]} : vector<16x96xf32> to vector<2x48xf32>
    %cst_217 = arith.constant dense<0.000000e+00> : vector<2x96xf32>
    %1706 = tpu.matmul %1703, %1367, %cst_217 {dimension_numbers = #tpu.dot_dimension_numbers<[1], [0], [0], [1], [0, 0, 1, 1], [], []>} : vector<2x32xf32>, vector<32x96xf32>, vector<2x96xf32> -> vector<2x96xf32>
    %1707 = vector.extract_strided_slice %1706 {offsets = [0, 0], sizes = [2, 48], strides = [1, 1]} : vector<2x96xf32> to vector<2x48xf32>
    %1708 = vector.extract_strided_slice %1369 {offsets = [0, 0], sizes = [1, 16], strides = [1, 1]} : vector<1x32xf32> to vector<1x16xf32>
    %1709 = vector.extract_strided_slice %1703 {offsets = [0, 0], sizes = [2, 16], strides = [1, 1]} : vector<2x32xf32> to vector<2x16xf32>
    %1710 = vector.extract_strided_slice %1704 {offsets = [0, 0], sizes = [2, 16], strides = [1, 1]} : vector<2x48xf32> to vector<2x16xf32>
    %1711 = vector.extract_strided_slice %1707 {offsets = [0, 0], sizes = [2, 16], strides = [1, 1]} : vector<2x48xf32> to vector<2x16xf32>
    %1712 = arith.addf %1710, %1711 : vector<2x16xf32>
    %1713 = arith.negf %1712 : vector<2x16xf32>
    %1714 = math.exp %1713 : vector<2x16xf32>
    %cst_218 = arith.constant 1.000000e+00 : f32
    %1715 = vector.broadcast %cst_218 : f32 to vector<2x16xf32>
    %1716 = arith.addf %1715, %1714 : vector<2x16xf32>
    %1717 = arith.divf %1715, %1716 : vector<2x16xf32>
    %1718 = vector.extract_strided_slice %1704 {offsets = [0, 16], sizes = [2, 16], strides = [1, 1]} : vector<2x48xf32> to vector<2x16xf32>
    %1719 = vector.extract_strided_slice %1707 {offsets = [0, 16], sizes = [2, 16], strides = [1, 1]} : vector<2x48xf32> to vector<2x16xf32>
    %1720 = arith.addf %1718, %1719 : vector<2x16xf32>
    %1721 = arith.negf %1720 : vector<2x16xf32>
    %1722 = math.exp %1721 : vector<2x16xf32>
    %cst_219 = arith.constant 1.000000e+00 : f32
    %1723 = vector.broadcast %cst_219 : f32 to vector<2x16xf32>
    %1724 = arith.addf %1723, %1722 : vector<2x16xf32>
    %1725 = arith.divf %1723, %1724 : vector<2x16xf32>
    %1726 = vector.extract_strided_slice %1704 {offsets = [0, 32], sizes = [2, 16], strides = [1, 1]} : vector<2x48xf32> to vector<2x16xf32>
    %1727 = vector.extract_strided_slice %1707 {offsets = [0, 32], sizes = [2, 16], strides = [1, 1]} : vector<2x48xf32> to vector<2x16xf32>
    %1728 = vector.broadcast %1708 : vector<1x16xf32> to vector<2x16xf32>
    %1729 = arith.addf %1727, %1728 : vector<2x16xf32>
    %1730 = arith.mulf %1717, %1729 : vector<2x16xf32>
    %1731 = arith.addf %1726, %1730 : vector<2x16xf32>
    %1732 = math.tanh %1731 : vector<2x16xf32>
    %cst_220 = arith.constant 1.000000e+00 : f32
    %1733 = vector.broadcast %cst_220 : f32 to vector<2x16xf32>
    %1734 = arith.subf %1733, %1725 : vector<2x16xf32>
    %1735 = arith.mulf %1734, %1732 : vector<2x16xf32>
    %1736 = arith.mulf %1725, %1709 : vector<2x16xf32>
    %1737 = arith.addf %1735, %1736 : vector<2x16xf32>
    %1738 = vector.extract_strided_slice %1706 {offsets = [0, 48], sizes = [2, 48], strides = [1, 1]} : vector<2x96xf32> to vector<2x48xf32>
    %1739 = vector.extract_strided_slice %1369 {offsets = [0, 16], sizes = [1, 16], strides = [1, 1]} : vector<1x32xf32> to vector<1x16xf32>
    %1740 = vector.extract_strided_slice %1703 {offsets = [0, 16], sizes = [2, 16], strides = [1, 1]} : vector<2x32xf32> to vector<2x16xf32>
    %1741 = vector.extract_strided_slice %1705 {offsets = [0, 0], sizes = [2, 16], strides = [1, 1]} : vector<2x48xf32> to vector<2x16xf32>
    %1742 = vector.extract_strided_slice %1738 {offsets = [0, 0], sizes = [2, 16], strides = [1, 1]} : vector<2x48xf32> to vector<2x16xf32>
    %1743 = arith.addf %1741, %1742 : vector<2x16xf32>
    %1744 = arith.negf %1743 : vector<2x16xf32>
    %1745 = math.exp %1744 : vector<2x16xf32>
    %cst_221 = arith.constant 1.000000e+00 : f32
    %1746 = vector.broadcast %cst_221 : f32 to vector<2x16xf32>
    %1747 = arith.addf %1746, %1745 : vector<2x16xf32>
    %1748 = arith.divf %1746, %1747 : vector<2x16xf32>
    %1749 = vector.extract_strided_slice %1705 {offsets = [0, 16], sizes = [2, 16], strides = [1, 1]} : vector<2x48xf32> to vector<2x16xf32>
    %1750 = vector.extract_strided_slice %1738 {offsets = [0, 16], sizes = [2, 16], strides = [1, 1]} : vector<2x48xf32> to vector<2x16xf32>
    %1751 = arith.addf %1749, %1750 : vector<2x16xf32>
    %1752 = arith.negf %1751 : vector<2x16xf32>
    %1753 = math.exp %1752 : vector<2x16xf32>
    %cst_222 = arith.constant 1.000000e+00 : f32
    %1754 = vector.broadcast %cst_222 : f32 to vector<2x16xf32>
    %1755 = arith.addf %1754, %1753 : vector<2x16xf32>
    %1756 = arith.divf %1754, %1755 : vector<2x16xf32>
    %1757 = vector.extract_strided_slice %1705 {offsets = [0, 32], sizes = [2, 16], strides = [1, 1]} : vector<2x48xf32> to vector<2x16xf32>
    %1758 = vector.extract_strided_slice %1738 {offsets = [0, 32], sizes = [2, 16], strides = [1, 1]} : vector<2x48xf32> to vector<2x16xf32>
    %1759 = vector.broadcast %1739 : vector<1x16xf32> to vector<2x16xf32>
    %1760 = arith.addf %1758, %1759 : vector<2x16xf32>
    %1761 = arith.mulf %1748, %1760 : vector<2x16xf32>
    %1762 = arith.addf %1757, %1761 : vector<2x16xf32>
    %1763 = math.tanh %1762 : vector<2x16xf32>
    %cst_223 = arith.constant 1.000000e+00 : f32
    %1764 = vector.broadcast %cst_223 : f32 to vector<2x16xf32>
    %1765 = arith.subf %1764, %1756 : vector<2x16xf32>
    %1766 = arith.mulf %1765, %1763 : vector<2x16xf32>
    %1767 = arith.mulf %1756, %1740 : vector<2x16xf32>
    %1768 = arith.addf %1766, %1767 : vector<2x16xf32>
    %1769 = tpu.concatenate %1737, %1768 in 1 : vector<2x16xf32>, vector<2x16xf32> -> vector<2x32xf32>
    %1770 = vector.extract_strided_slice %1372 {offsets = [12, 0], sizes = [2, 48], strides = [1, 1]} : vector<16x96xf32> to vector<2x48xf32>
    %1771 = vector.extract_strided_slice %1372 {offsets = [2, 48], sizes = [2, 48], strides = [1, 1]} : vector<16x96xf32> to vector<2x48xf32>
    %cst_224 = arith.constant dense<0.000000e+00> : vector<2x96xf32>
    %1772 = tpu.matmul %1769, %1367, %cst_224 {dimension_numbers = #tpu.dot_dimension_numbers<[1], [0], [0], [1], [0, 0, 1, 1], [], []>} : vector<2x32xf32>, vector<32x96xf32>, vector<2x96xf32> -> vector<2x96xf32>
    %1773 = vector.extract_strided_slice %1772 {offsets = [0, 0], sizes = [2, 48], strides = [1, 1]} : vector<2x96xf32> to vector<2x48xf32>
    %1774 = vector.extract_strided_slice %1369 {offsets = [0, 0], sizes = [1, 16], strides = [1, 1]} : vector<1x32xf32> to vector<1x16xf32>
    %1775 = vector.extract_strided_slice %1769 {offsets = [0, 0], sizes = [2, 16], strides = [1, 1]} : vector<2x32xf32> to vector<2x16xf32>
    %1776 = vector.extract_strided_slice %1770 {offsets = [0, 0], sizes = [2, 16], strides = [1, 1]} : vector<2x48xf32> to vector<2x16xf32>
    %1777 = vector.extract_strided_slice %1773 {offsets = [0, 0], sizes = [2, 16], strides = [1, 1]} : vector<2x48xf32> to vector<2x16xf32>
    %1778 = arith.addf %1776, %1777 : vector<2x16xf32>
    %1779 = arith.negf %1778 : vector<2x16xf32>
    %1780 = math.exp %1779 : vector<2x16xf32>
    %cst_225 = arith.constant 1.000000e+00 : f32
    %1781 = vector.broadcast %cst_225 : f32 to vector<2x16xf32>
    %1782 = arith.addf %1781, %1780 : vector<2x16xf32>
    %1783 = arith.divf %1781, %1782 : vector<2x16xf32>
    %1784 = vector.extract_strided_slice %1770 {offsets = [0, 16], sizes = [2, 16], strides = [1, 1]} : vector<2x48xf32> to vector<2x16xf32>
    %1785 = vector.extract_strided_slice %1773 {offsets = [0, 16], sizes = [2, 16], strides = [1, 1]} : vector<2x48xf32> to vector<2x16xf32>
    %1786 = arith.addf %1784, %1785 : vector<2x16xf32>
    %1787 = arith.negf %1786 : vector<2x16xf32>
    %1788 = math.exp %1787 : vector<2x16xf32>
    %cst_226 = arith.constant 1.000000e+00 : f32
    %1789 = vector.broadcast %cst_226 : f32 to vector<2x16xf32>
    %1790 = arith.addf %1789, %1788 : vector<2x16xf32>
    %1791 = arith.divf %1789, %1790 : vector<2x16xf32>
    %1792 = vector.extract_strided_slice %1770 {offsets = [0, 32], sizes = [2, 16], strides = [1, 1]} : vector<2x48xf32> to vector<2x16xf32>
    %1793 = vector.extract_strided_slice %1773 {offsets = [0, 32], sizes = [2, 16], strides = [1, 1]} : vector<2x48xf32> to vector<2x16xf32>
    %1794 = vector.broadcast %1774 : vector<1x16xf32> to vector<2x16xf32>
    %1795 = arith.addf %1793, %1794 : vector<2x16xf32>
    %1796 = arith.mulf %1783, %1795 : vector<2x16xf32>
    %1797 = arith.addf %1792, %1796 : vector<2x16xf32>
    %1798 = math.tanh %1797 : vector<2x16xf32>
    %cst_227 = arith.constant 1.000000e+00 : f32
    %1799 = vector.broadcast %cst_227 : f32 to vector<2x16xf32>
    %1800 = arith.subf %1799, %1791 : vector<2x16xf32>
    %1801 = arith.mulf %1800, %1798 : vector<2x16xf32>
    %1802 = arith.mulf %1791, %1775 : vector<2x16xf32>
    %1803 = arith.addf %1801, %1802 : vector<2x16xf32>
    %1804 = vector.extract_strided_slice %1772 {offsets = [0, 48], sizes = [2, 48], strides = [1, 1]} : vector<2x96xf32> to vector<2x48xf32>
    %1805 = vector.extract_strided_slice %1369 {offsets = [0, 16], sizes = [1, 16], strides = [1, 1]} : vector<1x32xf32> to vector<1x16xf32>
    %1806 = vector.extract_strided_slice %1769 {offsets = [0, 16], sizes = [2, 16], strides = [1, 1]} : vector<2x32xf32> to vector<2x16xf32>
    %1807 = vector.extract_strided_slice %1771 {offsets = [0, 0], sizes = [2, 16], strides = [1, 1]} : vector<2x48xf32> to vector<2x16xf32>
    %1808 = vector.extract_strided_slice %1804 {offsets = [0, 0], sizes = [2, 16], strides = [1, 1]} : vector<2x48xf32> to vector<2x16xf32>
    %1809 = arith.addf %1807, %1808 : vector<2x16xf32>
    %1810 = arith.negf %1809 : vector<2x16xf32>
    %1811 = math.exp %1810 : vector<2x16xf32>
    %cst_228 = arith.constant 1.000000e+00 : f32
    %1812 = vector.broadcast %cst_228 : f32 to vector<2x16xf32>
    %1813 = arith.addf %1812, %1811 : vector<2x16xf32>
    %1814 = arith.divf %1812, %1813 : vector<2x16xf32>
    %1815 = vector.extract_strided_slice %1771 {offsets = [0, 16], sizes = [2, 16], strides = [1, 1]} : vector<2x48xf32> to vector<2x16xf32>
    %1816 = vector.extract_strided_slice %1804 {offsets = [0, 16], sizes = [2, 16], strides = [1, 1]} : vector<2x48xf32> to vector<2x16xf32>
    %1817 = arith.addf %1815, %1816 : vector<2x16xf32>
    %1818 = arith.negf %1817 : vector<2x16xf32>
    %1819 = math.exp %1818 : vector<2x16xf32>
    %cst_229 = arith.constant 1.000000e+00 : f32
    %1820 = vector.broadcast %cst_229 : f32 to vector<2x16xf32>
    %1821 = arith.addf %1820, %1819 : vector<2x16xf32>
    %1822 = arith.divf %1820, %1821 : vector<2x16xf32>
    %1823 = vector.extract_strided_slice %1771 {offsets = [0, 32], sizes = [2, 16], strides = [1, 1]} : vector<2x48xf32> to vector<2x16xf32>
    %1824 = vector.extract_strided_slice %1804 {offsets = [0, 32], sizes = [2, 16], strides = [1, 1]} : vector<2x48xf32> to vector<2x16xf32>
    %1825 = vector.broadcast %1805 : vector<1x16xf32> to vector<2x16xf32>
    %1826 = arith.addf %1824, %1825 : vector<2x16xf32>
    %1827 = arith.mulf %1814, %1826 : vector<2x16xf32>
    %1828 = arith.addf %1823, %1827 : vector<2x16xf32>
    %1829 = math.tanh %1828 : vector<2x16xf32>
    %cst_230 = arith.constant 1.000000e+00 : f32
    %1830 = vector.broadcast %cst_230 : f32 to vector<2x16xf32>
    %1831 = arith.subf %1830, %1822 : vector<2x16xf32>
    %1832 = arith.mulf %1831, %1829 : vector<2x16xf32>
    %1833 = arith.mulf %1822, %1806 : vector<2x16xf32>
    %1834 = arith.addf %1832, %1833 : vector<2x16xf32>
    %1835 = tpu.concatenate %1803, %1834 in 1 : vector<2x16xf32>, vector<2x16xf32> -> vector<2x32xf32>
    %1836 = vector.extract_strided_slice %1372 {offsets = [14, 0], sizes = [2, 48], strides = [1, 1]} : vector<16x96xf32> to vector<2x48xf32>
    %1837 = vector.extract_strided_slice %1372 {offsets = [0, 48], sizes = [2, 48], strides = [1, 1]} : vector<16x96xf32> to vector<2x48xf32>
    %cst_231 = arith.constant dense<0.000000e+00> : vector<2x96xf32>
    %1838 = tpu.matmul %1835, %1367, %cst_231 {dimension_numbers = #tpu.dot_dimension_numbers<[1], [0], [0], [1], [0, 0, 1, 1], [], []>} : vector<2x32xf32>, vector<32x96xf32>, vector<2x96xf32> -> vector<2x96xf32>
    %1839 = vector.extract_strided_slice %1838 {offsets = [0, 0], sizes = [2, 48], strides = [1, 1]} : vector<2x96xf32> to vector<2x48xf32>
    %1840 = vector.extract_strided_slice %1369 {offsets = [0, 0], sizes = [1, 16], strides = [1, 1]} : vector<1x32xf32> to vector<1x16xf32>
    %1841 = vector.extract_strided_slice %1835 {offsets = [0, 0], sizes = [2, 16], strides = [1, 1]} : vector<2x32xf32> to vector<2x16xf32>
    %1842 = vector.extract_strided_slice %1836 {offsets = [0, 0], sizes = [2, 16], strides = [1, 1]} : vector<2x48xf32> to vector<2x16xf32>
    %1843 = vector.extract_strided_slice %1839 {offsets = [0, 0], sizes = [2, 16], strides = [1, 1]} : vector<2x48xf32> to vector<2x16xf32>
    %1844 = arith.addf %1842, %1843 : vector<2x16xf32>
    %1845 = arith.negf %1844 : vector<2x16xf32>
    %1846 = math.exp %1845 : vector<2x16xf32>
    %cst_232 = arith.constant 1.000000e+00 : f32
    %1847 = vector.broadcast %cst_232 : f32 to vector<2x16xf32>
    %1848 = arith.addf %1847, %1846 : vector<2x16xf32>
    %1849 = arith.divf %1847, %1848 : vector<2x16xf32>
    %1850 = vector.extract_strided_slice %1836 {offsets = [0, 16], sizes = [2, 16], strides = [1, 1]} : vector<2x48xf32> to vector<2x16xf32>
    %1851 = vector.extract_strided_slice %1839 {offsets = [0, 16], sizes = [2, 16], strides = [1, 1]} : vector<2x48xf32> to vector<2x16xf32>
    %1852 = arith.addf %1850, %1851 : vector<2x16xf32>
    %1853 = arith.negf %1852 : vector<2x16xf32>
    %1854 = math.exp %1853 : vector<2x16xf32>
    %cst_233 = arith.constant 1.000000e+00 : f32
    %1855 = vector.broadcast %cst_233 : f32 to vector<2x16xf32>
    %1856 = arith.addf %1855, %1854 : vector<2x16xf32>
    %1857 = arith.divf %1855, %1856 : vector<2x16xf32>
    %1858 = vector.extract_strided_slice %1836 {offsets = [0, 32], sizes = [2, 16], strides = [1, 1]} : vector<2x48xf32> to vector<2x16xf32>
    %1859 = vector.extract_strided_slice %1839 {offsets = [0, 32], sizes = [2, 16], strides = [1, 1]} : vector<2x48xf32> to vector<2x16xf32>
    %1860 = vector.broadcast %1840 : vector<1x16xf32> to vector<2x16xf32>
    %1861 = arith.addf %1859, %1860 : vector<2x16xf32>
    %1862 = arith.mulf %1849, %1861 : vector<2x16xf32>
    %1863 = arith.addf %1858, %1862 : vector<2x16xf32>
    %1864 = math.tanh %1863 : vector<2x16xf32>
    %cst_234 = arith.constant 1.000000e+00 : f32
    %1865 = vector.broadcast %cst_234 : f32 to vector<2x16xf32>
    %1866 = arith.subf %1865, %1857 : vector<2x16xf32>
    %1867 = arith.mulf %1866, %1864 : vector<2x16xf32>
    %1868 = arith.mulf %1857, %1841 : vector<2x16xf32>
    %1869 = arith.addf %1867, %1868 : vector<2x16xf32>
    %1870 = vector.extract_strided_slice %1838 {offsets = [0, 48], sizes = [2, 48], strides = [1, 1]} : vector<2x96xf32> to vector<2x48xf32>
    %1871 = vector.extract_strided_slice %1369 {offsets = [0, 16], sizes = [1, 16], strides = [1, 1]} : vector<1x32xf32> to vector<1x16xf32>
    %1872 = vector.extract_strided_slice %1835 {offsets = [0, 16], sizes = [2, 16], strides = [1, 1]} : vector<2x32xf32> to vector<2x16xf32>
    %1873 = vector.extract_strided_slice %1837 {offsets = [0, 0], sizes = [2, 16], strides = [1, 1]} : vector<2x48xf32> to vector<2x16xf32>
    %1874 = vector.extract_strided_slice %1870 {offsets = [0, 0], sizes = [2, 16], strides = [1, 1]} : vector<2x48xf32> to vector<2x16xf32>
    %1875 = arith.addf %1873, %1874 : vector<2x16xf32>
    %1876 = arith.negf %1875 : vector<2x16xf32>
    %1877 = math.exp %1876 : vector<2x16xf32>
    %cst_235 = arith.constant 1.000000e+00 : f32
    %1878 = vector.broadcast %cst_235 : f32 to vector<2x16xf32>
    %1879 = arith.addf %1878, %1877 : vector<2x16xf32>
    %1880 = arith.divf %1878, %1879 : vector<2x16xf32>
    %1881 = vector.extract_strided_slice %1837 {offsets = [0, 16], sizes = [2, 16], strides = [1, 1]} : vector<2x48xf32> to vector<2x16xf32>
    %1882 = vector.extract_strided_slice %1870 {offsets = [0, 16], sizes = [2, 16], strides = [1, 1]} : vector<2x48xf32> to vector<2x16xf32>
    %1883 = arith.addf %1881, %1882 : vector<2x16xf32>
    %1884 = arith.negf %1883 : vector<2x16xf32>
    %1885 = math.exp %1884 : vector<2x16xf32>
    %cst_236 = arith.constant 1.000000e+00 : f32
    %1886 = vector.broadcast %cst_236 : f32 to vector<2x16xf32>
    %1887 = arith.addf %1886, %1885 : vector<2x16xf32>
    %1888 = arith.divf %1886, %1887 : vector<2x16xf32>
    %1889 = vector.extract_strided_slice %1837 {offsets = [0, 32], sizes = [2, 16], strides = [1, 1]} : vector<2x48xf32> to vector<2x16xf32>
    %1890 = vector.extract_strided_slice %1870 {offsets = [0, 32], sizes = [2, 16], strides = [1, 1]} : vector<2x48xf32> to vector<2x16xf32>
    %1891 = vector.broadcast %1871 : vector<1x16xf32> to vector<2x16xf32>
    %1892 = arith.addf %1890, %1891 : vector<2x16xf32>
    %1893 = arith.mulf %1880, %1892 : vector<2x16xf32>
    %1894 = arith.addf %1889, %1893 : vector<2x16xf32>
    %1895 = math.tanh %1894 : vector<2x16xf32>
    %cst_237 = arith.constant 1.000000e+00 : f32
    %1896 = vector.broadcast %cst_237 : f32 to vector<2x16xf32>
    %1897 = arith.subf %1896, %1888 : vector<2x16xf32>
    %1898 = arith.mulf %1897, %1895 : vector<2x16xf32>
    %1899 = arith.mulf %1888, %1872 : vector<2x16xf32>
    %1900 = arith.addf %1898, %1899 : vector<2x16xf32>
    %1901 = tpu.concatenate %1407, %1900 in 1 : vector<2x16xf32>, vector<2x16xf32> -> vector<2x32xf32>
    %1902 = tpu.concatenate %1473, %1834 in 1 : vector<2x16xf32>, vector<2x16xf32> -> vector<2x32xf32>
    %1903 = tpu.concatenate %1539, %1768 in 1 : vector<2x16xf32>, vector<2x16xf32> -> vector<2x32xf32>
    %1904 = tpu.concatenate %1605, %1702 in 1 : vector<2x16xf32>, vector<2x16xf32> -> vector<2x32xf32>
    %1905 = tpu.concatenate %1671, %1636 in 1 : vector<2x16xf32>, vector<2x16xf32> -> vector<2x32xf32>
    %1906 = tpu.concatenate %1737, %1570 in 1 : vector<2x16xf32>, vector<2x16xf32> -> vector<2x32xf32>
    %1907 = tpu.concatenate %1803, %1504 in 1 : vector<2x16xf32>, vector<2x16xf32> -> vector<2x32xf32>
    %1908 = tpu.concatenate %1869, %1438 in 1 : vector<2x16xf32>, vector<2x16xf32> -> vector<2x32xf32>
    %1909 = tpu.concatenate %1901, %1902, %1903, %1904, %1905, %1906, %1907, %1908 in 0 : vector<2x32xf32>, vector<2x32xf32>, vector<2x32xf32>, vector<2x32xf32>, vector<2x32xf32>, vector<2x32xf32>, vector<2x32xf32>, vector<2x32xf32> -> vector<16x32xf32>
    %c0_238 = arith.constant 0 : index
    %c0_239 = arith.constant 0 : index
    %1910 = vector.load %arg1[%c0_238, %c0_239] : memref<12x1xf32, #tpu.memory_space<vmem>>, vector<12x1xf32>
    %1911 = vector.broadcast %1910 : vector<12x1xf32> to vector<12x32xf32>
    %1912 = arith.mulf %820, %1911 : vector<12x32xf32>
    %1913 = vector.extract_strided_slice %1912 {offsets = [0, 0], sizes = [2, 32], strides = [1, 1]} : vector<12x32xf32> to vector<2x32xf32>
    %1914 = vector.extract_strided_slice %1912 {offsets = [2, 0], sizes = [2, 32], strides = [1, 1]} : vector<12x32xf32> to vector<2x32xf32>
    %1915 = arith.addf %1913, %1914 : vector<2x32xf32>
    %1916 = vector.extract_strided_slice %1912 {offsets = [4, 0], sizes = [2, 32], strides = [1, 1]} : vector<12x32xf32> to vector<2x32xf32>
    %1917 = arith.addf %1915, %1916 : vector<2x32xf32>
    %1918 = vector.extract_strided_slice %1912 {offsets = [6, 0], sizes = [2, 32], strides = [1, 1]} : vector<12x32xf32> to vector<2x32xf32>
    %1919 = arith.addf %1917, %1918 : vector<2x32xf32>
    %1920 = vector.extract_strided_slice %1912 {offsets = [8, 0], sizes = [2, 32], strides = [1, 1]} : vector<12x32xf32> to vector<2x32xf32>
    %1921 = arith.addf %1919, %1920 : vector<2x32xf32>
    %1922 = vector.extract_strided_slice %1912 {offsets = [10, 0], sizes = [2, 32], strides = [1, 1]} : vector<12x32xf32> to vector<2x32xf32>
    %1923 = arith.addf %1921, %1922 : vector<2x32xf32>
    %c0_240 = arith.constant 0 : index
    %c0_241 = arith.constant 0 : index
    %1924 = vector.load %arg19[%c0_240, %c0_241] : memref<32x200xf32, #tpu.memory_space<vmem>>, vector<32x200xf32>
    %cst_242 = arith.constant dense<0.000000e+00> : vector<2x200xf32>
    %1925 = tpu.matmul %1923, %1924, %cst_242 {dimension_numbers = #tpu.dot_dimension_numbers<[1], [0], [0], [1], [0, 0, 1, 1], [], []>} : vector<2x32xf32>, vector<32x200xf32>, vector<2x200xf32> -> vector<2x200xf32>
    %1926 = tpu.concatenate %1925, %1925, %1925, %1925, %1925, %1925, %1925, %1925 in 0 : vector<2x200xf32>, vector<2x200xf32>, vector<2x200xf32>, vector<2x200xf32>, vector<2x200xf32>, vector<2x200xf32>, vector<2x200xf32>, vector<2x200xf32> -> vector<16x200xf32>
    %c0_243 = arith.constant 0 : index
    %c0_244 = arith.constant 0 : index
    %1927 = vector.load %arg20[%c0_243, %c0_244] : memref<32x200xf32, #tpu.memory_space<vmem>>, vector<32x200xf32>
    %cst_245 = arith.constant dense<0.000000e+00> : vector<16x200xf32>
    %1928 = tpu.matmul %1909, %1927, %cst_245 {dimension_numbers = #tpu.dot_dimension_numbers<[1], [0], [0], [1], [0, 0, 1, 1], [], []>} : vector<16x32xf32>, vector<32x200xf32>, vector<16x200xf32> -> vector<16x200xf32>
    %1929 = arith.addf %1928, %1926 : vector<16x200xf32>
    %c0_246 = arith.constant 0 : index
    %c0_247 = arith.constant 0 : index
    %1930 = vector.load %arg21[%c0_246, %c0_247] : memref<1x200xf32, #tpu.memory_space<vmem>>, vector<1x200xf32>
    %1931 = vector.broadcast %1930 : vector<1x200xf32> to vector<16x200xf32>
    %1932 = arith.addf %1929, %1931 : vector<16x200xf32>
    %1933 = arith.negf %1932 : vector<16x200xf32>
    %1934 = math.exp %1933 : vector<16x200xf32>
    %cst_248 = arith.constant 1.000000e+00 : f32
    %1935 = vector.broadcast %cst_248 : f32 to vector<16x200xf32>
    %1936 = arith.addf %1935, %1934 : vector<16x200xf32>
    %1937 = arith.divf %1935, %1936 : vector<16x200xf32>
    %c0_249 = arith.constant 0 : index
    %c0_250 = arith.constant 0 : index
    %1938 = vector.load %arg22[%c0_249, %c0_250] : memref<200x200xf32, #tpu.memory_space<vmem>>, vector<200x200xf32>
    %cst_251 = arith.constant dense<0.000000e+00> : vector<16x200xf32>
    %1939 = tpu.matmul %1937, %1938, %cst_251 {dimension_numbers = #tpu.dot_dimension_numbers<[1], [0], [0], [1], [0, 0, 1, 1], [], []>} : vector<16x200xf32>, vector<200x200xf32>, vector<16x200xf32> -> vector<16x200xf32>
    %c0_252 = arith.constant 0 : index
    %c0_253 = arith.constant 0 : index
    %1940 = vector.load %arg23[%c0_252, %c0_253] : memref<1x200xf32, #tpu.memory_space<vmem>>, vector<1x200xf32>
    %1941 = vector.broadcast %1940 : vector<1x200xf32> to vector<16x200xf32>
    %1942 = arith.addf %1939, %1941 : vector<16x200xf32>
    %1943 = arith.negf %1942 : vector<16x200xf32>
    %1944 = math.exp %1943 : vector<16x200xf32>
    %cst_254 = arith.constant 1.000000e+00 : f32
    %1945 = vector.broadcast %cst_254 : f32 to vector<16x200xf32>
    %1946 = arith.addf %1945, %1944 : vector<16x200xf32>
    %1947 = arith.divf %1945, %1946 : vector<16x200xf32>
    %c0_255 = arith.constant 0 : index
    %c0_256 = arith.constant 0 : index
    %1948 = vector.load %arg24[%c0_255, %c0_256] : memref<200x1xf32, #tpu.memory_space<vmem>>, vector<200x1xf32>
    %cst_257 = arith.constant dense<0.000000e+00> : vector<16x1xf32>
    %1949 = tpu.matmul %1947, %1948, %cst_257 {dimension_numbers = #tpu.dot_dimension_numbers<[1], [0], [0], [1], [0, 0, 1, 1], [], []>} : vector<16x200xf32>, vector<200x1xf32>, vector<16x1xf32> -> vector<16x1xf32>
    %c0_258 = arith.constant 0 : index
    %c0_259 = arith.constant 0 : index
    %1950 = vector.load %arg25[%c0_258, %c0_259] : memref<1x1xf32, #tpu.memory_space<vmem>>, vector<1x1xf32>
    %1951 = vector.broadcast %1950 : vector<1x1xf32> to vector<16x1xf32>
    %1952 = arith.addf %1949, %1951 : vector<16x1xf32>
    %1953 = arith.negf %1952 : vector<16x1xf32>
    %1954 = math.exp %1953 : vector<16x1xf32>
    %cst_260 = arith.constant 1.000000e+00 : f32
    %1955 = vector.broadcast %cst_260 : f32 to vector<16x1xf32>
    %1956 = arith.addf %1955, %1954 : vector<16x1xf32>
    %1957 = arith.divf %1955, %1956 : vector<16x1xf32>
    %c0_261 = arith.constant 0 : index
    %c0_262 = arith.constant 0 : index
    %1958 = vector.load %arg26[%c0_261, %c0_262] : memref<16x1xf32, #tpu.memory_space<vmem>>, vector<16x1xf32>
    tpu.vector_store %arg26[%c0_261, %c0_262], %1957 {strides = array<i32>} : memref<16x1xf32, #tpu.memory_space<vmem>>, vector<16x1xf32>,
    return
  }
}

</mosaic_0001>

<llo_original>
// kernel: recurrent_forward.1
$region0: #{recurrent_forward.1}
  #allocation0 [shape = 'u32[]', space=smem, size = 0x4, offset = 0x4, fixed_abs, tag = 'smem constant byte address 0x4 - core index']
  #allocation1 [shape = 'u32[144,128]{1,0:T(1,128)}', space=vmem, size = 0x12000, scoped, tag = 'internal scratch']
  #allocation2 [shape = 'f32[1,1]{1,0:T(1,128)S(1)}', space=vmem, size = 0x200, scoped, tag = 'scoped memory for recurrent_forward.1']
  %s0 = inlined_call_operand.vmem [shape: f32[12,32], index: 0, kind: input, shape index: {}]
  %s1 = inlined_call_operand.vmem [shape: f32[12,1], index: 1, kind: input, shape index: {}]
  %s2 = inlined_call_operand.vmem [shape: f32[16,32], index: 2, kind: input, shape index: {}]
  %s3 = inlined_call_operand.vmem [shape: f32[32,96], index: 3, kind: input, shape index: {}]
  %s4 = inlined_call_operand.vmem [shape: f32[32,96], index: 4, kind: input, shape index: {}]
  %s5 = inlined_call_operand.vmem [shape: f32[1,96], index: 5, kind: input, shape index: {}]
  %s6 = inlined_call_operand.vmem [shape: f32[1,32], index: 6, kind: input, shape index: {}]
  %s7 = inlined_call_operand.vmem [shape: f32[32,96], index: 7, kind: input, shape index: {}]
  %s8 = inlined_call_operand.vmem [shape: f32[32,96], index: 8, kind: input, shape index: {}]
  %s9 = inlined_call_operand.vmem [shape: f32[1,96], index: 9, kind: input, shape index: {}]
  %s10 = inlined_call_operand.vmem [shape: f32[1,32], index: 10, kind: input, shape index: {}]
  %s11 = inlined_call_operand.vmem [shape: f32[32,96], index: 11, kind: input, shape index: {}]
  %s12 = inlined_call_operand.vmem [shape: f32[32,96], index: 12, kind: input, shape index: {}]
  %s13 = inlined_call_operand.vmem [shape: f32[1,96], index: 13, kind: input, shape index: {}]
  %s14 = inlined_call_operand.vmem [shape: f32[1,32], index: 14, kind: input, shape index: {}]
  %s15 = inlined_call_operand.hbm [shape: f32[32,96], index: 15, kind: input, shape index: {}]
  %s16 = inlined_call_operand.hbm [shape: f32[32,96], index: 16, kind: input, shape index: {}]
  %s17 = inlined_call_operand.vmem [shape: f32[1,96], index: 17, kind: input, shape index: {}]
  %s18 = inlined_call_operand.vmem [shape: f32[1,32], index: 18, kind: input, shape index: {}]
  %s19 = inlined_call_operand.vmem [shape: f32[32,200], index: 19, kind: input, shape index: {}]
  %s20 = inlined_call_operand.vmem [shape: f32[32,200], index: 20, kind: input, shape index: {}]
  %s21 = inlined_call_operand.vmem [shape: f32[1,200], index: 21, kind: input, shape index: {}]
  %s22 = inlined_call_operand.vmem [shape: f32[200,200], index: 22, kind: input, shape index: {}]
  %s23 = inlined_call_operand.vmem [shape: f32[1,200], index: 23, kind: input, shape index: {}]
  %s24 = inlined_call_operand.vmem [shape: f32[200,1], index: 24, kind: input, shape index: {}]
  %s25 = inlined_call_operand.<no memory space> [shape: f32[1,1], index: 25, kind: input, shape index: {}]
  %s26 = inlined_call_operand.vmem [shape: f32[16,1], index: 26, kind: output, shape index: {}]
  %s27 = sld [smem:[#allocation0]]
  $region122: #{recurrent_forward.1} parent=0
    _
  %s29 = ssub.s32 1, %s27
  %s30 = scalar_select 0, %s29, %s27
  %v31 = vstv %s25
  %32 = vst [vmem:[#allocation2] sm:$0x1] %v31
  $region1: #{recurrent_forward.1} parent=0
    #allocation3 [shape = 'u8[16384]{0}', space=vmem, size = 0x4000, scoped, tag = 'input window, operand 15, single buffered']
    #allocation4 [shape = 's32[1]{0}', space=sflag, size = 0x4, scoped, tag = 'scoped memory for recurrent_forward.1']
    #allocation5 [shape = 'u8[16384]{0}', space=vmem, size = 0x4000, scoped, tag = 'input window, operand 16, single buffered']
    #allocation6 [shape = 's32[1]{0}', space=sflag, size = 0x4, scoped, tag = 'scoped memory for recurrent_forward.1']
    %33 = vsyncpa [#allocation4], 0
    %34 = vsyncpa [#allocation6], 0
    // Predicated region
    $region2: #{recurrent_forward.1} parent=1 // pred_check
      _
    $region3: #{recurrent_forward.1} parent=1 // pred_check_branch
      %36 = sbr.rel (0) target = $region5
    $region4: #{recurrent_forward.1} parent=1 // pred_region
      _
    $region5: #{recurrent_forward.1} parent=1 // pred_fallthru
      _
    // Predicated region
    $region6: #{recurrent_forward.1} parent=1 // pred_check
      _
    $region7: #{recurrent_forward.1} parent=1 // pred_check_branch
      %38 = sbr.rel (0) target = $region9
    $region8: #{recurrent_forward.1} parent=1 // pred_region
      _
    $region9: #{recurrent_forward.1} parent=1 // pred_fallthru
      _
    // Predicated region
    $region10: #{recurrent_forward.1} parent=1 // pred_check
      _
    $region11: #{recurrent_forward.1} parent=1 // pred_check_branch
      %40 = sbr.rel (0) target = $region13
    $region12: #{recurrent_forward.1} parent=1 // pred_region
      _
    $region13: #{recurrent_forward.1} parent=1 // pred_fallthru
      _
    // Predicated region
    $region14: #{recurrent_forward.1} parent=1 // pred_check
      _
    $region15: #{recurrent_forward.1} parent=1 // pred_check_branch
      %42 = sbr.rel (0) target = $region17
    $region16: #{recurrent_forward.1} parent=1 // pred_region
      _
    $region17: #{recurrent_forward.1} parent=1 // pred_fallthru
      _
    // Predicated region
    $region18: #{recurrent_forward.1} parent=1 // pred_check
      _
    $region19: #{recurrent_forward.1} parent=1 // pred_check_branch
      %44 = sbr.rel (0) target = $region21
    $region20: #{recurrent_forward.1} parent=1 // pred_region
      _
    $region21: #{recurrent_forward.1} parent=1 // pred_fallthru
      _
    // Predicated region
    $region22: #{recurrent_forward.1} parent=1 // pred_check
      _
    $region23: #{recurrent_forward.1} parent=1 // pred_check_branch
      %46 = sbr.rel (0) target = $region25
    $region24: #{recurrent_forward.1} parent=1 // pred_region
      _
    $region25: #{recurrent_forward.1} parent=1 // pred_fallthru
      _
    // Predicated region
    $region26: #{recurrent_forward.1} parent=1 // pred_check
      _
    $region27: #{recurrent_forward.1} parent=1 // pred_check_branch
      %48 = sbr.rel (0) target = $region29
    $region28: #{recurrent_forward.1} parent=1 // pred_region
      _
    $region29: #{recurrent_forward.1} parent=1 // pred_fallthru
      _
    // Predicated region
    $region30: #{recurrent_forward.1} parent=1 // pred_check
      _
    $region31: #{recurrent_forward.1} parent=1 // pred_check_branch
      %50 = sbr.rel (0) target = $region33
    $region32: #{recurrent_forward.1} parent=1 // pred_region
      _
    $region33: #{recurrent_forward.1} parent=1 // pred_fallthru
      _
    // Predicated region
    $region34: #{recurrent_forward.1} parent=1 // pred_check
      _
    $region35: #{recurrent_forward.1} parent=1 // pred_check_branch
      %52 = sbr.rel (0) target = $region37
    $region36: #{recurrent_forward.1} parent=1 // pred_region
      _
    $region37: #{recurrent_forward.1} parent=1 // pred_fallthru
      _
    // Predicated region
    $region38: #{recurrent_forward.1} parent=1 // pred_check
      _
    $region39: #{recurrent_forward.1} parent=1 // pred_check_branch
      %54 = sbr.rel (0) target = $region41
    $region40: #{recurrent_forward.1} parent=1 // pred_region
      _
    $region41: #{recurrent_forward.1} parent=1 // pred_fallthru
      _
    // Predicated region
    $region42: #{recurrent_forward.1} parent=1 // pred_check
      _
    $region43: #{recurrent_forward.1} parent=1 // pred_check_branch
      %56 = sbr.rel (0) target = $region45
    $region44: #{recurrent_forward.1} parent=1 // pred_region
      _
    $region45: #{recurrent_forward.1} parent=1 // pred_fallthru
      _
    // Predicated region
    $region46: #{recurrent_forward.1} parent=1 // pred_check
      _
    $region47: #{recurrent_forward.1} parent=1 // pred_check_branch
      %58 = sbr.rel (0) target = $region49
    $region48: #{recurrent_forward.1} parent=1 // pred_region
      _
    $region49: #{recurrent_forward.1} parent=1 // pred_fallthru
      _
    // Predicated region
    $region50: #{recurrent_forward.1} parent=1 // pred_check
      _
    $region51: #{recurrent_forward.1} parent=1 // pred_check_branch
      %60 = sbr.rel (0) target = $region53
    $region52: #{recurrent_forward.1} parent=1 // pred_region
      _
    $region53: #{recurrent_forward.1} parent=1 // pred_fallthru
      _
    // Predicated region
    $region54: #{recurrent_forward.1} parent=1 // pred_check
      _
    $region55: #{recurrent_forward.1} parent=1 // pred_check_branch
      %62 = sbr.rel (0) target = $region57
    $region56: #{recurrent_forward.1} parent=1 // pred_region
      _
    $region57: #{recurrent_forward.1} parent=1 // pred_fallthru
      _
    // Predicated region
    $region58: #{recurrent_forward.1} parent=1 // pred_check
      _
    $region59: #{recurrent_forward.1} parent=1 // pred_check_branch
      %64 = sbr.rel (0) target = $region61
    $region60: #{recurrent_forward.1} parent=1 // pred_region
      _
    $region61: #{recurrent_forward.1} parent=1 // pred_fallthru
      _
    // Predicated region
    $region62: #{recurrent_forward.1} parent=1 // pred_check
      _
    $region63: #{recurrent_forward.1} parent=1 // pred_check_branch
      %66 = sbr.rel (0) target = $region65
    $region64: #{recurrent_forward.1} parent=1 // pred_region
      %s68 = ssub.s32 512, 512
      %69 = vsyncadd [#allocation4], %s68
      %s70 = sshll.u32 [#allocation3], 4
      %s71 = int_to_ptr.vmem [resolvable:$true] %s70
      %76 = dma.hbm_to_vmem [thread:$0]  %s15, 512, %s71, [#allocation4], 128, 128, 8
    $region65: #{recurrent_forward.1} parent=1 // pred_fallthru
      _
    // Predicated region
    $region66: #{recurrent_forward.1} parent=1 // pred_check
      _
    $region67: #{recurrent_forward.1} parent=1 // pred_check_branch
      %78 = sbr.rel (0) target = $region69
    $region68: #{recurrent_forward.1} parent=1 // pred_region
      %s80 = ssub.s32 512, 512
      %81 = vsyncadd [#allocation6], %s80
      %s82 = sshll.u32 [#allocation5], 4
      %s83 = int_to_ptr.vmem [resolvable:$true] %s82
      %88 = dma.hbm_to_vmem [thread:$0]  %s16, 512, %s83, [#allocation6], 128, 128, 8
    $region69: #{recurrent_forward.1} parent=1 // pred_fallthru
      _
    // Predicated region
    $region70: #{recurrent_forward.1} parent=1 // pred_check
      _
    $region71: #{recurrent_forward.1} parent=1 // pred_check_branch
      %90 = sbr.rel (0) target = $region73
    $region72: #{recurrent_forward.1} parent=1 // pred_region
      _
    $region73: #{recurrent_forward.1} parent=1 // pred_fallthru
      _
    // Predicated region
    $region74: #{recurrent_forward.1} parent=1 // pred_check
      _
    $region75: #{recurrent_forward.1} parent=1 // pred_check_branch
      %92 = sbr.rel (0) target = $region77
    $region76: #{recurrent_forward.1} parent=1 // pred_region
      _
    $region77: #{recurrent_forward.1} parent=1 // pred_fallthru
      _
    // Predicated region
    $region78: #{recurrent_forward.1} parent=1 // pred_check
      _
    $region79: #{recurrent_forward.1} parent=1 // pred_check_branch
      %94 = sbr.rel (0) target = $region81
    $region80: #{recurrent_forward.1} parent=1 // pred_region
      _
    $region81: #{recurrent_forward.1} parent=1 // pred_fallthru
      _
    // Predicated region
    $region82: #{recurrent_forward.1} parent=1 // pred_check
      _
    $region83: #{recurrent_forward.1} parent=1 // pred_check_branch
      %96 = sbr.rel (0) target = $region85
    $region84: #{recurrent_forward.1} parent=1 // pred_region
      _
    $region85: #{recurrent_forward.1} parent=1 // pred_fallthru
      _
    // Predicated region
    $region86: #{recurrent_forward.1} parent=1 // pred_check
      _
    $region87: #{recurrent_forward.1} parent=1 // pred_check_branch
      %98 = sbr.rel (0) target = $region89
    $region88: #{recurrent_forward.1} parent=1 // pred_region
      _
    $region89: #{recurrent_forward.1} parent=1 // pred_fallthru
      _
    // Predicated region
    $region90: #{recurrent_forward.1} parent=1 // pred_check
      _
    $region91: #{recurrent_forward.1} parent=1 // pred_check_branch
      %100 = sbr.rel (0) target = $region93
    $region92: #{recurrent_forward.1} parent=1 // pred_region
      _
    $region93: #{recurrent_forward.1} parent=1 // pred_fallthru
      _
    // Predicated region
    $region94: #{recurrent_forward.1} parent=1 // pred_check
      _
    $region95: #{recurrent_forward.1} parent=1 // pred_check_branch
      %102 = sbr.rel (0) target = $region97
    $region96: #{recurrent_forward.1} parent=1 // pred_region
      _
    $region97: #{recurrent_forward.1} parent=1 // pred_fallthru
      _
    // Predicated region
    $region98: #{recurrent_forward.1} parent=1 // pred_check
      _
    $region99: #{recurrent_forward.1} parent=1 // pred_check_branch
      %104 = sbr.rel (0) target = $region101
    $region100: #{recurrent_forward.1} parent=1 // pred_region
      _
    $region101: #{recurrent_forward.1} parent=1 // pred_fallthru
      _
    // Predicated region
    $region102: #{recurrent_forward.1} parent=1 // pred_check
      _
    $region103: #{recurrent_forward.1} parent=1 // pred_check_branch
      %106 = sbr.rel (0) target = $region105
    $region104: #{recurrent_forward.1} parent=1 // pred_region
      _
    $region105: #{recurrent_forward.1} parent=1 // pred_fallthru
      _
    // Predicated region
    $region106: #{recurrent_forward.1} parent=1 // pred_check
      _
    $region107: #{recurrent_forward.1} parent=1 // pred_check_branch
      %108 = sbr.rel (0) target = $region109
    $region108: #{recurrent_forward.1} parent=1 // pred_region
      %109 = dma.done [#allocation4], 512
    $region109: #{recurrent_forward.1} parent=1 // pred_fallthru
      _
    // Predicated region
    $region110: #{recurrent_forward.1} parent=1 // pred_check
      _
    $region111: #{recurrent_forward.1} parent=1 // pred_check_branch
      %111 = sbr.rel (0) target = $region113
    $region112: #{recurrent_forward.1} parent=1 // pred_region
      %112 = dma.done [#allocation6], 512
    $region113: #{recurrent_forward.1} parent=1 // pred_fallthru
      _
    %v113 = vld [vmem:[%s0] sm:$0xff]
    %v114 = vld [vmem:[%s0 + $0x8] sm:$0xf]
    %v115 = vld [vmem:[%s3] sm:$0xff]
    %v116 = vld [vmem:[%s3 + $0x8] sm:$0xff]
    %v117 = vld [vmem:[%s3 + $0x10] sm:$0xff]
    %v118 = vld [vmem:[%s3 + $0x18] sm:$0xff]
    %v119 = vld [vmem:[%s4] sm:$0xff]
    %v120 = vld [vmem:[%s4 + $0x8] sm:$0xff]
    %v121 = vld [vmem:[%s4 + $0x10] sm:$0xff]
    %v122 = vld [vmem:[%s4 + $0x18] sm:$0xff]
    %v123 = vld [vmem:[%s5] sm:$0x1]
    %v124 = vld [vmem:[%s6] sm:$0x1]
    %v126 = vlaneseq
    %v127 = vshrl.u32 %v126, 7
    %v128 = vsub.s32 0, %v127
    %v129 = vrot.slane %v123, %v128
    %vm131 = vcmask 261120
    %v133 = vsel %vm131, %v113, 0
    %v136 = vsel %vm131, %v114, 0
    %138 = vmatprep.subr.mxu0 0.0
    %139 = vmatpush1.msra.mxu0 %v115
    %140 = vmatprep.subr.mxu0 0.0
    %141 = vmatpush1.msra.mxu0 %v116
    %142 = vmatprep.subr.mxu0 0.0
    %143 = vmatpush1.msra.mxu0 %v117
    %144 = vmatprep.subr.mxu0 0.0
    %145 = vmatpush1.msra.mxu0 %v118
    %146 = vmatprep.subr.mxu0 0.0
    %147 = vmatpush1.msra.mxu0 0.0
    %148 = vmatprep.subr.mxu0 0.0
    %149 = vmatpush1.msra.mxu0 0.0
    %150 = vmatprep.subr.mxu0 0.0
    %151 = vmatpush1.msra.mxu0 0.0
    %152 = vmatprep.subr.mxu0 0.0
    %153 = vmatpush1.msra.mxu0 0.0
    %154 = vmatprep.subr.mxu0 0.0
    %155 = vmatpush1.msra.mxu0 0.0
    %156 = vmatprep.subr.mxu0 0.0
    %157 = vmatpush1.msra.mxu0 0.0
    %158 = vmatprep.subr.mxu0 0.0
    %159 = vmatpush1.msra.mxu0 0.0
    %160 = vmatprep.subr.mxu0 0.0
    %161 = vmatpush1.msra.mxu0 0.0
    %162 = vmatprep.subr.mxu0 0.0
    %163 = vmatpush1.msra.mxu0 0.0
    %164 = vmatprep.subr.mxu0 0.0
    %165 = vmatpush1.msra.mxu0 0.0
    %166 = vmatprep.subr.mxu0 0.0
    %167 = vmatpush1.msra.mxu0 0.0
    %168 = vmatprep.subr.mxu0 0.0
    %169 = vmatpush1.msra.mxu0 0.0
    %170 = vmatprep.subr.mxu0 0.0
    %171 = vmatpush1.msra.mxu0 0.0
    %172 = vmatprep.subr.mxu0 0.0
    %173 = vmatpush1.msra.mxu0 0.0
    %174 = vmatprep.subr.mxu0 0.0
    %175 = vmatpush1.msra.mxu0 0.0
    %176 = vmatprep.subr.mxu0 0.0
    %177 = vmatpush1.msra.mxu0 0.0
    %178 = vmatprep.subr.mxu0 0.0
    %179 = vmatpush1.msra.mxu0 0.0
    %180 = vmatprep.subr.mxu0 0.0
    %181 = vmatpush1.msra.mxu0 0.0
    %182 = vmatprep.subr.mxu0 0.0
    %183 = vmatpush1.msra.mxu0 0.0
    %184 = vmatprep.subr.mxu0 0.0
    %185 = vmatpush1.msra.mxu0 0.0
    %186 = vmatprep.subr.mxu0 0.0
    %187 = vmatpush1.msra.mxu0 0.0
    %188 = vmatprep.subr.mxu0 0.0
    %189 = vmatpush1.msra.mxu0 0.0
    %190 = vmatprep.subr.mxu0 0.0
    %191 = vmatpush1.msra.mxu0 0.0
    %192 = vmatprep.subr.mxu0 0.0
    %193 = vmatpush1.msra.mxu0 0.0
    %194 = vmatprep.subr.mxu0 0.0
    %195 = vmatpush1.msra.mxu0 0.0
    %196 = vmatprep.subr.mxu0 0.0
    %197 = vmatpush1.msra.mxu0 0.0
    %198 = vmatprep.subr.mxu0 0.0
    %199 = vmatpush1.msra.mxu0 0.0
    %200 = vmatprep.subr.mxu0 0.0
    %201 = vmatpush1.msra.mxu0 0.0
    %202 = vmatprep.mubr.f32.mxu0 0.0
    %203 = vmatmul.mubr.f32.gmra.mrb[0].mxu0 %v133
    %v204 = vpop.f32.mrb[0].mxu0
    %v205 = vadd.f32 %v129, %v204
    %v206 = vpop.f32.mrb[0].mxu0
    %207 = vmatprep.mubr.f32.mxu0 0.0
    %208 = vmatmul.mubr.f32.gmra.mrb[0].mxu0 %v136
    %v209 = vpop.f32.mrb[0].mxu0
    %v210 = vadd.f32 %v129, %v209
    %v211 = vpop.f32.mrb[0].mxu0
    %212 = vdwg.mxu0
    %v214 = vsel %vm131, 0.0, 0
    %216 = vmatprep.subr.mxu0 0.0
    %217 = vmatpush1.msra.mxu0 %v119
    %218 = vmatprep.subr.mxu0 0.0
    %219 = vmatpush1.msra.mxu0 %v120
    %220 = vmatprep.subr.mxu0 0.0
    %221 = vmatpush1.msra.mxu0 %v121
    %222 = vmatprep.subr.mxu0 0.0
    %223 = vmatpush1.msra.mxu0 %v122
    %224 = vmatprep.subr.mxu0 0.0
    %225 = vmatpush1.msra.mxu0 0.0
    %226 = vmatprep.subr.mxu0 0.0
    %227 = vmatpush1.msra.mxu0 0.0
    %228 = vmatprep.subr.mxu0 0.0
    %229 = vmatpush1.msra.mxu0 0.0
    %230 = vmatprep.subr.mxu0 0.0
    %231 = vmatpush1.msra.mxu0 0.0
    %232 = vmatprep.subr.mxu0 0.0
    %233 = vmatpush1.msra.mxu0 0.0
    %234 = vmatprep.subr.mxu0 0.0
    %235 = vmatpush1.msra.mxu0 0.0
    %236 = vmatprep.subr.mxu0 0.0
    %237 = vmatpush1.msra.mxu0 0.0
    %238 = vmatprep.subr.mxu0 0.0
    %239 = vmatpush1.msra.mxu0 0.0
    %240 = vmatprep.subr.mxu0 0.0
    %241 = vmatpush1.msra.mxu0 0.0
    %242 = vmatprep.subr.mxu0 0.0
    %243 = vmatpush1.msra.mxu0 0.0
    %244 = vmatprep.subr.mxu0 0.0
    %245 = vmatpush1.msra.mxu0 0.0
    %246 = vmatprep.subr.mxu0 0.0
    %247 = vmatpush1.msra.mxu0 0.0
    %248 = vmatprep.subr.mxu0 0.0
    %249 = vmatpush1.msra.mxu0 0.0
    %250 = vmatprep.subr.mxu0 0.0
    %251 = vmatpush1.msra.mxu0 0.0
    %252 = vmatprep.subr.mxu0 0.0
    %253 = vmatpush1.msra.mxu0 0.0
    %254 = vmatprep.subr.mxu0 0.0
    %255 = vmatpush1.msra.mxu0 0.0
    %256 = vmatprep.subr.mxu0 0.0
    %257 = vmatpush1.msra.mxu0 0.0
    %258 = vmatprep.subr.mxu0 0.0
    %259 = vmatpush1.msra.mxu0 0.0
    %260 = vmatprep.subr.mxu0 0.0
    %261 = vmatpush1.msra.mxu0 0.0
    %262 = vmatprep.subr.mxu0 0.0
    %263 = vmatpush1.msra.mxu0 0.0
    %264 = vmatprep.subr.mxu0 0.0
    %265 = vmatpush1.msra.mxu0 0.0
    %266 = vmatprep.subr.mxu0 0.0
    %267 = vmatpush1.msra.mxu0 0.0
    %268 = vmatprep.subr.mxu0 0.0
    %269 = vmatpush1.msra.mxu0 0.0
    %270 = vmatprep.subr.mxu0 0.0
    %271 = vmatpush1.msra.mxu0 0.0
    %272 = vmatprep.subr.mxu0 0.0
    %273 = vmatpush1.msra.mxu0 0.0
    %274 = vmatprep.subr.mxu0 0.0
    %275 = vmatpush1.msra.mxu0 0.0
    %276 = vmatprep.subr.mxu0 0.0
    %277 = vmatpush1.msra.mxu0 0.0
    %278 = vmatprep.subr.mxu0 0.0
    %279 = vmatpush1.msra.mxu0 0.0
    %280 = vmatprep.mubr.f32.mxu0 0.0
    %281 = vmatmul.mubr.f32.gmra.mrb[0].mxu0 %v214
    %v282 = vpop.f32.mrb[0].mxu0
    %v283 = vadd.f32 0.0, %v282
    %v284 = vpop.f32.mrb[0].mxu0
    %285 = vdwg.mxu0
    %v286 = vadd.f32 %v205, %v283
    %v287 = vxor.u32 %v286, 2147483648
    %v288 = vmul.f32 %v287, 1.442695
    %v289 = vpow.pop %v288
    %v290 = vadd.f32 %v289, 1.0
    %v291 = vrcp.pop %v290
    %v292 = vmul.f32 1.0, %v291
    %v294 = vlaneseq
    %v295 = vshrl.u32 %v294, 7
    %v296 = vsub.s32 0, %v295
    %v297 = vrot.slane %v124, %v296
    %298 = vrot.lane.b32.xlu0 %v297, 32
    %v299 = vpop.permute.xlu0 %298
    %v301 = vadd.f32 %v283, %v299
    %303 = vrot.lane.b32.xlu0 %v301, 96
    %v304 = vpop.permute.xlu0 %303
    %v306 = vmul.f32 %v292, %v304
    %308 = vrot.lane.b32.xlu0 %v306, 32
    %v309 = vpop.permute.xlu0 %308
    %v311 = vadd.f32 %v205, %v309
    %v312 = vtanh.pop %v311
    %v313 = vsub.f32 1.0, %v292
    %315 = vrot.lane.b32.xlu0 %v312, 112
    %v316 = vpop.permute.xlu0 %315
    %v318 = vmul.f32 %v313, %v316
    %v319 = vmul.f32 %v292, 0.0
    %v320 = vadd.f32 %v318, %v319
    %v322 = vrot.slane %v283, 6
    %v324 = vadd.f32 %v210, %v322
    %v325 = vxor.u32 %v324, 2147483648
    %v326 = vmul.f32 %v325, 1.442695
    %v327 = vpow.pop %v326
    %v328 = vadd.f32 %v327, 1.0
    %v329 = vrcp.pop %v328
    %v330 = vmul.f32 1.0, %v329
    %331 = vrot.lane.b32.xlu0 %v297, 64
    %v332 = vpop.permute.xlu0 %331
    %v334 = vadd.f32 %v283, %v332
    %v336 = vrot.slane %v334, 6
    %337 = vrot.lane.b32.xlu0 %v336, 96
    %v338 = vpop.permute.xlu0 %337
    %v340 = vmul.f32 %v330, %v338
    %342 = vrot.lane.b32.xlu0 %v340, 32
    %v343 = vpop.permute.xlu0 %342
    %v345 = vadd.f32 %v210, %v343
    %v346 = vtanh.pop %v345
    %v347 = vsub.f32 1.0, %v330
    %349 = vrot.lane.b32.xlu0 %v346, 112
    %v350 = vpop.permute.xlu0 %349
    %v352 = vmul.f32 %v347, %v350
    %v353 = vmul.f32 %v330, 0.0
    %v354 = vadd.f32 %v352, %v353
    %356 = vrot.lane.b32.xlu0 %v320, 112
    %v357 = vpop.permute.xlu0 %356
    %v360 = vrot.slane %v354, 2
    %361 = vrot.lane.b32.xlu0 %v360, 80
    %v362 = vpop.permute.xlu0 %361
    %vm364 = vcmask 130048
    %v365 = vsel %vm364, %v357, %v362
    %v367 = vsel %vm131, %v365, 0
    %369 = vmatprep.subr.mxu0 0.0
    %370 = vmatpush1.msra.mxu0 %v119
    %371 = vmatprep.subr.mxu0 0.0
    %372 = vmatpush1.msra.mxu0 %v120
    %373 = vmatprep.subr.mxu0 0.0
    %374 = vmatpush1.msra.mxu0 %v121
    %375 = vmatprep.subr.mxu0 0.0
    %376 = vmatpush1.msra.mxu0 %v122
    %377 = vmatprep.subr.mxu0 0.0
    %378 = vmatpush1.msra.mxu0 0.0
    %379 = vmatprep.subr.mxu0 0.0
    %380 = vmatpush1.msra.mxu0 0.0
    %381 = vmatprep.subr.mxu0 0.0
    %382 = vmatpush1.msra.mxu0 0.0
    %383 = vmatprep.subr.mxu0 0.0
    %384 = vmatpush1.msra.mxu0 0.0
    %385 = vmatprep.subr.mxu0 0.0
    %386 = vmatpush1.msra.mxu0 0.0
    %387 = vmatprep.subr.mxu0 0.0
    %388 = vmatpush1.msra.mxu0 0.0
    %389 = vmatprep.subr.mxu0 0.0
    %390 = vmatpush1.msra.mxu0 0.0
    %391 = vmatprep.subr.mxu0 0.0
    %392 = vmatpush1.msra.mxu0 0.0
    %393 = vmatprep.subr.mxu0 0.0
    %394 = vmatpush1.msra.mxu0 0.0
    %395 = vmatprep.subr.mxu0 0.0
    %396 = vmatpush1.msra.mxu0 0.0
    %397 = vmatprep.subr.mxu0 0.0
    %398 = vmatpush1.msra.mxu0 0.0
    %399 = vmatprep.subr.mxu0 0.0
    %400 = vmatpush1.msra.mxu0 0.0
    %401 = vmatprep.subr.mxu0 0.0
    %402 = vmatpush1.msra.mxu0 0.0
    %403 = vmatprep.subr.mxu0 0.0
    %404 = vmatpush1.msra.mxu0 0.0
    %405 = vmatprep.subr.mxu0 0.0
    %406 = vmatpush1.msra.mxu0 0.0
    %407 = vmatprep.subr.mxu0 0.0
    %408 = vmatpush1.msra.mxu0 0.0
    %409 = vmatprep.subr.mxu0 0.0
    %410 = vmatpush1.msra.mxu0 0.0
    %411 = vmatprep.subr.mxu0 0.0
    %412 = vmatpush1.msra.mxu0 0.0
    %413 = vmatprep.subr.mxu0 0.0
    %414 = vmatpush1.msra.mxu0 0.0
    %415 = vmatprep.subr.mxu0 0.0
    %416 = vmatpush1.msra.mxu0 0.0
    %417 = vmatprep.subr.mxu0 0.0
    %418 = vmatpush1.msra.mxu0 0.0
    %419 = vmatprep.subr.mxu0 0.0
    %420 = vmatpush1.msra.mxu0 0.0
    %421 = vmatprep.subr.mxu0 0.0
    %422 = vmatpush1.msra.mxu0 0.0
    %423 = vmatprep.subr.mxu0 0.0
    %424 = vmatpush1.msra.mxu0 0.0
    %425 = vmatprep.subr.mxu0 0.0
    %426 = vmatpush1.msra.mxu0 0.0
    %427 = vmatprep.subr.mxu0 0.0
    %428 = vmatpush1.msra.mxu0 0.0
    %429 = vmatprep.subr.mxu0 0.0
    %430 = vmatpush1.msra.mxu0 0.0
    %431 = vmatprep.subr.mxu0 0.0
    %432 = vmatpush1.msra.mxu0 0.0
    %433 = vmatprep.mubr.f32.mxu0 0.0
    %434 = vmatmul.mubr.f32.gmra.mrb[0].mxu0 %v367
    %v435 = vpop.f32.mrb[0].mxu0
    %v436 = vadd.f32 0.0, %v435
    %v437 = vpop.f32.mrb[0].mxu0
    %438 = vdwg.mxu0
    %v440 = vrot.slane %v436, 6
    %v442 = vadd.f32 %v205, %v440
    %v443 = vxor.u32 %v442, 2147483648
    %v444 = vmul.f32 %v443, 1.442695
    %v445 = vpow.pop %v444
    %v446 = vadd.f32 %v445, 1.0
    %v447 = vrcp.pop %v446
    %v448 = vmul.f32 1.0, %v447
    %v449 = vadd.f32 %v436, %v299
    %v451 = vrot.slane %v449, 6
    %452 = vrot.lane.b32.xlu0 %v451, 96
    %v453 = vpop.permute.xlu0 %452
    %v455 = vmul.f32 %v448, %v453
    %457 = vrot.lane.b32.xlu0 %v455, 32
    %v458 = vpop.permute.xlu0 %457
    %v460 = vadd.f32 %v205, %v458
    %v461 = vtanh.pop %v460
    %v462 = vsub.f32 1.0, %v448
    %464 = vrot.lane.b32.xlu0 %v461, 112
    %v465 = vpop.permute.xlu0 %464
    %v467 = vmul.f32 %v462, %v465
    %v468 = vrot.slane %v365, 6
    %469 = vrot.lane.b32.xlu0 %v468, 16
    %v470 = vpop.permute.xlu0 %469
    %v472 = vmul.f32 %v448, %v470
    %v473 = vadd.f32 %v467, %v472
    %v474 = vadd.f32 %v210, %v436
    %v475 = vxor.u32 %v474, 2147483648
    %v476 = vmul.f32 %v475, 1.442695
    %v477 = vpow.pop %v476
    %v478 = vadd.f32 %v477, 1.0
    %v479 = vrcp.pop %v478
    %v480 = vmul.f32 1.0, %v479
    %v481 = vadd.f32 %v436, %v332
    %483 = vrot.lane.b32.xlu0 %v481, 96
    %v484 = vpop.permute.xlu0 %483
    %v486 = vmul.f32 %v480, %v484
    %488 = vrot.lane.b32.xlu0 %v486, 32
    %v489 = vpop.permute.xlu0 %488
    %v491 = vadd.f32 %v210, %v489
    %v492 = vtanh.pop %v491
    %v493 = vsub.f32 1.0, %v480
    %495 = vrot.lane.b32.xlu0 %v492, 112
    %v496 = vpop.permute.xlu0 %495
    %v498 = vmul.f32 %v493, %v496
    %499 = vrot.lane.b32.xlu0 %v365, 48
    %v500 = vpop.permute.xlu0 %499
    %v502 = vmul.f32 %v480, %v500
    %v503 = vadd.f32 %v498, %v502
    %505 = vrot.lane.b32.xlu0 %v473, 112
    %v506 = vpop.permute.xlu0 %505
    %v509 = vrot.slane %v503, 6
    %510 = vrot.lane.b32.xlu0 %v509, 80
    %v511 = vpop.permute.xlu0 %510
    %v513 = vsel %vm364, %v506, %v511
    %v515 = vrot.slane %v513, 2
    %v516 = vsel %vm131, %v515, 0
    %518 = vmatprep.subr.mxu0 0.0
    %519 = vmatpush1.msra.mxu0 %v119
    %520 = vmatprep.subr.mxu0 0.0
    %521 = vmatpush1.msra.mxu0 %v120
    %522 = vmatprep.subr.mxu0 0.0
    %523 = vmatpush1.msra.mxu0 %v121
    %524 = vmatprep.subr.mxu0 0.0
    %525 = vmatpush1.msra.mxu0 %v122
    %526 = vmatprep.subr.mxu0 0.0
    %527 = vmatpush1.msra.mxu0 0.0
    %528 = vmatprep.subr.mxu0 0.0
    %529 = vmatpush1.msra.mxu0 0.0
    %530 = vmatprep.subr.mxu0 0.0
    %531 = vmatpush1.msra.mxu0 0.0
    %532 = vmatprep.subr.mxu0 0.0
    %533 = vmatpush1.msra.mxu0 0.0
    %534 = vmatprep.subr.mxu0 0.0
    %535 = vmatpush1.msra.mxu0 0.0
    %536 = vmatprep.subr.mxu0 0.0
    %537 = vmatpush1.msra.mxu0 0.0
    %538 = vmatprep.subr.mxu0 0.0
    %539 = vmatpush1.msra.mxu0 0.0
    %540 = vmatprep.subr.mxu0 0.0
    %541 = vmatpush1.msra.mxu0 0.0
    %542 = vmatprep.subr.mxu0 0.0
    %543 = vmatpush1.msra.mxu0 0.0
    %544 = vmatprep.subr.mxu0 0.0
    %545 = vmatpush1.msra.mxu0 0.0
    %546 = vmatprep.subr.mxu0 0.0
    %547 = vmatpush1.msra.mxu0 0.0
    %548 = vmatprep.subr.mxu0 0.0
    %549 = vmatpush1.msra.mxu0 0.0
    %550 = vmatprep.subr.mxu0 0.0
    %551 = vmatpush1.msra.mxu0 0.0
    %552 = vmatprep.subr.mxu0 0.0
    %553 = vmatpush1.msra.mxu0 0.0
    %554 = vmatprep.subr.mxu0 0.0
    %555 = vmatpush1.msra.mxu0 0.0
    %556 = vmatprep.subr.mxu0 0.0
    %557 = vmatpush1.msra.mxu0 0.0
    %558 = vmatprep.subr.mxu0 0.0
    %559 = vmatpush1.msra.mxu0 0.0
    %560 = vmatprep.subr.mxu0 0.0
    %561 = vmatpush1.msra.mxu0 0.0
    %562 = vmatprep.subr.mxu0 0.0
    %563 = vmatpush1.msra.mxu0 0.0
    %564 = vmatprep.subr.mxu0 0.0
    %565 = vmatpush1.msra.mxu0 0.0
    %566 = vmatprep.subr.mxu0 0.0
    %567 = vmatpush1.msra.mxu0 0.0
    %568 = vmatprep.subr.mxu0 0.0
    %569 = vmatpush1.msra.mxu0 0.0
    %570 = vmatprep.subr.mxu0 0.0
    %571 = vmatpush1.msra.mxu0 0.0
    %572 = vmatprep.subr.mxu0 0.0
    %573 = vmatpush1.msra.mxu0 0.0
    %574 = vmatprep.subr.mxu0 0.0
    %575 = vmatpush1.msra.mxu0 0.0
    %576 = vmatprep.subr.mxu0 0.0
    %577 = vmatpush1.msra.mxu0 0.0
    %578 = vmatprep.subr.mxu0 0.0
    %579 = vmatpush1.msra.mxu0 0.0
    %580 = vmatprep.subr.mxu0 0.0
    %581 = vmatpush1.msra.mxu0 0.0
    %582 = vmatprep.mubr.f32.mxu0 0.0
    %583 = vmatmul.mubr.f32.gmra.mrb[0].mxu0 %v516
    %v584 = vpop.f32.mrb[0].mxu0
    %v585 = vadd.f32 0.0, %v584
    %v586 = vpop.f32.mrb[0].mxu0
    %587 = vdwg.mxu0
    %v589 = vrot.slane %v585, 4
    %v591 = vadd.f32 %v205, %v589
    %v592 = vxor.u32 %v591, 2147483648
    %v593 = vmul.f32 %v592, 1.442695
    %v594 = vpow.pop %v593
    %v595 = vadd.f32 %v594, 1.0
    %v596 = vrcp.pop %v595
    %v597 = vmul.f32 1.0, %v596
    %v598 = vadd.f32 %v585, %v299
    %v600 = vrot.slane %v598, 4
    %601 = vrot.lane.b32.xlu0 %v600, 96
    %v602 = vpop.permute.xlu0 %601
    %v604 = vmul.f32 %v597, %v602
    %606 = vrot.lane.b32.xlu0 %v604, 32
    %v607 = vpop.permute.xlu0 %606
    %v609 = vadd.f32 %v205, %v607
    %v610 = vtanh.pop %v609
    %v611 = vsub.f32 1.0, %v597
    %613 = vrot.lane.b32.xlu0 %v610, 112
    %v614 = vpop.permute.xlu0 %613
    %v616 = vmul.f32 %v611, %v614
    %v617 = vrot.slane %v513, 6
    %618 = vrot.lane.b32.xlu0 %v617, 16
    %v619 = vpop.permute.xlu0 %618
    %v621 = vmul.f32 %v597, %v619
    %v622 = vadd.f32 %v616, %v621
    %v623 = vrot.slane %v585, 2
    %v625 = vadd.f32 %v205, %v623
    %v626 = vxor.u32 %v625, 2147483648
    %v627 = vmul.f32 %v626, 1.442695
    %v628 = vpow.pop %v627
    %v629 = vadd.f32 %v628, 1.0
    %v630 = vrcp.pop %v629
    %v631 = vmul.f32 1.0, %v630
    %v632 = vadd.f32 %v585, %v332
    %v634 = vrot.slane %v632, 2
    %635 = vrot.lane.b32.xlu0 %v634, 96
    %v636 = vpop.permute.xlu0 %635
    %v638 = vmul.f32 %v631, %v636
    %640 = vrot.lane.b32.xlu0 %v638, 32
    %v641 = vpop.permute.xlu0 %640
    %v643 = vadd.f32 %v205, %v641
    %v644 = vtanh.pop %v643
    %v645 = vsub.f32 1.0, %v631
    %647 = vrot.lane.b32.xlu0 %v644, 112
    %v648 = vpop.permute.xlu0 %647
    %v650 = vmul.f32 %v645, %v648
    %v651 = vrot.slane %v513, 4
    %652 = vrot.lane.b32.xlu0 %v651, 48
    %v653 = vpop.permute.xlu0 %652
    %v655 = vmul.f32 %v631, %v653
    %v656 = vadd.f32 %v650, %v655
    %658 = vrot.lane.b32.xlu0 %v622, 112
    %v659 = vpop.permute.xlu0 %658
    %v662 = vrot.slane %v656, 2
    %663 = vrot.lane.b32.xlu0 %v662, 80
    %v664 = vpop.permute.xlu0 %663
    %v666 = vsel %vm364, %v659, %v664
    %v668 = vrot.slane %v666, 4
    %v669 = vsel %vm131, %v668, 0
    %671 = vmatprep.subr.mxu0 0.0
    %672 = vmatpush1.msra.mxu0 %v119
    %673 = vmatprep.subr.mxu0 0.0
    %674 = vmatpush1.msra.mxu0 %v120
    %675 = vmatprep.subr.mxu0 0.0
    %676 = vmatpush1.msra.mxu0 %v121
    %677 = vmatprep.subr.mxu0 0.0
    %678 = vmatpush1.msra.mxu0 %v122
    %679 = vmatprep.subr.mxu0 0.0
    %680 = vmatpush1.msra.mxu0 0.0
    %681 = vmatprep.subr.mxu0 0.0
    %682 = vmatpush1.msra.mxu0 0.0
    %683 = vmatprep.subr.mxu0 0.0
    %684 = vmatpush1.msra.mxu0 0.0
    %685 = vmatprep.subr.mxu0 0.0
    %686 = vmatpush1.msra.mxu0 0.0
    %687 = vmatprep.subr.mxu0 0.0
    %688 = vmatpush1.msra.mxu0 0.0
    %689 = vmatprep.subr.mxu0 0.0
    %690 = vmatpush1.msra.mxu0 0.0
    %691 = vmatprep.subr.mxu0 0.0
    %692 = vmatpush1.msra.mxu0 0.0
    %693 = vmatprep.subr.mxu0 0.0
    %694 = vmatpush1.msra.mxu0 0.0
    %695 = vmatprep.subr.mxu0 0.0
    %696 = vmatpush1.msra.mxu0 0.0
    %697 = vmatprep.subr.mxu0 0.0
    %698 = vmatpush1.msra.mxu0 0.0
    %699 = vmatprep.subr.mxu0 0.0
    %700 = vmatpush1.msra.mxu0 0.0
    %701 = vmatprep.subr.mxu0 0.0
    %702 = vmatpush1.msra.mxu0 0.0
    %703 = vmatprep.subr.mxu0 0.0
    %704 = vmatpush1.msra.mxu0 0.0
    %705 = vmatprep.subr.mxu0 0.0
    %706 = vmatpush1.msra.mxu0 0.0
    %707 = vmatprep.subr.mxu0 0.0
    %708 = vmatpush1.msra.mxu0 0.0
    %709 = vmatprep.subr.mxu0 0.0
    %710 = vmatpush1.msra.mxu0 0.0
    %711 = vmatprep.subr.mxu0 0.0
    %712 = vmatpush1.msra.mxu0 0.0
    %713 = vmatprep.subr.mxu0 0.0
    %714 = vmatpush1.msra.mxu0 0.0
    %715 = vmatprep.subr.mxu0 0.0
    %716 = vmatpush1.msra.mxu0 0.0
    %717 = vmatprep.subr.mxu0 0.0
    %718 = vmatpush1.msra.mxu0 0.0
    %719 = vmatprep.subr.mxu0 0.0
    %720 = vmatpush1.msra.mxu0 0.0
    %721 = vmatprep.subr.mxu0 0.0
    %722 = vmatpush1.msra.mxu0 0.0
    %723 = vmatprep.subr.mxu0 0.0
    %724 = vmatpush1.msra.mxu0 0.0
    %725 = vmatprep.subr.mxu0 0.0
    %726 = vmatpush1.msra.mxu0 0.0
    %727 = vmatprep.subr.mxu0 0.0
    %728 = vmatpush1.msra.mxu0 0.0
    %729 = vmatprep.subr.mxu0 0.0
    %730 = vmatpush1.msra.mxu0 0.0
    %731 = vmatprep.subr.mxu0 0.0
    %732 = vmatpush1.msra.mxu0 0.0
    %733 = vmatprep.subr.mxu0 0.0
    %734 = vmatpush1.msra.mxu0 0.0
    %735 = vmatprep.mubr.f32.mxu0 0.0
    %736 = vmatmul.mubr.f32.gmra.mrb[0].mxu0 %v669
    %v737 = vpop.f32.mrb[0].mxu0
    %v738 = vadd.f32 0.0, %v737
    %v739 = vpop.f32.mrb[0].mxu0
    %740 = vdwg.mxu0
    %v742 = vrot.slane %v738, 2
    %v744 = vadd.f32 %v205, %v742
    %v745 = vxor.u32 %v744, 2147483648
    %v746 = vmul.f32 %v745, 1.442695
    %v747 = vpow.pop %v746
    %v748 = vadd.f32 %v747, 1.0
    %v749 = vrcp.pop %v748
    %v750 = vmul.f32 1.0, %v749
    %v751 = vadd.f32 %v738, %v299
    %v753 = vrot.slane %v751, 2
    %754 = vrot.lane.b32.xlu0 %v753, 96
    %v755 = vpop.permute.xlu0 %754
    %v757 = vmul.f32 %v750, %v755
    %759 = vrot.lane.b32.xlu0 %v757, 32
    %v760 = vpop.permute.xlu0 %759
    %v762 = vadd.f32 %v205, %v760
    %v763 = vtanh.pop %v762
    %v764 = vsub.f32 1.0, %v750
    %766 = vrot.lane.b32.xlu0 %v763, 112
    %v767 = vpop.permute.xlu0 %766
    %v769 = vmul.f32 %v764, %v767
    %v770 = vrot.slane %v666, 6
    %771 = vrot.lane.b32.xlu0 %v770, 16
    %v772 = vpop.permute.xlu0 %771
    %v774 = vmul.f32 %v750, %v772
    %v775 = vadd.f32 %v769, %v774
    %v776 = vrot.slane %v738, 4
    %v778 = vadd.f32 %v205, %v776
    %v779 = vxor.u32 %v778, 2147483648
    %v780 = vmul.f32 %v779, 1.442695
    %v781 = vpow.pop %v780
    %v782 = vadd.f32 %v781, 1.0
    %v783 = vrcp.pop %v782
    %v784 = vmul.f32 1.0, %v783
    %v785 = vadd.f32 %v738, %v332
    %v787 = vrot.slane %v785, 4
    %788 = vrot.lane.b32.xlu0 %v787, 96
    %v789 = vpop.permute.xlu0 %788
    %v791 = vmul.f32 %v784, %v789
    %793 = vrot.lane.b32.xlu0 %v791, 32
    %v794 = vpop.permute.xlu0 %793
    %v796 = vadd.f32 %v205, %v794
    %v797 = vtanh.pop %v796
    %v798 = vsub.f32 1.0, %v784
    %800 = vrot.lane.b32.xlu0 %v797, 112
    %v801 = vpop.permute.xlu0 %800
    %v803 = vmul.f32 %v798, %v801
    %804 = vrot.lane.b32.xlu0 %v666, 48
    %v805 = vpop.permute.xlu0 %804
    %v807 = vmul.f32 %v784, %v805
    %v808 = vadd.f32 %v803, %v807
    %810 = vrot.lane.b32.xlu0 %v775, 112
    %v811 = vpop.permute.xlu0 %810
    %v814 = vrot.slane %v808, 6
    %815 = vrot.lane.b32.xlu0 %v814, 80
    %v816 = vpop.permute.xlu0 %815
    %v818 = vsel %vm364, %v811, %v816
    %v820 = vrot.slane %v818, 6
    %v821 = vsel %vm131, %v820, 0
    %823 = vmatprep.subr.mxu0 0.0
    %824 = vmatpush1.msra.mxu0 %v119
    %825 = vmatprep.subr.mxu0 0.0
    %826 = vmatpush1.msra.mxu0 %v120
    %827 = vmatprep.subr.mxu0 0.0
    %828 = vmatpush1.msra.mxu0 %v121
    %829 = vmatprep.subr.mxu0 0.0
    %830 = vmatpush1.msra.mxu0 %v122
    %831 = vmatprep.subr.mxu0 0.0
    %832 = vmatpush1.msra.mxu0 0.0
    %833 = vmatprep.subr.mxu0 0.0
    %834 = vmatpush1.msra.mxu0 0.0
    %835 = vmatprep.subr.mxu0 0.0
    %836 = vmatpush1.msra.mxu0 0.0
    %837 = vmatprep.subr.mxu0 0.0
    %838 = vmatpush1.msra.mxu0 0.0
    %839 = vmatprep.subr.mxu0 0.0
    %840 = vmatpush1.msra.mxu0 0.0
    %841 = vmatprep.subr.mxu0 0.0
    %842 = vmatpush1.msra.mxu0 0.0
    %843 = vmatprep.subr.mxu0 0.0
    %844 = vmatpush1.msra.mxu0 0.0
    %845 = vmatprep.subr.mxu0 0.0
    %846 = vmatpush1.msra.mxu0 0.0
    %847 = vmatprep.subr.mxu0 0.0
    %848 = vmatpush1.msra.mxu0 0.0
    %849 = vmatprep.subr.mxu0 0.0
    %850 = vmatpush1.msra.mxu0 0.0
    %851 = vmatprep.subr.mxu0 0.0
    %852 = vmatpush1.msra.mxu0 0.0
    %853 = vmatprep.subr.mxu0 0.0
    %854 = vmatpush1.msra.mxu0 0.0
    %855 = vmatprep.subr.mxu0 0.0
    %856 = vmatpush1.msra.mxu0 0.0
    %857 = vmatprep.subr.mxu0 0.0
    %858 = vmatpush1.msra.mxu0 0.0
    %859 = vmatprep.subr.mxu0 0.0
    %860 = vmatpush1.msra.mxu0 0.0
    %861 = vmatprep.subr.mxu0 0.0
    %862 = vmatpush1.msra.mxu0 0.0
    %863 = vmatprep.subr.mxu0 0.0
    %864 = vmatpush1.msra.mxu0 0.0
    %865 = vmatprep.subr.mxu0 0.0
    %866 = vmatpush1.msra.mxu0 0.0
    %867 = vmatprep.subr.mxu0 0.0
    %868 = vmatpush1.msra.mxu0 0.0
    %869 = vmatprep.subr.mxu0 0.0
    %870 = vmatpush1.msra.mxu0 0.0
    %871 = vmatprep.subr.mxu0 0.0
    %872 = vmatpush1.msra.mxu0 0.0
    %873 = vmatprep.subr.mxu0 0.0
    %874 = vmatpush1.msra.mxu0 0.0
    %875 = vmatprep.subr.mxu0 0.0
    %876 = vmatpush1.msra.mxu0 0.0
    %877 = vmatprep.subr.mxu0 0.0
    %878 = vmatpush1.msra.mxu0 0.0
    %879 = vmatprep.subr.mxu0 0.0
    %880 = vmatpush1.msra.mxu0 0.0
    %881 = vmatprep.subr.mxu0 0.0
    %882 = vmatpush1.msra.mxu0 0.0
    %883 = vmatprep.subr.mxu0 0.0
    %884 = vmatpush1.msra.mxu0 0.0
    %885 = vmatprep.subr.mxu0 0.0
    %886 = vmatpush1.msra.mxu0 0.0
    %887 = vmatprep.mubr.f32.mxu0 0.0
    %888 = vmatmul.mubr.f32.gmra.mrb[0].mxu0 %v821
    %v889 = vpop.f32.mrb[0].mxu0
    %v890 = vadd.f32 0.0, %v889
    %v891 = vpop.f32.mrb[0].mxu0
    %892 = vdwg.mxu0
    %v893 = vadd.f32 %v210, %v890
    %v894 = vxor.u32 %v893, 2147483648
    %v895 = vmul.f32 %v894, 1.442695
    %v896 = vpow.pop %v895
    %v897 = vadd.f32 %v896, 1.0
    %v898 = vrcp.pop %v897
    %v899 = vmul.f32 1.0, %v898
    %v900 = vadd.f32 %v890, %v299
    %902 = vrot.lane.b32.xlu0 %v900, 96
    %v903 = vpop.permute.xlu0 %902
    %v905 = vmul.f32 %v899, %v903
    %907 = vrot.lane.b32.xlu0 %v905, 32
    %v908 = vpop.permute.xlu0 %907
    %v910 = vadd.f32 %v210, %v908
    %v911 = vtanh.pop %v910
    %v912 = vsub.f32 1.0, %v899
    %914 = vrot.lane.b32.xlu0 %v911, 112
    %v915 = vpop.permute.xlu0 %914
    %v917 = vmul.f32 %v912, %v915
    %918 = vrot.lane.b32.xlu0 %v820, 16
    %v919 = vpop.permute.xlu0 %918
    %v921 = vmul.f32 %v899, %v919
    %v922 = vadd.f32 %v917, %v921
    %v924 = vrot.slane %v890, 6
    %v926 = vadd.f32 %v205, %v924
    %v927 = vxor.u32 %v926, 2147483648
    %v928 = vmul.f32 %v927, 1.442695
    %v929 = vpow.pop %v928
    %v930 = vadd.f32 %v929, 1.0
    %v931 = vrcp.pop %v930
    %v932 = vmul.f32 1.0, %v931
    %v933 = vadd.f32 %v890, %v332
    %v935 = vrot.slane %v933, 6
    %936 = vrot.lane.b32.xlu0 %v935, 96
    %v937 = vpop.permute.xlu0 %936
    %v939 = vmul.f32 %v932, %v937
    %941 = vrot.lane.b32.xlu0 %v939, 32
    %v942 = vpop.permute.xlu0 %941
    %v944 = vadd.f32 %v205, %v942
    %v945 = vtanh.pop %v944
    %v946 = vsub.f32 1.0, %v932
    %948 = vrot.lane.b32.xlu0 %v945, 112
    %v949 = vpop.permute.xlu0 %948
    %v951 = vmul.f32 %v946, %v949
    %v952 = vrot.slane %v818, 4
    %953 = vrot.lane.b32.xlu0 %v952, 48
    %v954 = vpop.permute.xlu0 %953
    %v956 = vmul.f32 %v932, %v954
    %v957 = vadd.f32 %v951, %v956
    %959 = vrot.lane.b32.xlu0 %v922, 112
    %v960 = vpop.permute.xlu0 %959
    %v963 = vrot.slane %v957, 2
    %964 = vrot.lane.b32.xlu0 %v963, 80
    %v965 = vpop.permute.xlu0 %964
    %v967 = vsel %vm364, %v960, %v965
    %v969 = vsel %vm131, %v967, 0
    %971 = vmatprep.subr.mxu0 0.0
    %972 = vmatpush1.msra.mxu0 %v119
    %973 = vmatprep.subr.mxu0 0.0
    %974 = vmatpush1.msra.mxu0 %v120
    %975 = vmatprep.subr.mxu0 0.0
    %976 = vmatpush1.msra.mxu0 %v121
    %977 = vmatprep.subr.mxu0 0.0
    %978 = vmatpush1.msra.mxu0 %v122
    %979 = vmatprep.subr.mxu0 0.0
    %980 = vmatpush1.msra.mxu0 0.0
    %981 = vmatprep.subr.mxu0 0.0
    %982 = vmatpush1.msra.mxu0 0.0
    %983 = vmatprep.subr.mxu0 0.0
    %984 = vmatpush1.msra.mxu0 0.0
    %985 = vmatprep.subr.mxu0 0.0
    %986 = vmatpush1.msra.mxu0 0.0
    %987 = vmatprep.subr.mxu0 0.0
    %988 = vmatpush1.msra.mxu0 0.0
    %989 = vmatprep.subr.mxu0 0.0
    %990 = vmatpush1.msra.mxu0 0.0
    %991 = vmatprep.subr.mxu0 0.0
    %992 = vmatpush1.msra.mxu0 0.0
    %993 = vmatprep.subr.mxu0 0.0
    %994 = vmatpush1.msra.mxu0 0.0
    %995 = vmatprep.subr.mxu0 0.0
    %996 = vmatpush1.msra.mxu0 0.0
    %997 = vmatprep.subr.mxu0 0.0
    %998 = vmatpush1.msra.mxu0 0.0
    %999 = vmatprep.subr.mxu0 0.0
    %1000 = vmatpush1.msra.mxu0 0.0
    %1001 = vmatprep.subr.mxu0 0.0
    %1002 = vmatpush1.msra.mxu0 0.0
    %1003 = vmatprep.subr.mxu0 0.0
    %1004 = vmatpush1.msra.mxu0 0.0
    %1005 = vmatprep.subr.mxu0 0.0
    %1006 = vmatpush1.msra.mxu0 0.0
    %1007 = vmatprep.subr.mxu0 0.0
    %1008 = vmatpush1.msra.mxu0 0.0
    %1009 = vmatprep.subr.mxu0 0.0
    %1010 = vmatpush1.msra.mxu0 0.0
    %1011 = vmatprep.subr.mxu0 0.0
    %1012 = vmatpush1.msra.mxu0 0.0
    %1013 = vmatprep.subr.mxu0 0.0
    %1014 = vmatpush1.msra.mxu0 0.0
    %1015 = vmatprep.subr.mxu0 0.0
    %1016 = vmatpush1.msra.mxu0 0.0
    %1017 = vmatprep.subr.mxu0 0.0
    %1018 = vmatpush1.msra.mxu0 0.0
    %1019 = vmatprep.subr.mxu0 0.0
    %1020 = vmatpush1.msra.mxu0 0.0
    %1021 = vmatprep.subr.mxu0 0.0
    %1022 = vmatpush1.msra.mxu0 0.0
    %1023 = vmatprep.subr.mxu0 0.0
    %1024 = vmatpush1.msra.mxu0 0.0
    %1025 = vmatprep.subr.mxu0 0.0
    %1026 = vmatpush1.msra.mxu0 0.0
    %1027 = vmatprep.subr.mxu0 0.0
    %1028 = vmatpush1.msra.mxu0 0.0
    %1029 = vmatprep.subr.mxu0 0.0
    %1030 = vmatpush1.msra.mxu0 0.0
    %1031 = vmatprep.subr.mxu0 0.0
    %1032 = vmatpush1.msra.mxu0 0.0
    %1033 = vmatprep.subr.mxu0 0.0
    %1034 = vmatpush1.msra.mxu0 0.0
    %1035 = vmatprep.mubr.f32.mxu0 0.0
    %1036 = vmatmul.mubr.f32.gmra.mrb[0].mxu0 %v969
    %v1037 = vpop.f32.mrb[0].mxu0
    %v1038 = vadd.f32 0.0, %v1037
    %v1039 = vpop.f32.mrb[0].mxu0
    %1040 = vdwg.mxu0
    %v1042 = vrot.slane %v1038, 6
    %v1044 = vadd.f32 %v210, %v1042
    %v1045 = vxor.u32 %v1044, 2147483648
    %v1046 = vmul.f32 %v1045, 1.442695
    %v1047 = vpow.pop %v1046
    %v1048 = vadd.f32 %v1047, 1.0
    %v1049 = vrcp.pop %v1048
    %v1050 = vmul.f32 1.0, %v1049
    %v1051 = vadd.f32 %v1038, %v299
    %v1053 = vrot.slane %v1051, 6
    %1054 = vrot.lane.b32.xlu0 %v1053, 96
    %v1055 = vpop.permute.xlu0 %1054
    %v1057 = vmul.f32 %v1050, %v1055
    %1059 = vrot.lane.b32.xlu0 %v1057, 32
    %v1060 = vpop.permute.xlu0 %1059
    %v1062 = vadd.f32 %v210, %v1060
    %v1063 = vtanh.pop %v1062
    %v1064 = vsub.f32 1.0, %v1050
    %1066 = vrot.lane.b32.xlu0 %v1063, 112
    %v1067 = vpop.permute.xlu0 %1066
    %v1069 = vmul.f32 %v1064, %v1067
    %v1070 = vrot.slane %v967, 6
    %1071 = vrot.lane.b32.xlu0 %v1070, 16
    %v1072 = vpop.permute.xlu0 %1071
    %v1074 = vmul.f32 %v1050, %v1072
    %v1075 = vadd.f32 %v1069, %v1074
    %v1076 = vadd.f32 %v205, %v1038
    %v1077 = vxor.u32 %v1076, 2147483648
    %v1078 = vmul.f32 %v1077, 1.442695
    %v1079 = vpow.pop %v1078
    %v1080 = vadd.f32 %v1079, 1.0
    %v1081 = vrcp.pop %v1080
    %v1082 = vmul.f32 1.0, %v1081
    %v1083 = vadd.f32 %v1038, %v332
    %1085 = vrot.lane.b32.xlu0 %v1083, 96
    %v1086 = vpop.permute.xlu0 %1085
    %v1088 = vmul.f32 %v1082, %v1086
    %1090 = vrot.lane.b32.xlu0 %v1088, 32
    %v1091 = vpop.permute.xlu0 %1090
    %v1093 = vadd.f32 %v205, %v1091
    %v1094 = vtanh.pop %v1093
    %v1095 = vsub.f32 1.0, %v1082
    %1097 = vrot.lane.b32.xlu0 %v1094, 112
    %v1098 = vpop.permute.xlu0 %1097
    %v1100 = vmul.f32 %v1095, %v1098
    %1101 = vrot.lane.b32.xlu0 %v967, 48
    %v1102 = vpop.permute.xlu0 %1101
    %v1104 = vmul.f32 %v1082, %v1102
    %v1105 = vadd.f32 %v1100, %v1104
    %1107 = vrot.lane.b32.xlu0 %v1105, 80
    %v1108 = vpop.permute.xlu0 %1107
    %v1110 = vsel %vm364, %v357, %v1108
    %1111 = vrot.lane.b32.xlu0 %v957, 80
    %v1112 = vpop.permute.xlu0 %1111
    %v1114 = vsel %vm364, %v506, %v1112
    %1115 = vrot.lane.b32.xlu0 %v808, 80
    %v1116 = vpop.permute.xlu0 %1115
    %v1118 = vsel %vm364, %v659, %v1116
    %1119 = vrot.lane.b32.xlu0 %v656, 80
    %v1120 = vpop.permute.xlu0 %1119
    %v1122 = vsel %vm364, %v811, %v1120
    %1123 = vrot.lane.b32.xlu0 %v503, 80
    %v1124 = vpop.permute.xlu0 %1123
    %v1126 = vsel %vm364, %v960, %v1124
    %1128 = vrot.lane.b32.xlu0 %v1075, 112
    %v1129 = vpop.permute.xlu0 %1128
    %1131 = vrot.lane.b32.xlu0 %v354, 80
    %v1132 = vpop.permute.xlu0 %1131
    %v1134 = vsel %vm364, %v1129, %v1132
    %vm1135 = vcmask 1041408
    %v1136 = vsel %vm1135, %v1110, %v1114
    %vm1137 = vcmask 1043456
    %v1138 = vsel %vm1137, %v1136, %v1118
    %vm1139 = vcmask 1045504
    %v1140 = vsel %vm1139, %v1138, %v1122
    %v1141 = vsel %vm1135, %v1126, %v1134
    %v1142 = vld [vmem:[%s7] sm:$0xff]
    %v1143 = vld [vmem:[%s7 + $0x8] sm:$0xff]
    %v1144 = vld [vmem:[%s7 + $0x10] sm:$0xff]
    %v1145 = vld [vmem:[%s7 + $0x18] sm:$0xff]
    %v1146 = vld [vmem:[%s8] sm:$0xff]
    %v1147 = vld [vmem:[%s8 + $0x8] sm:$0xff]
    %v1148 = vld [vmem:[%s8 + $0x10] sm:$0xff]
    %v1149 = vld [vmem:[%s8 + $0x18] sm:$0xff]
    %v1150 = vld [vmem:[%s9] sm:$0x1]
    %v1151 = vld [vmem:[%s10] sm:$0x1]
    %v1153 = vlaneseq
    %v1154 = vshrl.u32 %v1153, 7
    %v1155 = vsub.s32 0, %v1154
    %v1156 = vrot.slane %v1150, %v1155
    %v1159 = vsel %vm131, %v1140, 0
    %v1162 = vsel %vm131, %v1141, 0
    %1164 = vmatprep.subr.mxu0 0.0
    %1165 = vmatpush1.msra.mxu0 %v1142
    %1166 = vmatprep.subr.mxu0 0.0
    %1167 = vmatpush1.msra.mxu0 %v1143
    %1168 = vmatprep.subr.mxu0 0.0
    %1169 = vmatpush1.msra.mxu0 %v1144
    %1170 = vmatprep.subr.mxu0 0.0
    %1171 = vmatpush1.msra.mxu0 %v1145
    %1172 = vmatprep.subr.mxu0 0.0
    %1173 = vmatpush1.msra.mxu0 0.0
    %1174 = vmatprep.subr.mxu0 0.0
    %1175 = vmatpush1.msra.mxu0 0.0
    %1176 = vmatprep.subr.mxu0 0.0
    %1177 = vmatpush1.msra.mxu0 0.0
    %1178 = vmatprep.subr.mxu0 0.0
    %1179 = vmatpush1.msra.mxu0 0.0
    %1180 = vmatprep.subr.mxu0 0.0
    %1181 = vmatpush1.msra.mxu0 0.0
    %1182 = vmatprep.subr.mxu0 0.0
    %1183 = vmatpush1.msra.mxu0 0.0
    %1184 = vmatprep.subr.mxu0 0.0
    %1185 = vmatpush1.msra.mxu0 0.0
    %1186 = vmatprep.subr.mxu0 0.0
    %1187 = vmatpush1.msra.mxu0 0.0
    %1188 = vmatprep.subr.mxu0 0.0
    %1189 = vmatpush1.msra.mxu0 0.0
    %1190 = vmatprep.subr.mxu0 0.0
    %1191 = vmatpush1.msra.mxu0 0.0
    %1192 = vmatprep.subr.mxu0 0.0
    %1193 = vmatpush1.msra.mxu0 0.0
    %1194 = vmatprep.subr.mxu0 0.0
    %1195 = vmatpush1.msra.mxu0 0.0
    %1196 = vmatprep.subr.mxu0 0.0
    %1197 = vmatpush1.msra.mxu0 0.0
    %1198 = vmatprep.subr.mxu0 0.0
    %1199 = vmatpush1.msra.mxu0 0.0
    %1200 = vmatprep.subr.mxu0 0.0
    %1201 = vmatpush1.msra.mxu0 0.0
    %1202 = vmatprep.subr.mxu0 0.0
    %1203 = vmatpush1.msra.mxu0 0.0
    %1204 = vmatprep.subr.mxu0 0.0
    %1205 = vmatpush1.msra.mxu0 0.0
    %1206 = vmatprep.subr.mxu0 0.0
    %1207 = vmatpush1.msra.mxu0 0.0
    %1208 = vmatprep.subr.mxu0 0.0
    %1209 = vmatpush1.msra.mxu0 0.0
    %1210 = vmatprep.subr.mxu0 0.0
    %1211 = vmatpush1.msra.mxu0 0.0
    %1212 = vmatprep.subr.mxu0 0.0
    %1213 = vmatpush1.msra.mxu0 0.0
    %1214 = vmatprep.subr.mxu0 0.0
    %1215 = vmatpush1.msra.mxu0 0.0
    %1216 = vmatprep.subr.mxu0 0.0
    %1217 = vmatpush1.msra.mxu0 0.0
    %1218 = vmatprep.subr.mxu0 0.0
    %1219 = vmatpush1.msra.mxu0 0.0
    %1220 = vmatprep.subr.mxu0 0.0
    %1221 = vmatpush1.msra.mxu0 0.0
    %1222 = vmatprep.subr.mxu0 0.0
    %1223 = vmatpush1.msra.mxu0 0.0
    %1224 = vmatprep.subr.mxu0 0.0
    %1225 = vmatpush1.msra.mxu0 0.0
    %1226 = vmatprep.subr.mxu0 0.0
    %1227 = vmatpush1.msra.mxu0 0.0
    %1228 = vmatprep.mubr.f32.mxu0 0.0
    %1229 = vmatmul.mubr.f32.gmra.mrb[0].mxu0 %v1159
    %v1230 = vpop.f32.mrb[0].mxu0
    %v1231 = vadd.f32 %v1156, %v1230
    %v1232 = vpop.f32.mrb[0].mxu0
    %1233 = vmatprep.mubr.f32.mxu0 0.0
    %1234 = vmatmul.mubr.f32.gmra.mrb[0].mxu0 %v1162
    %v1235 = vpop.f32.mrb[0].mxu0
    %v1236 = vadd.f32 %v1156, %v1235
    %v1237 = vpop.f32.mrb[0].mxu0
    %1238 = vdwg.mxu0
    %1239 = vmatprep.subr.mxu0 0.0
    %1240 = vmatpush1.msra.mxu0 %v1146
    %1241 = vmatprep.subr.mxu0 0.0
    %1242 = vmatpush1.msra.mxu0 %v1147
    %1243 = vmatprep.subr.mxu0 0.0
    %1244 = vmatpush1.msra.mxu0 %v1148
    %1245 = vmatprep.subr.mxu0 0.0
    %1246 = vmatpush1.msra.mxu0 %v1149
    %1247 = vmatprep.subr.mxu0 0.0
    %1248 = vmatpush1.msra.mxu0 0.0
    %1249 = vmatprep.subr.mxu0 0.0
    %1250 = vmatpush1.msra.mxu0 0.0
    %1251 = vmatprep.subr.mxu0 0.0
    %1252 = vmatpush1.msra.mxu0 0.0
    %1253 = vmatprep.subr.mxu0 0.0
    %1254 = vmatpush1.msra.mxu0 0.0
    %1255 = vmatprep.subr.mxu0 0.0
    %1256 = vmatpush1.msra.mxu0 0.0
    %1257 = vmatprep.subr.mxu0 0.0
    %1258 = vmatpush1.msra.mxu0 0.0
    %1259 = vmatprep.subr.mxu0 0.0
    %1260 = vmatpush1.msra.mxu0 0.0
    %1261 = vmatprep.subr.mxu0 0.0
    %1262 = vmatpush1.msra.mxu0 0.0
    %1263 = vmatprep.subr.mxu0 0.0
    %1264 = vmatpush1.msra.mxu0 0.0
    %1265 = vmatprep.subr.mxu0 0.0
    %1266 = vmatpush1.msra.mxu0 0.0
    %1267 = vmatprep.subr.mxu0 0.0
    %1268 = vmatpush1.msra.mxu0 0.0
    %1269 = vmatprep.subr.mxu0 0.0
    %1270 = vmatpush1.msra.mxu0 0.0
    %1271 = vmatprep.subr.mxu0 0.0
    %1272 = vmatpush1.msra.mxu0 0.0
    %1273 = vmatprep.subr.mxu0 0.0
    %1274 = vmatpush1.msra.mxu0 0.0
    %1275 = vmatprep.subr.mxu0 0.0
    %1276 = vmatpush1.msra.mxu0 0.0
    %1277 = vmatprep.subr.mxu0 0.0
    %1278 = vmatpush1.msra.mxu0 0.0
    %1279 = vmatprep.subr.mxu0 0.0
    %1280 = vmatpush1.msra.mxu0 0.0
    %1281 = vmatprep.subr.mxu0 0.0
    %1282 = vmatpush1.msra.mxu0 0.0
    %1283 = vmatprep.subr.mxu0 0.0
    %1284 = vmatpush1.msra.mxu0 0.0
    %1285 = vmatprep.subr.mxu0 0.0
    %1286 = vmatpush1.msra.mxu0 0.0
    %1287 = vmatprep.subr.mxu0 0.0
    %1288 = vmatpush1.msra.mxu0 0.0
    %1289 = vmatprep.subr.mxu0 0.0
    %1290 = vmatpush1.msra.mxu0 0.0
    %1291 = vmatprep.subr.mxu0 0.0
    %1292 = vmatpush1.msra.mxu0 0.0
    %1293 = vmatprep.subr.mxu0 0.0
    %1294 = vmatpush1.msra.mxu0 0.0
    %1295 = vmatprep.subr.mxu0 0.0
    %1296 = vmatpush1.msra.mxu0 0.0
    %1297 = vmatprep.subr.mxu0 0.0
    %1298 = vmatpush1.msra.mxu0 0.0
    %1299 = vmatprep.subr.mxu0 0.0
    %1300 = vmatpush1.msra.mxu0 0.0
    %1301 = vmatprep.subr.mxu0 0.0
    %1302 = vmatpush1.msra.mxu0 0.0
    %1303 = vmatprep.mubr.f32.mxu0 0.0
    %1304 = vmatmul.mubr.f32.gmra.mrb[0].mxu0 %v214
    %v1305 = vpop.f32.mrb[0].mxu0
    %v1306 = vadd.f32 0.0, %v1305
    %v1307 = vpop.f32.mrb[0].mxu0
    %1308 = vdwg.mxu0
    %v1309 = vadd.f32 %v1231, %v1306
    %v1310 = vxor.u32 %v1309, 2147483648
    %v1311 = vmul.f32 %v1310, 1.442695
    %v1312 = vpow.pop %v1311
    %v1313 = vadd.f32 %v1312, 1.0
    %v1314 = vrcp.pop %v1313
    %v1315 = vmul.f32 1.0, %v1314
    %v1317 = vlaneseq
    %v1318 = vshrl.u32 %v1317, 7
    %v1319 = vsub.s32 0, %v1318
    %v1320 = vrot.slane %v1151, %v1319
    %1321 = vrot.lane.b32.xlu0 %v1320, 32
    %v1322 = vpop.permute.xlu0 %1321
    %v1324 = vadd.f32 %v1306, %v1322
    %1326 = vrot.lane.b32.xlu0 %v1324, 96
    %v1327 = vpop.permute.xlu0 %1326
    %v1329 = vmul.f32 %v1315, %v1327
    %1331 = vrot.lane.b32.xlu0 %v1329, 32
    %v1332 = vpop.permute.xlu0 %1331
    %v1334 = vadd.f32 %v1231, %v1332
    %v1335 = vtanh.pop %v1334
    %v1336 = vsub.f32 1.0, %v1315
    %1338 = vrot.lane.b32.xlu0 %v1335, 112
    %v1339 = vpop.permute.xlu0 %1338
    %v1341 = vmul.f32 %v1336, %v1339
    %v1342 = vmul.f32 %v1315, 0.0
    %v1343 = vadd.f32 %v1341, %v1342
    %v1345 = vrot.slane %v1306, 6
    %v1347 = vadd.f32 %v1236, %v1345
    %v1348 = vxor.u32 %v1347, 2147483648
    %v1349 = vmul.f32 %v1348, 1.442695
    %v1350 = vpow.pop %v1349
    %v1351 = vadd.f32 %v1350, 1.0
    %v1352 = vrcp.pop %v1351
    %v1353 = vmul.f32 1.0, %v1352
    %1354 = vrot.lane.b32.xlu0 %v1320, 64
    %v1355 = vpop.permute.xlu0 %1354
    %v1357 = vadd.f32 %v1306, %v1355
    %v1359 = vrot.slane %v1357, 6
    %1360 = vrot.lane.b32.xlu0 %v1359, 96
    %v1361 = vpop.permute.xlu0 %1360
    %v1363 = vmul.f32 %v1353, %v1361
    %1365 = vrot.lane.b32.xlu0 %v1363, 32
    %v1366 = vpop.permute.xlu0 %1365
    %v1368 = vadd.f32 %v1236, %v1366
    %v1369 = vtanh.pop %v1368
    %v1370 = vsub.f32 1.0, %v1353
    %1372 = vrot.lane.b32.xlu0 %v1369, 112
    %v1373 = vpop.permute.xlu0 %1372
    %v1375 = vmul.f32 %v1370, %v1373
    %v1376 = vmul.f32 %v1353, 0.0
    %v1377 = vadd.f32 %v1375, %v1376
    %1379 = vrot.lane.b32.xlu0 %v1343, 112
    %v1380 = vpop.permute.xlu0 %1379
    %v1383 = vrot.slane %v1377, 2
    %1384 = vrot.lane.b32.xlu0 %v1383, 80
    %v1385 = vpop.permute.xlu0 %1384
    %v1387 = vsel %vm364, %v1380, %v1385
    %v1389 = vsel %vm131, %v1387, 0
    %1391 = vmatprep.subr.mxu0 0.0
    %1392 = vmatpush1.msra.mxu0 %v1146
    %1393 = vmatprep.subr.mxu0 0.0
    %1394 = vmatpush1.msra.mxu0 %v1147
    %1395 = vmatprep.subr.mxu0 0.0
    %1396 = vmatpush1.msra.mxu0 %v1148
    %1397 = vmatprep.subr.mxu0 0.0
    %1398 = vmatpush1.msra.mxu0 %v1149
    %1399 = vmatprep.subr.mxu0 0.0
    %1400 = vmatpush1.msra.mxu0 0.0
    %1401 = vmatprep.subr.mxu0 0.0
    %1402 = vmatpush1.msra.mxu0 0.0
    %1403 = vmatprep.subr.mxu0 0.0
    %1404 = vmatpush1.msra.mxu0 0.0
    %1405 = vmatprep.subr.mxu0 0.0
    %1406 = vmatpush1.msra.mxu0 0.0
    %1407 = vmatprep.subr.mxu0 0.0
    %1408 = vmatpush1.msra.mxu0 0.0
    %1409 = vmatprep.subr.mxu0 0.0
    %1410 = vmatpush1.msra.mxu0 0.0
    %1411 = vmatprep.subr.mxu0 0.0
    %1412 = vmatpush1.msra.mxu0 0.0
    %1413 = vmatprep.subr.mxu0 0.0
    %1414 = vmatpush1.msra.mxu0 0.0
    %1415 = vmatprep.subr.mxu0 0.0
    %1416 = vmatpush1.msra.mxu0 0.0
    %1417 = vmatprep.subr.mxu0 0.0
    %1418 = vmatpush1.msra.mxu0 0.0
    %1419 = vmatprep.subr.mxu0 0.0
    %1420 = vmatpush1.msra.mxu0 0.0
    %1421 = vmatprep.subr.mxu0 0.0
    %1422 = vmatpush1.msra.mxu0 0.0
    %1423 = vmatprep.subr.mxu0 0.0
    %1424 = vmatpush1.msra.mxu0 0.0
    %1425 = vmatprep.subr.mxu0 0.0
    %1426 = vmatpush1.msra.mxu0 0.0
    %1427 = vmatprep.subr.mxu0 0.0
    %1428 = vmatpush1.msra.mxu0 0.0
    %1429 = vmatprep.subr.mxu0 0.0
    %1430 = vmatpush1.msra.mxu0 0.0
    %1431 = vmatprep.subr.mxu0 0.0
    %1432 = vmatpush1.msra.mxu0 0.0
    %1433 = vmatprep.subr.mxu0 0.0
    %1434 = vmatpush1.msra.mxu0 0.0
    %1435 = vmatprep.subr.mxu0 0.0
    %1436 = vmatpush1.msra.mxu0 0.0
    %1437 = vmatprep.subr.mxu0 0.0
    %1438 = vmatpush1.msra.mxu0 0.0
    %1439 = vmatprep.subr.mxu0 0.0
    %1440 = vmatpush1.msra.mxu0 0.0
    %1441 = vmatprep.subr.mxu0 0.0
    %1442 = vmatpush1.msra.mxu0 0.0
    %1443 = vmatprep.subr.mxu0 0.0
    %1444 = vmatpush1.msra.mxu0 0.0
    %1445 = vmatprep.subr.mxu0 0.0
    %1446 = vmatpush1.msra.mxu0 0.0
    %1447 = vmatprep.subr.mxu0 0.0
    %1448 = vmatpush1.msra.mxu0 0.0
    %1449 = vmatprep.subr.mxu0 0.0
    %1450 = vmatpush1.msra.mxu0 0.0
    %1451 = vmatprep.subr.mxu0 0.0
    %1452 = vmatpush1.msra.mxu0 0.0
    %1453 = vmatprep.subr.mxu0 0.0
    %1454 = vmatpush1.msra.mxu0 0.0
    %1455 = vmatprep.mubr.f32.mxu0 0.0
    %1456 = vmatmul.mubr.f32.gmra.mrb[0].mxu0 %v1389
    %v1457 = vpop.f32.mrb[0].mxu0
    %v1458 = vadd.f32 0.0, %v1457
    %v1459 = vpop.f32.mrb[0].mxu0
    %1460 = vdwg.mxu0
    %v1462 = vrot.slane %v1458, 6
    %v1464 = vadd.f32 %v1231, %v1462
    %v1465 = vxor.u32 %v1464, 2147483648
    %v1466 = vmul.f32 %v1465, 1.442695
    %v1467 = vpow.pop %v1466
    %v1468 = vadd.f32 %v1467, 1.0
    %v1469 = vrcp.pop %v1468
    %v1470 = vmul.f32 1.0, %v1469
    %v1471 = vadd.f32 %v1458, %v1322
    %v1473 = vrot.slane %v1471, 6
    %1474 = vrot.lane.b32.xlu0 %v1473, 96
    %v1475 = vpop.permute.xlu0 %1474
    %v1477 = vmul.f32 %v1470, %v1475
    %1479 = vrot.lane.b32.xlu0 %v1477, 32
    %v1480 = vpop.permute.xlu0 %1479
    %v1482 = vadd.f32 %v1231, %v1480
    %v1483 = vtanh.pop %v1482
    %v1484 = vsub.f32 1.0, %v1470
    %1486 = vrot.lane.b32.xlu0 %v1483, 112
    %v1487 = vpop.permute.xlu0 %1486
    %v1489 = vmul.f32 %v1484, %v1487
    %v1490 = vrot.slane %v1387, 6
    %1491 = vrot.lane.b32.xlu0 %v1490, 16
    %v1492 = vpop.permute.xlu0 %1491
    %v1494 = vmul.f32 %v1470, %v1492
    %v1495 = vadd.f32 %v1489, %v1494
    %v1496 = vadd.f32 %v1236, %v1458
    %v1497 = vxor.u32 %v1496, 2147483648
    %v1498 = vmul.f32 %v1497, 1.442695
    %v1499 = vpow.pop %v1498
    %v1500 = vadd.f32 %v1499, 1.0
    %v1501 = vrcp.pop %v1500
    %v1502 = vmul.f32 1.0, %v1501
    %v1503 = vadd.f32 %v1458, %v1355
    %1505 = vrot.lane.b32.xlu0 %v1503, 96
    %v1506 = vpop.permute.xlu0 %1505
    %v1508 = vmul.f32 %v1502, %v1506
    %1510 = vrot.lane.b32.xlu0 %v1508, 32
    %v1511 = vpop.permute.xlu0 %1510
    %v1513 = vadd.f32 %v1236, %v1511
    %v1514 = vtanh.pop %v1513
    %v1515 = vsub.f32 1.0, %v1502
    %1517 = vrot.lane.b32.xlu0 %v1514, 112
    %v1518 = vpop.permute.xlu0 %1517
    %v1520 = vmul.f32 %v1515, %v1518
    %1521 = vrot.lane.b32.xlu0 %v1387, 48
    %v1522 = vpop.permute.xlu0 %1521
    %v1524 = vmul.f32 %v1502, %v1522
    %v1525 = vadd.f32 %v1520, %v1524
    %1527 = vrot.lane.b32.xlu0 %v1495, 112
    %v1528 = vpop.permute.xlu0 %1527
    %v1531 = vrot.slane %v1525, 6
    %1532 = vrot.lane.b32.xlu0 %v1531, 80
    %v1533 = vpop.permute.xlu0 %1532
    %v1535 = vsel %vm364, %v1528, %v1533
    %v1537 = vrot.slane %v1535, 2
    %v1538 = vsel %vm131, %v1537, 0
    %1540 = vmatprep.subr.mxu0 0.0
    %1541 = vmatpush1.msra.mxu0 %v1146
    %1542 = vmatprep.subr.mxu0 0.0
    %1543 = vmatpush1.msra.mxu0 %v1147
    %1544 = vmatprep.subr.mxu0 0.0
    %1545 = vmatpush1.msra.mxu0 %v1148
    %1546 = vmatprep.subr.mxu0 0.0
    %1547 = vmatpush1.msra.mxu0 %v1149
    %1548 = vmatprep.subr.mxu0 0.0
    %1549 = vmatpush1.msra.mxu0 0.0
    %1550 = vmatprep.subr.mxu0 0.0
    %1551 = vmatpush1.msra.mxu0 0.0
    %1552 = vmatprep.subr.mxu0 0.0
    %1553 = vmatpush1.msra.mxu0 0.0
    %1554 = vmatprep.subr.mxu0 0.0
    %1555 = vmatpush1.msra.mxu0 0.0
    %1556 = vmatprep.subr.mxu0 0.0
    %1557 = vmatpush1.msra.mxu0 0.0
    %1558 = vmatprep.subr.mxu0 0.0
    %1559 = vmatpush1.msra.mxu0 0.0
    %1560 = vmatprep.subr.mxu0 0.0
    %1561 = vmatpush1.msra.mxu0 0.0
    %1562 = vmatprep.subr.mxu0 0.0
    %1563 = vmatpush1.msra.mxu0 0.0
    %1564 = vmatprep.subr.mxu0 0.0
    %1565 = vmatpush1.msra.mxu0 0.0
    %1566 = vmatprep.subr.mxu0 0.0
    %1567 = vmatpush1.msra.mxu0 0.0
    %1568 = vmatprep.subr.mxu0 0.0
    %1569 = vmatpush1.msra.mxu0 0.0
    %1570 = vmatprep.subr.mxu0 0.0
    %1571 = vmatpush1.msra.mxu0 0.0
    %1572 = vmatprep.subr.mxu0 0.0
    %1573 = vmatpush1.msra.mxu0 0.0
    %1574 = vmatprep.subr.mxu0 0.0
    %1575 = vmatpush1.msra.mxu0 0.0
    %1576 = vmatprep.subr.mxu0 0.0
    %1577 = vmatpush1.msra.mxu0 0.0
    %1578 = vmatprep.subr.mxu0 0.0
    %1579 = vmatpush1.msra.mxu0 0.0
    %1580 = vmatprep.subr.mxu0 0.0
    %1581 = vmatpush1.msra.mxu0 0.0
    %1582 = vmatprep.subr.mxu0 0.0
    %1583 = vmatpush1.msra.mxu0 0.0
    %1584 = vmatprep.subr.mxu0 0.0
    %1585 = vmatpush1.msra.mxu0 0.0
    %1586 = vmatprep.subr.mxu0 0.0
    %1587 = vmatpush1.msra.mxu0 0.0
    %1588 = vmatprep.subr.mxu0 0.0
    %1589 = vmatpush1.msra.mxu0 0.0
    %1590 = vmatprep.subr.mxu0 0.0
    %1591 = vmatpush1.msra.mxu0 0.0
    %1592 = vmatprep.subr.mxu0 0.0
    %1593 = vmatpush1.msra.mxu0 0.0
    %1594 = vmatprep.subr.mxu0 0.0
    %1595 = vmatpush1.msra.mxu0 0.0
    %1596 = vmatprep.subr.mxu0 0.0
    %1597 = vmatpush1.msra.mxu0 0.0
    %1598 = vmatprep.subr.mxu0 0.0
    %1599 = vmatpush1.msra.mxu0 0.0
    %1600 = vmatprep.subr.mxu0 0.0
    %1601 = vmatpush1.msra.mxu0 0.0
    %1602 = vmatprep.subr.mxu0 0.0
    %1603 = vmatpush1.msra.mxu0 0.0
    %1604 = vmatprep.mubr.f32.mxu0 0.0
    %1605 = vmatmul.mubr.f32.gmra.mrb[0].mxu0 %v1538
    %v1606 = vpop.f32.mrb[0].mxu0
    %v1607 = vadd.f32 0.0, %v1606
    %v1608 = vpop.f32.mrb[0].mxu0
    %1609 = vdwg.mxu0
    %v1611 = vrot.slane %v1607, 4
    %v1613 = vadd.f32 %v1231, %v1611
    %v1614 = vxor.u32 %v1613, 2147483648
    %v1615 = vmul.f32 %v1614, 1.442695
    %v1616 = vpow.pop %v1615
    %v1617 = vadd.f32 %v1616, 1.0
    %v1618 = vrcp.pop %v1617
    %v1619 = vmul.f32 1.0, %v1618
    %v1620 = vadd.f32 %v1607, %v1322
    %v1622 = vrot.slane %v1620, 4
    %1623 = vrot.lane.b32.xlu0 %v1622, 96
    %v1624 = vpop.permute.xlu0 %1623
    %v1626 = vmul.f32 %v1619, %v1624
    %1628 = vrot.lane.b32.xlu0 %v1626, 32
    %v1629 = vpop.permute.xlu0 %1628
    %v1631 = vadd.f32 %v1231, %v1629
    %v1632 = vtanh.pop %v1631
    %v1633 = vsub.f32 1.0, %v1619
    %1635 = vrot.lane.b32.xlu0 %v1632, 112
    %v1636 = vpop.permute.xlu0 %1635
    %v1638 = vmul.f32 %v1633, %v1636
    %v1639 = vrot.slane %v1535, 6
    %1640 = vrot.lane.b32.xlu0 %v1639, 16
    %v1641 = vpop.permute.xlu0 %1640
    %v1643 = vmul.f32 %v1619, %v1641
    %v1644 = vadd.f32 %v1638, %v1643
    %v1645 = vrot.slane %v1607, 2
    %v1647 = vadd.f32 %v1231, %v1645
    %v1648 = vxor.u32 %v1647, 2147483648
    %v1649 = vmul.f32 %v1648, 1.442695
    %v1650 = vpow.pop %v1649
    %v1651 = vadd.f32 %v1650, 1.0
    %v1652 = vrcp.pop %v1651
    %v1653 = vmul.f32 1.0, %v1652
    %v1654 = vadd.f32 %v1607, %v1355
    %v1656 = vrot.slane %v1654, 2
    %1657 = vrot.lane.b32.xlu0 %v1656, 96
    %v1658 = vpop.permute.xlu0 %1657
    %v1660 = vmul.f32 %v1653, %v1658
    %1662 = vrot.lane.b32.xlu0 %v1660, 32
    %v1663 = vpop.permute.xlu0 %1662
    %v1665 = vadd.f32 %v1231, %v1663
    %v1666 = vtanh.pop %v1665
    %v1667 = vsub.f32 1.0, %v1653
    %1669 = vrot.lane.b32.xlu0 %v1666, 112
    %v1670 = vpop.permute.xlu0 %1669
    %v1672 = vmul.f32 %v1667, %v1670
    %v1673 = vrot.slane %v1535, 4
    %1674 = vrot.lane.b32.xlu0 %v1673, 48
    %v1675 = vpop.permute.xlu0 %1674
    %v1677 = vmul.f32 %v1653, %v1675
    %v1678 = vadd.f32 %v1672, %v1677
    %1680 = vrot.lane.b32.xlu0 %v1644, 112
    %v1681 = vpop.permute.xlu0 %1680
    %v1684 = vrot.slane %v1678, 2
    %1685 = vrot.lane.b32.xlu0 %v1684, 80
    %v1686 = vpop.permute.xlu0 %1685
    %v1688 = vsel %vm364, %v1681, %v1686
    %v1690 = vrot.slane %v1688, 4
    %v1691 = vsel %vm131, %v1690, 0
    %1693 = vmatprep.subr.mxu0 0.0
    %1694 = vmatpush1.msra.mxu0 %v1146
    %1695 = vmatprep.subr.mxu0 0.0
    %1696 = vmatpush1.msra.mxu0 %v1147
    %1697 = vmatprep.subr.mxu0 0.0
    %1698 = vmatpush1.msra.mxu0 %v1148
    %1699 = vmatprep.subr.mxu0 0.0
    %1700 = vmatpush1.msra.mxu0 %v1149
    %1701 = vmatprep.subr.mxu0 0.0
    %1702 = vmatpush1.msra.mxu0 0.0
    %1703 = vmatprep.subr.mxu0 0.0
    %1704 = vmatpush1.msra.mxu0 0.0
    %1705 = vmatprep.subr.mxu0 0.0
    %1706 = vmatpush1.msra.mxu0 0.0
    %1707 = vmatprep.subr.mxu0 0.0
    %1708 = vmatpush1.msra.mxu0 0.0
    %1709 = vmatprep.subr.mxu0 0.0
    %1710 = vmatpush1.msra.mxu0 0.0
    %1711 = vmatprep.subr.mxu0 0.0
    %1712 = vmatpush1.msra.mxu0 0.0
    %1713 = vmatprep.subr.mxu0 0.0
    %1714 = vmatpush1.msra.mxu0 0.0
    %1715 = vmatprep.subr.mxu0 0.0
    %1716 = vmatpush1.msra.mxu0 0.0
    %1717 = vmatprep.subr.mxu0 0.0
    %1718 = vmatpush1.msra.mxu0 0.0
    %1719 = vmatprep.subr.mxu0 0.0
    %1720 = vmatpush1.msra.mxu0 0.0
    %1721 = vmatprep.subr.mxu0 0.0
    %1722 = vmatpush1.msra.mxu0 0.0
    %1723 = vmatprep.subr.mxu0 0.0
    %1724 = vmatpush1.msra.mxu0 0.0
    %1725 = vmatprep.subr.mxu0 0.0
    %1726 = vmatpush1.msra.mxu0 0.0
    %1727 = vmatprep.subr.mxu0 0.0
    %1728 = vmatpush1.msra.mxu0 0.0
    %1729 = vmatprep.subr.mxu0 0.0
    %1730 = vmatpush1.msra.mxu0 0.0
    %1731 = vmatprep.subr.mxu0 0.0
    %1732 = vmatpush1.msra.mxu0 0.0
    %1733 = vmatprep.subr.mxu0 0.0
    %1734 = vmatpush1.msra.mxu0 0.0
    %1735 = vmatprep.subr.mxu0 0.0
    %1736 = vmatpush1.msra.mxu0 0.0
    %1737 = vmatprep.subr.mxu0 0.0
    %1738 = vmatpush1.msra.mxu0 0.0
    %1739 = vmatprep.subr.mxu0 0.0
    %1740 = vmatpush1.msra.mxu0 0.0
    %1741 = vmatprep.subr.mxu0 0.0
    %1742 = vmatpush1.msra.mxu0 0.0
    %1743 = vmatprep.subr.mxu0 0.0
    %1744 = vmatpush1.msra.mxu0 0.0
    %1745 = vmatprep.subr.mxu0 0.0
    %1746 = vmatpush1.msra.mxu0 0.0
    %1747 = vmatprep.subr.mxu0 0.0
    %1748 = vmatpush1.msra.mxu0 0.0
    %1749 = vmatprep.subr.mxu0 0.0
    %1750 = vmatpush1.msra.mxu0 0.0
    %1751 = vmatprep.subr.mxu0 0.0
    %1752 = vmatpush1.msra.mxu0 0.0
    %1753 = vmatprep.subr.mxu0 0.0
    %1754 = vmatpush1.msra.mxu0 0.0
    %1755 = vmatprep.subr.mxu0 0.0
    %1756 = vmatpush1.msra.mxu0 0.0
    %1757 = vmatprep.mubr.f32.mxu0 0.0
    %1758 = vmatmul.mubr.f32.gmra.mrb[0].mxu0 %v1691
    %v1759 = vpop.f32.mrb[0].mxu0
    %v1760 = vadd.f32 0.0, %v1759
    %v1761 = vpop.f32.mrb[0].mxu0
    %1762 = vdwg.mxu0
    %v1764 = vrot.slane %v1760, 2
    %v1766 = vadd.f32 %v1231, %v1764
    %v1767 = vxor.u32 %v1766, 2147483648
    %v1768 = vmul.f32 %v1767, 1.442695
    %v1769 = vpow.pop %v1768
    %v1770 = vadd.f32 %v1769, 1.0
    %v1771 = vrcp.pop %v1770
    %v1772 = vmul.f32 1.0, %v1771
    %v1773 = vadd.f32 %v1760, %v1322
    %v1775 = vrot.slane %v1773, 2
    %1776 = vrot.lane.b32.xlu0 %v1775, 96
    %v1777 = vpop.permute.xlu0 %1776
    %v1779 = vmul.f32 %v1772, %v1777
    %1781 = vrot.lane.b32.xlu0 %v1779, 32
    %v1782 = vpop.permute.xlu0 %1781
    %v1784 = vadd.f32 %v1231, %v1782
    %v1785 = vtanh.pop %v1784
    %v1786 = vsub.f32 1.0, %v1772
    %1788 = vrot.lane.b32.xlu0 %v1785, 112
    %v1789 = vpop.permute.xlu0 %1788
    %v1791 = vmul.f32 %v1786, %v1789
    %v1792 = vrot.slane %v1688, 6
    %1793 = vrot.lane.b32.xlu0 %v1792, 16
    %v1794 = vpop.permute.xlu0 %1793
    %v1796 = vmul.f32 %v1772, %v1794
    %v1797 = vadd.f32 %v1791, %v1796
    %v1798 = vrot.slane %v1760, 4
    %v1800 = vadd.f32 %v1231, %v1798
    %v1801 = vxor.u32 %v1800, 2147483648
    %v1802 = vmul.f32 %v1801, 1.442695
    %v1803 = vpow.pop %v1802
    %v1804 = vadd.f32 %v1803, 1.0
    %v1805 = vrcp.pop %v1804
    %v1806 = vmul.f32 1.0, %v1805
    %v1807 = vadd.f32 %v1760, %v1355
    %v1809 = vrot.slane %v1807, 4
    %1810 = vrot.lane.b32.xlu0 %v1809, 96
    %v1811 = vpop.permute.xlu0 %1810
    %v1813 = vmul.f32 %v1806, %v1811
    %1815 = vrot.lane.b32.xlu0 %v1813, 32
    %v1816 = vpop.permute.xlu0 %1815
    %v1818 = vadd.f32 %v1231, %v1816
    %v1819 = vtanh.pop %v1818
    %v1820 = vsub.f32 1.0, %v1806
    %1822 = vrot.lane.b32.xlu0 %v1819, 112
    %v1823 = vpop.permute.xlu0 %1822
    %v1825 = vmul.f32 %v1820, %v1823
    %1826 = vrot.lane.b32.xlu0 %v1688, 48
    %v1827 = vpop.permute.xlu0 %1826
    %v1829 = vmul.f32 %v1806, %v1827
    %v1830 = vadd.f32 %v1825, %v1829
    %1832 = vrot.lane.b32.xlu0 %v1797, 112
    %v1833 = vpop.permute.xlu0 %1832
    %v1836 = vrot.slane %v1830, 6
    %1837 = vrot.lane.b32.xlu0 %v1836, 80
    %v1838 = vpop.permute.xlu0 %1837
    %v1840 = vsel %vm364, %v1833, %v1838
    %v1842 = vrot.slane %v1840, 6
    %v1843 = vsel %vm131, %v1842, 0
    %1845 = vmatprep.subr.mxu0 0.0
    %1846 = vmatpush1.msra.mxu0 %v1146
    %1847 = vmatprep.subr.mxu0 0.0
    %1848 = vmatpush1.msra.mxu0 %v1147
    %1849 = vmatprep.subr.mxu0 0.0
    %1850 = vmatpush1.msra.mxu0 %v1148
    %1851 = vmatprep.subr.mxu0 0.0
    %1852 = vmatpush1.msra.mxu0 %v1149
    %1853 = vmatprep.subr.mxu0 0.0
    %1854 = vmatpush1.msra.mxu0 0.0
    %1855 = vmatprep.subr.mxu0 0.0
    %1856 = vmatpush1.msra.mxu0 0.0
    %1857 = vmatprep.subr.mxu0 0.0
    %1858 = vmatpush1.msra.mxu0 0.0
    %1859 = vmatprep.subr.mxu0 0.0
    %1860 = vmatpush1.msra.mxu0 0.0
    %1861 = vmatprep.subr.mxu0 0.0
    %1862 = vmatpush1.msra.mxu0 0.0
    %1863 = vmatprep.subr.mxu0 0.0
    %1864 = vmatpush1.msra.mxu0 0.0
    %1865 = vmatprep.subr.mxu0 0.0
    %1866 = vmatpush1.msra.mxu0 0.0
    %1867 = vmatprep.subr.mxu0 0.0
    %1868 = vmatpush1.msra.mxu0 0.0
    %1869 = vmatprep.subr.mxu0 0.0
    %1870 = vmatpush1.msra.mxu0 0.0
    %1871 = vmatprep.subr.mxu0 0.0
    %1872 = vmatpush1.msra.mxu0 0.0
    %1873 = vmatprep.subr.mxu0 0.0
    %1874 = vmatpush1.msra.mxu0 0.0
    %1875 = vmatprep.subr.mxu0 0.0
    %1876 = vmatpush1.msra.mxu0 0.0
    %1877 = vmatprep.subr.mxu0 0.0
    %1878 = vmatpush1.msra.mxu0 0.0
    %1879 = vmatprep.subr.mxu0 0.0
    %1880 = vmatpush1.msra.mxu0 0.0
    %1881 = vmatprep.subr.mxu0 0.0
    %1882 = vmatpush1.msra.mxu0 0.0
    %1883 = vmatprep.subr.mxu0 0.0
    %1884 = vmatpush1.msra.mxu0 0.0
    %1885 = vmatprep.subr.mxu0 0.0
    %1886 = vmatpush1.msra.mxu0 0.0
    %1887 = vmatprep.subr.mxu0 0.0
    %1888 = vmatpush1.msra.mxu0 0.0
    %1889 = vmatprep.subr.mxu0 0.0
    %1890 = vmatpush1.msra.mxu0 0.0
    %1891 = vmatprep.subr.mxu0 0.0
    %1892 = vmatpush1.msra.mxu0 0.0
    %1893 = vmatprep.subr.mxu0 0.0
    %1894 = vmatpush1.msra.mxu0 0.0
    %1895 = vmatprep.subr.mxu0 0.0
    %1896 = vmatpush1.msra.mxu0 0.0
    %1897 = vmatprep.subr.mxu0 0.0
    %1898 = vmatpush1.msra.mxu0 0.0
    %1899 = vmatprep.subr.mxu0 0.0
    %1900 = vmatpush1.msra.mxu0 0.0
    %1901 = vmatprep.subr.mxu0 0.0
    %1902 = vmatpush1.msra.mxu0 0.0
    %1903 = vmatprep.subr.mxu0 0.0
    %1904 = vmatpush1.msra.mxu0 0.0
    %1905 = vmatprep.subr.mxu0 0.0
    %1906 = vmatpush1.msra.mxu0 0.0
    %1907 = vmatprep.subr.mxu0 0.0
    %1908 = vmatpush1.msra.mxu0 0.0
    %1909 = vmatprep.mubr.f32.mxu0 0.0
    %1910 = vmatmul.mubr.f32.gmra.mrb[0].mxu0 %v1843
    %v1911 = vpop.f32.mrb[0].mxu0
    %v1912 = vadd.f32 0.0, %v1911
    %v1913 = vpop.f32.mrb[0].mxu0
    %1914 = vdwg.mxu0
    %v1915 = vadd.f32 %v1236, %v1912
    %v1916 = vxor.u32 %v1915, 2147483648
    %v1917 = vmul.f32 %v1916, 1.442695
    %v1918 = vpow.pop %v1917
    %v1919 = vadd.f32 %v1918, 1.0
    %v1920 = vrcp.pop %v1919
    %v1921 = vmul.f32 1.0, %v1920
    %v1922 = vadd.f32 %v1912, %v1322
    %1924 = vrot.lane.b32.xlu0 %v1922, 96
    %v1925 = vpop.permute.xlu0 %1924
    %v1927 = vmul.f32 %v1921, %v1925
    %1929 = vrot.lane.b32.xlu0 %v1927, 32
    %v1930 = vpop.permute.xlu0 %1929
    %v1932 = vadd.f32 %v1236, %v1930
    %v1933 = vtanh.pop %v1932
    %v1934 = vsub.f32 1.0, %v1921
    %1936 = vrot.lane.b32.xlu0 %v1933, 112
    %v1937 = vpop.permute.xlu0 %1936
    %v1939 = vmul.f32 %v1934, %v1937
    %1940 = vrot.lane.b32.xlu0 %v1842, 16
    %v1941 = vpop.permute.xlu0 %1940
    %v1943 = vmul.f32 %v1921, %v1941
    %v1944 = vadd.f32 %v1939, %v1943
    %v1946 = vrot.slane %v1912, 6
    %v1948 = vadd.f32 %v1231, %v1946
    %v1949 = vxor.u32 %v1948, 2147483648
    %v1950 = vmul.f32 %v1949, 1.442695
    %v1951 = vpow.pop %v1950
    %v1952 = vadd.f32 %v1951, 1.0
    %v1953 = vrcp.pop %v1952
    %v1954 = vmul.f32 1.0, %v1953
    %v1955 = vadd.f32 %v1912, %v1355
    %v1957 = vrot.slane %v1955, 6
    %1958 = vrot.lane.b32.xlu0 %v1957, 96
    %v1959 = vpop.permute.xlu0 %1958
    %v1961 = vmul.f32 %v1954, %v1959
    %1963 = vrot.lane.b32.xlu0 %v1961, 32
    %v1964 = vpop.permute.xlu0 %1963
    %v1966 = vadd.f32 %v1231, %v1964
    %v1967 = vtanh.pop %v1966
    %v1968 = vsub.f32 1.0, %v1954
    %1970 = vrot.lane.b32.xlu0 %v1967, 112
    %v1971 = vpop.permute.xlu0 %1970
    %v1973 = vmul.f32 %v1968, %v1971
    %v1974 = vrot.slane %v1840, 4
    %1975 = vrot.lane.b32.xlu0 %v1974, 48
    %v1976 = vpop.permute.xlu0 %1975
    %v1978 = vmul.f32 %v1954, %v1976
    %v1979 = vadd.f32 %v1973, %v1978
    %1981 = vrot.lane.b32.xlu0 %v1944, 112
    %v1982 = vpop.permute.xlu0 %1981
    %v1985 = vrot.slane %v1979, 2
    %1986 = vrot.lane.b32.xlu0 %v1985, 80
    %v1987 = vpop.permute.xlu0 %1986
    %v1989 = vsel %vm364, %v1982, %v1987
    %v1991 = vsel %vm131, %v1989, 0
    %1993 = vmatprep.subr.mxu0 0.0
    %1994 = vmatpush1.msra.mxu0 %v1146
    %1995 = vmatprep.subr.mxu0 0.0
    %1996 = vmatpush1.msra.mxu0 %v1147
    %1997 = vmatprep.subr.mxu0 0.0
    %1998 = vmatpush1.msra.mxu0 %v1148
    %1999 = vmatprep.subr.mxu0 0.0
    %2000 = vmatpush1.msra.mxu0 %v1149
    %2001 = vmatprep.subr.mxu0 0.0
    %2002 = vmatpush1.msra.mxu0 0.0
    %2003 = vmatprep.subr.mxu0 0.0
    %2004 = vmatpush1.msra.mxu0 0.0
    %2005 = vmatprep.subr.mxu0 0.0
    %2006 = vmatpush1.msra.mxu0 0.0
    %2007 = vmatprep.subr.mxu0 0.0
    %2008 = vmatpush1.msra.mxu0 0.0
    %2009 = vmatprep.subr.mxu0 0.0
    %2010 = vmatpush1.msra.mxu0 0.0
    %2011 = vmatprep.subr.mxu0 0.0
    %2012 = vmatpush1.msra.mxu0 0.0
    %2013 = vmatprep.subr.mxu0 0.0
    %2014 = vmatpush1.msra.mxu0 0.0
    %2015 = vmatprep.subr.mxu0 0.0
    %2016 = vmatpush1.msra.mxu0 0.0
    %2017 = vmatprep.subr.mxu0 0.0
    %2018 = vmatpush1.msra.mxu0 0.0
    %2019 = vmatprep.subr.mxu0 0.0
    %2020 = vmatpush1.msra.mxu0 0.0
    %2021 = vmatprep.subr.mxu0 0.0
    %2022 = vmatpush1.msra.mxu0 0.0
    %2023 = vmatprep.subr.mxu0 0.0
    %2024 = vmatpush1.msra.mxu0 0.0
    %2025 = vmatprep.subr.mxu0 0.0
    %2026 = vmatpush1.msra.mxu0 0.0
    %2027 = vmatprep.subr.mxu0 0.0
    %2028 = vmatpush1.msra.mxu0 0.0
    %2029 = vmatprep.subr.mxu0 0.0
    %2030 = vmatpush1.msra.mxu0 0.0
    %2031 = vmatprep.subr.mxu0 0.0
    %2032 = vmatpush1.msra.mxu0 0.0
    %2033 = vmatprep.subr.mxu0 0.0
    %2034 = vmatpush1.msra.mxu0 0.0
    %2035 = vmatprep.subr.mxu0 0.0
    %2036 = vmatpush1.msra.mxu0 0.0
    %2037 = vmatprep.subr.mxu0 0.0
    %2038 = vmatpush1.msra.mxu0 0.0
    %2039 = vmatprep.subr.mxu0 0.0
    %2040 = vmatpush1.msra.mxu0 0.0
    %2041 = vmatprep.subr.mxu0 0.0
    %2042 = vmatpush1.msra.mxu0 0.0
    %2043 = vmatprep.subr.mxu0 0.0
    %2044 = vmatpush1.msra.mxu0 0.0
    %2045 = vmatprep.subr.mxu0 0.0
    %2046 = vmatpush1.msra.mxu0 0.0
    %2047 = vmatprep.subr.mxu0 0.0
    %2048 = vmatpush1.msra.mxu0 0.0
    %2049 = vmatprep.subr.mxu0 0.0
    %2050 = vmatpush1.msra.mxu0 0.0
    %2051 = vmatprep.subr.mxu0 0.0
    %2052 = vmatpush1.msra.mxu0 0.0
    %2053 = vmatprep.subr.mxu0 0.0
    %2054 = vmatpush1.msra.mxu0 0.0
    %2055 = vmatprep.subr.mxu0 0.0
    %2056 = vmatpush1.msra.mxu0 0.0
    %2057 = vmatprep.mubr.f32.mxu0 0.0
    %2058 = vmatmul.mubr.f32.gmra.mrb[0].mxu0 %v1991
    %v2059 = vpop.f32.mrb[0].mxu0
    %v2060 = vadd.f32 0.0, %v2059
    %v2061 = vpop.f32.mrb[0].mxu0
    %2062 = vdwg.mxu0
    %v2064 = vrot.slane %v2060, 6
    %v2066 = vadd.f32 %v1236, %v2064
    %v2067 = vxor.u32 %v2066, 2147483648
    %v2068 = vmul.f32 %v2067, 1.442695
    %v2069 = vpow.pop %v2068
    %v2070 = vadd.f32 %v2069, 1.0
    %v2071 = vrcp.pop %v2070
    %v2072 = vmul.f32 1.0, %v2071
    %v2073 = vadd.f32 %v2060, %v1322
    %v2075 = vrot.slane %v2073, 6
    %2076 = vrot.lane.b32.xlu0 %v2075, 96
    %v2077 = vpop.permute.xlu0 %2076
    %v2079 = vmul.f32 %v2072, %v2077
    %2081 = vrot.lane.b32.xlu0 %v2079, 32
    %v2082 = vpop.permute.xlu0 %2081
    %v2084 = vadd.f32 %v1236, %v2082
    %v2085 = vtanh.pop %v2084
    %v2086 = vsub.f32 1.0, %v2072
    %2088 = vrot.lane.b32.xlu0 %v2085, 112
    %v2089 = vpop.permute.xlu0 %2088
    %v2091 = vmul.f32 %v2086, %v2089
    %v2092 = vrot.slane %v1989, 6
    %2093 = vrot.lane.b32.xlu0 %v2092, 16
    %v2094 = vpop.permute.xlu0 %2093
    %v2096 = vmul.f32 %v2072, %v2094
    %v2097 = vadd.f32 %v2091, %v2096
    %v2098 = vadd.f32 %v1231, %v2060
    %v2099 = vxor.u32 %v2098, 2147483648
    %v2100 = vmul.f32 %v2099, 1.442695
    %v2101 = vpow.pop %v2100
    %v2102 = vadd.f32 %v2101, 1.0
    %v2103 = vrcp.pop %v2102
    %v2104 = vmul.f32 1.0, %v2103
    %v2105 = vadd.f32 %v2060, %v1355
    %2107 = vrot.lane.b32.xlu0 %v2105, 96
    %v2108 = vpop.permute.xlu0 %2107
    %v2110 = vmul.f32 %v2104, %v2108
    %2112 = vrot.lane.b32.xlu0 %v2110, 32
    %v2113 = vpop.permute.xlu0 %2112
    %v2115 = vadd.f32 %v1231, %v2113
    %v2116 = vtanh.pop %v2115
    %v2117 = vsub.f32 1.0, %v2104
    %2119 = vrot.lane.b32.xlu0 %v2116, 112
    %v2120 = vpop.permute.xlu0 %2119
    %v2122 = vmul.f32 %v2117, %v2120
    %2123 = vrot.lane.b32.xlu0 %v1989, 48
    %v2124 = vpop.permute.xlu0 %2123
    %v2126 = vmul.f32 %v2104, %v2124
    %v2127 = vadd.f32 %v2122, %v2126
    %2129 = vrot.lane.b32.xlu0 %v2127, 80
    %v2130 = vpop.permute.xlu0 %2129
    %v2132 = vsel %vm364, %v1380, %v2130
    %2133 = vrot.lane.b32.xlu0 %v1979, 80
    %v2134 = vpop.permute.xlu0 %2133
    %v2136 = vsel %vm364, %v1528, %v2134
    %2137 = vrot.lane.b32.xlu0 %v1830, 80
    %v2138 = vpop.permute.xlu0 %2137
    %v2140 = vsel %vm364, %v1681, %v2138
    %2141 = vrot.lane.b32.xlu0 %v1678, 80
    %v2142 = vpop.permute.xlu0 %2141
    %v2144 = vsel %vm364, %v1833, %v2142
    %2145 = vrot.lane.b32.xlu0 %v1525, 80
    %v2146 = vpop.permute.xlu0 %2145
    %v2148 = vsel %vm364, %v1982, %v2146
    %2150 = vrot.lane.b32.xlu0 %v2097, 112
    %v2151 = vpop.permute.xlu0 %2150
    %2153 = vrot.lane.b32.xlu0 %v1377, 80
    %v2154 = vpop.permute.xlu0 %2153
    %v2156 = vsel %vm364, %v2151, %v2154
    %v2157 = vsel %vm1135, %v2132, %v2136
    %v2158 = vsel %vm1137, %v2157, %v2140
    %v2159 = vsel %vm1139, %v2158, %v2144
    %v2160 = vsel %vm1135, %v2148, %v2156
    %v2161 = vld [vmem:[%s2] sm:$0xff]
    %v2162 = vld [vmem:[%s2 + $0x8] sm:$0xff]
    %v2163 = vld [vmem:[%s11] sm:$0xff]
    %v2164 = vld [vmem:[%s11 + $0x8] sm:$0xff]
    %v2165 = vld [vmem:[%s11 + $0x10] sm:$0xff]
    %v2166 = vld [vmem:[%s11 + $0x18] sm:$0xff]
    %v2167 = vld [vmem:[%s12] sm:$0xff]
    %v2168 = vld [vmem:[%s12 + $0x8] sm:$0xff]
    %v2169 = vld [vmem:[%s12 + $0x10] sm:$0xff]
    %v2170 = vld [vmem:[%s12 + $0x18] sm:$0xff]
    %v2171 = vld [vmem:[%s13] sm:$0x1]
    %v2172 = vld [vmem:[%s14] sm:$0x1]
    %v2174 = vlaneseq
    %v2175 = vshrl.u32 %v2174, 7
    %v2176 = vsub.s32 0, %v2175
    %v2177 = vrot.slane %v2171, %v2176
    %v2180 = vsel %vm131, %v2161, 0
    %v2183 = vsel %vm131, %v2162, 0
    %2185 = vmatprep.subr.mxu0 0.0
    %2186 = vmatpush1.msra.mxu0 %v2163
    %2187 = vmatprep.subr.mxu0 0.0
    %2188 = vmatpush1.msra.mxu0 %v2164
    %2189 = vmatprep.subr.mxu0 0.0
    %2190 = vmatpush1.msra.mxu0 %v2165
    %2191 = vmatprep.subr.mxu0 0.0
    %2192 = vmatpush1.msra.mxu0 %v2166
    %2193 = vmatprep.subr.mxu0 0.0
    %2194 = vmatpush1.msra.mxu0 0.0
    %2195 = vmatprep.subr.mxu0 0.0
    %2196 = vmatpush1.msra.mxu0 0.0
    %2197 = vmatprep.subr.mxu0 0.0
    %2198 = vmatpush1.msra.mxu0 0.0
    %2199 = vmatprep.subr.mxu0 0.0
    %2200 = vmatpush1.msra.mxu0 0.0
    %2201 = vmatprep.subr.mxu0 0.0
    %2202 = vmatpush1.msra.mxu0 0.0
    %2203 = vmatprep.subr.mxu0 0.0
    %2204 = vmatpush1.msra.mxu0 0.0
    %2205 = vmatprep.subr.mxu0 0.0
    %2206 = vmatpush1.msra.mxu0 0.0
    %2207 = vmatprep.subr.mxu0 0.0
    %2208 = vmatpush1.msra.mxu0 0.0
    %2209 = vmatprep.subr.mxu0 0.0
    %2210 = vmatpush1.msra.mxu0 0.0
    %2211 = vmatprep.subr.mxu0 0.0
    %2212 = vmatpush1.msra.mxu0 0.0
    %2213 = vmatprep.subr.mxu0 0.0
    %2214 = vmatpush1.msra.mxu0 0.0
    %2215 = vmatprep.subr.mxu0 0.0
    %2216 = vmatpush1.msra.mxu0 0.0
    %2217 = vmatprep.subr.mxu0 0.0
    %2218 = vmatpush1.msra.mxu0 0.0
    %2219 = vmatprep.subr.mxu0 0.0
    %2220 = vmatpush1.msra.mxu0 0.0
    %2221 = vmatprep.subr.mxu0 0.0
    %2222 = vmatpush1.msra.mxu0 0.0
    %2223 = vmatprep.subr.mxu0 0.0
    %2224 = vmatpush1.msra.mxu0 0.0
    %2225 = vmatprep.subr.mxu0 0.0
    %2226 = vmatpush1.msra.mxu0 0.0
    %2227 = vmatprep.subr.mxu0 0.0
    %2228 = vmatpush1.msra.mxu0 0.0
    %2229 = vmatprep.subr.mxu0 0.0
    %2230 = vmatpush1.msra.mxu0 0.0
    %2231 = vmatprep.subr.mxu0 0.0
    %2232 = vmatpush1.msra.mxu0 0.0
    %2233 = vmatprep.subr.mxu0 0.0
    %2234 = vmatpush1.msra.mxu0 0.0
    %2235 = vmatprep.subr.mxu0 0.0
    %2236 = vmatpush1.msra.mxu0 0.0
    %2237 = vmatprep.subr.mxu0 0.0
    %2238 = vmatpush1.msra.mxu0 0.0
    %2239 = vmatprep.subr.mxu0 0.0
    %2240 = vmatpush1.msra.mxu0 0.0
    %2241 = vmatprep.subr.mxu0 0.0
    %2242 = vmatpush1.msra.mxu0 0.0
    %2243 = vmatprep.subr.mxu0 0.0
    %2244 = vmatpush1.msra.mxu0 0.0
    %2245 = vmatprep.subr.mxu0 0.0
    %2246 = vmatpush1.msra.mxu0 0.0
    %2247 = vmatprep.subr.mxu0 0.0
    %2248 = vmatpush1.msra.mxu0 0.0
    %2249 = vmatprep.mubr.f32.mxu0 0.0
    %2250 = vmatmul.mubr.f32.gmra.mrb[0].mxu0 %v2180
    %v2251 = vpop.f32.mrb[0].mxu0
    %v2252 = vadd.f32 %v2177, %v2251
    %v2253 = vpop.f32.mrb[0].mxu0
    %2254 = vmatprep.mubr.f32.mxu0 0.0
    %2255 = vmatmul.mubr.f32.gmra.mrb[0].mxu0 %v2183
    %v2256 = vpop.f32.mrb[0].mxu0
    %v2257 = vadd.f32 %v2177, %v2256
    %v2258 = vpop.f32.mrb[0].mxu0
    %2259 = vdwg.mxu0
    %2260 = vmatprep.subr.mxu0 0.0
    %2261 = vmatpush1.msra.mxu0 %v2167
    %2262 = vmatprep.subr.mxu0 0.0
    %2263 = vmatpush1.msra.mxu0 %v2168
    %2264 = vmatprep.subr.mxu0 0.0
    %2265 = vmatpush1.msra.mxu0 %v2169
    %2266 = vmatprep.subr.mxu0 0.0
    %2267 = vmatpush1.msra.mxu0 %v2170
    %2268 = vmatprep.subr.mxu0 0.0
    %2269 = vmatpush1.msra.mxu0 0.0
    %2270 = vmatprep.subr.mxu0 0.0
    %2271 = vmatpush1.msra.mxu0 0.0
    %2272 = vmatprep.subr.mxu0 0.0
    %2273 = vmatpush1.msra.mxu0 0.0
    %2274 = vmatprep.subr.mxu0 0.0
    %2275 = vmatpush1.msra.mxu0 0.0
    %2276 = vmatprep.subr.mxu0 0.0
    %2277 = vmatpush1.msra.mxu0 0.0
    %2278 = vmatprep.subr.mxu0 0.0
    %2279 = vmatpush1.msra.mxu0 0.0
    %2280 = vmatprep.subr.mxu0 0.0
    %2281 = vmatpush1.msra.mxu0 0.0
    %2282 = vmatprep.subr.mxu0 0.0
    %2283 = vmatpush1.msra.mxu0 0.0
    %2284 = vmatprep.subr.mxu0 0.0
    %2285 = vmatpush1.msra.mxu0 0.0
    %2286 = vmatprep.subr.mxu0 0.0
    %2287 = vmatpush1.msra.mxu0 0.0
    %2288 = vmatprep.subr.mxu0 0.0
    %2289 = vmatpush1.msra.mxu0 0.0
    %2290 = vmatprep.subr.mxu0 0.0
    %2291 = vmatpush1.msra.mxu0 0.0
    %2292 = vmatprep.subr.mxu0 0.0
    %2293 = vmatpush1.msra.mxu0 0.0
    %2294 = vmatprep.subr.mxu0 0.0
    %2295 = vmatpush1.msra.mxu0 0.0
    %2296 = vmatprep.subr.mxu0 0.0
    %2297 = vmatpush1.msra.mxu0 0.0
    %2298 = vmatprep.subr.mxu0 0.0
    %2299 = vmatpush1.msra.mxu0 0.0
    %2300 = vmatprep.subr.mxu0 0.0
    %2301 = vmatpush1.msra.mxu0 0.0
    %2302 = vmatprep.subr.mxu0 0.0
    %2303 = vmatpush1.msra.mxu0 0.0
    %2304 = vmatprep.subr.mxu0 0.0
    %2305 = vmatpush1.msra.mxu0 0.0
    %2306 = vmatprep.subr.mxu0 0.0
    %2307 = vmatpush1.msra.mxu0 0.0
    %2308 = vmatprep.subr.mxu0 0.0
    %2309 = vmatpush1.msra.mxu0 0.0
    %2310 = vmatprep.subr.mxu0 0.0
    %2311 = vmatpush1.msra.mxu0 0.0
    %2312 = vmatprep.subr.mxu0 0.0
    %2313 = vmatpush1.msra.mxu0 0.0
    %2314 = vmatprep.subr.mxu0 0.0
    %2315 = vmatpush1.msra.mxu0 0.0
    %2316 = vmatprep.subr.mxu0 0.0
    %2317 = vmatpush1.msra.mxu0 0.0
    %2318 = vmatprep.subr.mxu0 0.0
    %2319 = vmatpush1.msra.mxu0 0.0
    %2320 = vmatprep.subr.mxu0 0.0
    %2321 = vmatpush1.msra.mxu0 0.0
    %2322 = vmatprep.subr.mxu0 0.0
    %2323 = vmatpush1.msra.mxu0 0.0
    %2324 = vmatprep.mubr.f32.mxu0 0.0
    %2325 = vmatmul.mubr.f32.gmra.mrb[0].mxu0 %v214
    %v2326 = vpop.f32.mrb[0].mxu0
    %v2327 = vadd.f32 0.0, %v2326
    %v2328 = vpop.f32.mrb[0].mxu0
    %2329 = vdwg.mxu0
    %v2330 = vadd.f32 %v2252, %v2327
    %v2331 = vxor.u32 %v2330, 2147483648
    %v2332 = vmul.f32 %v2331, 1.442695
    %v2333 = vpow.pop %v2332
    %v2334 = vadd.f32 %v2333, 1.0
    %v2335 = vrcp.pop %v2334
    %v2336 = vmul.f32 1.0, %v2335
    %v2338 = vlaneseq
    %v2339 = vshrl.u32 %v2338, 7
    %v2340 = vsub.s32 0, %v2339
    %v2341 = vrot.slane %v2172, %v2340
    %2342 = vrot.lane.b32.xlu0 %v2341, 32
    %v2343 = vpop.permute.xlu0 %2342
    %v2345 = vadd.f32 %v2327, %v2343
    %2347 = vrot.lane.b32.xlu0 %v2345, 96
    %v2348 = vpop.permute.xlu0 %2347
    %v2350 = vmul.f32 %v2336, %v2348
    %2352 = vrot.lane.b32.xlu0 %v2350, 32
    %v2353 = vpop.permute.xlu0 %2352
    %v2355 = vadd.f32 %v2252, %v2353
    %v2356 = vtanh.pop %v2355
    %v2357 = vsub.f32 1.0, %v2336
    %2359 = vrot.lane.b32.xlu0 %v2356, 112
    %v2360 = vpop.permute.xlu0 %2359
    %v2362 = vmul.f32 %v2357, %v2360
    %v2363 = vmul.f32 %v2336, 0.0
    %v2364 = vadd.f32 %v2362, %v2363
    %v2366 = vrot.slane %v2327, 2
    %v2368 = vadd.f32 %v2257, %v2366
    %v2369 = vxor.u32 %v2368, 2147483648
    %v2370 = vmul.f32 %v2369, 1.442695
    %v2371 = vpow.pop %v2370
    %v2372 = vadd.f32 %v2371, 1.0
    %v2373 = vrcp.pop %v2372
    %v2374 = vmul.f32 1.0, %v2373
    %2375 = vrot.lane.b32.xlu0 %v2341, 64
    %v2376 = vpop.permute.xlu0 %2375
    %v2378 = vadd.f32 %v2327, %v2376
    %v2380 = vrot.slane %v2378, 2
    %2381 = vrot.lane.b32.xlu0 %v2380, 96
    %v2382 = vpop.permute.xlu0 %2381
    %v2384 = vmul.f32 %v2374, %v2382
    %2386 = vrot.lane.b32.xlu0 %v2384, 32
    %v2387 = vpop.permute.xlu0 %2386
    %v2389 = vadd.f32 %v2257, %v2387
    %v2390 = vtanh.pop %v2389
    %v2391 = vsub.f32 1.0, %v2374
    %2393 = vrot.lane.b32.xlu0 %v2390, 112
    %v2394 = vpop.permute.xlu0 %2393
    %v2396 = vmul.f32 %v2391, %v2394
    %v2397 = vmul.f32 %v2374, 0.0
    %v2398 = vadd.f32 %v2396, %v2397
    %2400 = vrot.lane.b32.xlu0 %v2364, 112
    %v2401 = vpop.permute.xlu0 %2400
    %v2404 = vrot.slane %v2398, 6
    %2405 = vrot.lane.b32.xlu0 %v2404, 80
    %v2406 = vpop.permute.xlu0 %2405
    %v2408 = vsel %vm364, %v2401, %v2406
    %v2410 = vsel %vm131, %v2408, 0
    %2412 = vmatprep.subr.mxu0 0.0
    %2413 = vmatpush1.msra.mxu0 %v2167
    %2414 = vmatprep.subr.mxu0 0.0
    %2415 = vmatpush1.msra.mxu0 %v2168
    %2416 = vmatprep.subr.mxu0 0.0
    %2417 = vmatpush1.msra.mxu0 %v2169
    %2418 = vmatprep.subr.mxu0 0.0
    %2419 = vmatpush1.msra.mxu0 %v2170
    %2420 = vmatprep.subr.mxu0 0.0
    %2421 = vmatpush1.msra.mxu0 0.0
    %2422 = vmatprep.subr.mxu0 0.0
    %2423 = vmatpush1.msra.mxu0 0.0
    %2424 = vmatprep.subr.mxu0 0.0
    %2425 = vmatpush1.msra.mxu0 0.0
    %2426 = vmatprep.subr.mxu0 0.0
    %2427 = vmatpush1.msra.mxu0 0.0
    %2428 = vmatprep.subr.mxu0 0.0
    %2429 = vmatpush1.msra.mxu0 0.0
    %2430 = vmatprep.subr.mxu0 0.0
    %2431 = vmatpush1.msra.mxu0 0.0
    %2432 = vmatprep.subr.mxu0 0.0
    %2433 = vmatpush1.msra.mxu0 0.0
    %2434 = vmatprep.subr.mxu0 0.0
    %2435 = vmatpush1.msra.mxu0 0.0
    %2436 = vmatprep.subr.mxu0 0.0
    %2437 = vmatpush1.msra.mxu0 0.0
    %2438 = vmatprep.subr.mxu0 0.0
    %2439 = vmatpush1.msra.mxu0 0.0
    %2440 = vmatprep.subr.mxu0 0.0
    %2441 = vmatpush1.msra.mxu0 0.0
    %2442 = vmatprep.subr.mxu0 0.0
    %2443 = vmatpush1.msra.mxu0 0.0
    %2444 = vmatprep.subr.mxu0 0.0
    %2445 = vmatpush1.msra.mxu0 0.0
    %2446 = vmatprep.subr.mxu0 0.0
    %2447 = vmatpush1.msra.mxu0 0.0
    %2448 = vmatprep.subr.mxu0 0.0
    %2449 = vmatpush1.msra.mxu0 0.0
    %2450 = vmatprep.subr.mxu0 0.0
    %2451 = vmatpush1.msra.mxu0 0.0
    %2452 = vmatprep.subr.mxu0 0.0
    %2453 = vmatpush1.msra.mxu0 0.0
    %2454 = vmatprep.subr.mxu0 0.0
    %2455 = vmatpush1.msra.mxu0 0.0
    %2456 = vmatprep.subr.mxu0 0.0
    %2457 = vmatpush1.msra.mxu0 0.0
    %2458 = vmatprep.subr.mxu0 0.0
    %2459 = vmatpush1.msra.mxu0 0.0
    %2460 = vmatprep.subr.mxu0 0.0
    %2461 = vmatpush1.msra.mxu0 0.0
    %2462 = vmatprep.subr.mxu0 0.0
    %2463 = vmatpush1.msra.mxu0 0.0
    %2464 = vmatprep.subr.mxu0 0.0
    %2465 = vmatpush1.msra.mxu0 0.0
    %2466 = vmatprep.subr.mxu0 0.0
    %2467 = vmatpush1.msra.mxu0 0.0
    %2468 = vmatprep.subr.mxu0 0.0
    %2469 = vmatpush1.msra.mxu0 0.0
    %2470 = vmatprep.subr.mxu0 0.0
    %2471 = vmatpush1.msra.mxu0 0.0
    %2472 = vmatprep.subr.mxu0 0.0
    %2473 = vmatpush1.msra.mxu0 0.0
    %2474 = vmatprep.subr.mxu0 0.0
    %2475 = vmatpush1.msra.mxu0 0.0
    %2476 = vmatprep.mubr.f32.mxu0 0.0
    %2477 = vmatmul.mubr.f32.gmra.mrb[0].mxu0 %v2410
    %v2478 = vpop.f32.mrb[0].mxu0
    %v2479 = vadd.f32 0.0, %v2478
    %v2480 = vpop.f32.mrb[0].mxu0
    %2481 = vdwg.mxu0
    %v2483 = vrot.slane %v2479, 6
    %v2485 = vadd.f32 %v2252, %v2483
    %v2486 = vxor.u32 %v2485, 2147483648
    %v2487 = vmul.f32 %v2486, 1.442695
    %v2488 = vpow.pop %v2487
    %v2489 = vadd.f32 %v2488, 1.0
    %v2490 = vrcp.pop %v2489
    %v2491 = vmul.f32 1.0, %v2490
    %v2492 = vadd.f32 %v2479, %v2343
    %v2494 = vrot.slane %v2492, 6
    %2495 = vrot.lane.b32.xlu0 %v2494, 96
    %v2496 = vpop.permute.xlu0 %2495
    %v2498 = vmul.f32 %v2491, %v2496
    %2500 = vrot.lane.b32.xlu0 %v2498, 32
    %v2501 = vpop.permute.xlu0 %2500
    %v2503 = vadd.f32 %v2252, %v2501
    %v2504 = vtanh.pop %v2503
    %v2505 = vsub.f32 1.0, %v2491
    %2507 = vrot.lane.b32.xlu0 %v2504, 112
    %v2508 = vpop.permute.xlu0 %2507
    %v2510 = vmul.f32 %v2505, %v2508
    %v2511 = vrot.slane %v2408, 6
    %2512 = vrot.lane.b32.xlu0 %v2511, 16
    %v2513 = vpop.permute.xlu0 %2512
    %v2515 = vmul.f32 %v2491, %v2513
    %v2516 = vadd.f32 %v2510, %v2515
    %v2517 = vrot.slane %v2479, 4
    %v2519 = vadd.f32 %v2257, %v2517
    %v2520 = vxor.u32 %v2519, 2147483648
    %v2521 = vmul.f32 %v2520, 1.442695
    %v2522 = vpow.pop %v2521
    %v2523 = vadd.f32 %v2522, 1.0
    %v2524 = vrcp.pop %v2523
    %v2525 = vmul.f32 1.0, %v2524
    %v2526 = vadd.f32 %v2479, %v2376
    %v2528 = vrot.slane %v2526, 4
    %2529 = vrot.lane.b32.xlu0 %v2528, 96
    %v2530 = vpop.permute.xlu0 %2529
    %v2532 = vmul.f32 %v2525, %v2530
    %2534 = vrot.lane.b32.xlu0 %v2532, 32
    %v2535 = vpop.permute.xlu0 %2534
    %v2537 = vadd.f32 %v2257, %v2535
    %v2538 = vtanh.pop %v2537
    %v2539 = vsub.f32 1.0, %v2525
    %2541 = vrot.lane.b32.xlu0 %v2538, 112
    %v2542 = vpop.permute.xlu0 %2541
    %v2544 = vmul.f32 %v2539, %v2542
    %v2545 = vrot.slane %v2408, 4
    %2546 = vrot.lane.b32.xlu0 %v2545, 48
    %v2547 = vpop.permute.xlu0 %2546
    %v2549 = vmul.f32 %v2525, %v2547
    %v2550 = vadd.f32 %v2544, %v2549
    %2552 = vrot.lane.b32.xlu0 %v2516, 112
    %v2553 = vpop.permute.xlu0 %2552
    %v2556 = vrot.slane %v2550, 2
    %2557 = vrot.lane.b32.xlu0 %v2556, 80
    %v2558 = vpop.permute.xlu0 %2557
    %v2560 = vsel %vm364, %v2553, %v2558
    %v2562 = vrot.slane %v2560, 2
    %v2563 = vsel %vm131, %v2562, 0
    %2565 = vmatprep.subr.mxu0 0.0
    %2566 = vmatpush1.msra.mxu0 %v2167
    %2567 = vmatprep.subr.mxu0 0.0
    %2568 = vmatpush1.msra.mxu0 %v2168
    %2569 = vmatprep.subr.mxu0 0.0
    %2570 = vmatpush1.msra.mxu0 %v2169
    %2571 = vmatprep.subr.mxu0 0.0
    %2572 = vmatpush1.msra.mxu0 %v2170
    %2573 = vmatprep.subr.mxu0 0.0
    %2574 = vmatpush1.msra.mxu0 0.0
    %2575 = vmatprep.subr.mxu0 0.0
    %2576 = vmatpush1.msra.mxu0 0.0
    %2577 = vmatprep.subr.mxu0 0.0
    %2578 = vmatpush1.msra.mxu0 0.0
    %2579 = vmatprep.subr.mxu0 0.0
    %2580 = vmatpush1.msra.mxu0 0.0
    %2581 = vmatprep.subr.mxu0 0.0
    %2582 = vmatpush1.msra.mxu0 0.0
    %2583 = vmatprep.subr.mxu0 0.0
    %2584 = vmatpush1.msra.mxu0 0.0
    %2585 = vmatprep.subr.mxu0 0.0
    %2586 = vmatpush1.msra.mxu0 0.0
    %2587 = vmatprep.subr.mxu0 0.0
    %2588 = vmatpush1.msra.mxu0 0.0
    %2589 = vmatprep.subr.mxu0 0.0
    %2590 = vmatpush1.msra.mxu0 0.0
    %2591 = vmatprep.subr.mxu0 0.0
    %2592 = vmatpush1.msra.mxu0 0.0
    %2593 = vmatprep.subr.mxu0 0.0
    %2594 = vmatpush1.msra.mxu0 0.0
    %2595 = vmatprep.subr.mxu0 0.0
    %2596 = vmatpush1.msra.mxu0 0.0
    %2597 = vmatprep.subr.mxu0 0.0
    %2598 = vmatpush1.msra.mxu0 0.0
    %2599 = vmatprep.subr.mxu0 0.0
    %2600 = vmatpush1.msra.mxu0 0.0
    %2601 = vmatprep.subr.mxu0 0.0
    %2602 = vmatpush1.msra.mxu0 0.0
    %2603 = vmatprep.subr.mxu0 0.0
    %2604 = vmatpush1.msra.mxu0 0.0
    %2605 = vmatprep.subr.mxu0 0.0
    %2606 = vmatpush1.msra.mxu0 0.0
    %2607 = vmatprep.subr.mxu0 0.0
    %2608 = vmatpush1.msra.mxu0 0.0
    %2609 = vmatprep.subr.mxu0 0.0
    %2610 = vmatpush1.msra.mxu0 0.0
    %2611 = vmatprep.subr.mxu0 0.0
    %2612 = vmatpush1.msra.mxu0 0.0
    %2613 = vmatprep.subr.mxu0 0.0
    %2614 = vmatpush1.msra.mxu0 0.0
    %2615 = vmatprep.subr.mxu0 0.0
    %2616 = vmatpush1.msra.mxu0 0.0
    %2617 = vmatprep.subr.mxu0 0.0
    %2618 = vmatpush1.msra.mxu0 0.0
    %2619 = vmatprep.subr.mxu0 0.0
    %2620 = vmatpush1.msra.mxu0 0.0
    %2621 = vmatprep.subr.mxu0 0.0
    %2622 = vmatpush1.msra.mxu0 0.0
    %2623 = vmatprep.subr.mxu0 0.0
    %2624 = vmatpush1.msra.mxu0 0.0
    %2625 = vmatprep.subr.mxu0 0.0
    %2626 = vmatpush1.msra.mxu0 0.0
    %2627 = vmatprep.subr.mxu0 0.0
    %2628 = vmatpush1.msra.mxu0 0.0
    %2629 = vmatprep.mubr.f32.mxu0 0.0
    %2630 = vmatmul.mubr.f32.gmra.mrb[0].mxu0 %v2563
    %v2631 = vpop.f32.mrb[0].mxu0
    %v2632 = vadd.f32 0.0, %v2631
    %v2633 = vpop.f32.mrb[0].mxu0
    %2634 = vdwg.mxu0
    %v2636 = vrot.slane %v2632, 4
    %v2638 = vadd.f32 %v2252, %v2636
    %v2639 = vxor.u32 %v2638, 2147483648
    %v2640 = vmul.f32 %v2639, 1.442695
    %v2641 = vpow.pop %v2640
    %v2642 = vadd.f32 %v2641, 1.0
    %v2643 = vrcp.pop %v2642
    %v2644 = vmul.f32 1.0, %v2643
    %v2645 = vadd.f32 %v2632, %v2343
    %v2647 = vrot.slane %v2645, 4
    %2648 = vrot.lane.b32.xlu0 %v2647, 96
    %v2649 = vpop.permute.xlu0 %2648
    %v2651 = vmul.f32 %v2644, %v2649
    %2653 = vrot.lane.b32.xlu0 %v2651, 32
    %v2654 = vpop.permute.xlu0 %2653
    %v2656 = vadd.f32 %v2252, %v2654
    %v2657 = vtanh.pop %v2656
    %v2658 = vsub.f32 1.0, %v2644
    %2660 = vrot.lane.b32.xlu0 %v2657, 112
    %v2661 = vpop.permute.xlu0 %2660
    %v2663 = vmul.f32 %v2658, %v2661
    %v2664 = vrot.slane %v2560, 6
    %2665 = vrot.lane.b32.xlu0 %v2664, 16
    %v2666 = vpop.permute.xlu0 %2665
    %v2668 = vmul.f32 %v2644, %v2666
    %v2669 = vadd.f32 %v2663, %v2668
    %v2670 = vrot.slane %v2632, 6
    %v2672 = vadd.f32 %v2257, %v2670
    %v2673 = vxor.u32 %v2672, 2147483648
    %v2674 = vmul.f32 %v2673, 1.442695
    %v2675 = vpow.pop %v2674
    %v2676 = vadd.f32 %v2675, 1.0
    %v2677 = vrcp.pop %v2676
    %v2678 = vmul.f32 1.0, %v2677
    %v2679 = vadd.f32 %v2632, %v2376
    %v2681 = vrot.slane %v2679, 6
    %2682 = vrot.lane.b32.xlu0 %v2681, 96
    %v2683 = vpop.permute.xlu0 %2682
    %v2685 = vmul.f32 %v2678, %v2683
    %2687 = vrot.lane.b32.xlu0 %v2685, 32
    %v2688 = vpop.permute.xlu0 %2687
    %v2690 = vadd.f32 %v2257, %v2688
    %v2691 = vtanh.pop %v2690
    %v2692 = vsub.f32 1.0, %v2678
    %2694 = vrot.lane.b32.xlu0 %v2691, 112
    %v2695 = vpop.permute.xlu0 %2694
    %v2697 = vmul.f32 %v2692, %v2695
    %2698 = vrot.lane.b32.xlu0 %v2560, 48
    %v2699 = vpop.permute.xlu0 %2698
    %v2701 = vmul.f32 %v2678, %v2699
    %v2702 = vadd.f32 %v2697, %v2701
    %2704 = vrot.lane.b32.xlu0 %v2669, 112
    %v2705 = vpop.permute.xlu0 %2704
    %v2708 = vrot.slane %v2702, 6
    %2709 = vrot.lane.b32.xlu0 %v2708, 80
    %v2710 = vpop.permute.xlu0 %2709
    %v2712 = vsel %vm364, %v2705, %v2710
    %v2714 = vrot.slane %v2712, 4
    %v2715 = vsel %vm131, %v2714, 0
    %2717 = vmatprep.subr.mxu0 0.0
    %2718 = vmatpush1.msra.mxu0 %v2167
    %2719 = vmatprep.subr.mxu0 0.0
    %2720 = vmatpush1.msra.mxu0 %v2168
    %2721 = vmatprep.subr.mxu0 0.0
    %2722 = vmatpush1.msra.mxu0 %v2169
    %2723 = vmatprep.subr.mxu0 0.0
    %2724 = vmatpush1.msra.mxu0 %v2170
    %2725 = vmatprep.subr.mxu0 0.0
    %2726 = vmatpush1.msra.mxu0 0.0
    %2727 = vmatprep.subr.mxu0 0.0
    %2728 = vmatpush1.msra.mxu0 0.0
    %2729 = vmatprep.subr.mxu0 0.0
    %2730 = vmatpush1.msra.mxu0 0.0
    %2731 = vmatprep.subr.mxu0 0.0
    %2732 = vmatpush1.msra.mxu0 0.0
    %2733 = vmatprep.subr.mxu0 0.0
    %2734 = vmatpush1.msra.mxu0 0.0
    %2735 = vmatprep.subr.mxu0 0.0
    %2736 = vmatpush1.msra.mxu0 0.0
    %2737 = vmatprep.subr.mxu0 0.0
    %2738 = vmatpush1.msra.mxu0 0.0
    %2739 = vmatprep.subr.mxu0 0.0
    %2740 = vmatpush1.msra.mxu0 0.0
    %2741 = vmatprep.subr.mxu0 0.0
    %2742 = vmatpush1.msra.mxu0 0.0
    %2743 = vmatprep.subr.mxu0 0.0
    %2744 = vmatpush1.msra.mxu0 0.0
    %2745 = vmatprep.subr.mxu0 0.0
    %2746 = vmatpush1.msra.mxu0 0.0
    %2747 = vmatprep.subr.mxu0 0.0
    %2748 = vmatpush1.msra.mxu0 0.0
    %2749 = vmatprep.subr.mxu0 0.0
    %2750 = vmatpush1.msra.mxu0 0.0
    %2751 = vmatprep.subr.mxu0 0.0
    %2752 = vmatpush1.msra.mxu0 0.0
    %2753 = vmatprep.subr.mxu0 0.0
    %2754 = vmatpush1.msra.mxu0 0.0
    %2755 = vmatprep.subr.mxu0 0.0
    %2756 = vmatpush1.msra.mxu0 0.0
    %2757 = vmatprep.subr.mxu0 0.0
    %2758 = vmatpush1.msra.mxu0 0.0
    %2759 = vmatprep.subr.mxu0 0.0
    %2760 = vmatpush1.msra.mxu0 0.0
    %2761 = vmatprep.subr.mxu0 0.0
    %2762 = vmatpush1.msra.mxu0 0.0
    %2763 = vmatprep.subr.mxu0 0.0
    %2764 = vmatpush1.msra.mxu0 0.0
    %2765 = vmatprep.subr.mxu0 0.0
    %2766 = vmatpush1.msra.mxu0 0.0
    %2767 = vmatprep.subr.mxu0 0.0
    %2768 = vmatpush1.msra.mxu0 0.0
    %2769 = vmatprep.subr.mxu0 0.0
    %2770 = vmatpush1.msra.mxu0 0.0
    %2771 = vmatprep.subr.mxu0 0.0
    %2772 = vmatpush1.msra.mxu0 0.0
    %2773 = vmatprep.subr.mxu0 0.0
    %2774 = vmatpush1.msra.mxu0 0.0
    %2775 = vmatprep.subr.mxu0 0.0
    %2776 = vmatpush1.msra.mxu0 0.0
    %2777 = vmatprep.subr.mxu0 0.0
    %2778 = vmatpush1.msra.mxu0 0.0
    %2779 = vmatprep.subr.mxu0 0.0
    %2780 = vmatpush1.msra.mxu0 0.0
    %2781 = vmatprep.mubr.f32.mxu0 0.0
    %2782 = vmatmul.mubr.f32.gmra.mrb[0].mxu0 %v2715
    %v2783 = vpop.f32.mrb[0].mxu0
    %v2784 = vadd.f32 0.0, %v2783
    %v2785 = vpop.f32.mrb[0].mxu0
    %2786 = vdwg.mxu0
    %v2788 = vrot.slane %v2784, 2
    %v2790 = vadd.f32 %v2252, %v2788
    %v2791 = vxor.u32 %v2790, 2147483648
    %v2792 = vmul.f32 %v2791, 1.442695
    %v2793 = vpow.pop %v2792
    %v2794 = vadd.f32 %v2793, 1.0
    %v2795 = vrcp.pop %v2794
    %v2796 = vmul.f32 1.0, %v2795
    %v2797 = vadd.f32 %v2784, %v2343
    %v2799 = vrot.slane %v2797, 2
    %2800 = vrot.lane.b32.xlu0 %v2799, 96
    %v2801 = vpop.permute.xlu0 %2800
    %v2803 = vmul.f32 %v2796, %v2801
    %2805 = vrot.lane.b32.xlu0 %v2803, 32
    %v2806 = vpop.permute.xlu0 %2805
    %v2808 = vadd.f32 %v2252, %v2806
    %v2809 = vtanh.pop %v2808
    %v2810 = vsub.f32 1.0, %v2796
    %2812 = vrot.lane.b32.xlu0 %v2809, 112
    %v2813 = vpop.permute.xlu0 %2812
    %v2815 = vmul.f32 %v2810, %v2813
    %v2816 = vrot.slane %v2712, 6
    %2817 = vrot.lane.b32.xlu0 %v2816, 16
    %v2818 = vpop.permute.xlu0 %2817
    %v2820 = vmul.f32 %v2796, %v2818
    %v2821 = vadd.f32 %v2815, %v2820
    %v2822 = vadd.f32 %v2257, %v2784
    %v2823 = vxor.u32 %v2822, 2147483648
    %v2824 = vmul.f32 %v2823, 1.442695
    %v2825 = vpow.pop %v2824
    %v2826 = vadd.f32 %v2825, 1.0
    %v2827 = vrcp.pop %v2826
    %v2828 = vmul.f32 1.0, %v2827
    %v2829 = vadd.f32 %v2784, %v2376
    %2831 = vrot.lane.b32.xlu0 %v2829, 96
    %v2832 = vpop.permute.xlu0 %2831
    %v2834 = vmul.f32 %v2828, %v2832
    %2836 = vrot.lane.b32.xlu0 %v2834, 32
    %v2837 = vpop.permute.xlu0 %2836
    %v2839 = vadd.f32 %v2257, %v2837
    %v2840 = vtanh.pop %v2839
    %v2841 = vsub.f32 1.0, %v2828
    %2843 = vrot.lane.b32.xlu0 %v2840, 112
    %v2844 = vpop.permute.xlu0 %2843
    %v2846 = vmul.f32 %v2841, %v2844
    %2847 = vrot.lane.b32.xlu0 %v2714, 48
    %v2848 = vpop.permute.xlu0 %2847
    %v2850 = vmul.f32 %v2828, %v2848
    %v2851 = vadd.f32 %v2846, %v2850
    %2853 = vrot.lane.b32.xlu0 %v2821, 112
    %v2854 = vpop.permute.xlu0 %2853
    %v2857 = vrot.slane %v2851, 2
    %2858 = vrot.lane.b32.xlu0 %v2857, 80
    %v2859 = vpop.permute.xlu0 %2858
    %v2861 = vsel %vm364, %v2854, %v2859
    %v2863 = vrot.slane %v2861, 6
    %v2864 = vsel %vm131, %v2863, 0
    %2866 = vmatprep.subr.mxu0 0.0
    %2867 = vmatpush1.msra.mxu0 %v2167
    %2868 = vmatprep.subr.mxu0 0.0
    %2869 = vmatpush1.msra.mxu0 %v2168
    %2870 = vmatprep.subr.mxu0 0.0
    %2871 = vmatpush1.msra.mxu0 %v2169
    %2872 = vmatprep.subr.mxu0 0.0
    %2873 = vmatpush1.msra.mxu0 %v2170
    %2874 = vmatprep.subr.mxu0 0.0
    %2875 = vmatpush1.msra.mxu0 0.0
    %2876 = vmatprep.subr.mxu0 0.0
    %2877 = vmatpush1.msra.mxu0 0.0
    %2878 = vmatprep.subr.mxu0 0.0
    %2879 = vmatpush1.msra.mxu0 0.0
    %2880 = vmatprep.subr.mxu0 0.0
    %2881 = vmatpush1.msra.mxu0 0.0
    %2882 = vmatprep.subr.mxu0 0.0
    %2883 = vmatpush1.msra.mxu0 0.0
    %2884 = vmatprep.subr.mxu0 0.0
    %2885 = vmatpush1.msra.mxu0 0.0
    %2886 = vmatprep.subr.mxu0 0.0
    %2887 = vmatpush1.msra.mxu0 0.0
    %2888 = vmatprep.subr.mxu0 0.0
    %2889 = vmatpush1.msra.mxu0 0.0
    %2890 = vmatprep.subr.mxu0 0.0
    %2891 = vmatpush1.msra.mxu0 0.0
    %2892 = vmatprep.subr.mxu0 0.0
    %2893 = vmatpush1.msra.mxu0 0.0
    %2894 = vmatprep.subr.mxu0 0.0
    %2895 = vmatpush1.msra.mxu0 0.0
    %2896 = vmatprep.subr.mxu0 0.0
    %2897 = vmatpush1.msra.mxu0 0.0
    %2898 = vmatprep.subr.mxu0 0.0
    %2899 = vmatpush1.msra.mxu0 0.0
    %2900 = vmatprep.subr.mxu0 0.0
    %2901 = vmatpush1.msra.mxu0 0.0
    %2902 = vmatprep.subr.mxu0 0.0
    %2903 = vmatpush1.msra.mxu0 0.0
    %2904 = vmatprep.subr.mxu0 0.0
    %2905 = vmatpush1.msra.mxu0 0.0
    %2906 = vmatprep.subr.mxu0 0.0
    %2907 = vmatpush1.msra.mxu0 0.0
    %2908 = vmatprep.subr.mxu0 0.0
    %2909 = vmatpush1.msra.mxu0 0.0
    %2910 = vmatprep.subr.mxu0 0.0
    %2911 = vmatpush1.msra.mxu0 0.0
    %2912 = vmatprep.subr.mxu0 0.0
    %2913 = vmatpush1.msra.mxu0 0.0
    %2914 = vmatprep.subr.mxu0 0.0
    %2915 = vmatpush1.msra.mxu0 0.0
    %2916 = vmatprep.subr.mxu0 0.0
    %2917 = vmatpush1.msra.mxu0 0.0
    %2918 = vmatprep.subr.mxu0 0.0
    %2919 = vmatpush1.msra.mxu0 0.0
    %2920 = vmatprep.subr.mxu0 0.0
    %2921 = vmatpush1.msra.mxu0 0.0
    %2922 = vmatprep.subr.mxu0 0.0
    %2923 = vmatpush1.msra.mxu0 0.0
    %2924 = vmatprep.subr.mxu0 0.0
    %2925 = vmatpush1.msra.mxu0 0.0
    %2926 = vmatprep.subr.mxu0 0.0
    %2927 = vmatpush1.msra.mxu0 0.0
    %2928 = vmatprep.subr.mxu0 0.0
    %2929 = vmatpush1.msra.mxu0 0.0
    %2930 = vmatprep.mubr.f32.mxu0 0.0
    %2931 = vmatmul.mubr.f32.gmra.mrb[0].mxu0 %v2864
    %v2932 = vpop.f32.mrb[0].mxu0
    %v2933 = vadd.f32 0.0, %v2932
    %v2934 = vpop.f32.mrb[0].mxu0
    %2935 = vdwg.mxu0
    %v2936 = vadd.f32 %v2257, %v2933
    %v2937 = vxor.u32 %v2936, 2147483648
    %v2938 = vmul.f32 %v2937, 1.442695
    %v2939 = vpow.pop %v2938
    %v2940 = vadd.f32 %v2939, 1.0
    %v2941 = vrcp.pop %v2940
    %v2942 = vmul.f32 1.0, %v2941
    %v2943 = vadd.f32 %v2933, %v2343
    %2945 = vrot.lane.b32.xlu0 %v2943, 96
    %v2946 = vpop.permute.xlu0 %2945
    %v2948 = vmul.f32 %v2942, %v2946
    %2950 = vrot.lane.b32.xlu0 %v2948, 32
    %v2951 = vpop.permute.xlu0 %2950
    %v2953 = vadd.f32 %v2257, %v2951
    %v2954 = vtanh.pop %v2953
    %v2955 = vsub.f32 1.0, %v2942
    %2957 = vrot.lane.b32.xlu0 %v2954, 112
    %v2958 = vpop.permute.xlu0 %2957
    %v2960 = vmul.f32 %v2955, %v2958
    %2961 = vrot.lane.b32.xlu0 %v2863, 16
    %v2962 = vpop.permute.xlu0 %2961
    %v2964 = vmul.f32 %v2942, %v2962
    %v2965 = vadd.f32 %v2960, %v2964
    %v2967 = vrot.slane %v2933, 2
    %v2969 = vadd.f32 %v2252, %v2967
    %v2970 = vxor.u32 %v2969, 2147483648
    %v2971 = vmul.f32 %v2970, 1.442695
    %v2972 = vpow.pop %v2971
    %v2973 = vadd.f32 %v2972, 1.0
    %v2974 = vrcp.pop %v2973
    %v2975 = vmul.f32 1.0, %v2974
    %v2976 = vadd.f32 %v2933, %v2376
    %v2978 = vrot.slane %v2976, 2
    %2979 = vrot.lane.b32.xlu0 %v2978, 96
    %v2980 = vpop.permute.xlu0 %2979
    %v2982 = vmul.f32 %v2975, %v2980
    %2984 = vrot.lane.b32.xlu0 %v2982, 32
    %v2985 = vpop.permute.xlu0 %2984
    %v2987 = vadd.f32 %v2252, %v2985
    %v2988 = vtanh.pop %v2987
    %v2989 = vsub.f32 1.0, %v2975
    %2991 = vrot.lane.b32.xlu0 %v2988, 112
    %v2992 = vpop.permute.xlu0 %2991
    %v2994 = vmul.f32 %v2989, %v2992
    %2995 = vrot.lane.b32.xlu0 %v2861, 48
    %v2996 = vpop.permute.xlu0 %2995
    %v2998 = vmul.f32 %v2975, %v2996
    %v2999 = vadd.f32 %v2994, %v2998
    %3001 = vrot.lane.b32.xlu0 %v2965, 112
    %v3002 = vpop.permute.xlu0 %3001
    %v3005 = vrot.slane %v2999, 6
    %3006 = vrot.lane.b32.xlu0 %v3005, 80
    %v3007 = vpop.permute.xlu0 %3006
    %v3009 = vsel %vm364, %v3002, %v3007
    %v3011 = vsel %vm131, %v3009, 0
    %3013 = vmatprep.subr.mxu0 0.0
    %3014 = vmatpush1.msra.mxu0 %v2167
    %3015 = vmatprep.subr.mxu0 0.0
    %3016 = vmatpush1.msra.mxu0 %v2168
    %3017 = vmatprep.subr.mxu0 0.0
    %3018 = vmatpush1.msra.mxu0 %v2169
    %3019 = vmatprep.subr.mxu0 0.0
    %3020 = vmatpush1.msra.mxu0 %v2170
    %3021 = vmatprep.subr.mxu0 0.0
    %3022 = vmatpush1.msra.mxu0 0.0
    %3023 = vmatprep.subr.mxu0 0.0
    %3024 = vmatpush1.msra.mxu0 0.0
    %3025 = vmatprep.subr.mxu0 0.0
    %3026 = vmatpush1.msra.mxu0 0.0
    %3027 = vmatprep.subr.mxu0 0.0
    %3028 = vmatpush1.msra.mxu0 0.0
    %3029 = vmatprep.subr.mxu0 0.0
    %3030 = vmatpush1.msra.mxu0 0.0
    %3031 = vmatprep.subr.mxu0 0.0
    %3032 = vmatpush1.msra.mxu0 0.0
    %3033 = vmatprep.subr.mxu0 0.0
    %3034 = vmatpush1.msra.mxu0 0.0
    %3035 = vmatprep.subr.mxu0 0.0
    %3036 = vmatpush1.msra.mxu0 0.0
    %3037 = vmatprep.subr.mxu0 0.0
    %3038 = vmatpush1.msra.mxu0 0.0
    %3039 = vmatprep.subr.mxu0 0.0
    %3040 = vmatpush1.msra.mxu0 0.0
    %3041 = vmatprep.subr.mxu0 0.0
    %3042 = vmatpush1.msra.mxu0 0.0
    %3043 = vmatprep.subr.mxu0 0.0
    %3044 = vmatpush1.msra.mxu0 0.0
    %3045 = vmatprep.subr.mxu0 0.0
    %3046 = vmatpush1.msra.mxu0 0.0
    %3047 = vmatprep.subr.mxu0 0.0
    %3048 = vmatpush1.msra.mxu0 0.0
    %3049 = vmatprep.subr.mxu0 0.0
    %3050 = vmatpush1.msra.mxu0 0.0
    %3051 = vmatprep.subr.mxu0 0.0
    %3052 = vmatpush1.msra.mxu0 0.0
    %3053 = vmatprep.subr.mxu0 0.0
    %3054 = vmatpush1.msra.mxu0 0.0
    %3055 = vmatprep.subr.mxu0 0.0
    %3056 = vmatpush1.msra.mxu0 0.0
    %3057 = vmatprep.subr.mxu0 0.0
    %3058 = vmatpush1.msra.mxu0 0.0
    %3059 = vmatprep.subr.mxu0 0.0
    %3060 = vmatpush1.msra.mxu0 0.0
    %3061 = vmatprep.subr.mxu0 0.0
    %3062 = vmatpush1.msra.mxu0 0.0
    %3063 = vmatprep.subr.mxu0 0.0
    %3064 = vmatpush1.msra.mxu0 0.0
    %3065 = vmatprep.subr.mxu0 0.0
    %3066 = vmatpush1.msra.mxu0 0.0
    %3067 = vmatprep.subr.mxu0 0.0
    %3068 = vmatpush1.msra.mxu0 0.0
    %3069 = vmatprep.subr.mxu0 0.0
    %3070 = vmatpush1.msra.mxu0 0.0
    %3071 = vmatprep.subr.mxu0 0.0
    %3072 = vmatpush1.msra.mxu0 0.0
    %3073 = vmatprep.subr.mxu0 0.0
    %3074 = vmatpush1.msra.mxu0 0.0
    %3075 = vmatprep.subr.mxu0 0.0
    %3076 = vmatpush1.msra.mxu0 0.0
    %3077 = vmatprep.mubr.f32.mxu0 0.0
    %3078 = vmatmul.mubr.f32.gmra.mrb[0].mxu0 %v3011
    %v3079 = vpop.f32.mrb[0].mxu0
    %v3080 = vadd.f32 0.0, %v3079
    %v3081 = vpop.f32.mrb[0].mxu0
    %3082 = vdwg.mxu0
    %v3084 = vrot.slane %v3080, 6
    %v3086 = vadd.f32 %v2257, %v3084
    %v3087 = vxor.u32 %v3086, 2147483648
    %v3088 = vmul.f32 %v3087, 1.442695
    %v3089 = vpow.pop %v3088
    %v3090 = vadd.f32 %v3089, 1.0
    %v3091 = vrcp.pop %v3090
    %v3092 = vmul.f32 1.0, %v3091
    %v3093 = vadd.f32 %v3080, %v2343
    %v3095 = vrot.slane %v3093, 6
    %3096 = vrot.lane.b32.xlu0 %v3095, 96
    %v3097 = vpop.permute.xlu0 %3096
    %v3099 = vmul.f32 %v3092, %v3097
    %3101 = vrot.lane.b32.xlu0 %v3099, 32
    %v3102 = vpop.permute.xlu0 %3101
    %v3104 = vadd.f32 %v2257, %v3102
    %v3105 = vtanh.pop %v3104
    %v3106 = vsub.f32 1.0, %v3092
    %3108 = vrot.lane.b32.xlu0 %v3105, 112
    %v3109 = vpop.permute.xlu0 %3108
    %v3111 = vmul.f32 %v3106, %v3109
    %v3112 = vrot.slane %v3009, 6
    %3113 = vrot.lane.b32.xlu0 %v3112, 16
    %v3114 = vpop.permute.xlu0 %3113
    %v3116 = vmul.f32 %v3092, %v3114
    %v3117 = vadd.f32 %v3111, %v3116
    %v3118 = vrot.slane %v3080, 4
    %v3120 = vadd.f32 %v2252, %v3118
    %v3121 = vxor.u32 %v3120, 2147483648
    %v3122 = vmul.f32 %v3121, 1.442695
    %v3123 = vpow.pop %v3122
    %v3124 = vadd.f32 %v3123, 1.0
    %v3125 = vrcp.pop %v3124
    %v3126 = vmul.f32 1.0, %v3125
    %v3127 = vadd.f32 %v3080, %v2376
    %v3129 = vrot.slane %v3127, 4
    %3130 = vrot.lane.b32.xlu0 %v3129, 96
    %v3131 = vpop.permute.xlu0 %3130
    %v3133 = vmul.f32 %v3126, %v3131
    %3135 = vrot.lane.b32.xlu0 %v3133, 32
    %v3136 = vpop.permute.xlu0 %3135
    %v3138 = vadd.f32 %v2252, %v3136
    %v3139 = vtanh.pop %v3138
    %v3140 = vsub.f32 1.0, %v3126
    %3142 = vrot.lane.b32.xlu0 %v3139, 112
    %v3143 = vpop.permute.xlu0 %3142
    %v3145 = vmul.f32 %v3140, %v3143
    %v3146 = vrot.slane %v3009, 4
    %3147 = vrot.lane.b32.xlu0 %v3146, 48
    %v3148 = vpop.permute.xlu0 %3147
    %v3150 = vmul.f32 %v3126, %v3148
    %v3151 = vadd.f32 %v3145, %v3150
    %3153 = vrot.lane.b32.xlu0 %v3117, 112
    %v3154 = vpop.permute.xlu0 %3153
    %v3157 = vrot.slane %v3151, 2
    %3158 = vrot.lane.b32.xlu0 %v3157, 80
    %v3159 = vpop.permute.xlu0 %3158
    %v3161 = vsel %vm364, %v3154, %v3159
    %v3163 = vrot.slane %v3161, 2
    %v3164 = vsel %vm131, %v3163, 0
    %3166 = vmatprep.subr.mxu0 0.0
    %3167 = vmatpush1.msra.mxu0 %v2167
    %3168 = vmatprep.subr.mxu0 0.0
    %3169 = vmatpush1.msra.mxu0 %v2168
    %3170 = vmatprep.subr.mxu0 0.0
    %3171 = vmatpush1.msra.mxu0 %v2169
    %3172 = vmatprep.subr.mxu0 0.0
    %3173 = vmatpush1.msra.mxu0 %v2170
    %3174 = vmatprep.subr.mxu0 0.0
    %3175 = vmatpush1.msra.mxu0 0.0
    %3176 = vmatprep.subr.mxu0 0.0
    %3177 = vmatpush1.msra.mxu0 0.0
    %3178 = vmatprep.subr.mxu0 0.0
    %3179 = vmatpush1.msra.mxu0 0.0
    %3180 = vmatprep.subr.mxu0 0.0
    %3181 = vmatpush1.msra.mxu0 0.0
    %3182 = vmatprep.subr.mxu0 0.0
    %3183 = vmatpush1.msra.mxu0 0.0
    %3184 = vmatprep.subr.mxu0 0.0
    %3185 = vmatpush1.msra.mxu0 0.0
    %3186 = vmatprep.subr.mxu0 0.0
    %3187 = vmatpush1.msra.mxu0 0.0
    %3188 = vmatprep.subr.mxu0 0.0
    %3189 = vmatpush1.msra.mxu0 0.0
    %3190 = vmatprep.subr.mxu0 0.0
    %3191 = vmatpush1.msra.mxu0 0.0
    %3192 = vmatprep.subr.mxu0 0.0
    %3193 = vmatpush1.msra.mxu0 0.0
    %3194 = vmatprep.subr.mxu0 0.0
    %3195 = vmatpush1.msra.mxu0 0.0
    %3196 = vmatprep.subr.mxu0 0.0
    %3197 = vmatpush1.msra.mxu0 0.0
    %3198 = vmatprep.subr.mxu0 0.0
    %3199 = vmatpush1.msra.mxu0 0.0
    %3200 = vmatprep.subr.mxu0 0.0
    %3201 = vmatpush1.msra.mxu0 0.0
    %3202 = vmatprep.subr.mxu0 0.0
    %3203 = vmatpush1.msra.mxu0 0.0
    %3204 = vmatprep.subr.mxu0 0.0
    %3205 = vmatpush1.msra.mxu0 0.0
    %3206 = vmatprep.subr.mxu0 0.0
    %3207 = vmatpush1.msra.mxu0 0.0
    %3208 = vmatprep.subr.mxu0 0.0
    %3209 = vmatpush1.msra.mxu0 0.0
    %3210 = vmatprep.subr.mxu0 0.0
    %3211 = vmatpush1.msra.mxu0 0.0
    %3212 = vmatprep.subr.mxu0 0.0
    %3213 = vmatpush1.msra.mxu0 0.0
    %3214 = vmatprep.subr.mxu0 0.0
    %3215 = vmatpush1.msra.mxu0 0.0
    %3216 = vmatprep.subr.mxu0 0.0
    %3217 = vmatpush1.msra.mxu0 0.0
    %3218 = vmatprep.subr.mxu0 0.0
    %3219 = vmatpush1.msra.mxu0 0.0
    %3220 = vmatprep.subr.mxu0 0.0
    %3221 = vmatpush1.msra.mxu0 0.0
    %3222 = vmatprep.subr.mxu0 0.0
    %3223 = vmatpush1.msra.mxu0 0.0
    %3224 = vmatprep.subr.mxu0 0.0
    %3225 = vmatpush1.msra.mxu0 0.0
    %3226 = vmatprep.subr.mxu0 0.0
    %3227 = vmatpush1.msra.mxu0 0.0
    %3228 = vmatprep.subr.mxu0 0.0
    %3229 = vmatpush1.msra.mxu0 0.0
    %3230 = vmatprep.mubr.f32.mxu0 0.0
    %3231 = vmatmul.mubr.f32.gmra.mrb[0].mxu0 %v3164
    %v3232 = vpop.f32.mrb[0].mxu0
    %v3233 = vadd.f32 0.0, %v3232
    %v3234 = vpop.f32.mrb[0].mxu0
    %3235 = vdwg.mxu0
    %v3237 = vrot.slane %v3233, 4
    %v3239 = vadd.f32 %v2257, %v3237
    %v3240 = vxor.u32 %v3239, 2147483648
    %v3241 = vmul.f32 %v3240, 1.442695
    %v3242 = vpow.pop %v3241
    %v3243 = vadd.f32 %v3242, 1.0
    %v3244 = vrcp.pop %v3243
    %v3245 = vmul.f32 1.0, %v3244
    %v3246 = vadd.f32 %v3233, %v2343
    %v3248 = vrot.slane %v3246, 4
    %3249 = vrot.lane.b32.xlu0 %v3248, 96
    %v3250 = vpop.permute.xlu0 %3249
    %v3252 = vmul.f32 %v3245, %v3250
    %3254 = vrot.lane.b32.xlu0 %v3252, 32
    %v3255 = vpop.permute.xlu0 %3254
    %v3257 = vadd.f32 %v2257, %v3255
    %v3258 = vtanh.pop %v3257
    %v3259 = vsub.f32 1.0, %v3245
    %3261 = vrot.lane.b32.xlu0 %v3258, 112
    %v3262 = vpop.permute.xlu0 %3261
    %v3264 = vmul.f32 %v3259, %v3262
    %v3265 = vrot.slane %v3161, 6
    %3266 = vrot.lane.b32.xlu0 %v3265, 16
    %v3267 = vpop.permute.xlu0 %3266
    %v3269 = vmul.f32 %v3245, %v3267
    %v3270 = vadd.f32 %v3264, %v3269
    %v3271 = vrot.slane %v3233, 6
    %v3273 = vadd.f32 %v2252, %v3271
    %v3274 = vxor.u32 %v3273, 2147483648
    %v3275 = vmul.f32 %v3274, 1.442695
    %v3276 = vpow.pop %v3275
    %v3277 = vadd.f32 %v3276, 1.0
    %v3278 = vrcp.pop %v3277
    %v3279 = vmul.f32 1.0, %v3278
    %v3280 = vadd.f32 %v3233, %v2376
    %v3282 = vrot.slane %v3280, 6
    %3283 = vrot.lane.b32.xlu0 %v3282, 96
    %v3284 = vpop.permute.xlu0 %3283
    %v3286 = vmul.f32 %v3279, %v3284
    %3288 = vrot.lane.b32.xlu0 %v3286, 32
    %v3289 = vpop.permute.xlu0 %3288
    %v3291 = vadd.f32 %v2252, %v3289
    %v3292 = vtanh.pop %v3291
    %v3293 = vsub.f32 1.0, %v3279
    %3295 = vrot.lane.b32.xlu0 %v3292, 112
    %v3296 = vpop.permute.xlu0 %3295
    %v3298 = vmul.f32 %v3293, %v3296
    %3299 = vrot.lane.b32.xlu0 %v3161, 48
    %v3300 = vpop.permute.xlu0 %3299
    %v3302 = vmul.f32 %v3279, %v3300
    %v3303 = vadd.f32 %v3298, %v3302
    %3305 = vrot.lane.b32.xlu0 %v3270, 112
    %v3306 = vpop.permute.xlu0 %3305
    %v3309 = vrot.slane %v3303, 6
    %3310 = vrot.lane.b32.xlu0 %v3309, 80
    %v3311 = vpop.permute.xlu0 %3310
    %v3313 = vsel %vm364, %v3306, %v3311
    %v3315 = vrot.slane %v3313, 4
    %v3316 = vsel %vm131, %v3315, 0
    %3318 = vmatprep.subr.mxu0 0.0
    %3319 = vmatpush1.msra.mxu0 %v2167
    %3320 = vmatprep.subr.mxu0 0.0
    %3321 = vmatpush1.msra.mxu0 %v2168
    %3322 = vmatprep.subr.mxu0 0.0
    %3323 = vmatpush1.msra.mxu0 %v2169
    %3324 = vmatprep.subr.mxu0 0.0
    %3325 = vmatpush1.msra.mxu0 %v2170
    %3326 = vmatprep.subr.mxu0 0.0
    %3327 = vmatpush1.msra.mxu0 0.0
    %3328 = vmatprep.subr.mxu0 0.0
    %3329 = vmatpush1.msra.mxu0 0.0
    %3330 = vmatprep.subr.mxu0 0.0
    %3331 = vmatpush1.msra.mxu0 0.0
    %3332 = vmatprep.subr.mxu0 0.0
    %3333 = vmatpush1.msra.mxu0 0.0
    %3334 = vmatprep.subr.mxu0 0.0
    %3335 = vmatpush1.msra.mxu0 0.0
    %3336 = vmatprep.subr.mxu0 0.0
    %3337 = vmatpush1.msra.mxu0 0.0
    %3338 = vmatprep.subr.mxu0 0.0
    %3339 = vmatpush1.msra.mxu0 0.0
    %3340 = vmatprep.subr.mxu0 0.0
    %3341 = vmatpush1.msra.mxu0 0.0
    %3342 = vmatprep.subr.mxu0 0.0
    %3343 = vmatpush1.msra.mxu0 0.0
    %3344 = vmatprep.subr.mxu0 0.0
    %3345 = vmatpush1.msra.mxu0 0.0
    %3346 = vmatprep.subr.mxu0 0.0
    %3347 = vmatpush1.msra.mxu0 0.0
    %3348 = vmatprep.subr.mxu0 0.0
    %3349 = vmatpush1.msra.mxu0 0.0
    %3350 = vmatprep.subr.mxu0 0.0
    %3351 = vmatpush1.msra.mxu0 0.0
    %3352 = vmatprep.subr.mxu0 0.0
    %3353 = vmatpush1.msra.mxu0 0.0
    %3354 = vmatprep.subr.mxu0 0.0
    %3355 = vmatpush1.msra.mxu0 0.0
    %3356 = vmatprep.subr.mxu0 0.0
    %3357 = vmatpush1.msra.mxu0 0.0
    %3358 = vmatprep.subr.mxu0 0.0
    %3359 = vmatpush1.msra.mxu0 0.0
    %3360 = vmatprep.subr.mxu0 0.0
    %3361 = vmatpush1.msra.mxu0 0.0
    %3362 = vmatprep.subr.mxu0 0.0
    %3363 = vmatpush1.msra.mxu0 0.0
    %3364 = vmatprep.subr.mxu0 0.0
    %3365 = vmatpush1.msra.mxu0 0.0
    %3366 = vmatprep.subr.mxu0 0.0
    %3367 = vmatpush1.msra.mxu0 0.0
    %3368 = vmatprep.subr.mxu0 0.0
    %3369 = vmatpush1.msra.mxu0 0.0
    %3370 = vmatprep.subr.mxu0 0.0
    %3371 = vmatpush1.msra.mxu0 0.0
    %3372 = vmatprep.subr.mxu0 0.0
    %3373 = vmatpush1.msra.mxu0 0.0
    %3374 = vmatprep.subr.mxu0 0.0
    %3375 = vmatpush1.msra.mxu0 0.0
    %3376 = vmatprep.subr.mxu0 0.0
    %3377 = vmatpush1.msra.mxu0 0.0
    %3378 = vmatprep.subr.mxu0 0.0
    %3379 = vmatpush1.msra.mxu0 0.0
    %3380 = vmatprep.subr.mxu0 0.0
    %3381 = vmatpush1.msra.mxu0 0.0
    %3382 = vmatprep.mubr.f32.mxu0 0.0
    %3383 = vmatmul.mubr.f32.gmra.mrb[0].mxu0 %v3316
    %v3384 = vpop.f32.mrb[0].mxu0
    %v3385 = vadd.f32 0.0, %v3384
    %v3386 = vpop.f32.mrb[0].mxu0
    %3387 = vdwg.mxu0
    %v3389 = vrot.slane %v3385, 2
    %v3391 = vadd.f32 %v2257, %v3389
    %v3392 = vxor.u32 %v3391, 2147483648
    %v3393 = vmul.f32 %v3392, 1.442695
    %v3394 = vpow.pop %v3393
    %v3395 = vadd.f32 %v3394, 1.0
    %v3396 = vrcp.pop %v3395
    %v3397 = vmul.f32 1.0, %v3396
    %v3398 = vadd.f32 %v3385, %v2343
    %v3400 = vrot.slane %v3398, 2
    %3401 = vrot.lane.b32.xlu0 %v3400, 96
    %v3402 = vpop.permute.xlu0 %3401
    %v3404 = vmul.f32 %v3397, %v3402
    %3406 = vrot.lane.b32.xlu0 %v3404, 32
    %v3407 = vpop.permute.xlu0 %3406
    %v3409 = vadd.f32 %v2257, %v3407
    %v3410 = vtanh.pop %v3409
    %v3411 = vsub.f32 1.0, %v3397
    %3413 = vrot.lane.b32.xlu0 %v3410, 112
    %v3414 = vpop.permute.xlu0 %3413
    %v3416 = vmul.f32 %v3411, %v3414
    %v3417 = vrot.slane %v3313, 6
    %3418 = vrot.lane.b32.xlu0 %v3417, 16
    %v3419 = vpop.permute.xlu0 %3418
    %v3421 = vmul.f32 %v3397, %v3419
    %v3422 = vadd.f32 %v3416, %v3421
    %v3423 = vadd.f32 %v2252, %v3385
    %v3424 = vxor.u32 %v3423, 2147483648
    %v3425 = vmul.f32 %v3424, 1.442695
    %v3426 = vpow.pop %v3425
    %v3427 = vadd.f32 %v3426, 1.0
    %v3428 = vrcp.pop %v3427
    %v3429 = vmul.f32 1.0, %v3428
    %v3430 = vadd.f32 %v3385, %v2376
    %3432 = vrot.lane.b32.xlu0 %v3430, 96
    %v3433 = vpop.permute.xlu0 %3432
    %v3435 = vmul.f32 %v3429, %v3433
    %3437 = vrot.lane.b32.xlu0 %v3435, 32
    %v3438 = vpop.permute.xlu0 %3437
    %v3440 = vadd.f32 %v2252, %v3438
    %v3441 = vtanh.pop %v3440
    %v3442 = vsub.f32 1.0, %v3429
    %3444 = vrot.lane.b32.xlu0 %v3441, 112
    %v3445 = vpop.permute.xlu0 %3444
    %v3447 = vmul.f32 %v3442, %v3445
    %3448 = vrot.lane.b32.xlu0 %v3315, 48
    %v3449 = vpop.permute.xlu0 %3448
    %v3451 = vmul.f32 %v3429, %v3449
    %v3452 = vadd.f32 %v3447, %v3451
    %3454 = vrot.lane.b32.xlu0 %v3452, 80
    %v3455 = vpop.permute.xlu0 %3454
    %v3457 = vsel %vm364, %v2401, %v3455
    %3458 = vrot.lane.b32.xlu0 %v3303, 80
    %v3459 = vpop.permute.xlu0 %3458
    %v3461 = vsel %vm364, %v2553, %v3459
    %3462 = vrot.lane.b32.xlu0 %v3151, 80
    %v3463 = vpop.permute.xlu0 %3462
    %v3465 = vsel %vm364, %v2705, %v3463
    %3466 = vrot.lane.b32.xlu0 %v2999, 80
    %v3467 = vpop.permute.xlu0 %3466
    %v3469 = vsel %vm364, %v2854, %v3467
    %3470 = vrot.lane.b32.xlu0 %v2851, 80
    %v3471 = vpop.permute.xlu0 %3470
    %v3473 = vsel %vm364, %v3002, %v3471
    %3474 = vrot.lane.b32.xlu0 %v2702, 80
    %v3475 = vpop.permute.xlu0 %3474
    %v3477 = vsel %vm364, %v3154, %v3475
    %3478 = vrot.lane.b32.xlu0 %v2550, 80
    %v3479 = vpop.permute.xlu0 %3478
    %v3481 = vsel %vm364, %v3306, %v3479
    %3483 = vrot.lane.b32.xlu0 %v3422, 112
    %v3484 = vpop.permute.xlu0 %3483
    %3486 = vrot.lane.b32.xlu0 %v2398, 80
    %v3487 = vpop.permute.xlu0 %3486
    %v3489 = vsel %vm364, %v3484, %v3487
    %v3490 = vsel %vm1135, %v3457, %v3461
    %v3491 = vsel %vm1137, %v3490, %v3465
    %v3492 = vsel %vm1139, %v3491, %v3469
    %v3493 = vsel %vm1135, %v3473, %v3477
    %v3494 = vsel %vm1137, %v3493, %v3481
    %v3495 = vsel %vm1139, %v3494, %v3489
    %v3496 = vld [vmem:[#allocation3] sm:$0xff]
    %v3497 = vld [vmem:[#allocation3 + $0x8] sm:$0xff]
    %v3498 = vld [vmem:[#allocation3 + $0x10] sm:$0xff]
    %v3499 = vld [vmem:[#allocation3 + $0x18] sm:$0xff]
    %v3500 = vld [vmem:[#allocation5] sm:$0xff]
    %v3501 = vld [vmem:[#allocation5 + $0x8] sm:$0xff]
    %v3502 = vld [vmem:[#allocation5 + $0x10] sm:$0xff]
    %v3503 = vld [vmem:[#allocation5 + $0x18] sm:$0xff]
    %v3504 = vld [vmem:[%s17] sm:$0x1]
    %v3505 = vld [vmem:[%s18] sm:$0x1]
    %v3507 = vlaneseq
    %v3508 = vshrl.u32 %v3507, 7
    %v3509 = vsub.s32 0, %v3508
    %v3510 = vrot.slane %v3504, %v3509
    %v3513 = vsel %vm131, %v3492, 0
    %v3516 = vsel %vm131, %v3495, 0
    %3518 = vmatprep.subr.mxu0 0.0
    %3519 = vmatpush1.msra.mxu0 %v3496
    %3520 = vmatprep.subr.mxu0 0.0
    %3521 = vmatpush1.msra.mxu0 %v3497
    %3522 = vmatprep.subr.mxu0 0.0
    %3523 = vmatpush1.msra.mxu0 %v3498
    %3524 = vmatprep.subr.mxu0 0.0
    %3525 = vmatpush1.msra.mxu0 %v3499
    %3526 = vmatprep.subr.mxu0 0.0
    %3527 = vmatpush1.msra.mxu0 0.0
    %3528 = vmatprep.subr.mxu0 0.0
    %3529 = vmatpush1.msra.mxu0 0.0
    %3530 = vmatprep.subr.mxu0 0.0
    %3531 = vmatpush1.msra.mxu0 0.0
    %3532 = vmatprep.subr.mxu0 0.0
    %3533 = vmatpush1.msra.mxu0 0.0
    %3534 = vmatprep.subr.mxu0 0.0
    %3535 = vmatpush1.msra.mxu0 0.0
    %3536 = vmatprep.subr.mxu0 0.0
    %3537 = vmatpush1.msra.mxu0 0.0
    %3538 = vmatprep.subr.mxu0 0.0
    %3539 = vmatpush1.msra.mxu0 0.0
    %3540 = vmatprep.subr.mxu0 0.0
    %3541 = vmatpush1.msra.mxu0 0.0
    %3542 = vmatprep.subr.mxu0 0.0
    %3543 = vmatpush1.msra.mxu0 0.0
    %3544 = vmatprep.subr.mxu0 0.0
    %3545 = vmatpush1.msra.mxu0 0.0
    %3546 = vmatprep.subr.mxu0 0.0
    %3547 = vmatpush1.msra.mxu0 0.0
    %3548 = vmatprep.subr.mxu0 0.0
    %3549 = vmatpush1.msra.mxu0 0.0
    %3550 = vmatprep.subr.mxu0 0.0
    %3551 = vmatpush1.msra.mxu0 0.0
    %3552 = vmatprep.subr.mxu0 0.0
    %3553 = vmatpush1.msra.mxu0 0.0
    %3554 = vmatprep.subr.mxu0 0.0
    %3555 = vmatpush1.msra.mxu0 0.0
    %3556 = vmatprep.subr.mxu0 0.0
    %3557 = vmatpush1.msra.mxu0 0.0
    %3558 = vmatprep.subr.mxu0 0.0
    %3559 = vmatpush1.msra.mxu0 0.0
    %3560 = vmatprep.subr.mxu0 0.0
    %3561 = vmatpush1.msra.mxu0 0.0
    %3562 = vmatprep.subr.mxu0 0.0
    %3563 = vmatpush1.msra.mxu0 0.0
    %3564 = vmatprep.subr.mxu0 0.0
    %3565 = vmatpush1.msra.mxu0 0.0
    %3566 = vmatprep.subr.mxu0 0.0
    %3567 = vmatpush1.msra.mxu0 0.0
    %3568 = vmatprep.subr.mxu0 0.0
    %3569 = vmatpush1.msra.mxu0 0.0
    %3570 = vmatprep.subr.mxu0 0.0
    %3571 = vmatpush1.msra.mxu0 0.0
    %3572 = vmatprep.subr.mxu0 0.0
    %3573 = vmatpush1.msra.mxu0 0.0
    %3574 = vmatprep.subr.mxu0 0.0
    %3575 = vmatpush1.msra.mxu0 0.0
    %3576 = vmatprep.subr.mxu0 0.0
    %3577 = vmatpush1.msra.mxu0 0.0
    %3578 = vmatprep.subr.mxu0 0.0
    %3579 = vmatpush1.msra.mxu0 0.0
    %3580 = vmatprep.subr.mxu0 0.0
    %3581 = vmatpush1.msra.mxu0 0.0
    %3582 = vmatprep.mubr.f32.mxu0 0.0
    %3583 = vmatmul.mubr.f32.gmra.mrb[0].mxu0 %v3513
    %v3584 = vpop.f32.mrb[0].mxu0
    %v3585 = vadd.f32 %v3510, %v3584
    %v3586 = vpop.f32.mrb[0].mxu0
    %3587 = vmatprep.mubr.f32.mxu0 0.0
    %3588 = vmatmul.mubr.f32.gmra.mrb[0].mxu0 %v3516
    %v3589 = vpop.f32.mrb[0].mxu0
    %v3590 = vadd.f32 %v3510, %v3589
    %v3591 = vpop.f32.mrb[0].mxu0
    %3592 = vdwg.mxu0
    %3593 = vmatprep.subr.mxu0 0.0
    %3594 = vmatpush1.msra.mxu0 %v3500
    %3595 = vmatprep.subr.mxu0 0.0
    %3596 = vmatpush1.msra.mxu0 %v3501
    %3597 = vmatprep.subr.mxu0 0.0
    %3598 = vmatpush1.msra.mxu0 %v3502
    %3599 = vmatprep.subr.mxu0 0.0
    %3600 = vmatpush1.msra.mxu0 %v3503
    %3601 = vmatprep.subr.mxu0 0.0
    %3602 = vmatpush1.msra.mxu0 0.0
    %3603 = vmatprep.subr.mxu0 0.0
    %3604 = vmatpush1.msra.mxu0 0.0
    %3605 = vmatprep.subr.mxu0 0.0
    %3606 = vmatpush1.msra.mxu0 0.0
    %3607 = vmatprep.subr.mxu0 0.0
    %3608 = vmatpush1.msra.mxu0 0.0
    %3609 = vmatprep.subr.mxu0 0.0
    %3610 = vmatpush1.msra.mxu0 0.0
    %3611 = vmatprep.subr.mxu0 0.0
    %3612 = vmatpush1.msra.mxu0 0.0
    %3613 = vmatprep.subr.mxu0 0.0
    %3614 = vmatpush1.msra.mxu0 0.0
    %3615 = vmatprep.subr.mxu0 0.0
    %3616 = vmatpush1.msra.mxu0 0.0
    %3617 = vmatprep.subr.mxu0 0.0
    %3618 = vmatpush1.msra.mxu0 0.0
    %3619 = vmatprep.subr.mxu0 0.0
    %3620 = vmatpush1.msra.mxu0 0.0
    %3621 = vmatprep.subr.mxu0 0.0
    %3622 = vmatpush1.msra.mxu0 0.0
    %3623 = vmatprep.subr.mxu0 0.0
    %3624 = vmatpush1.msra.mxu0 0.0
    %3625 = vmatprep.subr.mxu0 0.0
    %3626 = vmatpush1.msra.mxu0 0.0
    %3627 = vmatprep.subr.mxu0 0.0
    %3628 = vmatpush1.msra.mxu0 0.0
    %3629 = vmatprep.subr.mxu0 0.0
    %3630 = vmatpush1.msra.mxu0 0.0
    %3631 = vmatprep.subr.mxu0 0.0
    %3632 = vmatpush1.msra.mxu0 0.0
    %3633 = vmatprep.subr.mxu0 0.0
    %3634 = vmatpush1.msra.mxu0 0.0
    %3635 = vmatprep.subr.mxu0 0.0
    %3636 = vmatpush1.msra.mxu0 0.0
    %3637 = vmatprep.subr.mxu0 0.0
    %3638 = vmatpush1.msra.mxu0 0.0
    %3639 = vmatprep.subr.mxu0 0.0
    %3640 = vmatpush1.msra.mxu0 0.0
    %3641 = vmatprep.subr.mxu0 0.0
    %3642 = vmatpush1.msra.mxu0 0.0
    %3643 = vmatprep.subr.mxu0 0.0
    %3644 = vmatpush1.msra.mxu0 0.0
    %3645 = vmatprep.subr.mxu0 0.0
    %3646 = vmatpush1.msra.mxu0 0.0
    %3647 = vmatprep.subr.mxu0 0.0
    %3648 = vmatpush1.msra.mxu0 0.0
    %3649 = vmatprep.subr.mxu0 0.0
    %3650 = vmatpush1.msra.mxu0 0.0
    %3651 = vmatprep.subr.mxu0 0.0
    %3652 = vmatpush1.msra.mxu0 0.0
    %3653 = vmatprep.subr.mxu0 0.0
    %3654 = vmatpush1.msra.mxu0 0.0
    %3655 = vmatprep.subr.mxu0 0.0
    %3656 = vmatpush1.msra.mxu0 0.0
    %3657 = vmatprep.mubr.f32.mxu0 0.0
    %3658 = vmatmul.mubr.f32.gmra.mrb[0].mxu0 %v214
    %v3659 = vpop.f32.mrb[0].mxu0
    %v3660 = vadd.f32 0.0, %v3659
    %v3661 = vpop.f32.mrb[0].mxu0
    %3662 = vdwg.mxu0
    %v3663 = vadd.f32 %v3585, %v3660
    %v3664 = vxor.u32 %v3663, 2147483648
    %v3665 = vmul.f32 %v3664, 1.442695
    %v3666 = vpow.pop %v3665
    %v3667 = vadd.f32 %v3666, 1.0
    %v3668 = vrcp.pop %v3667
    %v3669 = vmul.f32 1.0, %v3668
    %v3671 = vlaneseq
    %v3672 = vshrl.u32 %v3671, 7
    %v3673 = vsub.s32 0, %v3672
    %v3674 = vrot.slane %v3505, %v3673
    %3675 = vrot.lane.b32.xlu0 %v3674, 32
    %v3676 = vpop.permute.xlu0 %3675
    %v3678 = vadd.f32 %v3660, %v3676
    %3680 = vrot.lane.b32.xlu0 %v3678, 96
    %v3681 = vpop.permute.xlu0 %3680
    %v3683 = vmul.f32 %v3669, %v3681
    %3685 = vrot.lane.b32.xlu0 %v3683, 32
    %v3686 = vpop.permute.xlu0 %3685
    %v3688 = vadd.f32 %v3585, %v3686
    %v3689 = vtanh.pop %v3688
    %v3690 = vsub.f32 1.0, %v3669
    %3692 = vrot.lane.b32.xlu0 %v3689, 112
    %v3693 = vpop.permute.xlu0 %3692
    %v3695 = vmul.f32 %v3690, %v3693
    %v3696 = vmul.f32 %v3669, 0.0
    %v3697 = vadd.f32 %v3695, %v3696
    %v3699 = vrot.slane %v3660, 2
    %v3701 = vadd.f32 %v3590, %v3699
    %v3702 = vxor.u32 %v3701, 2147483648
    %v3703 = vmul.f32 %v3702, 1.442695
    %v3704 = vpow.pop %v3703
    %v3705 = vadd.f32 %v3704, 1.0
    %v3706 = vrcp.pop %v3705
    %v3707 = vmul.f32 1.0, %v3706
    %3708 = vrot.lane.b32.xlu0 %v3674, 64
    %v3709 = vpop.permute.xlu0 %3708
    %v3711 = vadd.f32 %v3660, %v3709
    %v3713 = vrot.slane %v3711, 2
    %3714 = vrot.lane.b32.xlu0 %v3713, 96
    %v3715 = vpop.permute.xlu0 %3714
    %v3717 = vmul.f32 %v3707, %v3715
    %3719 = vrot.lane.b32.xlu0 %v3717, 32
    %v3720 = vpop.permute.xlu0 %3719
    %v3722 = vadd.f32 %v3590, %v3720
    %v3723 = vtanh.pop %v3722
    %v3724 = vsub.f32 1.0, %v3707
    %3726 = vrot.lane.b32.xlu0 %v3723, 112
    %v3727 = vpop.permute.xlu0 %3726
    %v3729 = vmul.f32 %v3724, %v3727
    %v3730 = vmul.f32 %v3707, 0.0
    %v3731 = vadd.f32 %v3729, %v3730
    %3733 = vrot.lane.b32.xlu0 %v3697, 112
    %v3734 = vpop.permute.xlu0 %3733
    %v3737 = vrot.slane %v3731, 6
    %3738 = vrot.lane.b32.xlu0 %v3737, 80
    %v3739 = vpop.permute.xlu0 %3738
    %v3741 = vsel %vm364, %v3734, %v3739
    %v3743 = vsel %vm131, %v3741, 0
    %3745 = vmatprep.subr.mxu0 0.0
    %3746 = vmatpush1.msra.mxu0 %v3500
    %3747 = vmatprep.subr.mxu0 0.0
    %3748 = vmatpush1.msra.mxu0 %v3501
    %3749 = vmatprep.subr.mxu0 0.0
    %3750 = vmatpush1.msra.mxu0 %v3502
    %3751 = vmatprep.subr.mxu0 0.0
    %3752 = vmatpush1.msra.mxu0 %v3503
    %3753 = vmatprep.subr.mxu0 0.0
    %3754 = vmatpush1.msra.mxu0 0.0
    %3755 = vmatprep.subr.mxu0 0.0
    %3756 = vmatpush1.msra.mxu0 0.0
    %3757 = vmatprep.subr.mxu0 0.0
    %3758 = vmatpush1.msra.mxu0 0.0
    %3759 = vmatprep.subr.mxu0 0.0
    %3760 = vmatpush1.msra.mxu0 0.0
    %3761 = vmatprep.subr.mxu0 0.0
    %3762 = vmatpush1.msra.mxu0 0.0
    %3763 = vmatprep.subr.mxu0 0.0
    %3764 = vmatpush1.msra.mxu0 0.0
    %3765 = vmatprep.subr.mxu0 0.0
    %3766 = vmatpush1.msra.mxu0 0.0
    %3767 = vmatprep.subr.mxu0 0.0
    %3768 = vmatpush1.msra.mxu0 0.0
    %3769 = vmatprep.subr.mxu0 0.0
    %3770 = vmatpush1.msra.mxu0 0.0
    %3771 = vmatprep.subr.mxu0 0.0
    %3772 = vmatpush1.msra.mxu0 0.0
    %3773 = vmatprep.subr.mxu0 0.0
    %3774 = vmatpush1.msra.mxu0 0.0
    %3775 = vmatprep.subr.mxu0 0.0
    %3776 = vmatpush1.msra.mxu0 0.0
    %3777 = vmatprep.subr.mxu0 0.0
    %3778 = vmatpush1.msra.mxu0 0.0
    %3779 = vmatprep.subr.mxu0 0.0
    %3780 = vmatpush1.msra.mxu0 0.0
    %3781 = vmatprep.subr.mxu0 0.0
    %3782 = vmatpush1.msra.mxu0 0.0
    %3783 = vmatprep.subr.mxu0 0.0
    %3784 = vmatpush1.msra.mxu0 0.0
    %3785 = vmatprep.subr.mxu0 0.0
    %3786 = vmatpush1.msra.mxu0 0.0
    %3787 = vmatprep.subr.mxu0 0.0
    %3788 = vmatpush1.msra.mxu0 0.0
    %3789 = vmatprep.subr.mxu0 0.0
    %3790 = vmatpush1.msra.mxu0 0.0
    %3791 = vmatprep.subr.mxu0 0.0
    %3792 = vmatpush1.msra.mxu0 0.0
    %3793 = vmatprep.subr.mxu0 0.0
    %3794 = vmatpush1.msra.mxu0 0.0
    %3795 = vmatprep.subr.mxu0 0.0
    %3796 = vmatpush1.msra.mxu0 0.0
    %3797 = vmatprep.subr.mxu0 0.0
    %3798 = vmatpush1.msra.mxu0 0.0
    %3799 = vmatprep.subr.mxu0 0.0
    %3800 = vmatpush1.msra.mxu0 0.0
    %3801 = vmatprep.subr.mxu0 0.0
    %3802 = vmatpush1.msra.mxu0 0.0
    %3803 = vmatprep.subr.mxu0 0.0
    %3804 = vmatpush1.msra.mxu0 0.0
    %3805 = vmatprep.subr.mxu0 0.0
    %3806 = vmatpush1.msra.mxu0 0.0
    %3807 = vmatprep.subr.mxu0 0.0
    %3808 = vmatpush1.msra.mxu0 0.0
    %3809 = vmatprep.mubr.f32.mxu0 0.0
    %3810 = vmatmul.mubr.f32.gmra.mrb[0].mxu0 %v3743
    %v3811 = vpop.f32.mrb[0].mxu0
    %v3812 = vadd.f32 0.0, %v3811
    %v3813 = vpop.f32.mrb[0].mxu0
    %3814 = vdwg.mxu0
    %v3816 = vrot.slane %v3812, 6
    %v3818 = vadd.f32 %v3585, %v3816
    %v3819 = vxor.u32 %v3818, 2147483648
    %v3820 = vmul.f32 %v3819, 1.442695
    %v3821 = vpow.pop %v3820
    %v3822 = vadd.f32 %v3821, 1.0
    %v3823 = vrcp.pop %v3822
    %v3824 = vmul.f32 1.0, %v3823
    %v3825 = vadd.f32 %v3812, %v3676
    %v3827 = vrot.slane %v3825, 6
    %3828 = vrot.lane.b32.xlu0 %v3827, 96
    %v3829 = vpop.permute.xlu0 %3828
    %v3831 = vmul.f32 %v3824, %v3829
    %3833 = vrot.lane.b32.xlu0 %v3831, 32
    %v3834 = vpop.permute.xlu0 %3833
    %v3836 = vadd.f32 %v3585, %v3834
    %v3837 = vtanh.pop %v3836
    %v3838 = vsub.f32 1.0, %v3824
    %3840 = vrot.lane.b32.xlu0 %v3837, 112
    %v3841 = vpop.permute.xlu0 %3840
    %v3843 = vmul.f32 %v3838, %v3841
    %v3844 = vrot.slane %v3741, 6
    %3845 = vrot.lane.b32.xlu0 %v3844, 16
    %v3846 = vpop.permute.xlu0 %3845
    %v3848 = vmul.f32 %v3824, %v3846
    %v3849 = vadd.f32 %v3843, %v3848
    %v3850 = vrot.slane %v3812, 4
    %v3852 = vadd.f32 %v3590, %v3850
    %v3853 = vxor.u32 %v3852, 2147483648
    %v3854 = vmul.f32 %v3853, 1.442695
    %v3855 = vpow.pop %v3854
    %v3856 = vadd.f32 %v3855, 1.0
    %v3857 = vrcp.pop %v3856
    %v3858 = vmul.f32 1.0, %v3857
    %v3859 = vadd.f32 %v3812, %v3709
    %v3861 = vrot.slane %v3859, 4
    %3862 = vrot.lane.b32.xlu0 %v3861, 96
    %v3863 = vpop.permute.xlu0 %3862
    %v3865 = vmul.f32 %v3858, %v3863
    %3867 = vrot.lane.b32.xlu0 %v3865, 32
    %v3868 = vpop.permute.xlu0 %3867
    %v3870 = vadd.f32 %v3590, %v3868
    %v3871 = vtanh.pop %v3870
    %v3872 = vsub.f32 1.0, %v3858
    %3874 = vrot.lane.b32.xlu0 %v3871, 112
    %v3875 = vpop.permute.xlu0 %3874
    %v3877 = vmul.f32 %v3872, %v3875
    %v3878 = vrot.slane %v3741, 4
    %3879 = vrot.lane.b32.xlu0 %v3878, 48
    %v3880 = vpop.permute.xlu0 %3879
    %v3882 = vmul.f32 %v3858, %v3880
    %v3883 = vadd.f32 %v3877, %v3882
    %3885 = vrot.lane.b32.xlu0 %v3849, 112
    %v3886 = vpop.permute.xlu0 %3885
    %v3889 = vrot.slane %v3883, 2
    %3890 = vrot.lane.b32.xlu0 %v3889, 80
    %v3891 = vpop.permute.xlu0 %3890
    %v3893 = vsel %vm364, %v3886, %v3891
    %v3895 = vrot.slane %v3893, 2
    %v3896 = vsel %vm131, %v3895, 0
    %3898 = vmatprep.subr.mxu0 0.0
    %3899 = vmatpush1.msra.mxu0 %v3500
    %3900 = vmatprep.subr.mxu0 0.0
    %3901 = vmatpush1.msra.mxu0 %v3501
    %3902 = vmatprep.subr.mxu0 0.0
    %3903 = vmatpush1.msra.mxu0 %v3502
    %3904 = vmatprep.subr.mxu0 0.0
    %3905 = vmatpush1.msra.mxu0 %v3503
    %3906 = vmatprep.subr.mxu0 0.0
    %3907 = vmatpush1.msra.mxu0 0.0
    %3908 = vmatprep.subr.mxu0 0.0
    %3909 = vmatpush1.msra.mxu0 0.0
    %3910 = vmatprep.subr.mxu0 0.0
    %3911 = vmatpush1.msra.mxu0 0.0
    %3912 = vmatprep.subr.mxu0 0.0
    %3913 = vmatpush1.msra.mxu0 0.0
    %3914 = vmatprep.subr.mxu0 0.0
    %3915 = vmatpush1.msra.mxu0 0.0
    %3916 = vmatprep.subr.mxu0 0.0
    %3917 = vmatpush1.msra.mxu0 0.0
    %3918 = vmatprep.subr.mxu0 0.0
    %3919 = vmatpush1.msra.mxu0 0.0
    %3920 = vmatprep.subr.mxu0 0.0
    %3921 = vmatpush1.msra.mxu0 0.0
    %3922 = vmatprep.subr.mxu0 0.0
    %3923 = vmatpush1.msra.mxu0 0.0
    %3924 = vmatprep.subr.mxu0 0.0
    %3925 = vmatpush1.msra.mxu0 0.0
    %3926 = vmatprep.subr.mxu0 0.0
    %3927 = vmatpush1.msra.mxu0 0.0
    %3928 = vmatprep.subr.mxu0 0.0
    %3929 = vmatpush1.msra.mxu0 0.0
    %3930 = vmatprep.subr.mxu0 0.0
    %3931 = vmatpush1.msra.mxu0 0.0
    %3932 = vmatprep.subr.mxu0 0.0
    %3933 = vmatpush1.msra.mxu0 0.0
    %3934 = vmatprep.subr.mxu0 0.0
    %3935 = vmatpush1.msra.mxu0 0.0
    %3936 = vmatprep.subr.mxu0 0.0
    %3937 = vmatpush1.msra.mxu0 0.0
    %3938 = vmatprep.subr.mxu0 0.0
    %3939 = vmatpush1.msra.mxu0 0.0
    %3940 = vmatprep.subr.mxu0 0.0
    %3941 = vmatpush1.msra.mxu0 0.0
    %3942 = vmatprep.subr.mxu0 0.0
    %3943 = vmatpush1.msra.mxu0 0.0
    %3944 = vmatprep.subr.mxu0 0.0
    %3945 = vmatpush1.msra.mxu0 0.0
    %3946 = vmatprep.subr.mxu0 0.0
    %3947 = vmatpush1.msra.mxu0 0.0
    %3948 = vmatprep.subr.mxu0 0.0
    %3949 = vmatpush1.msra.mxu0 0.0
    %3950 = vmatprep.subr.mxu0 0.0
    %3951 = vmatpush1.msra.mxu0 0.0
    %3952 = vmatprep.subr.mxu0 0.0
    %3953 = vmatpush1.msra.mxu0 0.0
    %3954 = vmatprep.subr.mxu0 0.0
    %3955 = vmatpush1.msra.mxu0 0.0
    %3956 = vmatprep.subr.mxu0 0.0
    %3957 = vmatpush1.msra.mxu0 0.0
    %3958 = vmatprep.subr.mxu0 0.0
    %3959 = vmatpush1.msra.mxu0 0.0
    %3960 = vmatprep.subr.mxu0 0.0
    %3961 = vmatpush1.msra.mxu0 0.0
    %3962 = vmatprep.mubr.f32.mxu0 0.0
    %3963 = vmatmul.mubr.f32.gmra.mrb[0].mxu0 %v3896
    %v3964 = vpop.f32.mrb[0].mxu0
    %v3965 = vadd.f32 0.0, %v3964
    %v3966 = vpop.f32.mrb[0].mxu0
    %3967 = vdwg.mxu0
    %v3969 = vrot.slane %v3965, 4
    %v3971 = vadd.f32 %v3585, %v3969
    %v3972 = vxor.u32 %v3971, 2147483648
    %v3973 = vmul.f32 %v3972, 1.442695
    %v3974 = vpow.pop %v3973
    %v3975 = vadd.f32 %v3974, 1.0
    %v3976 = vrcp.pop %v3975
    %v3977 = vmul.f32 1.0, %v3976
    %v3978 = vadd.f32 %v3965, %v3676
    %v3980 = vrot.slane %v3978, 4
    %3981 = vrot.lane.b32.xlu0 %v3980, 96
    %v3982 = vpop.permute.xlu0 %3981
    %v3984 = vmul.f32 %v3977, %v3982
    %3986 = vrot.lane.b32.xlu0 %v3984, 32
    %v3987 = vpop.permute.xlu0 %3986
    %v3989 = vadd.f32 %v3585, %v3987
    %v3990 = vtanh.pop %v3989
    %v3991 = vsub.f32 1.0, %v3977
    %3993 = vrot.lane.b32.xlu0 %v3990, 112
    %v3994 = vpop.permute.xlu0 %3993
    %v3996 = vmul.f32 %v3991, %v3994
    %v3997 = vrot.slane %v3893, 6
    %3998 = vrot.lane.b32.xlu0 %v3997, 16
    %v3999 = vpop.permute.xlu0 %3998
    %v4001 = vmul.f32 %v3977, %v3999
    %v4002 = vadd.f32 %v3996, %v4001
    %v4003 = vrot.slane %v3965, 6
    %v4005 = vadd.f32 %v3590, %v4003
    %v4006 = vxor.u32 %v4005, 2147483648
    %v4007 = vmul.f32 %v4006, 1.442695
    %v4008 = vpow.pop %v4007
    %v4009 = vadd.f32 %v4008, 1.0
    %v4010 = vrcp.pop %v4009
    %v4011 = vmul.f32 1.0, %v4010
    %v4012 = vadd.f32 %v3965, %v3709
    %v4014 = vrot.slane %v4012, 6
    %4015 = vrot.lane.b32.xlu0 %v4014, 96
    %v4016 = vpop.permute.xlu0 %4015
    %v4018 = vmul.f32 %v4011, %v4016
    %4020 = vrot.lane.b32.xlu0 %v4018, 32
    %v4021 = vpop.permute.xlu0 %4020
    %v4023 = vadd.f32 %v3590, %v4021
    %v4024 = vtanh.pop %v4023
    %v4025 = vsub.f32 1.0, %v4011
    %4027 = vrot.lane.b32.xlu0 %v4024, 112
    %v4028 = vpop.permute.xlu0 %4027
    %v4030 = vmul.f32 %v4025, %v4028
    %4031 = vrot.lane.b32.xlu0 %v3893, 48
    %v4032 = vpop.permute.xlu0 %4031
    %v4034 = vmul.f32 %v4011, %v4032
    %v4035 = vadd.f32 %v4030, %v4034
    %4037 = vrot.lane.b32.xlu0 %v4002, 112
    %v4038 = vpop.permute.xlu0 %4037
    %v4041 = vrot.slane %v4035, 6
    %4042 = vrot.lane.b32.xlu0 %v4041, 80
    %v4043 = vpop.permute.xlu0 %4042
    %v4045 = vsel %vm364, %v4038, %v4043
    %v4047 = vrot.slane %v4045, 4
    %v4048 = vsel %vm131, %v4047, 0
    %4050 = vmatprep.subr.mxu0 0.0
    %4051 = vmatpush1.msra.mxu0 %v3500
    %4052 = vmatprep.subr.mxu0 0.0
    %4053 = vmatpush1.msra.mxu0 %v3501
    %4054 = vmatprep.subr.mxu0 0.0
    %4055 = vmatpush1.msra.mxu0 %v3502
    %4056 = vmatprep.subr.mxu0 0.0
    %4057 = vmatpush1.msra.mxu0 %v3503
    %4058 = vmatprep.subr.mxu0 0.0
    %4059 = vmatpush1.msra.mxu0 0.0
    %4060 = vmatprep.subr.mxu0 0.0
    %4061 = vmatpush1.msra.mxu0 0.0
    %4062 = vmatprep.subr.mxu0 0.0
    %4063 = vmatpush1.msra.mxu0 0.0
    %4064 = vmatprep.subr.mxu0 0.0
    %4065 = vmatpush1.msra.mxu0 0.0
    %4066 = vmatprep.subr.mxu0 0.0
    %4067 = vmatpush1.msra.mxu0 0.0
    %4068 = vmatprep.subr.mxu0 0.0
    %4069 = vmatpush1.msra.mxu0 0.0
    %4070 = vmatprep.subr.mxu0 0.0
    %4071 = vmatpush1.msra.mxu0 0.0
    %4072 = vmatprep.subr.mxu0 0.0
    %4073 = vmatpush1.msra.mxu0 0.0
    %4074 = vmatprep.subr.mxu0 0.0
    %4075 = vmatpush1.msra.mxu0 0.0
    %4076 = vmatprep.subr.mxu0 0.0
    %4077 = vmatpush1.msra.mxu0 0.0
    %4078 = vmatprep.subr.mxu0 0.0
    %4079 = vmatpush1.msra.mxu0 0.0
    %4080 = vmatprep.subr.mxu0 0.0
    %4081 = vmatpush1.msra.mxu0 0.0
    %4082 = vmatprep.subr.mxu0 0.0
    %4083 = vmatpush1.msra.mxu0 0.0
    %4084 = vmatprep.subr.mxu0 0.0
    %4085 = vmatpush1.msra.mxu0 0.0
    %4086 = vmatprep.subr.mxu0 0.0
    %4087 = vmatpush1.msra.mxu0 0.0
    %4088 = vmatprep.subr.mxu0 0.0
    %4089 = vmatpush1.msra.mxu0 0.0
    %4090 = vmatprep.subr.mxu0 0.0
    %4091 = vmatpush1.msra.mxu0 0.0
    %4092 = vmatprep.subr.mxu0 0.0
    %4093 = vmatpush1.msra.mxu0 0.0
    %4094 = vmatprep.subr.mxu0 0.0
    %4095 = vmatpush1.msra.mxu0 0.0
    %4096 = vmatprep.subr.mxu0 0.0
    %4097 = vmatpush1.msra.mxu0 0.0
    %4098 = vmatprep.subr.mxu0 0.0
    %4099 = vmatpush1.msra.mxu0 0.0
    %4100 = vmatprep.subr.mxu0 0.0
    %4101 = vmatpush1.msra.mxu0 0.0
    %4102 = vmatprep.subr.mxu0 0.0
    %4103 = vmatpush1.msra.mxu0 0.0
    %4104 = vmatprep.subr.mxu0 0.0
    %4105 = vmatpush1.msra.mxu0 0.0
    %4106 = vmatprep.subr.mxu0 0.0
    %4107 = vmatpush1.msra.mxu0 0.0
    %4108 = vmatprep.subr.mxu0 0.0
    %4109 = vmatpush1.msra.mxu0 0.0
    %4110 = vmatprep.subr.mxu0 0.0
    %4111 = vmatpush1.msra.mxu0 0.0
    %4112 = vmatprep.subr.mxu0 0.0
    %4113 = vmatpush1.msra.mxu0 0.0
    %4114 = vmatprep.mubr.f32.mxu0 0.0
    %4115 = vmatmul.mubr.f32.gmra.mrb[0].mxu0 %v4048
    %v4116 = vpop.f32.mrb[0].mxu0
    %v4117 = vadd.f32 0.0, %v4116
    %v4118 = vpop.f32.mrb[0].mxu0
    %4119 = vdwg.mxu0
    %v4121 = vrot.slane %v4117, 2
    %v4123 = vadd.f32 %v3585, %v4121
    %v4124 = vxor.u32 %v4123, 2147483648
    %v4125 = vmul.f32 %v4124, 1.442695
    %v4126 = vpow.pop %v4125
    %v4127 = vadd.f32 %v4126, 1.0
    %v4128 = vrcp.pop %v4127
    %v4129 = vmul.f32 1.0, %v4128
    %v4130 = vadd.f32 %v4117, %v3676
    %v4132 = vrot.slane %v4130, 2
    %4133 = vrot.lane.b32.xlu0 %v4132, 96
    %v4134 = vpop.permute.xlu0 %4133
    %v4136 = vmul.f32 %v4129, %v4134
    %4138 = vrot.lane.b32.xlu0 %v4136, 32
    %v4139 = vpop.permute.xlu0 %4138
    %v4141 = vadd.f32 %v3585, %v4139
    %v4142 = vtanh.pop %v4141
    %v4143 = vsub.f32 1.0, %v4129
    %4145 = vrot.lane.b32.xlu0 %v4142, 112
    %v4146 = vpop.permute.xlu0 %4145
    %v4148 = vmul.f32 %v4143, %v4146
    %v4149 = vrot.slane %v4045, 6
    %4150 = vrot.lane.b32.xlu0 %v4149, 16
    %v4151 = vpop.permute.xlu0 %4150
    %v4153 = vmul.f32 %v4129, %v4151
    %v4154 = vadd.f32 %v4148, %v4153
    %v4155 = vadd.f32 %v3590, %v4117
    %v4156 = vxor.u32 %v4155, 2147483648
    %v4157 = vmul.f32 %v4156, 1.442695
    %v4158 = vpow.pop %v4157
    %v4159 = vadd.f32 %v4158, 1.0
    %v4160 = vrcp.pop %v4159
    %v4161 = vmul.f32 1.0, %v4160
    %v4162 = vadd.f32 %v4117, %v3709
    %4164 = vrot.lane.b32.xlu0 %v4162, 96
    %v4165 = vpop.permute.xlu0 %4164
    %v4167 = vmul.f32 %v4161, %v4165
    %4169 = vrot.lane.b32.xlu0 %v4167, 32
    %v4170 = vpop.permute.xlu0 %4169
    %v4172 = vadd.f32 %v3590, %v4170
    %v4173 = vtanh.pop %v4172
    %v4174 = vsub.f32 1.0, %v4161
    %4176 = vrot.lane.b32.xlu0 %v4173, 112
    %v4177 = vpop.permute.xlu0 %4176
    %v4179 = vmul.f32 %v4174, %v4177
    %4180 = vrot.lane.b32.xlu0 %v4047, 48
    %v4181 = vpop.permute.xlu0 %4180
    %v4183 = vmul.f32 %v4161, %v4181
    %v4184 = vadd.f32 %v4179, %v4183
    %4186 = vrot.lane.b32.xlu0 %v4154, 112
    %v4187 = vpop.permute.xlu0 %4186
    %v4190 = vrot.slane %v4184, 2
    %4191 = vrot.lane.b32.xlu0 %v4190, 80
    %v4192 = vpop.permute.xlu0 %4191
    %v4194 = vsel %vm364, %v4187, %v4192
    %v4196 = vrot.slane %v4194, 6
    %v4197 = vsel %vm131, %v4196, 0
    %4199 = vmatprep.subr.mxu0 0.0
    %4200 = vmatpush1.msra.mxu0 %v3500
    %4201 = vmatprep.subr.mxu0 0.0
    %4202 = vmatpush1.msra.mxu0 %v3501
    %4203 = vmatprep.subr.mxu0 0.0
    %4204 = vmatpush1.msra.mxu0 %v3502
    %4205 = vmatprep.subr.mxu0 0.0
    %4206 = vmatpush1.msra.mxu0 %v3503
    %4207 = vmatprep.subr.mxu0 0.0
    %4208 = vmatpush1.msra.mxu0 0.0
    %4209 = vmatprep.subr.mxu0 0.0
    %4210 = vmatpush1.msra.mxu0 0.0
    %4211 = vmatprep.subr.mxu0 0.0
    %4212 = vmatpush1.msra.mxu0 0.0
    %4213 = vmatprep.subr.mxu0 0.0
    %4214 = vmatpush1.msra.mxu0 0.0
    %4215 = vmatprep.subr.mxu0 0.0
    %4216 = vmatpush1.msra.mxu0 0.0
    %4217 = vmatprep.subr.mxu0 0.0
    %4218 = vmatpush1.msra.mxu0 0.0
    %4219 = vmatprep.subr.mxu0 0.0
    %4220 = vmatpush1.msra.mxu0 0.0
    %4221 = vmatprep.subr.mxu0 0.0
    %4222 = vmatpush1.msra.mxu0 0.0
    %4223 = vmatprep.subr.mxu0 0.0
    %4224 = vmatpush1.msra.mxu0 0.0
    %4225 = vmatprep.subr.mxu0 0.0
    %4226 = vmatpush1.msra.mxu0 0.0
    %4227 = vmatprep.subr.mxu0 0.0
    %4228 = vmatpush1.msra.mxu0 0.0
    %4229 = vmatprep.subr.mxu0 0.0
    %4230 = vmatpush1.msra.mxu0 0.0
    %4231 = vmatprep.subr.mxu0 0.0
    %4232 = vmatpush1.msra.mxu0 0.0
    %4233 = vmatprep.subr.mxu0 0.0
    %4234 = vmatpush1.msra.mxu0 0.0
    %4235 = vmatprep.subr.mxu0 0.0
    %4236 = vmatpush1.msra.mxu0 0.0
    %4237 = vmatprep.subr.mxu0 0.0
    %4238 = vmatpush1.msra.mxu0 0.0
    %4239 = vmatprep.subr.mxu0 0.0
    %4240 = vmatpush1.msra.mxu0 0.0
    %4241 = vmatprep.subr.mxu0 0.0
    %4242 = vmatpush1.msra.mxu0 0.0
    %4243 = vmatprep.subr.mxu0 0.0
    %4244 = vmatpush1.msra.mxu0 0.0
    %4245 = vmatprep.subr.mxu0 0.0
    %4246 = vmatpush1.msra.mxu0 0.0
    %4247 = vmatprep.subr.mxu0 0.0
    %4248 = vmatpush1.msra.mxu0 0.0
    %4249 = vmatprep.subr.mxu0 0.0
    %4250 = vmatpush1.msra.mxu0 0.0
    %4251 = vmatprep.subr.mxu0 0.0
    %4252 = vmatpush1.msra.mxu0 0.0
    %4253 = vmatprep.subr.mxu0 0.0
    %4254 = vmatpush1.msra.mxu0 0.0
    %4255 = vmatprep.subr.mxu0 0.0
    %4256 = vmatpush1.msra.mxu0 0.0
    %4257 = vmatprep.subr.mxu0 0.0
    %4258 = vmatpush1.msra.mxu0 0.0
    %4259 = vmatprep.subr.mxu0 0.0
    %4260 = vmatpush1.msra.mxu0 0.0
    %4261 = vmatprep.subr.mxu0 0.0
    %4262 = vmatpush1.msra.mxu0 0.0
    %4263 = vmatprep.mubr.f32.mxu0 0.0
    %4264 = vmatmul.mubr.f32.gmra.mrb[0].mxu0 %v4197
    %v4265 = vpop.f32.mrb[0].mxu0
    %v4266 = vadd.f32 0.0, %v4265
    %v4267 = vpop.f32.mrb[0].mxu0
    %4268 = vdwg.mxu0
    %v4269 = vadd.f32 %v3590, %v4266
    %v4270 = vxor.u32 %v4269, 2147483648
    %v4271 = vmul.f32 %v4270, 1.442695
    %v4272 = vpow.pop %v4271
    %v4273 = vadd.f32 %v4272, 1.0
    %v4274 = vrcp.pop %v4273
    %v4275 = vmul.f32 1.0, %v4274
    %v4276 = vadd.f32 %v4266, %v3676
    %4278 = vrot.lane.b32.xlu0 %v4276, 96
    %v4279 = vpop.permute.xlu0 %4278
    %v4281 = vmul.f32 %v4275, %v4279
    %4283 = vrot.lane.b32.xlu0 %v4281, 32
    %v4284 = vpop.permute.xlu0 %4283
    %v4286 = vadd.f32 %v3590, %v4284
    %v4287 = vtanh.pop %v4286
    %v4288 = vsub.f32 1.0, %v4275
    %4290 = vrot.lane.b32.xlu0 %v4287, 112
    %v4291 = vpop.permute.xlu0 %4290
    %v4293 = vmul.f32 %v4288, %v4291
    %4294 = vrot.lane.b32.xlu0 %v4196, 16
    %v4295 = vpop.permute.xlu0 %4294
    %v4297 = vmul.f32 %v4275, %v4295
    %v4298 = vadd.f32 %v4293, %v4297
    %v4300 = vrot.slane %v4266, 2
    %v4302 = vadd.f32 %v3585, %v4300
    %v4303 = vxor.u32 %v4302, 2147483648
    %v4304 = vmul.f32 %v4303, 1.442695
    %v4305 = vpow.pop %v4304
    %v4306 = vadd.f32 %v4305, 1.0
    %v4307 = vrcp.pop %v4306
    %v4308 = vmul.f32 1.0, %v4307
    %v4309 = vadd.f32 %v4266, %v3709
    %v4311 = vrot.slane %v4309, 2
    %4312 = vrot.lane.b32.xlu0 %v4311, 96
    %v4313 = vpop.permute.xlu0 %4312
    %v4315 = vmul.f32 %v4308, %v4313
    %4317 = vrot.lane.b32.xlu0 %v4315, 32
    %v4318 = vpop.permute.xlu0 %4317
    %v4320 = vadd.f32 %v3585, %v4318
    %v4321 = vtanh.pop %v4320
    %v4322 = vsub.f32 1.0, %v4308
    %4324 = vrot.lane.b32.xlu0 %v4321, 112
    %v4325 = vpop.permute.xlu0 %4324
    %v4327 = vmul.f32 %v4322, %v4325
    %4328 = vrot.lane.b32.xlu0 %v4194, 48
    %v4329 = vpop.permute.xlu0 %4328
    %v4331 = vmul.f32 %v4308, %v4329
    %v4332 = vadd.f32 %v4327, %v4331
    %4334 = vrot.lane.b32.xlu0 %v4298, 112
    %v4335 = vpop.permute.xlu0 %4334
    %v4338 = vrot.slane %v4332, 6
    %4339 = vrot.lane.b32.xlu0 %v4338, 80
    %v4340 = vpop.permute.xlu0 %4339
    %v4342 = vsel %vm364, %v4335, %v4340
    %v4344 = vsel %vm131, %v4342, 0
    %4346 = vmatprep.subr.mxu0 0.0
    %4347 = vmatpush1.msra.mxu0 %v3500
    %4348 = vmatprep.subr.mxu0 0.0
    %4349 = vmatpush1.msra.mxu0 %v3501
    %4350 = vmatprep.subr.mxu0 0.0
    %4351 = vmatpush1.msra.mxu0 %v3502
    %4352 = vmatprep.subr.mxu0 0.0
    %4353 = vmatpush1.msra.mxu0 %v3503
    %4354 = vmatprep.subr.mxu0 0.0
    %4355 = vmatpush1.msra.mxu0 0.0
    %4356 = vmatprep.subr.mxu0 0.0
    %4357 = vmatpush1.msra.mxu0 0.0
    %4358 = vmatprep.subr.mxu0 0.0
    %4359 = vmatpush1.msra.mxu0 0.0
    %4360 = vmatprep.subr.mxu0 0.0
    %4361 = vmatpush1.msra.mxu0 0.0
    %4362 = vmatprep.subr.mxu0 0.0
    %4363 = vmatpush1.msra.mxu0 0.0
    %4364 = vmatprep.subr.mxu0 0.0
    %4365 = vmatpush1.msra.mxu0 0.0
    %4366 = vmatprep.subr.mxu0 0.0
    %4367 = vmatpush1.msra.mxu0 0.0
    %4368 = vmatprep.subr.mxu0 0.0
    %4369 = vmatpush1.msra.mxu0 0.0
    %4370 = vmatprep.subr.mxu0 0.0
    %4371 = vmatpush1.msra.mxu0 0.0
    %4372 = vmatprep.subr.mxu0 0.0
    %4373 = vmatpush1.msra.mxu0 0.0
    %4374 = vmatprep.subr.mxu0 0.0
    %4375 = vmatpush1.msra.mxu0 0.0
    %4376 = vmatprep.subr.mxu0 0.0
    %4377 = vmatpush1.msra.mxu0 0.0
    %4378 = vmatprep.subr.mxu0 0.0
    %4379 = vmatpush1.msra.mxu0 0.0
    %4380 = vmatprep.subr.mxu0 0.0
    %4381 = vmatpush1.msra.mxu0 0.0
    %4382 = vmatprep.subr.mxu0 0.0
    %4383 = vmatpush1.msra.mxu0 0.0
    %4384 = vmatprep.subr.mxu0 0.0
    %4385 = vmatpush1.msra.mxu0 0.0
    %4386 = vmatprep.subr.mxu0 0.0
    %4387 = vmatpush1.msra.mxu0 0.0
    %4388 = vmatprep.subr.mxu0 0.0
    %4389 = vmatpush1.msra.mxu0 0.0
    %4390 = vmatprep.subr.mxu0 0.0
    %4391 = vmatpush1.msra.mxu0 0.0
    %4392 = vmatprep.subr.mxu0 0.0
    %4393 = vmatpush1.msra.mxu0 0.0
    %4394 = vmatprep.subr.mxu0 0.0
    %4395 = vmatpush1.msra.mxu0 0.0
    %4396 = vmatprep.subr.mxu0 0.0
    %4397 = vmatpush1.msra.mxu0 0.0
    %4398 = vmatprep.subr.mxu0 0.0
    %4399 = vmatpush1.msra.mxu0 0.0
    %4400 = vmatprep.subr.mxu0 0.0
    %4401 = vmatpush1.msra.mxu0 0.0
    %4402 = vmatprep.subr.mxu0 0.0
    %4403 = vmatpush1.msra.mxu0 0.0
    %4404 = vmatprep.subr.mxu0 0.0
    %4405 = vmatpush1.msra.mxu0 0.0
    %4406 = vmatprep.subr.mxu0 0.0
    %4407 = vmatpush1.msra.mxu0 0.0
    %4408 = vmatprep.subr.mxu0 0.0
    %4409 = vmatpush1.msra.mxu0 0.0
    %4410 = vmatprep.mubr.f32.mxu0 0.0
    %4411 = vmatmul.mubr.f32.gmra.mrb[0].mxu0 %v4344
    %v4412 = vpop.f32.mrb[0].mxu0
    %v4413 = vadd.f32 0.0, %v4412
    %v4414 = vpop.f32.mrb[0].mxu0
    %4415 = vdwg.mxu0
    %v4417 = vrot.slane %v4413, 6
    %v4419 = vadd.f32 %v3590, %v4417
    %v4420 = vxor.u32 %v4419, 2147483648
    %v4421 = vmul.f32 %v4420, 1.442695
    %v4422 = vpow.pop %v4421
    %v4423 = vadd.f32 %v4422, 1.0
    %v4424 = vrcp.pop %v4423
    %v4425 = vmul.f32 1.0, %v4424
    %v4426 = vadd.f32 %v4413, %v3676
    %v4428 = vrot.slane %v4426, 6
    %4429 = vrot.lane.b32.xlu0 %v4428, 96
    %v4430 = vpop.permute.xlu0 %4429
    %v4432 = vmul.f32 %v4425, %v4430
    %4434 = vrot.lane.b32.xlu0 %v4432, 32
    %v4435 = vpop.permute.xlu0 %4434
    %v4437 = vadd.f32 %v3590, %v4435
    %v4438 = vtanh.pop %v4437
    %v4439 = vsub.f32 1.0, %v4425
    %4441 = vrot.lane.b32.xlu0 %v4438, 112
    %v4442 = vpop.permute.xlu0 %4441
    %v4444 = vmul.f32 %v4439, %v4442
    %v4445 = vrot.slane %v4342, 6
    %4446 = vrot.lane.b32.xlu0 %v4445, 16
    %v4447 = vpop.permute.xlu0 %4446
    %v4449 = vmul.f32 %v4425, %v4447
    %v4450 = vadd.f32 %v4444, %v4449
    %v4451 = vrot.slane %v4413, 4
    %v4453 = vadd.f32 %v3585, %v4451
    %v4454 = vxor.u32 %v4453, 2147483648
    %v4455 = vmul.f32 %v4454, 1.442695
    %v4456 = vpow.pop %v4455
    %v4457 = vadd.f32 %v4456, 1.0
    %v4458 = vrcp.pop %v4457
    %v4459 = vmul.f32 1.0, %v4458
    %v4460 = vadd.f32 %v4413, %v3709
    %v4462 = vrot.slane %v4460, 4
    %4463 = vrot.lane.b32.xlu0 %v4462, 96
    %v4464 = vpop.permute.xlu0 %4463
    %v4466 = vmul.f32 %v4459, %v4464
    %4468 = vrot.lane.b32.xlu0 %v4466, 32
    %v4469 = vpop.permute.xlu0 %4468
    %v4471 = vadd.f32 %v3585, %v4469
    %v4472 = vtanh.pop %v4471
    %v4473 = vsub.f32 1.0, %v4459
    %4475 = vrot.lane.b32.xlu0 %v4472, 112
    %v4476 = vpop.permute.xlu0 %4475
    %v4478 = vmul.f32 %v4473, %v4476
    %v4479 = vrot.slane %v4342, 4
    %4480 = vrot.lane.b32.xlu0 %v4479, 48
    %v4481 = vpop.permute.xlu0 %4480
    %v4483 = vmul.f32 %v4459, %v4481
    %v4484 = vadd.f32 %v4478, %v4483
    %4486 = vrot.lane.b32.xlu0 %v4450, 112
    %v4487 = vpop.permute.xlu0 %4486
    %v4490 = vrot.slane %v4484, 2
    %4491 = vrot.lane.b32.xlu0 %v4490, 80
    %v4492 = vpop.permute.xlu0 %4491
    %v4494 = vsel %vm364, %v4487, %v4492
    %v4496 = vrot.slane %v4494, 2
    %v4497 = vsel %vm131, %v4496, 0
    %4499 = vmatprep.subr.mxu0 0.0
    %4500 = vmatpush1.msra.mxu0 %v3500
    %4501 = vmatprep.subr.mxu0 0.0
    %4502 = vmatpush1.msra.mxu0 %v3501
    %4503 = vmatprep.subr.mxu0 0.0
    %4504 = vmatpush1.msra.mxu0 %v3502
    %4505 = vmatprep.subr.mxu0 0.0
    %4506 = vmatpush1.msra.mxu0 %v3503
    %4507 = vmatprep.subr.mxu0 0.0
    %4508 = vmatpush1.msra.mxu0 0.0
    %4509 = vmatprep.subr.mxu0 0.0
    %4510 = vmatpush1.msra.mxu0 0.0
    %4511 = vmatprep.subr.mxu0 0.0
    %4512 = vmatpush1.msra.mxu0 0.0
    %4513 = vmatprep.subr.mxu0 0.0
    %4514 = vmatpush1.msra.mxu0 0.0
    %4515 = vmatprep.subr.mxu0 0.0
    %4516 = vmatpush1.msra.mxu0 0.0
    %4517 = vmatprep.subr.mxu0 0.0
    %4518 = vmatpush1.msra.mxu0 0.0
    %4519 = vmatprep.subr.mxu0 0.0
    %4520 = vmatpush1.msra.mxu0 0.0
    %4521 = vmatprep.subr.mxu0 0.0
    %4522 = vmatpush1.msra.mxu0 0.0
    %4523 = vmatprep.subr.mxu0 0.0
    %4524 = vmatpush1.msra.mxu0 0.0
    %4525 = vmatprep.subr.mxu0 0.0
    %4526 = vmatpush1.msra.mxu0 0.0
    %4527 = vmatprep.subr.mxu0 0.0
    %4528 = vmatpush1.msra.mxu0 0.0
    %4529 = vmatprep.subr.mxu0 0.0
    %4530 = vmatpush1.msra.mxu0 0.0
    %4531 = vmatprep.subr.mxu0 0.0
    %4532 = vmatpush1.msra.mxu0 0.0
    %4533 = vmatprep.subr.mxu0 0.0
    %4534 = vmatpush1.msra.mxu0 0.0
    %4535 = vmatprep.subr.mxu0 0.0
    %4536 = vmatpush1.msra.mxu0 0.0
    %4537 = vmatprep.subr.mxu0 0.0
    %4538 = vmatpush1.msra.mxu0 0.0
    %4539 = vmatprep.subr.mxu0 0.0
    %4540 = vmatpush1.msra.mxu0 0.0
    %4541 = vmatprep.subr.mxu0 0.0
    %4542 = vmatpush1.msra.mxu0 0.0
    %4543 = vmatprep.subr.mxu0 0.0
    %4544 = vmatpush1.msra.mxu0 0.0
    %4545 = vmatprep.subr.mxu0 0.0
    %4546 = vmatpush1.msra.mxu0 0.0
    %4547 = vmatprep.subr.mxu0 0.0
    %4548 = vmatpush1.msra.mxu0 0.0
    %4549 = vmatprep.subr.mxu0 0.0
    %4550 = vmatpush1.msra.mxu0 0.0
    %4551 = vmatprep.subr.mxu0 0.0
    %4552 = vmatpush1.msra.mxu0 0.0
    %4553 = vmatprep.subr.mxu0 0.0
    %4554 = vmatpush1.msra.mxu0 0.0
    %4555 = vmatprep.subr.mxu0 0.0
    %4556 = vmatpush1.msra.mxu0 0.0
    %4557 = vmatprep.subr.mxu0 0.0
    %4558 = vmatpush1.msra.mxu0 0.0
    %4559 = vmatprep.subr.mxu0 0.0
    %4560 = vmatpush1.msra.mxu0 0.0
    %4561 = vmatprep.subr.mxu0 0.0
    %4562 = vmatpush1.msra.mxu0 0.0
    %4563 = vmatprep.mubr.f32.mxu0 0.0
    %4564 = vmatmul.mubr.f32.gmra.mrb[0].mxu0 %v4497
    %v4565 = vpop.f32.mrb[0].mxu0
    %v4566 = vadd.f32 0.0, %v4565
    %v4567 = vpop.f32.mrb[0].mxu0
    %4568 = vdwg.mxu0
    %v4570 = vrot.slane %v4566, 4
    %v4572 = vadd.f32 %v3590, %v4570
    %v4573 = vxor.u32 %v4572, 2147483648
    %v4574 = vmul.f32 %v4573, 1.442695
    %v4575 = vpow.pop %v4574
    %v4576 = vadd.f32 %v4575, 1.0
    %v4577 = vrcp.pop %v4576
    %v4578 = vmul.f32 1.0, %v4577
    %v4579 = vadd.f32 %v4566, %v3676
    %v4581 = vrot.slane %v4579, 4
    %4582 = vrot.lane.b32.xlu0 %v4581, 96
    %v4583 = vpop.permute.xlu0 %4582
    %v4585 = vmul.f32 %v4578, %v4583
    %4587 = vrot.lane.b32.xlu0 %v4585, 32
    %v4588 = vpop.permute.xlu0 %4587
    %v4590 = vadd.f32 %v3590, %v4588
    %v4591 = vtanh.pop %v4590
    %v4592 = vsub.f32 1.0, %v4578
    %4594 = vrot.lane.b32.xlu0 %v4591, 112
    %v4595 = vpop.permute.xlu0 %4594
    %v4597 = vmul.f32 %v4592, %v4595
    %v4598 = vrot.slane %v4494, 6
    %4599 = vrot.lane.b32.xlu0 %v4598, 16
    %v4600 = vpop.permute.xlu0 %4599
    %v4602 = vmul.f32 %v4578, %v4600
    %v4603 = vadd.f32 %v4597, %v4602
    %v4604 = vrot.slane %v4566, 6
    %v4606 = vadd.f32 %v3585, %v4604
    %v4607 = vxor.u32 %v4606, 2147483648
    %v4608 = vmul.f32 %v4607, 1.442695
    %v4609 = vpow.pop %v4608
    %v4610 = vadd.f32 %v4609, 1.0
    %v4611 = vrcp.pop %v4610
    %v4612 = vmul.f32 1.0, %v4611
    %v4613 = vadd.f32 %v4566, %v3709
    %v4615 = vrot.slane %v4613, 6
    %4616 = vrot.lane.b32.xlu0 %v4615, 96
    %v4617 = vpop.permute.xlu0 %4616
    %v4619 = vmul.f32 %v4612, %v4617
    %4621 = vrot.lane.b32.xlu0 %v4619, 32
    %v4622 = vpop.permute.xlu0 %4621
    %v4624 = vadd.f32 %v3585, %v4622
    %v4625 = vtanh.pop %v4624
    %v4626 = vsub.f32 1.0, %v4612
    %4628 = vrot.lane.b32.xlu0 %v4625, 112
    %v4629 = vpop.permute.xlu0 %4628
    %v4631 = vmul.f32 %v4626, %v4629
    %4632 = vrot.lane.b32.xlu0 %v4494, 48
    %v4633 = vpop.permute.xlu0 %4632
    %v4635 = vmul.f32 %v4612, %v4633
    %v4636 = vadd.f32 %v4631, %v4635
    %4638 = vrot.lane.b32.xlu0 %v4603, 112
    %v4639 = vpop.permute.xlu0 %4638
    %v4642 = vrot.slane %v4636, 6
    %4643 = vrot.lane.b32.xlu0 %v4642, 80
    %v4644 = vpop.permute.xlu0 %4643
    %v4646 = vsel %vm364, %v4639, %v4644
    %v4648 = vrot.slane %v4646, 4
    %v4649 = vsel %vm131, %v4648, 0
    %4651 = vmatprep.subr.mxu0 0.0
    %4652 = vmatpush1.msra.mxu0 %v3500
    %4653 = vmatprep.subr.mxu0 0.0
    %4654 = vmatpush1.msra.mxu0 %v3501
    %4655 = vmatprep.subr.mxu0 0.0
    %4656 = vmatpush1.msra.mxu0 %v3502
    %4657 = vmatprep.subr.mxu0 0.0
    %4658 = vmatpush1.msra.mxu0 %v3503
    %4659 = vmatprep.subr.mxu0 0.0
    %4660 = vmatpush1.msra.mxu0 0.0
    %4661 = vmatprep.subr.mxu0 0.0
    %4662 = vmatpush1.msra.mxu0 0.0
    %4663 = vmatprep.subr.mxu0 0.0
    %4664 = vmatpush1.msra.mxu0 0.0
    %4665 = vmatprep.subr.mxu0 0.0
    %4666 = vmatpush1.msra.mxu0 0.0
    %4667 = vmatprep.subr.mxu0 0.0
    %4668 = vmatpush1.msra.mxu0 0.0
    %4669 = vmatprep.subr.mxu0 0.0
    %4670 = vmatpush1.msra.mxu0 0.0
    %4671 = vmatprep.subr.mxu0 0.0
    %4672 = vmatpush1.msra.mxu0 0.0
    %4673 = vmatprep.subr.mxu0 0.0
    %4674 = vmatpush1.msra.mxu0 0.0
    %4675 = vmatprep.subr.mxu0 0.0
    %4676 = vmatpush1.msra.mxu0 0.0
    %4677 = vmatprep.subr.mxu0 0.0
    %4678 = vmatpush1.msra.mxu0 0.0
    %4679 = vmatprep.subr.mxu0 0.0
    %4680 = vmatpush1.msra.mxu0 0.0
    %4681 = vmatprep.subr.mxu0 0.0
    %4682 = vmatpush1.msra.mxu0 0.0
    %4683 = vmatprep.subr.mxu0 0.0
    %4684 = vmatpush1.msra.mxu0 0.0
    %4685 = vmatprep.subr.mxu0 0.0
    %4686 = vmatpush1.msra.mxu0 0.0
    %4687 = vmatprep.subr.mxu0 0.0
    %4688 = vmatpush1.msra.mxu0 0.0
    %4689 = vmatprep.subr.mxu0 0.0
    %4690 = vmatpush1.msra.mxu0 0.0
    %4691 = vmatprep.subr.mxu0 0.0
    %4692 = vmatpush1.msra.mxu0 0.0
    %4693 = vmatprep.subr.mxu0 0.0
    %4694 = vmatpush1.msra.mxu0 0.0
    %4695 = vmatprep.subr.mxu0 0.0
    %4696 = vmatpush1.msra.mxu0 0.0
    %4697 = vmatprep.subr.mxu0 0.0
    %4698 = vmatpush1.msra.mxu0 0.0
    %4699 = vmatprep.subr.mxu0 0.0
    %4700 = vmatpush1.msra.mxu0 0.0
    %4701 = vmatprep.subr.mxu0 0.0
    %4702 = vmatpush1.msra.mxu0 0.0
    %4703 = vmatprep.subr.mxu0 0.0
    %4704 = vmatpush1.msra.mxu0 0.0
    %4705 = vmatprep.subr.mxu0 0.0
    %4706 = vmatpush1.msra.mxu0 0.0
    %4707 = vmatprep.subr.mxu0 0.0
    %4708 = vmatpush1.msra.mxu0 0.0
    %4709 = vmatprep.subr.mxu0 0.0
    %4710 = vmatpush1.msra.mxu0 0.0
    %4711 = vmatprep.subr.mxu0 0.0
    %4712 = vmatpush1.msra.mxu0 0.0
    %4713 = vmatprep.subr.mxu0 0.0
    %4714 = vmatpush1.msra.mxu0 0.0
    %4715 = vmatprep.mubr.f32.mxu0 0.0
    %4716 = vmatmul.mubr.f32.gmra.mrb[0].mxu0 %v4649
    %v4717 = vpop.f32.mrb[0].mxu0
    %v4718 = vadd.f32 0.0, %v4717
    %v4719 = vpop.f32.mrb[0].mxu0
    %4720 = vdwg.mxu0
    %v4722 = vrot.slane %v4718, 2
    %v4724 = vadd.f32 %v3590, %v4722
    %v4725 = vxor.u32 %v4724, 2147483648
    %v4726 = vmul.f32 %v4725, 1.442695
    %v4727 = vpow.pop %v4726
    %v4728 = vadd.f32 %v4727, 1.0
    %v4729 = vrcp.pop %v4728
    %v4730 = vmul.f32 1.0, %v4729
    %v4731 = vadd.f32 %v4718, %v3676
    %v4733 = vrot.slane %v4731, 2
    %4734 = vrot.lane.b32.xlu0 %v4733, 96
    %v4735 = vpop.permute.xlu0 %4734
    %v4737 = vmul.f32 %v4730, %v4735
    %4739 = vrot.lane.b32.xlu0 %v4737, 32
    %v4740 = vpop.permute.xlu0 %4739
    %v4742 = vadd.f32 %v3590, %v4740
    %v4743 = vtanh.pop %v4742
    %v4744 = vsub.f32 1.0, %v4730
    %4746 = vrot.lane.b32.xlu0 %v4743, 112
    %v4747 = vpop.permute.xlu0 %4746
    %v4749 = vmul.f32 %v4744, %v4747
    %v4750 = vrot.slane %v4646, 6
    %4751 = vrot.lane.b32.xlu0 %v4750, 16
    %v4752 = vpop.permute.xlu0 %4751
    %v4754 = vmul.f32 %v4730, %v4752
    %v4755 = vadd.f32 %v4749, %v4754
    %v4756 = vadd.f32 %v3585, %v4718
    %v4757 = vxor.u32 %v4756, 2147483648
    %v4758 = vmul.f32 %v4757, 1.442695
    %v4759 = vpow.pop %v4758
    %v4760 = vadd.f32 %v4759, 1.0
    %v4761 = vrcp.pop %v4760
    %v4762 = vmul.f32 1.0, %v4761
    %v4763 = vadd.f32 %v4718, %v3709
    %4765 = vrot.lane.b32.xlu0 %v4763, 96
    %v4766 = vpop.permute.xlu0 %4765
    %v4768 = vmul.f32 %v4762, %v4766
    %4770 = vrot.lane.b32.xlu0 %v4768, 32
    %v4771 = vpop.permute.xlu0 %4770
    %v4773 = vadd.f32 %v3585, %v4771
    %v4774 = vtanh.pop %v4773
    %v4775 = vsub.f32 1.0, %v4762
    %4777 = vrot.lane.b32.xlu0 %v4774, 112
    %v4778 = vpop.permute.xlu0 %4777
    %v4780 = vmul.f32 %v4775, %v4778
    %4781 = vrot.lane.b32.xlu0 %v4648, 48
    %v4782 = vpop.permute.xlu0 %4781
    %v4784 = vmul.f32 %v4762, %v4782
    %v4785 = vadd.f32 %v4780, %v4784
    %4787 = vrot.lane.b32.xlu0 %v4785, 80
    %v4788 = vpop.permute.xlu0 %4787
    %v4790 = vsel %vm364, %v3734, %v4788
    %4791 = vrot.lane.b32.xlu0 %v4636, 80
    %v4792 = vpop.permute.xlu0 %4791
    %v4794 = vsel %vm364, %v3886, %v4792
    %4795 = vrot.lane.b32.xlu0 %v4484, 80
    %v4796 = vpop.permute.xlu0 %4795
    %v4798 = vsel %vm364, %v4038, %v4796
    %4799 = vrot.lane.b32.xlu0 %v4332, 80
    %v4800 = vpop.permute.xlu0 %4799
    %v4802 = vsel %vm364, %v4187, %v4800
    %4803 = vrot.lane.b32.xlu0 %v4184, 80
    %v4804 = vpop.permute.xlu0 %4803
    %v4806 = vsel %vm364, %v4335, %v4804
    %4807 = vrot.lane.b32.xlu0 %v4035, 80
    %v4808 = vpop.permute.xlu0 %4807
    %v4810 = vsel %vm364, %v4487, %v4808
    %4811 = vrot.lane.b32.xlu0 %v3883, 80
    %v4812 = vpop.permute.xlu0 %4811
    %v4814 = vsel %vm364, %v4639, %v4812
    %4816 = vrot.lane.b32.xlu0 %v4755, 112
    %v4817 = vpop.permute.xlu0 %4816
    %4819 = vrot.lane.b32.xlu0 %v3731, 80
    %v4820 = vpop.permute.xlu0 %4819
    %v4822 = vsel %vm364, %v4817, %v4820
    %v4823 = vsel %vm1135, %v4790, %v4794
    %v4824 = vsel %vm1137, %v4823, %v4798
    %v4825 = vsel %vm1139, %v4824, %v4802
    %v4826 = vsel %vm1135, %v4806, %v4810
    %v4827 = vsel %vm1137, %v4826, %v4814
    %v4828 = vsel %vm1139, %v4827, %v4822
    %v4829 = vld [vmem:[%s1] sm:$0xff]
    %v4830 = vld [vmem:[%s1 + $0x8] sm:$0xf]
    %4832 = vset.pattern.permute.xlu0 0
    %4833 = vperm.xlu0 %4832, %v4829
    %v4834 = vpop.permute.xlu0 %4833
    %4837 = vset.pattern.permute.xlu0 0
    %4838 = vperm.xlu0 %4837, %v4830
    %v4839 = vpop.permute.xlu0 %4838
    %v4841 = vmul.f32 %v2159, %v4834
    %v4842 = vmul.f32 %v2160, %v4839
    %v4844 = vrot.slane %v4841, 2
    %v4846 = vadd.f32 %v4841, %v4844
    %v4847 = vrot.slane %v4841, 4
    %v4849 = vadd.f32 %v4846, %v4847
    %v4850 = vrot.slane %v4841, 6
    %v4852 = vadd.f32 %v4849, %v4850
    %v4853 = vadd.f32 %v4852, %v4842
    %v4855 = vrot.slane %v4842, 2
    %v4857 = vadd.f32 %v4853, %v4855
    %v4858 = vld [vmem:[%s19] sm:$0xff]
    %v4859 = vld [vmem:[%s19 + $0x8] sm:$0xff]
    %v4860 = vld [vmem:[%s19 + $0x10] sm:$0xff]
    %v4861 = vld [vmem:[%s19 + $0x18] sm:$0xff]
    %v4862 = vld [vmem:[%s19 + $0x20] sm:$0xff]
    %v4863 = vld [vmem:[%s19 + $0x28] sm:$0xff]
    %v4864 = vld [vmem:[%s19 + $0x30] sm:$0xff]
    %v4865 = vld [vmem:[%s19 + $0x38] sm:$0xff]
    %v4867 = vsel %vm131, %v4857, 0
    %4869 = vmatprep.subr.mxu0 %v4859
    %4870 = vmatpush1.msra.mxu0 %v4858
    %4871 = vmatprep.subr.mxu0 %v4861
    %4872 = vmatpush1.msra.mxu0 %v4860
    %4873 = vmatprep.subr.mxu0 %v4863
    %4874 = vmatpush1.msra.mxu0 %v4862
    %4875 = vmatprep.subr.mxu0 %v4865
    %4876 = vmatpush1.msra.mxu0 %v4864
    %4877 = vmatprep.subr.mxu0 0.0
    %4878 = vmatpush1.msra.mxu0 0.0
    %4879 = vmatprep.subr.mxu0 0.0
    %4880 = vmatpush1.msra.mxu0 0.0
    %4881 = vmatprep.subr.mxu0 0.0
    %4882 = vmatpush1.msra.mxu0 0.0
    %4883 = vmatprep.subr.mxu0 0.0
    %4884 = vmatpush1.msra.mxu0 0.0
    %4885 = vmatprep.subr.mxu0 0.0
    %4886 = vmatpush1.msra.mxu0 0.0
    %4887 = vmatprep.subr.mxu0 0.0
    %4888 = vmatpush1.msra.mxu0 0.0
    %4889 = vmatprep.subr.mxu0 0.0
    %4890 = vmatpush1.msra.mxu0 0.0
    %4891 = vmatprep.subr.mxu0 0.0
    %4892 = vmatpush1.msra.mxu0 0.0
    %4893 = vmatprep.subr.mxu0 0.0
    %4894 = vmatpush1.msra.mxu0 0.0
    %4895 = vmatprep.subr.mxu0 0.0
    %4896 = vmatpush1.msra.mxu0 0.0
    %4897 = vmatprep.subr.mxu0 0.0
    %4898 = vmatpush1.msra.mxu0 0.0
    %4899 = vmatprep.subr.mxu0 0.0
    %4900 = vmatpush1.msra.mxu0 0.0
    %4901 = vmatprep.subr.mxu0 0.0
    %4902 = vmatpush1.msra.mxu0 0.0
    %4903 = vmatprep.subr.mxu0 0.0
    %4904 = vmatpush1.msra.mxu0 0.0
    %4905 = vmatprep.subr.mxu0 0.0
    %4906 = vmatpush1.msra.mxu0 0.0
    %4907 = vmatprep.subr.mxu0 0.0
    %4908 = vmatpush1.msra.mxu0 0.0
    %4909 = vmatprep.subr.mxu0 0.0
    %4910 = vmatpush1.msra.mxu0 0.0
    %4911 = vmatprep.subr.mxu0 0.0
    %4912 = vmatpush1.msra.mxu0 0.0
    %4913 = vmatprep.subr.mxu0 0.0
    %4914 = vmatpush1.msra.mxu0 0.0
    %4915 = vmatprep.subr.mxu0 0.0
    %4916 = vmatpush1.msra.mxu0 0.0
    %4917 = vmatprep.subr.mxu0 0.0
    %4918 = vmatpush1.msra.mxu0 0.0
    %4919 = vmatprep.subr.mxu0 0.0
    %4920 = vmatpush1.msra.mxu0 0.0
    %4921 = vmatprep.subr.mxu0 0.0
    %4922 = vmatpush1.msra.mxu0 0.0
    %4923 = vmatprep.subr.mxu0 0.0
    %4924 = vmatpush1.msra.mxu0 0.0
    %4925 = vmatprep.subr.mxu0 0.0
    %4926 = vmatpush1.msra.mxu0 0.0
    %4927 = vmatprep.subr.mxu0 0.0
    %4928 = vmatpush1.msra.mxu0 0.0
    %4929 = vmatprep.subr.mxu0 0.0
    %4930 = vmatpush1.msra.mxu0 0.0
    %4931 = vmatprep.subr.mxu0 0.0
    %4932 = vmatpush1.msra.mxu0 0.0
    %4933 = vmatprep.mubr.f32.mxu0 0.0
    %4934 = vmatmul.mubr.f32.gmra.mrb[0].mxu0 %v4867
    %v4935 = vpop.f32.mrb[0].mxu0
    %v4936 = vadd.f32 0.0, %v4935
    %v4937 = vpop.f32.mrb[0].mxu0
    %v4938 = vadd.f32 0.0, %v4937
    %4939 = vdwg.mxu0
    %v4942 = vrot.slane %v4936, 6
    %v4943 = vrot.slane %v4938, 6
    %v4946 = vrot.slane %v4936, 4
    %v4947 = vrot.slane %v4938, 4
    %v4950 = vrot.slane %v4936, 2
    %v4951 = vrot.slane %v4938, 2
    %v4954 = vsel %vm1135, %v4936, %v4942
    %v4955 = vsel %vm1135, %v4938, %v4943
    %v4956 = vsel %vm1137, %v4954, %v4946
    %v4957 = vsel %vm1137, %v4955, %v4947
    %v4958 = vsel %vm1139, %v4956, %v4950
    %v4959 = vsel %vm1139, %v4957, %v4951
    %v4960 = vld [vmem:[%s20] sm:$0xff]
    %v4961 = vld [vmem:[%s20 + $0x8] sm:$0xff]
    %v4962 = vld [vmem:[%s20 + $0x10] sm:$0xff]
    %v4963 = vld [vmem:[%s20 + $0x18] sm:$0xff]
    %v4964 = vld [vmem:[%s20 + $0x20] sm:$0xff]
    %v4965 = vld [vmem:[%s20 + $0x28] sm:$0xff]
    %v4966 = vld [vmem:[%s20 + $0x30] sm:$0xff]
    %v4967 = vld [vmem:[%s20 + $0x38] sm:$0xff]
    %v4969 = vsel %vm131, %v4825, 0
    %v4972 = vsel %vm131, %v4828, 0
    %4974 = vmatprep.subr.mxu0 %v4961
    %4975 = vmatpush1.msra.mxu0 %v4960
    %4976 = vmatprep.subr.mxu0 %v4963
    %4977 = vmatpush1.msra.mxu0 %v4962
    %4978 = vmatprep.subr.mxu0 %v4965
    %4979 = vmatpush1.msra.mxu0 %v4964
    %4980 = vmatprep.subr.mxu0 %v4967
    %4981 = vmatpush1.msra.mxu0 %v4966
    %4982 = vmatprep.subr.mxu0 0.0
    %4983 = vmatpush1.msra.mxu0 0.0
    %4984 = vmatprep.subr.mxu0 0.0
    %4985 = vmatpush1.msra.mxu0 0.0
    %4986 = vmatprep.subr.mxu0 0.0
    %4987 = vmatpush1.msra.mxu0 0.0
    %4988 = vmatprep.subr.mxu0 0.0
    %4989 = vmatpush1.msra.mxu0 0.0
    %4990 = vmatprep.subr.mxu0 0.0
    %4991 = vmatpush1.msra.mxu0 0.0
    %4992 = vmatprep.subr.mxu0 0.0
    %4993 = vmatpush1.msra.mxu0 0.0
    %4994 = vmatprep.subr.mxu0 0.0
    %4995 = vmatpush1.msra.mxu0 0.0
    %4996 = vmatprep.subr.mxu0 0.0
    %4997 = vmatpush1.msra.mxu0 0.0
    %4998 = vmatprep.subr.mxu0 0.0
    %4999 = vmatpush1.msra.mxu0 0.0
    %5000 = vmatprep.subr.mxu0 0.0
    %5001 = vmatpush1.msra.mxu0 0.0
    %5002 = vmatprep.subr.mxu0 0.0
    %5003 = vmatpush1.msra.mxu0 0.0
    %5004 = vmatprep.subr.mxu0 0.0
    %5005 = vmatpush1.msra.mxu0 0.0
    %5006 = vmatprep.subr.mxu0 0.0
    %5007 = vmatpush1.msra.mxu0 0.0
    %5008 = vmatprep.subr.mxu0 0.0
    %5009 = vmatpush1.msra.mxu0 0.0
    %5010 = vmatprep.subr.mxu0 0.0
    %5011 = vmatpush1.msra.mxu0 0.0
    %5012 = vmatprep.subr.mxu0 0.0
    %5013 = vmatpush1.msra.mxu0 0.0
    %5014 = vmatprep.subr.mxu0 0.0
    %5015 = vmatpush1.msra.mxu0 0.0
    %5016 = vmatprep.subr.mxu0 0.0
    %5017 = vmatpush1.msra.mxu0 0.0
    %5018 = vmatprep.subr.mxu0 0.0
    %5019 = vmatpush1.msra.mxu0 0.0
    %5020 = vmatprep.subr.mxu0 0.0
    %5021 = vmatpush1.msra.mxu0 0.0
    %5022 = vmatprep.subr.mxu0 0.0
    %5023 = vmatpush1.msra.mxu0 0.0
    %5024 = vmatprep.subr.mxu0 0.0
    %5025 = vmatpush1.msra.mxu0 0.0
    %5026 = vmatprep.subr.mxu0 0.0
    %5027 = vmatpush1.msra.mxu0 0.0
    %5028 = vmatprep.subr.mxu0 0.0
    %5029 = vmatpush1.msra.mxu0 0.0
    %5030 = vmatprep.subr.mxu0 0.0
    %5031 = vmatpush1.msra.mxu0 0.0
    %5032 = vmatprep.subr.mxu0 0.0
    %5033 = vmatpush1.msra.mxu0 0.0
    %5034 = vmatprep.subr.mxu0 0.0
    %5035 = vmatpush1.msra.mxu0 0.0
    %5036 = vmatprep.subr.mxu0 0.0
    %5037 = vmatpush1.msra.mxu0 0.0
    %5038 = vmatprep.mubr.f32.mxu0 0.0
    %5039 = vmatmul.mubr.f32.gmra.mrb[0].mxu0 %v4969
    %v5040 = vpop.f32.mrb[0].mxu0
    %v5041 = vadd.f32 %v4958, %v5040
    %v5042 = vpop.f32.mrb[0].mxu0
    %v5043 = vadd.f32 %v4959, %v5042
    %5044 = vmatprep.mubr.f32.mxu0 0.0
    %5045 = vmatmul.mubr.f32.gmra.mrb[0].mxu0 %v4972
    %v5046 = vpop.f32.mrb[0].mxu0
    %v5047 = vadd.f32 %v4958, %v5046
    %v5048 = vpop.f32.mrb[0].mxu0
    %v5049 = vadd.f32 %v4959, %v5048
    %5050 = vdwg.mxu0
    %v5051 = vld [vmem:[%s21] sm:$0x3]
    %v5053 = vlaneseq
    %v5054 = vshrl.u32 %v5053, 7
    %v5055 = vsub.s32 0, %v5054
    %v5056 = vrot.slane %v5051, %v5055
    %v5057 = vlaneseq
    %v5058 = vshrl.u32 %v5057, 7
    %v5059 = vsub.s32 1, %v5058
    %v5060 = vrot.slane %v5051, %v5059
    %v5063 = vadd.f32 %v5041, %v5056
    %v5064 = vadd.f32 %v5043, %v5060
    %v5065 = vadd.f32 %v5047, %v5056
    %v5066 = vadd.f32 %v5049, %v5060
    %v5067 = vxor.u32 %v5063, 2147483648
    %v5068 = vxor.u32 %v5064, 2147483648
    %v5069 = vxor.u32 %v5065, 2147483648
    %v5070 = vxor.u32 %v5066, 2147483648
    %v5071 = vmul.f32 %v5067, 1.442695
    %v5072 = vpow.pop %v5071
    %v5073 = vmul.f32 %v5068, 1.442695
    %v5074 = vpow.pop %v5073
    %v5075 = vmul.f32 %v5069, 1.442695
    %v5076 = vpow.pop %v5075
    %v5077 = vmul.f32 %v5070, 1.442695
    %v5078 = vpow.pop %v5077
    %v5079 = vadd.f32 %v5072, 1.0
    %v5080 = vadd.f32 %v5074, 1.0
    %v5081 = vadd.f32 %v5076, 1.0
    %v5082 = vadd.f32 %v5078, 1.0
    %v5083 = vrcp.pop %v5079
    %v5084 = vmul.f32 1.0, %v5083
    %v5085 = vrcp.pop %v5080
    %v5086 = vmul.f32 1.0, %v5085
    %v5087 = vrcp.pop %v5081
    %v5088 = vmul.f32 1.0, %v5087
    %v5089 = vrcp.pop %v5082
    %v5090 = vmul.f32 1.0, %v5089
    %v5091 = vld [vmem:[%s22] sm:$0xff]
    %v5092 = vld [vmem:[%s22 + $0x8] sm:$0xff]
    %v5093 = vld [vmem:[%s22 + $0x10] sm:$0xff]
    %v5094 = vld [vmem:[%s22 + $0x18] sm:$0xff]
    %v5095 = vld [vmem:[%s22 + $0x20] sm:$0xff]
    %v5096 = vld [vmem:[%s22 + $0x28] sm:$0xff]
    %v5097 = vld [vmem:[%s22 + $0x30] sm:$0xff]
    %v5098 = vld [vmem:[%s22 + $0x38] sm:$0xff]
    %v5099 = vld [vmem:[%s22 + $0x40] sm:$0xff]
    %v5100 = vld [vmem:[%s22 + $0x48] sm:$0xff]
    %v5101 = vld [vmem:[%s22 + $0x50] sm:$0xff]
    %v5102 = vld [vmem:[%s22 + $0x58] sm:$0xff]
    %v5103 = vld [vmem:[%s22 + $0x60] sm:$0xff]
    %v5104 = vld [vmem:[%s22 + $0x68] sm:$0xff]
    %v5105 = vld [vmem:[%s22 + $0x70] sm:$0xff]
    %v5106 = vld [vmem:[%s22 + $0x78] sm:$0xff]
    %v5107 = vld [vmem:[%s22 + $0x80] sm:$0xff]
    %v5108 = vld [vmem:[%s22 + $0x88] sm:$0xff]
    %v5109 = vld [vmem:[%s22 + $0x90] sm:$0xff]
    %v5110 = vld [vmem:[%s22 + $0x98] sm:$0xff]
    %v5111 = vld [vmem:[%s22 + $0xa0] sm:$0xff]
    %v5112 = vld [vmem:[%s22 + $0xa8] sm:$0xff]
    %v5113 = vld [vmem:[%s22 + $0xb0] sm:$0xff]
    %v5114 = vld [vmem:[%s22 + $0xb8] sm:$0xff]
    %v5115 = vld [vmem:[%s22 + $0xc0] sm:$0xff]
    %v5116 = vld [vmem:[%s22 + $0xc8] sm:$0xff]
    %v5117 = vld [vmem:[%s22 + $0xd0] sm:$0xff]
    %v5118 = vld [vmem:[%s22 + $0xd8] sm:$0xff]
    %v5119 = vld [vmem:[%s22 + $0xe0] sm:$0xff]
    %v5120 = vld [vmem:[%s22 + $0xe8] sm:$0xff]
    %v5121 = vld [vmem:[%s22 + $0xf0] sm:$0xff]
    %v5122 = vld [vmem:[%s22 + $0xf8] sm:$0xff]
    %v5123 = vld [vmem:[%s22 + $0x100] sm:$0xff]
    %v5124 = vld [vmem:[%s22 + $0x108] sm:$0xff]
    %v5125 = vld [vmem:[%s22 + $0x110] sm:$0xff]
    %v5126 = vld [vmem:[%s22 + $0x118] sm:$0xff]
    %v5127 = vld [vmem:[%s22 + $0x120] sm:$0xff]
    %v5128 = vld [vmem:[%s22 + $0x128] sm:$0xff]
    %v5129 = vld [vmem:[%s22 + $0x130] sm:$0xff]
    %v5130 = vld [vmem:[%s22 + $0x138] sm:$0xff]
    %v5131 = vld [vmem:[%s22 + $0x140] sm:$0xff]
    %v5132 = vld [vmem:[%s22 + $0x148] sm:$0xff]
    %v5133 = vld [vmem:[%s22 + $0x150] sm:$0xff]
    %v5134 = vld [vmem:[%s22 + $0x158] sm:$0xff]
    %v5135 = vld [vmem:[%s22 + $0x160] sm:$0xff]
    %v5136 = vld [vmem:[%s22 + $0x168] sm:$0xff]
    %v5137 = vld [vmem:[%s22 + $0x170] sm:$0xff]
    %v5138 = vld [vmem:[%s22 + $0x178] sm:$0xff]
    %v5139 = vld [vmem:[%s22 + $0x180] sm:$0xff]
    %v5140 = vld [vmem:[%s22 + $0x188] sm:$0xff]
    %v5141 = vld [vmem:[%s23] sm:$0x3]
    %v5143 = vlaneseq
    %v5144 = vshrl.u32 %v5143, 7
    %v5145 = vsub.s32 0, %v5144
    %v5146 = vrot.slane %v5141, %v5145
    %v5147 = vlaneseq
    %v5148 = vshrl.u32 %v5147, 7
    %v5149 = vsub.s32 1, %v5148
    %v5150 = vrot.slane %v5141, %v5149
    %vm5153 = vcmask 588800
    %v5155 = vsel %vm5153, %v5086, 0
    %v5158 = vsel %vm5153, %v5090, 0
    %5160 = vmatprep.subr.mxu0 %v5092
    %5161 = vmatpush1.msra.mxu0 %v5091
    %5162 = vmatprep.subr.mxu0 %v5094
    %5163 = vmatpush1.msra.mxu0 %v5093
    %5164 = vmatprep.subr.mxu0 %v5096
    %5165 = vmatpush1.msra.mxu0 %v5095
    %5166 = vmatprep.subr.mxu0 %v5098
    %5167 = vmatpush1.msra.mxu0 %v5097
    %5168 = vmatprep.subr.mxu0 %v5100
    %5169 = vmatpush1.msra.mxu0 %v5099
    %5170 = vmatprep.subr.mxu0 %v5102
    %5171 = vmatpush1.msra.mxu0 %v5101
    %5172 = vmatprep.subr.mxu0 %v5104
    %5173 = vmatpush1.msra.mxu0 %v5103
    %5174 = vmatprep.subr.mxu0 %v5106
    %5175 = vmatpush1.msra.mxu0 %v5105
    %5176 = vmatprep.subr.mxu0 %v5108
    %5177 = vmatpush1.msra.mxu0 %v5107
    %5178 = vmatprep.subr.mxu0 %v5110
    %5179 = vmatpush1.msra.mxu0 %v5109
    %5180 = vmatprep.subr.mxu0 %v5112
    %5181 = vmatpush1.msra.mxu0 %v5111
    %5182 = vmatprep.subr.mxu0 %v5114
    %5183 = vmatpush1.msra.mxu0 %v5113
    %5184 = vmatprep.subr.mxu0 %v5116
    %5185 = vmatpush1.msra.mxu0 %v5115
    %5186 = vmatprep.subr.mxu0 %v5118
    %5187 = vmatpush1.msra.mxu0 %v5117
    %5188 = vmatprep.subr.mxu0 %v5120
    %5189 = vmatpush1.msra.mxu0 %v5119
    %5190 = vmatprep.subr.mxu0 %v5122
    %5191 = vmatpush1.msra.mxu0 %v5121
    %5192 = vmatprep.subr.mxu0 %v5124
    %5193 = vmatpush1.msra.mxu0 %v5123
    %5194 = vmatprep.subr.mxu0 %v5126
    %5195 = vmatpush1.msra.mxu0 %v5125
    %5196 = vmatprep.subr.mxu0 %v5128
    %5197 = vmatpush1.msra.mxu0 %v5127
    %5198 = vmatprep.subr.mxu0 %v5130
    %5199 = vmatpush1.msra.mxu0 %v5129
    %5200 = vmatprep.subr.mxu0 %v5132
    %5201 = vmatpush1.msra.mxu0 %v5131
    %5202 = vmatprep.subr.mxu0 %v5134
    %5203 = vmatpush1.msra.mxu0 %v5133
    %5204 = vmatprep.subr.mxu0 %v5136
    %5205 = vmatpush1.msra.mxu0 %v5135
    %5206 = vmatprep.subr.mxu0 %v5138
    %5207 = vmatpush1.msra.mxu0 %v5137
    %5208 = vmatprep.subr.mxu0 %v5140
    %5209 = vmatpush1.msra.mxu0 %v5139
    %5210 = vmatprep.subr.mxu0 0.0
    %5211 = vmatpush1.msra.mxu0 0.0
    %5212 = vmatprep.subr.mxu0 0.0
    %5213 = vmatpush1.msra.mxu0 0.0
    %5214 = vmatprep.subr.mxu0 0.0
    %5215 = vmatpush1.msra.mxu0 0.0
    %5216 = vmatprep.subr.mxu0 0.0
    %5217 = vmatpush1.msra.mxu0 0.0
    %5218 = vmatprep.subr.mxu0 0.0
    %5219 = vmatpush1.msra.mxu0 0.0
    %5220 = vmatprep.subr.mxu0 0.0
    %5221 = vmatpush1.msra.mxu0 0.0
    %5222 = vmatprep.subr.mxu0 0.0
    %5223 = vmatpush1.msra.mxu0 0.0
    %5224 = vmatprep.mubr.f32.mxu0 %v5155
    %5225 = vmatmul.mubr.f32.gmra.mrb[0].mxu0 %v5084
    %v5226 = vpop.f32.mrb[0].mxu0
    %v5227 = vadd.f32 %v5146, %v5226
    %v5228 = vpop.f32.mrb[0].mxu0
    %v5229 = vadd.f32 %v5150, %v5228
    %5230 = vmatprep.mubr.f32.mxu0 %v5158
    %5231 = vmatmul.mubr.f32.gmra.mrb[0].mxu0 %v5088
    %v5232 = vpop.f32.mrb[0].mxu0
    %v5233 = vadd.f32 %v5146, %v5232
    %v5234 = vpop.f32.mrb[0].mxu0
    %v5235 = vadd.f32 %v5150, %v5234
    %5236 = vdwg.mxu0
    %v5237 = vxor.u32 %v5227, 2147483648
    %v5238 = vxor.u32 %v5229, 2147483648
    %v5239 = vxor.u32 %v5233, 2147483648
    %v5240 = vxor.u32 %v5235, 2147483648
    %v5241 = vmul.f32 %v5237, 1.442695
    %v5242 = vpow.pop %v5241
    %v5243 = vmul.f32 %v5238, 1.442695
    %v5244 = vpow.pop %v5243
    %v5245 = vmul.f32 %v5239, 1.442695
    %v5246 = vpow.pop %v5245
    %v5247 = vmul.f32 %v5240, 1.442695
    %v5248 = vpow.pop %v5247
    %v5249 = vadd.f32 %v5242, 1.0
    %v5250 = vadd.f32 %v5244, 1.0
    %v5251 = vadd.f32 %v5246, 1.0
    %v5252 = vadd.f32 %v5248, 1.0
    %v5253 = vrcp.pop %v5249
    %v5254 = vmul.f32 1.0, %v5253
    %v5255 = vrcp.pop %v5250
    %v5256 = vmul.f32 1.0, %v5255
    %v5257 = vrcp.pop %v5251
    %v5258 = vmul.f32 1.0, %v5257
    %v5259 = vrcp.pop %v5252
    %v5260 = vmul.f32 1.0, %v5259
    %v5261 = vld [vmem:[%s24] sm:$0xff]
    %v5262 = vld [vmem:[%s24 + $0x8] sm:$0xff]
    %v5263 = vld [vmem:[%s24 + $0x10] sm:$0xff]
    %v5264 = vld [vmem:[%s24 + $0x18] sm:$0xff]
    %v5265 = vld [vmem:[%s24 + $0x20] sm:$0xff]
    %v5266 = vld [vmem:[%s24 + $0x28] sm:$0xff]
    %v5267 = vld [vmem:[%s24 + $0x30] sm:$0xff]
    %v5268 = vld [vmem:[%s24 + $0x38] sm:$0xff]
    %v5269 = vld [vmem:[%s24 + $0x40] sm:$0xff]
    %v5270 = vld [vmem:[%s24 + $0x48] sm:$0xff]
    %v5271 = vld [vmem:[%s24 + $0x50] sm:$0xff]
    %v5272 = vld [vmem:[%s24 + $0x58] sm:$0xff]
    %v5273 = vld [vmem:[%s24 + $0x60] sm:$0xff]
    %v5274 = vld [vmem:[%s24 + $0x68] sm:$0xff]
    %v5275 = vld [vmem:[%s24 + $0x70] sm:$0xff]
    %v5276 = vld [vmem:[%s24 + $0x78] sm:$0xff]
    %v5277 = vld [vmem:[%s24 + $0x80] sm:$0xff]
    %v5278 = vld [vmem:[%s24 + $0x88] sm:$0xff]
    %v5279 = vld [vmem:[%s24 + $0x90] sm:$0xff]
    %v5280 = vld [vmem:[%s24 + $0x98] sm:$0xff]
    %v5281 = vld [vmem:[%s24 + $0xa0] sm:$0xff]
    %v5282 = vld [vmem:[%s24 + $0xa8] sm:$0xff]
    %v5283 = vld [vmem:[%s24 + $0xb0] sm:$0xff]
    %v5284 = vld [vmem:[%s24 + $0xb8] sm:$0xff]
    %v5285 = vld [vmem:[%s24 + $0xc0] sm:$0xff]
    %v5286 = vld [vmem:[#allocation2] sm:$0x1]
    %v5288 = vlaneseq
    %v5289 = vshrl.u32 %v5288, 7
    %v5290 = vsub.s32 0, %v5289
    %v5291 = vrot.slane %v5286, %v5290
    %v5294 = vsel %vm5153, %v5256, 0
    %v5297 = vsel %vm5153, %v5260, 0
    %5299 = vmatprep.subr.mxu0 0.0
    %5300 = vmatpush1.msra.mxu0 %v5261
    %5301 = vmatprep.subr.mxu0 0.0
    %5302 = vmatpush1.msra.mxu0 %v5262
    %5303 = vmatprep.subr.mxu0 0.0
    %5304 = vmatpush1.msra.mxu0 %v5263
    %5305 = vmatprep.subr.mxu0 0.0
    %5306 = vmatpush1.msra.mxu0 %v5264
    %5307 = vmatprep.subr.mxu0 0.0
    %5308 = vmatpush1.msra.mxu0 %v5265
    %5309 = vmatprep.subr.mxu0 0.0
    %5310 = vmatpush1.msra.mxu0 %v5266
    %5311 = vmatprep.subr.mxu0 0.0
    %5312 = vmatpush1.msra.mxu0 %v5267
    %5313 = vmatprep.subr.mxu0 0.0
    %5314 = vmatpush1.msra.mxu0 %v5268
    %5315 = vmatprep.subr.mxu0 0.0
    %5316 = vmatpush1.msra.mxu0 %v5269
    %5317 = vmatprep.subr.mxu0 0.0
    %5318 = vmatpush1.msra.mxu0 %v5270
    %5319 = vmatprep.subr.mxu0 0.0
    %5320 = vmatpush1.msra.mxu0 %v5271
    %5321 = vmatprep.subr.mxu0 0.0
    %5322 = vmatpush1.msra.mxu0 %v5272
    %5323 = vmatprep.subr.mxu0 0.0
    %5324 = vmatpush1.msra.mxu0 %v5273
    %5325 = vmatprep.subr.mxu0 0.0
    %5326 = vmatpush1.msra.mxu0 %v5274
    %5327 = vmatprep.subr.mxu0 0.0
    %5328 = vmatpush1.msra.mxu0 %v5275
    %5329 = vmatprep.subr.mxu0 0.0
    %5330 = vmatpush1.msra.mxu0 %v5276
    %5331 = vmatprep.subr.mxu0 0.0
    %5332 = vmatpush1.msra.mxu0 %v5277
    %5333 = vmatprep.subr.mxu0 0.0
    %5334 = vmatpush1.msra.mxu0 %v5278
    %5335 = vmatprep.subr.mxu0 0.0
    %5336 = vmatpush1.msra.mxu0 %v5279
    %5337 = vmatprep.subr.mxu0 0.0
    %5338 = vmatpush1.msra.mxu0 %v5280
    %5339 = vmatprep.subr.mxu0 0.0
    %5340 = vmatpush1.msra.mxu0 %v5281
    %5341 = vmatprep.subr.mxu0 0.0
    %5342 = vmatpush1.msra.mxu0 %v5282
    %5343 = vmatprep.subr.mxu0 0.0
    %5344 = vmatpush1.msra.mxu0 %v5283
    %5345 = vmatprep.subr.mxu0 0.0
    %5346 = vmatpush1.msra.mxu0 %v5284
    %5347 = vmatprep.subr.mxu0 0.0
    %5348 = vmatpush1.msra.mxu0 %v5285
    %5349 = vmatprep.subr.mxu0 0.0
    %5350 = vmatpush1.msra.mxu0 0.0
    %5351 = vmatprep.subr.mxu0 0.0
    %5352 = vmatpush1.msra.mxu0 0.0
    %5353 = vmatprep.subr.mxu0 0.0
    %5354 = vmatpush1.msra.mxu0 0.0
    %5355 = vmatprep.subr.mxu0 0.0
    %5356 = vmatpush1.msra.mxu0 0.0
    %5357 = vmatprep.subr.mxu0 0.0
    %5358 = vmatpush1.msra.mxu0 0.0
    %5359 = vmatprep.subr.mxu0 0.0
    %5360 = vmatpush1.msra.mxu0 0.0
    %5361 = vmatprep.subr.mxu0 0.0
    %5362 = vmatpush1.msra.mxu0 0.0
    %5363 = vmatprep.mubr.f32.mxu0 %v5294
    %5364 = vmatmul.mubr.f32.gmra.mrb[0].mxu0 %v5254
    %v5365 = vpop.f32.mrb[0].mxu0
    %v5366 = vadd.f32 %v5291, %v5365
    %v5367 = vpop.f32.mrb[0].mxu0
    %5368 = vmatprep.mubr.f32.mxu0 %v5297
    %5369 = vmatmul.mubr.f32.gmra.mrb[0].mxu0 %v5258
    %v5370 = vpop.f32.mrb[0].mxu0
    %v5371 = vadd.f32 %v5291, %v5370
    %v5372 = vpop.f32.mrb[0].mxu0
    %5373 = vdwg.mxu0
    %v5374 = vxor.u32 %v5366, 2147483648
    %v5375 = vxor.u32 %v5371, 2147483648
    %v5376 = vmul.f32 %v5374, 1.442695
    %v5377 = vpow.pop %v5376
    %v5378 = vmul.f32 %v5375, 1.442695
    %v5379 = vpow.pop %v5378
    %v5380 = vadd.f32 %v5377, 1.0
    %v5381 = vadd.f32 %v5379, 1.0
    %v5382 = vrcp.pop %v5380
    %v5383 = vmul.f32 1.0, %v5382
    %v5384 = vrcp.pop %v5381
    %v5385 = vmul.f32 1.0, %v5384
    %vm5386 = vcmask 7168
    %5387 = vst.msk [vmem:[%s26] sm:$0xff] %vm5386, %v5383
    %5388 = vst.msk [vmem:[%s26 + $0x8] sm:$0xff] %vm5386, %v5385
    // Predicated region
    $region114: #{recurrent_forward.1} parent=1 // pred_check
      _
    $region115: #{recurrent_forward.1} parent=1 // pred_check_branch
      %5390 = sbr.rel (0) target = $region117
    $region116: #{recurrent_forward.1} parent=1 // pred_region
      _
    $region117: #{recurrent_forward.1} parent=1 // pred_fallthru
      _
    // Predicated region
    $region118: #{recurrent_forward.1} parent=1 // pred_check
      _
    $region119: #{recurrent_forward.1} parent=1 // pred_check_branch
      %5392 = sbr.rel (0) target = $region121
    $region120: #{recurrent_forward.1} parent=1 // pred_region
      _
    $region121: #{recurrent_forward.1} parent=1 // pred_fallthru
      _
    %5393 = vsyncpa [#allocation4], 1
    %5394 = vsyncpa [#allocation6], 1

</llo_original>
